<compile_context>
chip_gen: v6e
topology: v6e:2x2x1
jax: 0.10.0
libtpu: 0.0.40
codegen_flags: <defaults>
</compile_context>

<pallas_src>
import jax
import jax.numpy as jnp
import numpy as np
from jax.experimental import pallas as pl
from jax.experimental.pallas import tpu as pltpu

# Scaled-down shapes (embedding/hidden kept at 128 as in the PyTorch module).
VOCAB = 512            # MAX_NB_WORDS scaled down
EMBED = 128            # EMBEDDING_DIM
HIDDEN = 128           # HIDDEN_DIM
SEQ = 8                # MAX_SEQUENCE_LENGTH scaled down
BATCH = 64             # batch_size from the module
NUM_CLASSES = 2
LANE = 128             # lane-dense padded head width


def lstm_head_kernel(ids_ref, emb_ref, wih0_ref, b0_ref, wstep_ref, b1_ref,
                     wfc_ref, bfc_ref, out_ref, xproj_ref):
    """In-kernel gather + hoisted xproj + fused 2-layer LSTM + lane-dense head.

    ids_ref   : (T*B, 1)  int32  time-major flat token ids (row = t*B + b)
    emb_ref   : (V, E)    bf16   embedding table
    wih0_ref  : (E, 4H)   bf16
    b0_ref    : (1, 4H)   f32    (b_ih0 + b_hh0)
    wstep_ref : (2H, 8H)  bf16   block weight [[wih1, whh0], [whh1, 0]]
    b1_ref    : (1, 4H)   f32    (b_ih1 + b_hh1)
    wfc_ref   : (H, 128)  bf16   fc1 weight padded to 128 lanes (pad cols = 0)
    bfc_ref   : (1, 128)  f32    fc1 bias padded (pad lanes = -1e30)
    out_ref   : (B, 128)  f32    padded log-probs (real classes in lanes 0..1)
    xproj_ref : (T*B, 4H) f32    VMEM scratch for the hoisted input projection
    """
    B = out_ref.shape[0]
    H4 = b0_ref.shape[1]
    H = H4 // 4
    TB = ids_ref.shape[0]
    T = TB // B
    V = emb_ref.shape[0]

    # ---- In-kernel embedding gather via one-hot MXU matmul (small vocab). ---
    # Exact: each output row is a sum with exactly one nonzero (bf16) term.
    # TODO(synk): at the full MAX_NB_WORDS=20000 scale the table no longer fits
    # VMEM; switch to scalar-prefetched ids + per-row DMA from an HBM table.
    lane_v = jax.lax.broadcasted_iota(jnp.int32, (TB, V), 1)
    ids_b = jnp.broadcast_to(ids_ref[...], (TB, V))
    onehot = jnp.where(lane_v == ids_b, 1.0, 0.0).astype(jnp.bfloat16)  # (TB,V)
    embeds = jnp.dot(onehot, emb_ref[...],
                     preferred_element_type=jnp.float32).astype(jnp.bfloat16)

    # ---- Hoisted, non-recurrent layer-0 input projection (bias folded) -----
    # One (T*B, E) x (E, 4H) matmul, staged in a tile-aligned VMEM scratch so
    # per-step reads are clean aligned vlds instead of compiler spill layout.
    xproj_ref[...] = (jnp.dot(embeds, wih0_ref[...],
                              preferred_element_type=jnp.float32)
                      + b0_ref[...])                                # (T*B, 4H)

    wstep = wstep_ref[...]
    b1b = jnp.broadcast_to(b1_ref[...], (B, H4))   # hoisted bias broadcast

    def gates_to_hc(g, c):
        # gate order [i, f, g, o] like torch.nn.LSTM; elementwise math in f32
        # (no bf16 VPU/EUP on v5e); h returned in bf16, persistent MXU operand.
        i = jax.nn.sigmoid(g[:, 0 * H:1 * H])
        f = jax.nn.sigmoid(g[:, 1 * H:2 * H])
        gg = jnp.tanh(g[:, 2 * H:3 * H])
        o = jax.nn.sigmoid(g[:, 3 * H:4 * H])
        c_new = f * c + i * gg
        h_new = o * jnp.tanh(c_new)
        return h_new.astype(jnp.bfloat16), c_new

    h0 = jnp.zeros((B, H), jnp.bfloat16)
    h1 = jnp.zeros((B, H), jnp.bfloat16)
    c0 = jnp.zeros((B, H), jnp.float32)
    c1 = jnp.zeros((B, H), jnp.float32)
    g0_rec = jnp.zeros((B, H4), jnp.float32)   # h0(-1) @ whh0 == 0

    # Fully unrolled time loop (T is a Python int).  One fused MXU op per step:
    #   fused[:, :4H]  = h0(t)@wih1 + h1(t-1)@whh1  -> g1(t)
    #   fused[:, 4H:]  = h0(t)@whh0                 -> g0_rec(t+1)
    for t in range(T):
        g0 = g0_rec + xproj_ref[t * B:(t + 1) * B, :]
        h0, c0 = gates_to_hc(g0, c0)

        hcat = jnp.concatenate([h0, h1], axis=-1)              # (B, 2H) bf16
        fused = jnp.dot(hcat, wstep, preferred_element_type=jnp.float32)
        g1 = fused[:, :H4] + b1b
        g0_rec = fused[:, H4:]       # recurrent part of layer-0 at step t+1
        h1, c1 = gates_to_hc(g1, c1)

    # Classifier head on the last-step top-layer hidden state (bf16 operands,
    # f32 accumulation).  Lane-dense (B, 128) output: padded lanes carry a
    # -1e30 f32 bias so they vanish under f32 log_softmax.
    logits = (jnp.dot(h1, wfc_ref[...], preferred_element_type=jnp.float32)
              + bfc_ref[...])
    m = jnp.max(logits, axis=-1, keepdims=True)
    shifted = logits - m
    lse = jnp.log(jnp.sum(jnp.exp(shifted), axis=-1, keepdims=True))
    out_ref[...] = shifted - lse


def init_params(key):
    ks = jax.random.split(key, 9)
    s = 1.0 / np.sqrt(HIDDEN)
    emb = jax.random.normal(ks[0], (VOCAB, EMBED), jnp.float32) * 0.1
    wih0 = jax.random.uniform(ks[1], (EMBED, 4 * HIDDEN), jnp.float32, -s, s)
    whh0 = jax.random.uniform(ks[2], (HIDDEN, 4 * HIDDEN), jnp.float32, -s, s)
    b0 = jax.random.uniform(ks[3], (1, 4 * HIDDEN), jnp.float32, -s, s)   # b_ih + b_hh folded
    wih1 = jax.random.uniform(ks[4], (HIDDEN, 4 * HIDDEN), jnp.float32, -s, s)
    whh1 = jax.random.uniform(ks[5], (HIDDEN, 4 * HIDDEN), jnp.float32, -s, s)
    b1 = jax.random.uniform(ks[6], (1, 4 * HIDDEN), jnp.float32, -s, s)
    wfc = jax.random.uniform(ks[7], (HIDDEN, NUM_CLASSES), jnp.float32, -s, s)
    bfc = jax.random.uniform(ks[8], (1, NUM_CLASSES), jnp.float32, -s, s)
    return (emb, wih0, whh0, b0, wih1, whh1, b1, wfc, bfc)


def _cost_estimate():
    flops = (2 * SEQ * BATCH * VOCAB * EMBED                    # one-hot gather
             + 2 * SEQ * BATCH * EMBED * 4 * HIDDEN             # hoisted xproj
             + SEQ * 2 * BATCH * 2 * HIDDEN * 8 * HIDDEN        # fused per-step
             + 2 * BATCH * HIDDEN * LANE)                       # classifier head
    transcendentals = 5 * 2 * SEQ * BATCH * HIDDEN + 2 * BATCH * LANE
    bytes_accessed = (SEQ * BATCH * 4                           # ids
                      + VOCAB * EMBED * 2                       # emb (bf16)
                      + EMBED * 4 * HIDDEN * 2                  # wih0 (bf16)
                      + 4 * HIDDEN * 4                          # b0
                      + 2 * HIDDEN * 8 * HIDDEN * 2             # wstep (bf16)
                      + 4 * HIDDEN * 4                          # b1
                      + HIDDEN * LANE * 2                       # wfc (bf16)
                      + LANE * 4                                # bfc
                      + BATCH * LANE * 4)                       # out
    return pl.CostEstimate(flops=flops, transcendentals=transcendentals,
                           bytes_accessed=bytes_accessed)


@jax.jit
def lstm_net_forward(tokens, params):
    emb_table, wih0, whh0, b0, wih1, whh1, b1, wfc, bfc = params

    # bf16 MXU operands (accumulation stays f32 inside the kernel).
    emb_bf = emb_table.astype(jnp.bfloat16)
    wih0_bf = wih0.astype(jnp.bfloat16)

    # Fused per-step block weight: one (B, 2H) x (2H, 8H) matmul per step
    # yields g1(t) and g0_rec(t+1).
    wstep_bf = jnp.concatenate(
        [jnp.concatenate([wih1, whh0], axis=1),
         jnp.concatenate([whh1, jnp.zeros_like(whh1)], axis=1)],
        axis=0).astype(jnp.bfloat16)                           # (2H, 8H)

    # Lane-dense bf16 head: pad 2 -> 128 output lanes; padded logits forced to
    # -1e30 via the f32 bias so they vanish under f32 log_softmax.
    wfc_pad = (jnp.zeros((HIDDEN, LANE), jnp.float32)
               .at[:, :NUM_CLASSES].set(wfc)).astype(jnp.bfloat16)
    bfc_pad = jnp.full((1, LANE), -1e30, jnp.float32).at[:, :NUM_CLASSES].set(bfc)

    # Time-major flat ids; the embedding gather happens inside the kernel.
    flat_ids = tokens.T.reshape(-1, 1).astype(jnp.int32)       # (T*B, 1)

    # TODO(synk): nn.Dropout(p=0.2) is identity at inference; not emitted.
    # TODO(synk): on v7x a ("parallel",) batch grid over both TensorCores would
    # help; kept gridless since it would serialize the recurrence on v5e/v6e.
    out_pad = pl.pallas_call(
        lstm_head_kernel,
        out_shape=jax.ShapeDtypeStruct((BATCH, LANE), jnp.float32),
        in_specs=[pl.BlockSpec(memory_space=pltpu.MemorySpace.VMEM)] * 8,
        out_specs=pl.BlockSpec(memory_space=pltpu.MemorySpace.VMEM),
        scratch_shapes=[pltpu.VMEM((SEQ * BATCH, 4 * HIDDEN), jnp.float32)],
        cost_estimate=_cost_estimate(),
    )(flat_ids, emb_bf, wih0_bf, b0, wstep_bf, b1, wfc_pad, bfc_pad)

    return out_pad[:, :NUM_CLASSES]                            # (B, 2) log-probs


def reference_forward(tokens, params):
    """Pure-JAX f32 reference with identical math for a sanity check."""
    emb_table, wih0, whh0, b0, wih1, whh1, b1, wfc, bfc = params
    embeds = jnp.take(emb_table, tokens, axis=0)      # (B, T, E)
    H = HIDDEN

    def cell(x, h, c, wih, whh, b):
        g = x @ wih + h @ whh + b
        i = jax.nn.sigmoid(g[:, 0 * H:1 * H])
        f = jax.nn.sigmoid(g[:, 1 * H:2 * H])
        gg = jnp.tanh(g[:, 2 * H:3 * H])
        o = jax.nn.sigmoid(g[:, 3 * H:4 * H])
        c_new = f * c + i * gg
        return o * jnp.tanh(c_new), c_new

    z = jnp.zeros((BATCH, H), jnp.float32)
    h0, c0, h1, c1 = z, z, z, z
    for t in range(SEQ):
        x_t = embeds[:, t, :]
        h0, c0 = cell(x_t, h0, c0, wih0, whh0, b0)
        h1, c1 = cell(h0, h1, c1, wih1, whh1, b1)
    logits = h1 @ wfc + bfc
    return jax.nn.log_softmax(logits, axis=-1)


if __name__ == "__main__":
    key = jax.random.PRNGKey(0)
    pkey, tkey = jax.random.split(key)
    params = init_params(pkey)
    tokens = jax.random.randint(tkey, (BATCH, SEQ), 0, VOCAB, dtype=jnp.int32)

    out = lstm_net_forward(tokens, params)
    out = jax.block_until_ready(out)

    assert out.shape == (BATCH, NUM_CLASSES)
    assert bool(jnp.all(jnp.isfinite(out)))

    ref = jax.block_until_ready(reference_forward(tokens, params))
    np.testing.assert_allclose(np.asarray(out), np.asarray(ref), atol=5e-2, rtol=5e-2)

    print("KERNEL_OK")
</pallas_src>

<mosaic_0001>
module attributes {stable_mosaic.version = 11 : i64} {
  func.func @lstm_head_kernel(%arg0: memref<512x1xi32, #tpu.memory_space<vmem>>, %arg1: memref<512x128xbf16, #tpu.memory_space<vmem>>, %arg2: memref<128x512xbf16, #tpu.memory_space<vmem>>, %arg3: memref<1x512xf32, #tpu.memory_space<vmem>>, %arg4: memref<256x1024xbf16, #tpu.memory_space<vmem>>, %arg5: memref<1x512xf32, #tpu.memory_space<vmem>>, %arg6: memref<128x128xbf16, #tpu.memory_space<vmem>>, %arg7: memref<1x128xf32, #tpu.memory_space<vmem>>, %arg8: memref<64x128xf32, #tpu.memory_space<vmem>>, %arg9: memref<512x512xf32, #tpu.memory_space<vmem>>) attributes {dimension_semantics = [], scalar_prefetch = 0 : i64, scratch_operands = 1 : i64, tpu.core_type = #tpu.core_type<tc>} {
    %0 = tpu.iota {dimensions = array<i32: 1>} : vector<512x512xi32>
    %c0 = arith.constant 0 : index
    %c0_0 = arith.constant 0 : index
    %1 = vector.load %arg0[%c0, %c0_0] : memref<512x1xi32, #tpu.memory_space<vmem>>, vector<512x1xi32>
    %2 = vector.shape_cast %1 : vector<512x1xi32> to vector<512x1xi32>
    %3 = vector.broadcast %2 : vector<512x1xi32> to vector<512x512xi32>
    %4 = arith.cmpi eq, %0, %3 : vector<512x512xi32>
    %cst = arith.constant 1.000000e+00 : f32
    %cst_1 = arith.constant 0.000000e+00 : f32
    %5 = vector.broadcast %cst : f32 to vector<512x512xf32>
    %6 = vector.broadcast %cst_1 : f32 to vector<512x512xf32>
    %7 = arith.select %4, %5, %6 : vector<512x512xi1>, vector<512x512xf32>
    %8 = arith.truncf %7 : vector<512x512xf32> to vector<512x512xbf16>
    %c0_2 = arith.constant 0 : index
    %c0_3 = arith.constant 0 : index
    %9 = vector.load %arg1[%c0_2, %c0_3] : memref<512x128xbf16, #tpu.memory_space<vmem>>, vector<512x128xbf16>
    %cst_4 = arith.constant dense<0.000000e+00> : vector<512x128xf32>
    %10 = tpu.matmul %8, %9, %cst_4 {dimension_numbers = #tpu.dot_dimension_numbers<[1], [0], [0], [1], [0, 0, 1, 1], [], []>} : vector<512x512xbf16>, vector<512x128xbf16>, vector<512x128xf32> -> vector<512x128xf32>
    %11 = arith.truncf %10 : vector<512x128xf32> to vector<512x128xbf16>
    %c0_5 = arith.constant 0 : index
    %c0_6 = arith.constant 0 : index
    %12 = vector.load %arg2[%c0_5, %c0_6] : memref<128x512xbf16, #tpu.memory_space<vmem>>, vector<128x512xbf16>
    %cst_7 = arith.constant dense<0.000000e+00> : vector<512x512xf32>
    %13 = tpu.matmul %11, %12, %cst_7 {dimension_numbers = #tpu.dot_dimension_numbers<[1], [0], [0], [1], [0, 0, 1, 1], [], []>} : vector<512x128xbf16>, vector<128x512xbf16>, vector<512x512xf32> -> vector<512x512xf32>
    %c0_8 = arith.constant 0 : index
    %c0_9 = arith.constant 0 : index
    %14 = vector.load %arg3[%c0_8, %c0_9] : memref<1x512xf32, #tpu.memory_space<vmem>>, vector<1x512xf32>
    %15 = vector.broadcast %14 : vector<1x512xf32> to vector<512x512xf32>
    %16 = arith.addf %13, %15 : vector<512x512xf32>
    %c0_10 = arith.constant 0 : index
    %c0_11 = arith.constant 0 : index
    %17 = vector.load %arg9[%c0_10, %c0_11] : memref<512x512xf32, #tpu.memory_space<vmem>>, vector<512x512xf32>
    tpu.vector_store %arg9[%c0_10, %c0_11], %16 {strides = array<i32>} : memref<512x512xf32, #tpu.memory_space<vmem>>, vector<512x512xf32>,
    %c0_12 = arith.constant 0 : index
    %c0_13 = arith.constant 0 : index
    %18 = vector.load %arg4[%c0_12, %c0_13] : memref<256x1024xbf16, #tpu.memory_space<vmem>>, vector<256x1024xbf16>
    %c0_14 = arith.constant 0 : index
    %c0_15 = arith.constant 0 : index
    %19 = vector.load %arg5[%c0_14, %c0_15] : memref<1x512xf32, #tpu.memory_space<vmem>>, vector<1x512xf32>
    %20 = vector.shape_cast %19 : vector<1x512xf32> to vector<1x512xf32>
    %21 = vector.broadcast %20 : vector<1x512xf32> to vector<64x512xf32>
    %cst_16 = arith.constant 0.000000e+00 : bf16
    %22 = vector.broadcast %cst_16 : bf16 to vector<64x128xbf16>
    %cst_17 = arith.constant 0.000000e+00 : f32
    %23 = vector.broadcast %cst_17 : f32 to vector<64x128xf32>
    %cst_18 = arith.constant 0.000000e+00 : f32
    %24 = vector.broadcast %cst_18 : f32 to vector<64x128xf32>
    %cst_19 = arith.constant 0.000000e+00 : f32
    %25 = vector.broadcast %cst_19 : f32 to vector<64x512xf32>
    %c0_20 = arith.constant 0 : index
    %c0_21 = arith.constant 0 : index
    %26 = vector.load %arg9[%c0_20, %c0_21] : memref<512x512xf32, #tpu.memory_space<vmem>>, vector<64x512xf32>
    %27 = arith.addf %25, %26 : vector<64x512xf32>
    %28 = vector.extract_strided_slice %27 {offsets = [0, 0], sizes = [64, 128], strides = [1, 1]} : vector<64x512xf32> to vector<64x128xf32>
    %29 = arith.negf %28 : vector<64x128xf32>
    %30 = math.exp %29 : vector<64x128xf32>
    %cst_22 = arith.constant 1.000000e+00 : f32
    %31 = vector.broadcast %cst_22 : f32 to vector<64x128xf32>
    %32 = arith.addf %31, %30 : vector<64x128xf32>
    %33 = arith.divf %31, %32 : vector<64x128xf32>
    %34 = vector.extract_strided_slice %27 {offsets = [0, 128], sizes = [64, 128], strides = [1, 1]} : vector<64x512xf32> to vector<64x128xf32>
    %35 = arith.negf %34 : vector<64x128xf32>
    %36 = math.exp %35 : vector<64x128xf32>
    %cst_23 = arith.constant 1.000000e+00 : f32
    %37 = vector.broadcast %cst_23 : f32 to vector<64x128xf32>
    %38 = arith.addf %37, %36 : vector<64x128xf32>
    %39 = arith.divf %37, %38 : vector<64x128xf32>
    %40 = vector.extract_strided_slice %27 {offsets = [0, 256], sizes = [64, 128], strides = [1, 1]} : vector<64x512xf32> to vector<64x128xf32>
    %41 = math.tanh %40 : vector<64x128xf32>
    %42 = vector.extract_strided_slice %27 {offsets = [0, 384], sizes = [64, 128], strides = [1, 1]} : vector<64x512xf32> to vector<64x128xf32>
    %43 = arith.negf %42 : vector<64x128xf32>
    %44 = math.exp %43 : vector<64x128xf32>
    %cst_24 = arith.constant 1.000000e+00 : f32
    %45 = vector.broadcast %cst_24 : f32 to vector<64x128xf32>
    %46 = arith.addf %45, %44 : vector<64x128xf32>
    %47 = arith.divf %45, %46 : vector<64x128xf32>
    %48 = arith.mulf %39, %23 : vector<64x128xf32>
    %49 = arith.mulf %33, %41 : vector<64x128xf32>
    %50 = arith.addf %48, %49 : vector<64x128xf32>
    %51 = math.tanh %50 : vector<64x128xf32>
    %52 = arith.mulf %47, %51 : vector<64x128xf32>
    %53 = arith.truncf %52 : vector<64x128xf32> to vector<64x128xbf16>
    %54 = tpu.concatenate %53, %22 in 1 : vector<64x128xbf16>, vector<64x128xbf16> -> vector<64x256xbf16>
    %cst_25 = arith.constant dense<0.000000e+00> : vector<64x1024xf32>
    %55 = tpu.matmul %54, %18, %cst_25 {dimension_numbers = #tpu.dot_dimension_numbers<[1], [0], [0], [1], [0, 0, 1, 1], [], []>} : vector<64x256xbf16>, vector<256x1024xbf16>, vector<64x1024xf32> -> vector<64x1024xf32>
    %56 = vector.extract_strided_slice %55 {offsets = [0, 0], sizes = [64, 512], strides = [1, 1]} : vector<64x1024xf32> to vector<64x512xf32>
    %57 = arith.addf %56, %21 : vector<64x512xf32>
    %58 = vector.extract_strided_slice %55 {offsets = [0, 512], sizes = [64, 512], strides = [1, 1]} : vector<64x1024xf32> to vector<64x512xf32>
    %59 = vector.extract_strided_slice %57 {offsets = [0, 0], sizes = [64, 128], strides = [1, 1]} : vector<64x512xf32> to vector<64x128xf32>
    %60 = arith.negf %59 : vector<64x128xf32>
    %61 = math.exp %60 : vector<64x128xf32>
    %cst_26 = arith.constant 1.000000e+00 : f32
    %62 = vector.broadcast %cst_26 : f32 to vector<64x128xf32>
    %63 = arith.addf %62, %61 : vector<64x128xf32>
    %64 = arith.divf %62, %63 : vector<64x128xf32>
    %65 = vector.extract_strided_slice %57 {offsets = [0, 128], sizes = [64, 128], strides = [1, 1]} : vector<64x512xf32> to vector<64x128xf32>
    %66 = arith.negf %65 : vector<64x128xf32>
    %67 = math.exp %66 : vector<64x128xf32>
    %cst_27 = arith.constant 1.000000e+00 : f32
    %68 = vector.broadcast %cst_27 : f32 to vector<64x128xf32>
    %69 = arith.addf %68, %67 : vector<64x128xf32>
    %70 = arith.divf %68, %69 : vector<64x128xf32>
    %71 = vector.extract_strided_slice %57 {offsets = [0, 256], sizes = [64, 128], strides = [1, 1]} : vector<64x512xf32> to vector<64x128xf32>
    %72 = math.tanh %71 : vector<64x128xf32>
    %73 = vector.extract_strided_slice %57 {offsets = [0, 384], sizes = [64, 128], strides = [1, 1]} : vector<64x512xf32> to vector<64x128xf32>
    %74 = arith.negf %73 : vector<64x128xf32>
    %75 = math.exp %74 : vector<64x128xf32>
    %cst_28 = arith.constant 1.000000e+00 : f32
    %76 = vector.broadcast %cst_28 : f32 to vector<64x128xf32>
    %77 = arith.addf %76, %75 : vector<64x128xf32>
    %78 = arith.divf %76, %77 : vector<64x128xf32>
    %79 = arith.mulf %70, %24 : vector<64x128xf32>
    %80 = arith.mulf %64, %72 : vector<64x128xf32>
    %81 = arith.addf %79, %80 : vector<64x128xf32>
    %82 = math.tanh %81 : vector<64x128xf32>
    %83 = arith.mulf %78, %82 : vector<64x128xf32>
    %84 = arith.truncf %83 : vector<64x128xf32> to vector<64x128xbf16>
    %c64 = arith.constant 64 : index
    %c0_29 = arith.constant 0 : index
    %85 = vector.load %arg9[%c64, %c0_29] : memref<512x512xf32, #tpu.memory_space<vmem>>, vector<64x512xf32>
    %86 = arith.addf %58, %85 : vector<64x512xf32>
    %87 = vector.extract_strided_slice %86 {offsets = [0, 0], sizes = [64, 128], strides = [1, 1]} : vector<64x512xf32> to vector<64x128xf32>
    %88 = arith.negf %87 : vector<64x128xf32>
    %89 = math.exp %88 : vector<64x128xf32>
    %cst_30 = arith.constant 1.000000e+00 : f32
    %90 = vector.broadcast %cst_30 : f32 to vector<64x128xf32>
    %91 = arith.addf %90, %89 : vector<64x128xf32>
    %92 = arith.divf %90, %91 : vector<64x128xf32>
    %93 = vector.extract_strided_slice %86 {offsets = [0, 128], sizes = [64, 128], strides = [1, 1]} : vector<64x512xf32> to vector<64x128xf32>
    %94 = arith.negf %93 : vector<64x128xf32>
    %95 = math.exp %94 : vector<64x128xf32>
    %cst_31 = arith.constant 1.000000e+00 : f32
    %96 = vector.broadcast %cst_31 : f32 to vector<64x128xf32>
    %97 = arith.addf %96, %95 : vector<64x128xf32>
    %98 = arith.divf %96, %97 : vector<64x128xf32>
    %99 = vector.extract_strided_slice %86 {offsets = [0, 256], sizes = [64, 128], strides = [1, 1]} : vector<64x512xf32> to vector<64x128xf32>
    %100 = math.tanh %99 : vector<64x128xf32>
    %101 = vector.extract_strided_slice %86 {offsets = [0, 384], sizes = [64, 128], strides = [1, 1]} : vector<64x512xf32> to vector<64x128xf32>
    %102 = arith.negf %101 : vector<64x128xf32>
    %103 = math.exp %102 : vector<64x128xf32>
    %cst_32 = arith.constant 1.000000e+00 : f32
    %104 = vector.broadcast %cst_32 : f32 to vector<64x128xf32>
    %105 = arith.addf %104, %103 : vector<64x128xf32>
    %106 = arith.divf %104, %105 : vector<64x128xf32>
    %107 = arith.mulf %98, %50 : vector<64x128xf32>
    %108 = arith.mulf %92, %100 : vector<64x128xf32>
    %109 = arith.addf %107, %108 : vector<64x128xf32>
    %110 = math.tanh %109 : vector<64x128xf32>
    %111 = arith.mulf %106, %110 : vector<64x128xf32>
    %112 = arith.truncf %111 : vector<64x128xf32> to vector<64x128xbf16>
    %113 = tpu.concatenate %112, %84 in 1 : vector<64x128xbf16>, vector<64x128xbf16> -> vector<64x256xbf16>
    %cst_33 = arith.constant dense<0.000000e+00> : vector<64x1024xf32>
    %114 = tpu.matmul %113, %18, %cst_33 {dimension_numbers = #tpu.dot_dimension_numbers<[1], [0], [0], [1], [0, 0, 1, 1], [], []>} : vector<64x256xbf16>, vector<256x1024xbf16>, vector<64x1024xf32> -> vector<64x1024xf32>
    %115 = vector.extract_strided_slice %114 {offsets = [0, 0], sizes = [64, 512], strides = [1, 1]} : vector<64x1024xf32> to vector<64x512xf32>
    %116 = arith.addf %115, %21 : vector<64x512xf32>
    %117 = vector.extract_strided_slice %114 {offsets = [0, 512], sizes = [64, 512], strides = [1, 1]} : vector<64x1024xf32> to vector<64x512xf32>
    %118 = vector.extract_strided_slice %116 {offsets = [0, 0], sizes = [64, 128], strides = [1, 1]} : vector<64x512xf32> to vector<64x128xf32>
    %119 = arith.negf %118 : vector<64x128xf32>
    %120 = math.exp %119 : vector<64x128xf32>
    %cst_34 = arith.constant 1.000000e+00 : f32
    %121 = vector.broadcast %cst_34 : f32 to vector<64x128xf32>
    %122 = arith.addf %121, %120 : vector<64x128xf32>
    %123 = arith.divf %121, %122 : vector<64x128xf32>
    %124 = vector.extract_strided_slice %116 {offsets = [0, 128], sizes = [64, 128], strides = [1, 1]} : vector<64x512xf32> to vector<64x128xf32>
    %125 = arith.negf %124 : vector<64x128xf32>
    %126 = math.exp %125 : vector<64x128xf32>
    %cst_35 = arith.constant 1.000000e+00 : f32
    %127 = vector.broadcast %cst_35 : f32 to vector<64x128xf32>
    %128 = arith.addf %127, %126 : vector<64x128xf32>
    %129 = arith.divf %127, %128 : vector<64x128xf32>
    %130 = vector.extract_strided_slice %116 {offsets = [0, 256], sizes = [64, 128], strides = [1, 1]} : vector<64x512xf32> to vector<64x128xf32>
    %131 = math.tanh %130 : vector<64x128xf32>
    %132 = vector.extract_strided_slice %116 {offsets = [0, 384], sizes = [64, 128], strides = [1, 1]} : vector<64x512xf32> to vector<64x128xf32>
    %133 = arith.negf %132 : vector<64x128xf32>
    %134 = math.exp %133 : vector<64x128xf32>
    %cst_36 = arith.constant 1.000000e+00 : f32
    %135 = vector.broadcast %cst_36 : f32 to vector<64x128xf32>
    %136 = arith.addf %135, %134 : vector<64x128xf32>
    %137 = arith.divf %135, %136 : vector<64x128xf32>
    %138 = arith.mulf %129, %81 : vector<64x128xf32>
    %139 = arith.mulf %123, %131 : vector<64x128xf32>
    %140 = arith.addf %138, %139 : vector<64x128xf32>
    %141 = math.tanh %140 : vector<64x128xf32>
    %142 = arith.mulf %137, %141 : vector<64x128xf32>
    %143 = arith.truncf %142 : vector<64x128xf32> to vector<64x128xbf16>
    %c128 = arith.constant 128 : index
    %c0_37 = arith.constant 0 : index
    %144 = vector.load %arg9[%c128, %c0_37] : memref<512x512xf32, #tpu.memory_space<vmem>>, vector<64x512xf32>
    %145 = arith.addf %117, %144 : vector<64x512xf32>
    %146 = vector.extract_strided_slice %145 {offsets = [0, 0], sizes = [64, 128], strides = [1, 1]} : vector<64x512xf32> to vector<64x128xf32>
    %147 = arith.negf %146 : vector<64x128xf32>
    %148 = math.exp %147 : vector<64x128xf32>
    %cst_38 = arith.constant 1.000000e+00 : f32
    %149 = vector.broadcast %cst_38 : f32 to vector<64x128xf32>
    %150 = arith.addf %149, %148 : vector<64x128xf32>
    %151 = arith.divf %149, %150 : vector<64x128xf32>
    %152 = vector.extract_strided_slice %145 {offsets = [0, 128], sizes = [64, 128], strides = [1, 1]} : vector<64x512xf32> to vector<64x128xf32>
    %153 = arith.negf %152 : vector<64x128xf32>
    %154 = math.exp %153 : vector<64x128xf32>
    %cst_39 = arith.constant 1.000000e+00 : f32
    %155 = vector.broadcast %cst_39 : f32 to vector<64x128xf32>
    %156 = arith.addf %155, %154 : vector<64x128xf32>
    %157 = arith.divf %155, %156 : vector<64x128xf32>
    %158 = vector.extract_strided_slice %145 {offsets = [0, 256], sizes = [64, 128], strides = [1, 1]} : vector<64x512xf32> to vector<64x128xf32>
    %159 = math.tanh %158 : vector<64x128xf32>
    %160 = vector.extract_strided_slice %145 {offsets = [0, 384], sizes = [64, 128], strides = [1, 1]} : vector<64x512xf32> to vector<64x128xf32>
    %161 = arith.negf %160 : vector<64x128xf32>
    %162 = math.exp %161 : vector<64x128xf32>
    %cst_40 = arith.constant 1.000000e+00 : f32
    %163 = vector.broadcast %cst_40 : f32 to vector<64x128xf32>
    %164 = arith.addf %163, %162 : vector<64x128xf32>
    %165 = arith.divf %163, %164 : vector<64x128xf32>
    %166 = arith.mulf %157, %109 : vector<64x128xf32>
    %167 = arith.mulf %151, %159 : vector<64x128xf32>
    %168 = arith.addf %166, %167 : vector<64x128xf32>
    %169 = math.tanh %168 : vector<64x128xf32>
    %170 = arith.mulf %165, %169 : vector<64x128xf32>
    %171 = arith.truncf %170 : vector<64x128xf32> to vector<64x128xbf16>
    %172 = tpu.concatenate %171, %143 in 1 : vector<64x128xbf16>, vector<64x128xbf16> -> vector<64x256xbf16>
    %cst_41 = arith.constant dense<0.000000e+00> : vector<64x1024xf32>
    %173 = tpu.matmul %172, %18, %cst_41 {dimension_numbers = #tpu.dot_dimension_numbers<[1], [0], [0], [1], [0, 0, 1, 1], [], []>} : vector<64x256xbf16>, vector<256x1024xbf16>, vector<64x1024xf32> -> vector<64x1024xf32>
    %174 = vector.extract_strided_slice %173 {offsets = [0, 0], sizes = [64, 512], strides = [1, 1]} : vector<64x1024xf32> to vector<64x512xf32>
    %175 = arith.addf %174, %21 : vector<64x512xf32>
    %176 = vector.extract_strided_slice %173 {offsets = [0, 512], sizes = [64, 512], strides = [1, 1]} : vector<64x1024xf32> to vector<64x512xf32>
    %177 = vector.extract_strided_slice %175 {offsets = [0, 0], sizes = [64, 128], strides = [1, 1]} : vector<64x512xf32> to vector<64x128xf32>
    %178 = arith.negf %177 : vector<64x128xf32>
    %179 = math.exp %178 : vector<64x128xf32>
    %cst_42 = arith.constant 1.000000e+00 : f32
    %180 = vector.broadcast %cst_42 : f32 to vector<64x128xf32>
    %181 = arith.addf %180, %179 : vector<64x128xf32>
    %182 = arith.divf %180, %181 : vector<64x128xf32>
    %183 = vector.extract_strided_slice %175 {offsets = [0, 128], sizes = [64, 128], strides = [1, 1]} : vector<64x512xf32> to vector<64x128xf32>
    %184 = arith.negf %183 : vector<64x128xf32>
    %185 = math.exp %184 : vector<64x128xf32>
    %cst_43 = arith.constant 1.000000e+00 : f32
    %186 = vector.broadcast %cst_43 : f32 to vector<64x128xf32>
    %187 = arith.addf %186, %185 : vector<64x128xf32>
    %188 = arith.divf %186, %187 : vector<64x128xf32>
    %189 = vector.extract_strided_slice %175 {offsets = [0, 256], sizes = [64, 128], strides = [1, 1]} : vector<64x512xf32> to vector<64x128xf32>
    %190 = math.tanh %189 : vector<64x128xf32>
    %191 = vector.extract_strided_slice %175 {offsets = [0, 384], sizes = [64, 128], strides = [1, 1]} : vector<64x512xf32> to vector<64x128xf32>
    %192 = arith.negf %191 : vector<64x128xf32>
    %193 = math.exp %192 : vector<64x128xf32>
    %cst_44 = arith.constant 1.000000e+00 : f32
    %194 = vector.broadcast %cst_44 : f32 to vector<64x128xf32>
    %195 = arith.addf %194, %193 : vector<64x128xf32>
    %196 = arith.divf %194, %195 : vector<64x128xf32>
    %197 = arith.mulf %188, %140 : vector<64x128xf32>
    %198 = arith.mulf %182, %190 : vector<64x128xf32>
    %199 = arith.addf %197, %198 : vector<64x128xf32>
    %200 = math.tanh %199 : vector<64x128xf32>
    %201 = arith.mulf %196, %200 : vector<64x128xf32>
    %202 = arith.truncf %201 : vector<64x128xf32> to vector<64x128xbf16>
    %c192 = arith.constant 192 : index
    %c0_45 = arith.constant 0 : index
    %203 = vector.load %arg9[%c192, %c0_45] : memref<512x512xf32, #tpu.memory_space<vmem>>, vector<64x512xf32>
    %204 = arith.addf %176, %203 : vector<64x512xf32>
    %205 = vector.extract_strided_slice %204 {offsets = [0, 0], sizes = [64, 128], strides = [1, 1]} : vector<64x512xf32> to vector<64x128xf32>
    %206 = arith.negf %205 : vector<64x128xf32>
    %207 = math.exp %206 : vector<64x128xf32>
    %cst_46 = arith.constant 1.000000e+00 : f32
    %208 = vector.broadcast %cst_46 : f32 to vector<64x128xf32>
    %209 = arith.addf %208, %207 : vector<64x128xf32>
    %210 = arith.divf %208, %209 : vector<64x128xf32>
    %211 = vector.extract_strided_slice %204 {offsets = [0, 128], sizes = [64, 128], strides = [1, 1]} : vector<64x512xf32> to vector<64x128xf32>
    %212 = arith.negf %211 : vector<64x128xf32>
    %213 = math.exp %212 : vector<64x128xf32>
    %cst_47 = arith.constant 1.000000e+00 : f32
    %214 = vector.broadcast %cst_47 : f32 to vector<64x128xf32>
    %215 = arith.addf %214, %213 : vector<64x128xf32>
    %216 = arith.divf %214, %215 : vector<64x128xf32>
    %217 = vector.extract_strided_slice %204 {offsets = [0, 256], sizes = [64, 128], strides = [1, 1]} : vector<64x512xf32> to vector<64x128xf32>
    %218 = math.tanh %217 : vector<64x128xf32>
    %219 = vector.extract_strided_slice %204 {offsets = [0, 384], sizes = [64, 128], strides = [1, 1]} : vector<64x512xf32> to vector<64x128xf32>
    %220 = arith.negf %219 : vector<64x128xf32>
    %221 = math.exp %220 : vector<64x128xf32>
    %cst_48 = arith.constant 1.000000e+00 : f32
    %222 = vector.broadcast %cst_48 : f32 to vector<64x128xf32>
    %223 = arith.addf %222, %221 : vector<64x128xf32>
    %224 = arith.divf %222, %223 : vector<64x128xf32>
    %225 = arith.mulf %216, %168 : vector<64x128xf32>
    %226 = arith.mulf %210, %218 : vector<64x128xf32>
    %227 = arith.addf %225, %226 : vector<64x128xf32>
    %228 = math.tanh %227 : vector<64x128xf32>
    %229 = arith.mulf %224, %228 : vector<64x128xf32>
    %230 = arith.truncf %229 : vector<64x128xf32> to vector<64x128xbf16>
    %231 = tpu.concatenate %230, %202 in 1 : vector<64x128xbf16>, vector<64x128xbf16> -> vector<64x256xbf16>
    %cst_49 = arith.constant dense<0.000000e+00> : vector<64x1024xf32>
    %232 = tpu.matmul %231, %18, %cst_49 {dimension_numbers = #tpu.dot_dimension_numbers<[1], [0], [0], [1], [0, 0, 1, 1], [], []>} : vector<64x256xbf16>, vector<256x1024xbf16>, vector<64x1024xf32> -> vector<64x1024xf32>
    %233 = vector.extract_strided_slice %232 {offsets = [0, 0], sizes = [64, 512], strides = [1, 1]} : vector<64x1024xf32> to vector<64x512xf32>
    %234 = arith.addf %233, %21 : vector<64x512xf32>
    %235 = vector.extract_strided_slice %232 {offsets = [0, 512], sizes = [64, 512], strides = [1, 1]} : vector<64x1024xf32> to vector<64x512xf32>
    %236 = vector.extract_strided_slice %234 {offsets = [0, 0], sizes = [64, 128], strides = [1, 1]} : vector<64x512xf32> to vector<64x128xf32>
    %237 = arith.negf %236 : vector<64x128xf32>
    %238 = math.exp %237 : vector<64x128xf32>
    %cst_50 = arith.constant 1.000000e+00 : f32
    %239 = vector.broadcast %cst_50 : f32 to vector<64x128xf32>
    %240 = arith.addf %239, %238 : vector<64x128xf32>
    %241 = arith.divf %239, %240 : vector<64x128xf32>
    %242 = vector.extract_strided_slice %234 {offsets = [0, 128], sizes = [64, 128], strides = [1, 1]} : vector<64x512xf32> to vector<64x128xf32>
    %243 = arith.negf %242 : vector<64x128xf32>
    %244 = math.exp %243 : vector<64x128xf32>
    %cst_51 = arith.constant 1.000000e+00 : f32
    %245 = vector.broadcast %cst_51 : f32 to vector<64x128xf32>
    %246 = arith.addf %245, %244 : vector<64x128xf32>
    %247 = arith.divf %245, %246 : vector<64x128xf32>
    %248 = vector.extract_strided_slice %234 {offsets = [0, 256], sizes = [64, 128], strides = [1, 1]} : vector<64x512xf32> to vector<64x128xf32>
    %249 = math.tanh %248 : vector<64x128xf32>
    %250 = vector.extract_strided_slice %234 {offsets = [0, 384], sizes = [64, 128], strides = [1, 1]} : vector<64x512xf32> to vector<64x128xf32>
    %251 = arith.negf %250 : vector<64x128xf32>
    %252 = math.exp %251 : vector<64x128xf32>
    %cst_52 = arith.constant 1.000000e+00 : f32
    %253 = vector.broadcast %cst_52 : f32 to vector<64x128xf32>
    %254 = arith.addf %253, %252 : vector<64x128xf32>
    %255 = arith.divf %253, %254 : vector<64x128xf32>
    %256 = arith.mulf %247, %199 : vector<64x128xf32>
    %257 = arith.mulf %241, %249 : vector<64x128xf32>
    %258 = arith.addf %256, %257 : vector<64x128xf32>
    %259 = math.tanh %258 : vector<64x128xf32>
    %260 = arith.mulf %255, %259 : vector<64x128xf32>
    %261 = arith.truncf %260 : vector<64x128xf32> to vector<64x128xbf16>
    %c256 = arith.constant 256 : index
    %c0_53 = arith.constant 0 : index
    %262 = vector.load %arg9[%c256, %c0_53] : memref<512x512xf32, #tpu.memory_space<vmem>>, vector<64x512xf32>
    %263 = arith.addf %235, %262 : vector<64x512xf32>
    %264 = vector.extract_strided_slice %263 {offsets = [0, 0], sizes = [64, 128], strides = [1, 1]} : vector<64x512xf32> to vector<64x128xf32>
    %265 = arith.negf %264 : vector<64x128xf32>
    %266 = math.exp %265 : vector<64x128xf32>
    %cst_54 = arith.constant 1.000000e+00 : f32
    %267 = vector.broadcast %cst_54 : f32 to vector<64x128xf32>
    %268 = arith.addf %267, %266 : vector<64x128xf32>
    %269 = arith.divf %267, %268 : vector<64x128xf32>
    %270 = vector.extract_strided_slice %263 {offsets = [0, 128], sizes = [64, 128], strides = [1, 1]} : vector<64x512xf32> to vector<64x128xf32>
    %271 = arith.negf %270 : vector<64x128xf32>
    %272 = math.exp %271 : vector<64x128xf32>
    %cst_55 = arith.constant 1.000000e+00 : f32
    %273 = vector.broadcast %cst_55 : f32 to vector<64x128xf32>
    %274 = arith.addf %273, %272 : vector<64x128xf32>
    %275 = arith.divf %273, %274 : vector<64x128xf32>
    %276 = vector.extract_strided_slice %263 {offsets = [0, 256], sizes = [64, 128], strides = [1, 1]} : vector<64x512xf32> to vector<64x128xf32>
    %277 = math.tanh %276 : vector<64x128xf32>
    %278 = vector.extract_strided_slice %263 {offsets = [0, 384], sizes = [64, 128], strides = [1, 1]} : vector<64x512xf32> to vector<64x128xf32>
    %279 = arith.negf %278 : vector<64x128xf32>
    %280 = math.exp %279 : vector<64x128xf32>
    %cst_56 = arith.constant 1.000000e+00 : f32
    %281 = vector.broadcast %cst_56 : f32 to vector<64x128xf32>
    %282 = arith.addf %281, %280 : vector<64x128xf32>
    %283 = arith.divf %281, %282 : vector<64x128xf32>
    %284 = arith.mulf %275, %227 : vector<64x128xf32>
    %285 = arith.mulf %269, %277 : vector<64x128xf32>
    %286 = arith.addf %284, %285 : vector<64x128xf32>
    %287 = math.tanh %286 : vector<64x128xf32>
    %288 = arith.mulf %283, %287 : vector<64x128xf32>
    %289 = arith.truncf %288 : vector<64x128xf32> to vector<64x128xbf16>
    %290 = tpu.concatenate %289, %261 in 1 : vector<64x128xbf16>, vector<64x128xbf16> -> vector<64x256xbf16>
    %cst_57 = arith.constant dense<0.000000e+00> : vector<64x1024xf32>
    %291 = tpu.matmul %290, %18, %cst_57 {dimension_numbers = #tpu.dot_dimension_numbers<[1], [0], [0], [1], [0, 0, 1, 1], [], []>} : vector<64x256xbf16>, vector<256x1024xbf16>, vector<64x1024xf32> -> vector<64x1024xf32>
    %292 = vector.extract_strided_slice %291 {offsets = [0, 0], sizes = [64, 512], strides = [1, 1]} : vector<64x1024xf32> to vector<64x512xf32>
    %293 = arith.addf %292, %21 : vector<64x512xf32>
    %294 = vector.extract_strided_slice %291 {offsets = [0, 512], sizes = [64, 512], strides = [1, 1]} : vector<64x1024xf32> to vector<64x512xf32>
    %295 = vector.extract_strided_slice %293 {offsets = [0, 0], sizes = [64, 128], strides = [1, 1]} : vector<64x512xf32> to vector<64x128xf32>
    %296 = arith.negf %295 : vector<64x128xf32>
    %297 = math.exp %296 : vector<64x128xf32>
    %cst_58 = arith.constant 1.000000e+00 : f32
    %298 = vector.broadcast %cst_58 : f32 to vector<64x128xf32>
    %299 = arith.addf %298, %297 : vector<64x128xf32>
    %300 = arith.divf %298, %299 : vector<64x128xf32>
    %301 = vector.extract_strided_slice %293 {offsets = [0, 128], sizes = [64, 128], strides = [1, 1]} : vector<64x512xf32> to vector<64x128xf32>
    %302 = arith.negf %301 : vector<64x128xf32>
    %303 = math.exp %302 : vector<64x128xf32>
    %cst_59 = arith.constant 1.000000e+00 : f32
    %304 = vector.broadcast %cst_59 : f32 to vector<64x128xf32>
    %305 = arith.addf %304, %303 : vector<64x128xf32>
    %306 = arith.divf %304, %305 : vector<64x128xf32>
    %307 = vector.extract_strided_slice %293 {offsets = [0, 256], sizes = [64, 128], strides = [1, 1]} : vector<64x512xf32> to vector<64x128xf32>
    %308 = math.tanh %307 : vector<64x128xf32>
    %309 = vector.extract_strided_slice %293 {offsets = [0, 384], sizes = [64, 128], strides = [1, 1]} : vector<64x512xf32> to vector<64x128xf32>
    %310 = arith.negf %309 : vector<64x128xf32>
    %311 = math.exp %310 : vector<64x128xf32>
    %cst_60 = arith.constant 1.000000e+00 : f32
    %312 = vector.broadcast %cst_60 : f32 to vector<64x128xf32>
    %313 = arith.addf %312, %311 : vector<64x128xf32>
    %314 = arith.divf %312, %313 : vector<64x128xf32>
    %315 = arith.mulf %306, %258 : vector<64x128xf32>
    %316 = arith.mulf %300, %308 : vector<64x128xf32>
    %317 = arith.addf %315, %316 : vector<64x128xf32>
    %318 = math.tanh %317 : vector<64x128xf32>
    %319 = arith.mulf %314, %318 : vector<64x128xf32>
    %320 = arith.truncf %319 : vector<64x128xf32> to vector<64x128xbf16>
    %c320 = arith.constant 320 : index
    %c0_61 = arith.constant 0 : index
    %321 = vector.load %arg9[%c320, %c0_61] : memref<512x512xf32, #tpu.memory_space<vmem>>, vector<64x512xf32>
    %322 = arith.addf %294, %321 : vector<64x512xf32>
    %323 = vector.extract_strided_slice %322 {offsets = [0, 0], sizes = [64, 128], strides = [1, 1]} : vector<64x512xf32> to vector<64x128xf32>
    %324 = arith.negf %323 : vector<64x128xf32>
    %325 = math.exp %324 : vector<64x128xf32>
    %cst_62 = arith.constant 1.000000e+00 : f32
    %326 = vector.broadcast %cst_62 : f32 to vector<64x128xf32>
    %327 = arith.addf %326, %325 : vector<64x128xf32>
    %328 = arith.divf %326, %327 : vector<64x128xf32>
    %329 = vector.extract_strided_slice %322 {offsets = [0, 128], sizes = [64, 128], strides = [1, 1]} : vector<64x512xf32> to vector<64x128xf32>
    %330 = arith.negf %329 : vector<64x128xf32>
    %331 = math.exp %330 : vector<64x128xf32>
    %cst_63 = arith.constant 1.000000e+00 : f32
    %332 = vector.broadcast %cst_63 : f32 to vector<64x128xf32>
    %333 = arith.addf %332, %331 : vector<64x128xf32>
    %334 = arith.divf %332, %333 : vector<64x128xf32>
    %335 = vector.extract_strided_slice %322 {offsets = [0, 256], sizes = [64, 128], strides = [1, 1]} : vector<64x512xf32> to vector<64x128xf32>
    %336 = math.tanh %335 : vector<64x128xf32>
    %337 = vector.extract_strided_slice %322 {offsets = [0, 384], sizes = [64, 128], strides = [1, 1]} : vector<64x512xf32> to vector<64x128xf32>
    %338 = arith.negf %337 : vector<64x128xf32>
    %339 = math.exp %338 : vector<64x128xf32>
    %cst_64 = arith.constant 1.000000e+00 : f32
    %340 = vector.broadcast %cst_64 : f32 to vector<64x128xf32>
    %341 = arith.addf %340, %339 : vector<64x128xf32>
    %342 = arith.divf %340, %341 : vector<64x128xf32>
    %343 = arith.mulf %334, %286 : vector<64x128xf32>
    %344 = arith.mulf %328, %336 : vector<64x128xf32>
    %345 = arith.addf %343, %344 : vector<64x128xf32>
    %346 = math.tanh %345 : vector<64x128xf32>
    %347 = arith.mulf %342, %346 : vector<64x128xf32>
    %348 = arith.truncf %347 : vector<64x128xf32> to vector<64x128xbf16>
    %349 = tpu.concatenate %348, %320 in 1 : vector<64x128xbf16>, vector<64x128xbf16> -> vector<64x256xbf16>
    %cst_65 = arith.constant dense<0.000000e+00> : vector<64x1024xf32>
    %350 = tpu.matmul %349, %18, %cst_65 {dimension_numbers = #tpu.dot_dimension_numbers<[1], [0], [0], [1], [0, 0, 1, 1], [], []>} : vector<64x256xbf16>, vector<256x1024xbf16>, vector<64x1024xf32> -> vector<64x1024xf32>
    %351 = vector.extract_strided_slice %350 {offsets = [0, 0], sizes = [64, 512], strides = [1, 1]} : vector<64x1024xf32> to vector<64x512xf32>
    %352 = arith.addf %351, %21 : vector<64x512xf32>
    %353 = vector.extract_strided_slice %350 {offsets = [0, 512], sizes = [64, 512], strides = [1, 1]} : vector<64x1024xf32> to vector<64x512xf32>
    %354 = vector.extract_strided_slice %352 {offsets = [0, 0], sizes = [64, 128], strides = [1, 1]} : vector<64x512xf32> to vector<64x128xf32>
    %355 = arith.negf %354 : vector<64x128xf32>
    %356 = math.exp %355 : vector<64x128xf32>
    %cst_66 = arith.constant 1.000000e+00 : f32
    %357 = vector.broadcast %cst_66 : f32 to vector<64x128xf32>
    %358 = arith.addf %357, %356 : vector<64x128xf32>
    %359 = arith.divf %357, %358 : vector<64x128xf32>
    %360 = vector.extract_strided_slice %352 {offsets = [0, 128], sizes = [64, 128], strides = [1, 1]} : vector<64x512xf32> to vector<64x128xf32>
    %361 = arith.negf %360 : vector<64x128xf32>
    %362 = math.exp %361 : vector<64x128xf32>
    %cst_67 = arith.constant 1.000000e+00 : f32
    %363 = vector.broadcast %cst_67 : f32 to vector<64x128xf32>
    %364 = arith.addf %363, %362 : vector<64x128xf32>
    %365 = arith.divf %363, %364 : vector<64x128xf32>
    %366 = vector.extract_strided_slice %352 {offsets = [0, 256], sizes = [64, 128], strides = [1, 1]} : vector<64x512xf32> to vector<64x128xf32>
    %367 = math.tanh %366 : vector<64x128xf32>
    %368 = vector.extract_strided_slice %352 {offsets = [0, 384], sizes = [64, 128], strides = [1, 1]} : vector<64x512xf32> to vector<64x128xf32>
    %369 = arith.negf %368 : vector<64x128xf32>
    %370 = math.exp %369 : vector<64x128xf32>
    %cst_68 = arith.constant 1.000000e+00 : f32
    %371 = vector.broadcast %cst_68 : f32 to vector<64x128xf32>
    %372 = arith.addf %371, %370 : vector<64x128xf32>
    %373 = arith.divf %371, %372 : vector<64x128xf32>
    %374 = arith.mulf %365, %317 : vector<64x128xf32>
    %375 = arith.mulf %359, %367 : vector<64x128xf32>
    %376 = arith.addf %374, %375 : vector<64x128xf32>
    %377 = math.tanh %376 : vector<64x128xf32>
    %378 = arith.mulf %373, %377 : vector<64x128xf32>
    %379 = arith.truncf %378 : vector<64x128xf32> to vector<64x128xbf16>
    %c384 = arith.constant 384 : index
    %c0_69 = arith.constant 0 : index
    %380 = vector.load %arg9[%c384, %c0_69] : memref<512x512xf32, #tpu.memory_space<vmem>>, vector<64x512xf32>
    %381 = arith.addf %353, %380 : vector<64x512xf32>
    %382 = vector.extract_strided_slice %381 {offsets = [0, 0], sizes = [64, 128], strides = [1, 1]} : vector<64x512xf32> to vector<64x128xf32>
    %383 = arith.negf %382 : vector<64x128xf32>
    %384 = math.exp %383 : vector<64x128xf32>
    %cst_70 = arith.constant 1.000000e+00 : f32
    %385 = vector.broadcast %cst_70 : f32 to vector<64x128xf32>
    %386 = arith.addf %385, %384 : vector<64x128xf32>
    %387 = arith.divf %385, %386 : vector<64x128xf32>
    %388 = vector.extract_strided_slice %381 {offsets = [0, 128], sizes = [64, 128], strides = [1, 1]} : vector<64x512xf32> to vector<64x128xf32>
    %389 = arith.negf %388 : vector<64x128xf32>
    %390 = math.exp %389 : vector<64x128xf32>
    %cst_71 = arith.constant 1.000000e+00 : f32
    %391 = vector.broadcast %cst_71 : f32 to vector<64x128xf32>
    %392 = arith.addf %391, %390 : vector<64x128xf32>
    %393 = arith.divf %391, %392 : vector<64x128xf32>
    %394 = vector.extract_strided_slice %381 {offsets = [0, 256], sizes = [64, 128], strides = [1, 1]} : vector<64x512xf32> to vector<64x128xf32>
    %395 = math.tanh %394 : vector<64x128xf32>
    %396 = vector.extract_strided_slice %381 {offsets = [0, 384], sizes = [64, 128], strides = [1, 1]} : vector<64x512xf32> to vector<64x128xf32>
    %397 = arith.negf %396 : vector<64x128xf32>
    %398 = math.exp %397 : vector<64x128xf32>
    %cst_72 = arith.constant 1.000000e+00 : f32
    %399 = vector.broadcast %cst_72 : f32 to vector<64x128xf32>
    %400 = arith.addf %399, %398 : vector<64x128xf32>
    %401 = arith.divf %399, %400 : vector<64x128xf32>
    %402 = arith.mulf %393, %345 : vector<64x128xf32>
    %403 = arith.mulf %387, %395 : vector<64x128xf32>
    %404 = arith.addf %402, %403 : vector<64x128xf32>
    %405 = math.tanh %404 : vector<64x128xf32>
    %406 = arith.mulf %401, %405 : vector<64x128xf32>
    %407 = arith.truncf %406 : vector<64x128xf32> to vector<64x128xbf16>
    %408 = tpu.concatenate %407, %379 in 1 : vector<64x128xbf16>, vector<64x128xbf16> -> vector<64x256xbf16>
    %cst_73 = arith.constant dense<0.000000e+00> : vector<64x1024xf32>
    %409 = tpu.matmul %408, %18, %cst_73 {dimension_numbers = #tpu.dot_dimension_numbers<[1], [0], [0], [1], [0, 0, 1, 1], [], []>} : vector<64x256xbf16>, vector<256x1024xbf16>, vector<64x1024xf32> -> vector<64x1024xf32>
    %410 = vector.extract_strided_slice %409 {offsets = [0, 0], sizes = [64, 512], strides = [1, 1]} : vector<64x1024xf32> to vector<64x512xf32>
    %411 = arith.addf %410, %21 : vector<64x512xf32>
    %412 = vector.extract_strided_slice %409 {offsets = [0, 512], sizes = [64, 512], strides = [1, 1]} : vector<64x1024xf32> to vector<64x512xf32>
    %413 = vector.extract_strided_slice %411 {offsets = [0, 0], sizes = [64, 128], strides = [1, 1]} : vector<64x512xf32> to vector<64x128xf32>
    %414 = arith.negf %413 : vector<64x128xf32>
    %415 = math.exp %414 : vector<64x128xf32>
    %cst_74 = arith.constant 1.000000e+00 : f32
    %416 = vector.broadcast %cst_74 : f32 to vector<64x128xf32>
    %417 = arith.addf %416, %415 : vector<64x128xf32>
    %418 = arith.divf %416, %417 : vector<64x128xf32>
    %419 = vector.extract_strided_slice %411 {offsets = [0, 128], sizes = [64, 128], strides = [1, 1]} : vector<64x512xf32> to vector<64x128xf32>
    %420 = arith.negf %419 : vector<64x128xf32>
    %421 = math.exp %420 : vector<64x128xf32>
    %cst_75 = arith.constant 1.000000e+00 : f32
    %422 = vector.broadcast %cst_75 : f32 to vector<64x128xf32>
    %423 = arith.addf %422, %421 : vector<64x128xf32>
    %424 = arith.divf %422, %423 : vector<64x128xf32>
    %425 = vector.extract_strided_slice %411 {offsets = [0, 256], sizes = [64, 128], strides = [1, 1]} : vector<64x512xf32> to vector<64x128xf32>
    %426 = math.tanh %425 : vector<64x128xf32>
    %427 = vector.extract_strided_slice %411 {offsets = [0, 384], sizes = [64, 128], strides = [1, 1]} : vector<64x512xf32> to vector<64x128xf32>
    %428 = arith.negf %427 : vector<64x128xf32>
    %429 = math.exp %428 : vector<64x128xf32>
    %cst_76 = arith.constant 1.000000e+00 : f32
    %430 = vector.broadcast %cst_76 : f32 to vector<64x128xf32>
    %431 = arith.addf %430, %429 : vector<64x128xf32>
    %432 = arith.divf %430, %431 : vector<64x128xf32>
    %433 = arith.mulf %424, %376 : vector<64x128xf32>
    %434 = arith.mulf %418, %426 : vector<64x128xf32>
    %435 = arith.addf %433, %434 : vector<64x128xf32>
    %436 = math.tanh %435 : vector<64x128xf32>
    %437 = arith.mulf %432, %436 : vector<64x128xf32>
    %438 = arith.truncf %437 : vector<64x128xf32> to vector<64x128xbf16>
    %c448 = arith.constant 448 : index
    %c0_77 = arith.constant 0 : index
    %439 = vector.load %arg9[%c448, %c0_77] : memref<512x512xf32, #tpu.memory_space<vmem>>, vector<64x512xf32>
    %440 = arith.addf %412, %439 : vector<64x512xf32>
    %441 = vector.extract_strided_slice %440 {offsets = [0, 0], sizes = [64, 128], strides = [1, 1]} : vector<64x512xf32> to vector<64x128xf32>
    %442 = arith.negf %441 : vector<64x128xf32>
    %443 = math.exp %442 : vector<64x128xf32>
    %cst_78 = arith.constant 1.000000e+00 : f32
    %444 = vector.broadcast %cst_78 : f32 to vector<64x128xf32>
    %445 = arith.addf %444, %443 : vector<64x128xf32>
    %446 = arith.divf %444, %445 : vector<64x128xf32>
    %447 = vector.extract_strided_slice %440 {offsets = [0, 128], sizes = [64, 128], strides = [1, 1]} : vector<64x512xf32> to vector<64x128xf32>
    %448 = arith.negf %447 : vector<64x128xf32>
    %449 = math.exp %448 : vector<64x128xf32>
    %cst_79 = arith.constant 1.000000e+00 : f32
    %450 = vector.broadcast %cst_79 : f32 to vector<64x128xf32>
    %451 = arith.addf %450, %449 : vector<64x128xf32>
    %452 = arith.divf %450, %451 : vector<64x128xf32>
    %453 = vector.extract_strided_slice %440 {offsets = [0, 256], sizes = [64, 128], strides = [1, 1]} : vector<64x512xf32> to vector<64x128xf32>
    %454 = math.tanh %453 : vector<64x128xf32>
    %455 = vector.extract_strided_slice %440 {offsets = [0, 384], sizes = [64, 128], strides = [1, 1]} : vector<64x512xf32> to vector<64x128xf32>
    %456 = arith.negf %455 : vector<64x128xf32>
    %457 = math.exp %456 : vector<64x128xf32>
    %cst_80 = arith.constant 1.000000e+00 : f32
    %458 = vector.broadcast %cst_80 : f32 to vector<64x128xf32>
    %459 = arith.addf %458, %457 : vector<64x128xf32>
    %460 = arith.divf %458, %459 : vector<64x128xf32>
    %461 = arith.mulf %452, %404 : vector<64x128xf32>
    %462 = arith.mulf %446, %454 : vector<64x128xf32>
    %463 = arith.addf %461, %462 : vector<64x128xf32>
    %464 = math.tanh %463 : vector<64x128xf32>
    %465 = arith.mulf %460, %464 : vector<64x128xf32>
    %466 = arith.truncf %465 : vector<64x128xf32> to vector<64x128xbf16>
    %467 = tpu.concatenate %466, %438 in 1 : vector<64x128xbf16>, vector<64x128xbf16> -> vector<64x256xbf16>
    %cst_81 = arith.constant dense<0.000000e+00> : vector<64x1024xf32>
    %468 = tpu.matmul %467, %18, %cst_81 {dimension_numbers = #tpu.dot_dimension_numbers<[1], [0], [0], [1], [0, 0, 1, 1], [], []>} : vector<64x256xbf16>, vector<256x1024xbf16>, vector<64x1024xf32> -> vector<64x1024xf32>
    %469 = vector.extract_strided_slice %468 {offsets = [0, 0], sizes = [64, 512], strides = [1, 1]} : vector<64x1024xf32> to vector<64x512xf32>
    %470 = arith.addf %469, %21 : vector<64x512xf32>
    %471 = vector.extract_strided_slice %470 {offsets = [0, 0], sizes = [64, 128], strides = [1, 1]} : vector<64x512xf32> to vector<64x128xf32>
    %472 = arith.negf %471 : vector<64x128xf32>
    %473 = math.exp %472 : vector<64x128xf32>
    %cst_82 = arith.constant 1.000000e+00 : f32
    %474 = vector.broadcast %cst_82 : f32 to vector<64x128xf32>
    %475 = arith.addf %474, %473 : vector<64x128xf32>
    %476 = arith.divf %474, %475 : vector<64x128xf32>
    %477 = vector.extract_strided_slice %470 {offsets = [0, 128], sizes = [64, 128], strides = [1, 1]} : vector<64x512xf32> to vector<64x128xf32>
    %478 = arith.negf %477 : vector<64x128xf32>
    %479 = math.exp %478 : vector<64x128xf32>
    %cst_83 = arith.constant 1.000000e+00 : f32
    %480 = vector.broadcast %cst_83 : f32 to vector<64x128xf32>
    %481 = arith.addf %480, %479 : vector<64x128xf32>
    %482 = arith.divf %480, %481 : vector<64x128xf32>
    %483 = vector.extract_strided_slice %470 {offsets = [0, 256], sizes = [64, 128], strides = [1, 1]} : vector<64x512xf32> to vector<64x128xf32>
    %484 = math.tanh %483 : vector<64x128xf32>
    %485 = vector.extract_strided_slice %470 {offsets = [0, 384], sizes = [64, 128], strides = [1, 1]} : vector<64x512xf32> to vector<64x128xf32>
    %486 = arith.negf %485 : vector<64x128xf32>
    %487 = math.exp %486 : vector<64x128xf32>
    %cst_84 = arith.constant 1.000000e+00 : f32
    %488 = vector.broadcast %cst_84 : f32 to vector<64x128xf32>
    %489 = arith.addf %488, %487 : vector<64x128xf32>
    %490 = arith.divf %488, %489 : vector<64x128xf32>
    %491 = arith.mulf %482, %435 : vector<64x128xf32>
    %492 = arith.mulf %476, %484 : vector<64x128xf32>
    %493 = arith.addf %491, %492 : vector<64x128xf32>
    %494 = math.tanh %493 : vector<64x128xf32>
    %495 = arith.mulf %490, %494 : vector<64x128xf32>
    %496 = arith.truncf %495 : vector<64x128xf32> to vector<64x128xbf16>
    %c0_85 = arith.constant 0 : index
    %c0_86 = arith.constant 0 : index
    %497 = vector.load %arg6[%c0_85, %c0_86] : memref<128x128xbf16, #tpu.memory_space<vmem>>, vector<128x128xbf16>
    %cst_87 = arith.constant dense<0.000000e+00> : vector<64x128xf32>
    %498 = tpu.matmul %496, %497, %cst_87 {dimension_numbers = #tpu.dot_dimension_numbers<[1], [0], [0], [1], [0, 0, 1, 1], [], []>} : vector<64x128xbf16>, vector<128x128xbf16>, vector<64x128xf32> -> vector<64x128xf32>
    %c0_88 = arith.constant 0 : index
    %c0_89 = arith.constant 0 : index
    %499 = vector.load %arg7[%c0_88, %c0_89] : memref<1x128xf32, #tpu.memory_space<vmem>>, vector<1x128xf32>
    %500 = vector.broadcast %499 : vector<1x128xf32> to vector<64x128xf32>
    %501 = arith.addf %498, %500 : vector<64x128xf32>
    %cst_90 = arith.constant dense<0xFF800000> : vector<64xf32>
    %502 = vector.multi_reduction <maximumf>, %501, %cst_90 [1] : vector<64x128xf32> to vector<64xf32>
    %503 = vector.shape_cast %502 : vector<64xf32> to vector<64x1xf32>
    %504 = vector.broadcast %503 : vector<64x1xf32> to vector<64x128xf32>
    %505 = arith.subf %501, %504 : vector<64x128xf32>
    %506 = math.exp %505 : vector<64x128xf32>
    %cst_91 = arith.constant dense<0.000000e+00> : vector<64xf32>
    %507 = vector.multi_reduction <add>, %506, %cst_91 [1] : vector<64x128xf32> to vector<64xf32>
    %508 = vector.shape_cast %507 : vector<64xf32> to vector<64x1xf32>
    %509 = math.log %508 : vector<64x1xf32>
    %510 = vector.broadcast %509 : vector<64x1xf32> to vector<64x128xf32>
    %511 = arith.subf %505, %510 : vector<64x128xf32>
    %c0_92 = arith.constant 0 : index
    %c0_93 = arith.constant 0 : index
    %512 = vector.load %arg8[%c0_92, %c0_93] : memref<64x128xf32, #tpu.memory_space<vmem>>, vector<64x128xf32>
    tpu.vector_store %arg8[%c0_92, %c0_93], %511 {strides = array<i32>} : memref<64x128xf32, #tpu.memory_space<vmem>>, vector<64x128xf32>,
    return
  }
}

</mosaic_0001>

<llo_original>
// kernel: lstm_net_forward.1
$region0: #{lstm_net_forward.1}
  #allocation0 [shape = 'u32[]', space=smem, size = 0x4, offset = 0x4, fixed_abs, tag = 'smem constant byte address 0x4 - core index']
  #allocation1 [shape = 'u32[144,128]{1,0:T(1,128)}', space=vmem, size = 0x12000, scoped, tag = 'internal scratch']
  #allocation2 [shape = 'f32[512,512]{1,0:T(8,128)}', space=vmem, size = 0x100000, scoped, tag = 'scratch operand']
  %s0 = inlined_call_operand.vmem [shape: s32[512,1], index: 0, kind: input, shape index: {}]
  %s1 = inlined_call_operand.vmem [shape: bf16[512,128], index: 1, kind: input, shape index: {}]
  %s2 = inlined_call_operand.vmem [shape: bf16[128,512], index: 2, kind: input, shape index: {}]
  %s3 = inlined_call_operand.vmem [shape: f32[1,512], index: 3, kind: input, shape index: {}]
  %s4 = inlined_call_operand.vmem [shape: bf16[256,1024], index: 4, kind: input, shape index: {}]
  %s5 = inlined_call_operand.vmem [shape: f32[1,512], index: 5, kind: input, shape index: {}]
  %s6 = inlined_call_operand.vmem [shape: bf16[128,128], index: 6, kind: input, shape index: {}]
  %s7 = inlined_call_operand.vmem [shape: f32[1,128], index: 7, kind: input, shape index: {}]
  %s8 = inlined_call_operand.vmem [shape: f32[64,128], index: 8, kind: output, shape index: {}]
  %s9 = sld [smem:[#allocation0]]
  $region42: #{lstm_net_forward.1} parent=0
    _
  %s11 = ssub.s32 1, %s9
  %s12 = scalar_select 0, %s11, %s9
  // Predicated region
  $region2: #{lstm_net_forward.1} parent=0 // pred_check
    _
  $region3: #{lstm_net_forward.1} parent=0 // pred_check_branch
    %14 = sbr.rel (0) target = $region5
  $region4: #{lstm_net_forward.1} parent=0 // pred_region
    _
  $region5: #{lstm_net_forward.1} parent=0 // pred_fallthru
    _
  // Predicated region
  $region6: #{lstm_net_forward.1} parent=0 // pred_check
    _
  $region7: #{lstm_net_forward.1} parent=0 // pred_check_branch
    %16 = sbr.rel (0) target = $region9
  $region8: #{lstm_net_forward.1} parent=0 // pred_region
    _
  $region9: #{lstm_net_forward.1} parent=0 // pred_fallthru
    _
  // Predicated region
  $region10: #{lstm_net_forward.1} parent=0 // pred_check
    _
  $region11: #{lstm_net_forward.1} parent=0 // pred_check_branch
    %18 = sbr.rel (0) target = $region13
  $region12: #{lstm_net_forward.1} parent=0 // pred_region
    _
  $region13: #{lstm_net_forward.1} parent=0 // pred_fallthru
    _
  // Predicated region
  $region14: #{lstm_net_forward.1} parent=0 // pred_check
    _
  $region15: #{lstm_net_forward.1} parent=0 // pred_check_branch
    %20 = sbr.rel (0) target = $region17
  $region16: #{lstm_net_forward.1} parent=0 // pred_region
    _
  $region17: #{lstm_net_forward.1} parent=0 // pred_fallthru
    _
  // Predicated region
  $region18: #{lstm_net_forward.1} parent=0 // pred_check
    _
  $region19: #{lstm_net_forward.1} parent=0 // pred_check_branch
    %22 = sbr.rel (0) target = $region21
  $region20: #{lstm_net_forward.1} parent=0 // pred_region
    _
  $region21: #{lstm_net_forward.1} parent=0 // pred_fallthru
    _
  // Predicated region
  $region22: #{lstm_net_forward.1} parent=0 // pred_check
    _
  $region23: #{lstm_net_forward.1} parent=0 // pred_check_branch
    %24 = sbr.rel (0) target = $region25
  $region24: #{lstm_net_forward.1} parent=0 // pred_region
    _
  $region25: #{lstm_net_forward.1} parent=0 // pred_fallthru
    _
  // Predicated region
  $region26: #{lstm_net_forward.1} parent=0 // pred_check
    _
  $region27: #{lstm_net_forward.1} parent=0 // pred_check_branch
    %26 = sbr.rel (0) target = $region29
  $region28: #{lstm_net_forward.1} parent=0 // pred_region
    _
  $region29: #{lstm_net_forward.1} parent=0 // pred_fallthru
    _
  // Predicated region
  $region30: #{lstm_net_forward.1} parent=0 // pred_check
    _
  $region31: #{lstm_net_forward.1} parent=0 // pred_check_branch
    %28 = sbr.rel (0) target = $region33
  $region32: #{lstm_net_forward.1} parent=0 // pred_region
    _
  $region33: #{lstm_net_forward.1} parent=0 // pred_fallthru
    _
  %v30 = vlaneseq
  %v31 = vand.u32 %v30, 127
  %v32 = vadd.s32 %v31, 128
  %v33 = vadd.s32 %v31, 256
  %v34 = vadd.s32 %v31, 384
  %v35 = vld [vmem:[%s0] sm:$0xff]
  %v36 = vld [vmem:[%s0 + $0x8] sm:$0xff]
  %v37 = vld [vmem:[%s0 + $0x10] sm:$0xff]
  %v38 = vld [vmem:[%s0 + $0x18] sm:$0xff]
  %v39 = vld [vmem:[%s0 + $0x20] sm:$0xff]
  %v40 = vld [vmem:[%s0 + $0x28] sm:$0xff]
  %v41 = vld [vmem:[%s0 + $0x30] sm:$0xff]
  %v42 = vld [vmem:[%s0 + $0x38] sm:$0xff]
  %v43 = vld [vmem:[%s0 + $0x40] sm:$0xff]
  %v44 = vld [vmem:[%s0 + $0x48] sm:$0xff]
  %v45 = vld [vmem:[%s0 + $0x50] sm:$0xff]
  %v46 = vld [vmem:[%s0 + $0x58] sm:$0xff]
  %v47 = vld [vmem:[%s0 + $0x60] sm:$0xff]
  %v48 = vld [vmem:[%s0 + $0x68] sm:$0xff]
  %v49 = vld [vmem:[%s0 + $0x70] sm:$0xff]
  %v50 = vld [vmem:[%s0 + $0x78] sm:$0xff]
  %v51 = vld [vmem:[%s0 + $0x80] sm:$0xff]
  %v52 = vld [vmem:[%s0 + $0x88] sm:$0xff]
  %v53 = vld [vmem:[%s0 + $0x90] sm:$0xff]
  %v54 = vld [vmem:[%s0 + $0x98] sm:$0xff]
  %v55 = vld [vmem:[%s0 + $0xa0] sm:$0xff]
  %v56 = vld [vmem:[%s0 + $0xa8] sm:$0xff]
  %v57 = vld [vmem:[%s0 + $0xb0] sm:$0xff]
  %v58 = vld [vmem:[%s0 + $0xb8] sm:$0xff]
  %v59 = vld [vmem:[%s0 + $0xc0] sm:$0xff]
  %v60 = vld [vmem:[%s0 + $0xc8] sm:$0xff]
  %v61 = vld [vmem:[%s0 + $0xd0] sm:$0xff]
  %v62 = vld [vmem:[%s0 + $0xd8] sm:$0xff]
  %v63 = vld [vmem:[%s0 + $0xe0] sm:$0xff]
  %v64 = vld [vmem:[%s0 + $0xe8] sm:$0xff]
  %v65 = vld [vmem:[%s0 + $0xf0] sm:$0xff]
  %v66 = vld [vmem:[%s0 + $0xf8] sm:$0xff]
  %v67 = vld [vmem:[%s0 + $0x100] sm:$0xff]
  %v68 = vld [vmem:[%s0 + $0x108] sm:$0xff]
  %v69 = vld [vmem:[%s0 + $0x110] sm:$0xff]
  %v70 = vld [vmem:[%s0 + $0x118] sm:$0xff]
  %v71 = vld [vmem:[%s0 + $0x120] sm:$0xff]
  %v72 = vld [vmem:[%s0 + $0x128] sm:$0xff]
  %v73 = vld [vmem:[%s0 + $0x130] sm:$0xff]
  %v74 = vld [vmem:[%s0 + $0x138] sm:$0xff]
  %v75 = vld [vmem:[%s0 + $0x140] sm:$0xff]
  %v76 = vld [vmem:[%s0 + $0x148] sm:$0xff]
  %v77 = vld [vmem:[%s0 + $0x150] sm:$0xff]
  %v78 = vld [vmem:[%s0 + $0x158] sm:$0xff]
  %v79 = vld [vmem:[%s0 + $0x160] sm:$0xff]
  %v80 = vld [vmem:[%s0 + $0x168] sm:$0xff]
  %v81 = vld [vmem:[%s0 + $0x170] sm:$0xff]
  %v82 = vld [vmem:[%s0 + $0x178] sm:$0xff]
  %v83 = vld [vmem:[%s0 + $0x180] sm:$0xff]
  %v84 = vld [vmem:[%s0 + $0x188] sm:$0xff]
  %v85 = vld [vmem:[%s0 + $0x190] sm:$0xff]
  %v86 = vld [vmem:[%s0 + $0x198] sm:$0xff]
  %v87 = vld [vmem:[%s0 + $0x1a0] sm:$0xff]
  %v88 = vld [vmem:[%s0 + $0x1a8] sm:$0xff]
  %v89 = vld [vmem:[%s0 + $0x1b0] sm:$0xff]
  %v90 = vld [vmem:[%s0 + $0x1b8] sm:$0xff]
  %v91 = vld [vmem:[%s0 + $0x1c0] sm:$0xff]
  %v92 = vld [vmem:[%s0 + $0x1c8] sm:$0xff]
  %v93 = vld [vmem:[%s0 + $0x1d0] sm:$0xff]
  %v94 = vld [vmem:[%s0 + $0x1d8] sm:$0xff]
  %v95 = vld [vmem:[%s0 + $0x1e0] sm:$0xff]
  %v96 = vld [vmem:[%s0 + $0x1e8] sm:$0xff]
  %v97 = vld [vmem:[%s0 + $0x1f0] sm:$0xff]
  %v98 = vld [vmem:[%s0 + $0x1f8] sm:$0xff]
  %99 = vset.pattern.permute.xlu0 0
  %100 = vperm.xlu0 %99, %v35
  %v101 = vpop.permute.xlu0 %100
  %102 = vset.pattern.permute.xlu0 0
  %103 = vperm.xlu0 %102, %v36
  %v104 = vpop.permute.xlu0 %103
  %105 = vset.pattern.permute.xlu0 0
  %106 = vperm.xlu0 %105, %v37
  %v107 = vpop.permute.xlu0 %106
  %108 = vset.pattern.permute.xlu0 0
  %109 = vperm.xlu0 %108, %v38
  %v110 = vpop.permute.xlu0 %109
  %111 = vset.pattern.permute.xlu0 0
  %112 = vperm.xlu0 %111, %v39
  %v113 = vpop.permute.xlu0 %112
  %114 = vset.pattern.permute.xlu0 0
  %115 = vperm.xlu0 %114, %v40
  %v116 = vpop.permute.xlu0 %115
  %117 = vset.pattern.permute.xlu0 0
  %118 = vperm.xlu0 %117, %v41
  %v119 = vpop.permute.xlu0 %118
  %120 = vset.pattern.permute.xlu0 0
  %121 = vperm.xlu0 %120, %v42
  %v122 = vpop.permute.xlu0 %121
  %123 = vset.pattern.permute.xlu0 0
  %124 = vperm.xlu0 %123, %v43
  %v125 = vpop.permute.xlu0 %124
  %126 = vset.pattern.permute.xlu0 0
  %127 = vperm.xlu0 %126, %v44
  %v128 = vpop.permute.xlu0 %127
  %129 = vset.pattern.permute.xlu0 0
  %130 = vperm.xlu0 %129, %v45
  %v131 = vpop.permute.xlu0 %130
  %132 = vset.pattern.permute.xlu0 0
  %133 = vperm.xlu0 %132, %v46
  %v134 = vpop.permute.xlu0 %133
  %135 = vset.pattern.permute.xlu0 0
  %136 = vperm.xlu0 %135, %v47
  %v137 = vpop.permute.xlu0 %136
  %138 = vset.pattern.permute.xlu0 0
  %139 = vperm.xlu0 %138, %v48
  %v140 = vpop.permute.xlu0 %139
  %141 = vset.pattern.permute.xlu0 0
  %142 = vperm.xlu0 %141, %v49
  %v143 = vpop.permute.xlu0 %142
  %144 = vset.pattern.permute.xlu0 0
  %145 = vperm.xlu0 %144, %v50
  %v146 = vpop.permute.xlu0 %145
  %147 = vset.pattern.permute.xlu0 0
  %148 = vperm.xlu0 %147, %v51
  %v149 = vpop.permute.xlu0 %148
  %150 = vset.pattern.permute.xlu0 0
  %151 = vperm.xlu0 %150, %v52
  %v152 = vpop.permute.xlu0 %151
  %153 = vset.pattern.permute.xlu0 0
  %154 = vperm.xlu0 %153, %v53
  %v155 = vpop.permute.xlu0 %154
  %156 = vset.pattern.permute.xlu0 0
  %157 = vperm.xlu0 %156, %v54
  %v158 = vpop.permute.xlu0 %157
  %159 = vset.pattern.permute.xlu0 0
  %160 = vperm.xlu0 %159, %v55
  %v161 = vpop.permute.xlu0 %160
  %162 = vset.pattern.permute.xlu0 0
  %163 = vperm.xlu0 %162, %v56
  %v164 = vpop.permute.xlu0 %163
  %165 = vset.pattern.permute.xlu0 0
  %166 = vperm.xlu0 %165, %v57
  %v167 = vpop.permute.xlu0 %166
  %168 = vset.pattern.permute.xlu0 0
  %169 = vperm.xlu0 %168, %v58
  %v170 = vpop.permute.xlu0 %169
  %171 = vset.pattern.permute.xlu0 0
  %172 = vperm.xlu0 %171, %v59
  %v173 = vpop.permute.xlu0 %172
  %174 = vset.pattern.permute.xlu0 0
  %175 = vperm.xlu0 %174, %v60
  %v176 = vpop.permute.xlu0 %175
  %177 = vset.pattern.permute.xlu0 0
  %178 = vperm.xlu0 %177, %v61
  %v179 = vpop.permute.xlu0 %178
  %180 = vset.pattern.permute.xlu0 0
  %181 = vperm.xlu0 %180, %v62
  %v182 = vpop.permute.xlu0 %181
  %183 = vset.pattern.permute.xlu0 0
  %184 = vperm.xlu0 %183, %v63
  %v185 = vpop.permute.xlu0 %184
  %186 = vset.pattern.permute.xlu0 0
  %187 = vperm.xlu0 %186, %v64
  %v188 = vpop.permute.xlu0 %187
  %189 = vset.pattern.permute.xlu0 0
  %190 = vperm.xlu0 %189, %v65
  %v191 = vpop.permute.xlu0 %190
  %192 = vset.pattern.permute.xlu0 0
  %193 = vperm.xlu0 %192, %v66
  %v194 = vpop.permute.xlu0 %193
  %195 = vset.pattern.permute.xlu0 0
  %196 = vperm.xlu0 %195, %v67
  %v197 = vpop.permute.xlu0 %196
  %198 = vset.pattern.permute.xlu0 0
  %199 = vperm.xlu0 %198, %v68
  %v200 = vpop.permute.xlu0 %199
  %201 = vset.pattern.permute.xlu0 0
  %202 = vperm.xlu0 %201, %v69
  %v203 = vpop.permute.xlu0 %202
  %204 = vset.pattern.permute.xlu0 0
  %205 = vperm.xlu0 %204, %v70
  %v206 = vpop.permute.xlu0 %205
  %207 = vset.pattern.permute.xlu0 0
  %208 = vperm.xlu0 %207, %v71
  %v209 = vpop.permute.xlu0 %208
  %210 = vset.pattern.permute.xlu0 0
  %211 = vperm.xlu0 %210, %v72
  %v212 = vpop.permute.xlu0 %211
  %213 = vset.pattern.permute.xlu0 0
  %214 = vperm.xlu0 %213, %v73
  %v215 = vpop.permute.xlu0 %214
  %216 = vset.pattern.permute.xlu0 0
  %217 = vperm.xlu0 %216, %v74
  %v218 = vpop.permute.xlu0 %217
  %219 = vset.pattern.permute.xlu0 0
  %220 = vperm.xlu0 %219, %v75
  %v221 = vpop.permute.xlu0 %220
  %222 = vset.pattern.permute.xlu0 0
  %223 = vperm.xlu0 %222, %v76
  %v224 = vpop.permute.xlu0 %223
  %225 = vset.pattern.permute.xlu0 0
  %226 = vperm.xlu0 %225, %v77
  %v227 = vpop.permute.xlu0 %226
  %228 = vset.pattern.permute.xlu0 0
  %229 = vperm.xlu0 %228, %v78
  %v230 = vpop.permute.xlu0 %229
  %231 = vset.pattern.permute.xlu0 0
  %232 = vperm.xlu0 %231, %v79
  %v233 = vpop.permute.xlu0 %232
  %234 = vset.pattern.permute.xlu0 0
  %235 = vperm.xlu0 %234, %v80
  %v236 = vpop.permute.xlu0 %235
  %237 = vset.pattern.permute.xlu0 0
  %238 = vperm.xlu0 %237, %v81
  %v239 = vpop.permute.xlu0 %238
  %240 = vset.pattern.permute.xlu0 0
  %241 = vperm.xlu0 %240, %v82
  %v242 = vpop.permute.xlu0 %241
  %243 = vset.pattern.permute.xlu0 0
  %244 = vperm.xlu0 %243, %v83
  %v245 = vpop.permute.xlu0 %244
  %246 = vset.pattern.permute.xlu0 0
  %247 = vperm.xlu0 %246, %v84
  %v248 = vpop.permute.xlu0 %247
  %249 = vset.pattern.permute.xlu0 0
  %250 = vperm.xlu0 %249, %v85
  %v251 = vpop.permute.xlu0 %250
  %252 = vset.pattern.permute.xlu0 0
  %253 = vperm.xlu0 %252, %v86
  %v254 = vpop.permute.xlu0 %253
  %255 = vset.pattern.permute.xlu0 0
  %256 = vperm.xlu0 %255, %v87
  %v257 = vpop.permute.xlu0 %256
  %258 = vset.pattern.permute.xlu0 0
  %259 = vperm.xlu0 %258, %v88
  %v260 = vpop.permute.xlu0 %259
  %261 = vset.pattern.permute.xlu0 0
  %262 = vperm.xlu0 %261, %v89
  %v263 = vpop.permute.xlu0 %262
  %264 = vset.pattern.permute.xlu0 0
  %265 = vperm.xlu0 %264, %v90
  %v266 = vpop.permute.xlu0 %265
  %267 = vset.pattern.permute.xlu0 0
  %268 = vperm.xlu0 %267, %v91
  %v269 = vpop.permute.xlu0 %268
  %270 = vset.pattern.permute.xlu0 0
  %271 = vperm.xlu0 %270, %v92
  %v272 = vpop.permute.xlu0 %271
  %273 = vset.pattern.permute.xlu0 0
  %274 = vperm.xlu0 %273, %v93
  %v275 = vpop.permute.xlu0 %274
  %276 = vset.pattern.permute.xlu0 0
  %277 = vperm.xlu0 %276, %v94
  %v278 = vpop.permute.xlu0 %277
  %279 = vset.pattern.permute.xlu0 0
  %280 = vperm.xlu0 %279, %v95
  %v281 = vpop.permute.xlu0 %280
  %282 = vset.pattern.permute.xlu0 0
  %283 = vperm.xlu0 %282, %v96
  %v284 = vpop.permute.xlu0 %283
  %285 = vset.pattern.permute.xlu0 0
  %286 = vperm.xlu0 %285, %v97
  %v287 = vpop.permute.xlu0 %286
  %288 = vset.pattern.permute.xlu0 0
  %289 = vperm.xlu0 %288, %v98
  %v290 = vpop.permute.xlu0 %289
  %vm291 = vcmp.eq.s32.totalorder %v31, %v101
  %vm292 = vcmp.eq.s32.totalorder %v32, %v101
  %vm293 = vcmp.eq.s32.totalorder %v33, %v101
  %vm294 = vcmp.eq.s32.totalorder %v34, %v101
  %vm295 = vcmp.eq.s32.totalorder %v31, %v104
  %vm296 = vcmp.eq.s32.totalorder %v32, %v104
  %vm297 = vcmp.eq.s32.totalorder %v33, %v104
  %vm298 = vcmp.eq.s32.totalorder %v34, %v104
  %vm299 = vcmp.eq.s32.totalorder %v31, %v107
  %vm300 = vcmp.eq.s32.totalorder %v32, %v107
  %vm301 = vcmp.eq.s32.totalorder %v33, %v107
  %vm302 = vcmp.eq.s32.totalorder %v34, %v107
  %vm303 = vcmp.eq.s32.totalorder %v31, %v110
  %vm304 = vcmp.eq.s32.totalorder %v32, %v110
  %vm305 = vcmp.eq.s32.totalorder %v33, %v110
  %vm306 = vcmp.eq.s32.totalorder %v34, %v110
  %vm307 = vcmp.eq.s32.totalorder %v31, %v113
  %vm308 = vcmp.eq.s32.totalorder %v32, %v113
  %vm309 = vcmp.eq.s32.totalorder %v33, %v113
  %vm310 = vcmp.eq.s32.totalorder %v34, %v113
  %vm311 = vcmp.eq.s32.totalorder %v31, %v116
  %vm312 = vcmp.eq.s32.totalorder %v32, %v116
  %vm313 = vcmp.eq.s32.totalorder %v33, %v116
  %vm314 = vcmp.eq.s32.totalorder %v34, %v116
  %vm315 = vcmp.eq.s32.totalorder %v31, %v119
  %vm316 = vcmp.eq.s32.totalorder %v32, %v119
  %vm317 = vcmp.eq.s32.totalorder %v33, %v119
  %vm318 = vcmp.eq.s32.totalorder %v34, %v119
  %vm319 = vcmp.eq.s32.totalorder %v31, %v122
  %vm320 = vcmp.eq.s32.totalorder %v32, %v122
  %vm321 = vcmp.eq.s32.totalorder %v33, %v122
  %vm322 = vcmp.eq.s32.totalorder %v34, %v122
  %vm323 = vcmp.eq.s32.totalorder %v31, %v125
  %vm324 = vcmp.eq.s32.totalorder %v32, %v125
  %vm325 = vcmp.eq.s32.totalorder %v33, %v125
  %vm326 = vcmp.eq.s32.totalorder %v34, %v125
  %vm327 = vcmp.eq.s32.totalorder %v31, %v128
  %vm328 = vcmp.eq.s32.totalorder %v32, %v128
  %vm329 = vcmp.eq.s32.totalorder %v33, %v128
  %vm330 = vcmp.eq.s32.totalorder %v34, %v128
  %vm331 = vcmp.eq.s32.totalorder %v31, %v131
  %vm332 = vcmp.eq.s32.totalorder %v32, %v131
  %vm333 = vcmp.eq.s32.totalorder %v33, %v131
  %vm334 = vcmp.eq.s32.totalorder %v34, %v131
  %vm335 = vcmp.eq.s32.totalorder %v31, %v134
  %vm336 = vcmp.eq.s32.totalorder %v32, %v134
  %vm337 = vcmp.eq.s32.totalorder %v33, %v134
  %vm338 = vcmp.eq.s32.totalorder %v34, %v134
  %vm339 = vcmp.eq.s32.totalorder %v31, %v137
  %vm340 = vcmp.eq.s32.totalorder %v32, %v137
  %vm341 = vcmp.eq.s32.totalorder %v33, %v137
  %vm342 = vcmp.eq.s32.totalorder %v34, %v137
  %vm343 = vcmp.eq.s32.totalorder %v31, %v140
  %vm344 = vcmp.eq.s32.totalorder %v32, %v140
  %vm345 = vcmp.eq.s32.totalorder %v33, %v140
  %vm346 = vcmp.eq.s32.totalorder %v34, %v140
  %vm347 = vcmp.eq.s32.totalorder %v31, %v143
  %vm348 = vcmp.eq.s32.totalorder %v32, %v143
  %vm349 = vcmp.eq.s32.totalorder %v33, %v143
  %vm350 = vcmp.eq.s32.totalorder %v34, %v143
  %vm351 = vcmp.eq.s32.totalorder %v31, %v146
  %vm352 = vcmp.eq.s32.totalorder %v32, %v146
  %vm353 = vcmp.eq.s32.totalorder %v33, %v146
  %vm354 = vcmp.eq.s32.totalorder %v34, %v146
  %vm355 = vcmp.eq.s32.totalorder %v31, %v149
  %vm356 = vcmp.eq.s32.totalorder %v32, %v149
  %vm357 = vcmp.eq.s32.totalorder %v33, %v149
  %vm358 = vcmp.eq.s32.totalorder %v34, %v149
  %vm359 = vcmp.eq.s32.totalorder %v31, %v152
  %vm360 = vcmp.eq.s32.totalorder %v32, %v152
  %vm361 = vcmp.eq.s32.totalorder %v33, %v152
  %vm362 = vcmp.eq.s32.totalorder %v34, %v152
  %vm363 = vcmp.eq.s32.totalorder %v31, %v155
  %vm364 = vcmp.eq.s32.totalorder %v32, %v155
  %vm365 = vcmp.eq.s32.totalorder %v33, %v155
  %vm366 = vcmp.eq.s32.totalorder %v34, %v155
  %vm367 = vcmp.eq.s32.totalorder %v31, %v158
  %vm368 = vcmp.eq.s32.totalorder %v32, %v158
  %vm369 = vcmp.eq.s32.totalorder %v33, %v158
  %vm370 = vcmp.eq.s32.totalorder %v34, %v158
  %vm371 = vcmp.eq.s32.totalorder %v31, %v161
  %vm372 = vcmp.eq.s32.totalorder %v32, %v161
  %vm373 = vcmp.eq.s32.totalorder %v33, %v161
  %vm374 = vcmp.eq.s32.totalorder %v34, %v161
  %vm375 = vcmp.eq.s32.totalorder %v31, %v164
  %vm376 = vcmp.eq.s32.totalorder %v32, %v164
  %vm377 = vcmp.eq.s32.totalorder %v33, %v164
  %vm378 = vcmp.eq.s32.totalorder %v34, %v164
  %vm379 = vcmp.eq.s32.totalorder %v31, %v167
  %vm380 = vcmp.eq.s32.totalorder %v32, %v167
  %vm381 = vcmp.eq.s32.totalorder %v33, %v167
  %vm382 = vcmp.eq.s32.totalorder %v34, %v167
  %vm383 = vcmp.eq.s32.totalorder %v31, %v170
  %vm384 = vcmp.eq.s32.totalorder %v32, %v170
  %vm385 = vcmp.eq.s32.totalorder %v33, %v170
  %vm386 = vcmp.eq.s32.totalorder %v34, %v170
  %vm387 = vcmp.eq.s32.totalorder %v31, %v173
  %vm388 = vcmp.eq.s32.totalorder %v32, %v173
  %vm389 = vcmp.eq.s32.totalorder %v33, %v173
  %vm390 = vcmp.eq.s32.totalorder %v34, %v173
  %vm391 = vcmp.eq.s32.totalorder %v31, %v176
  %vm392 = vcmp.eq.s32.totalorder %v32, %v176
  %vm393 = vcmp.eq.s32.totalorder %v33, %v176
  %vm394 = vcmp.eq.s32.totalorder %v34, %v176
  %vm395 = vcmp.eq.s32.totalorder %v31, %v179
  %vm396 = vcmp.eq.s32.totalorder %v32, %v179
  %vm397 = vcmp.eq.s32.totalorder %v33, %v179
  %vm398 = vcmp.eq.s32.totalorder %v34, %v179
  %vm399 = vcmp.eq.s32.totalorder %v31, %v182
  %vm400 = vcmp.eq.s32.totalorder %v32, %v182
  %vm401 = vcmp.eq.s32.totalorder %v33, %v182
  %vm402 = vcmp.eq.s32.totalorder %v34, %v182
  %vm403 = vcmp.eq.s32.totalorder %v31, %v185
  %vm404 = vcmp.eq.s32.totalorder %v32, %v185
  %vm405 = vcmp.eq.s32.totalorder %v33, %v185
  %vm406 = vcmp.eq.s32.totalorder %v34, %v185
  %vm407 = vcmp.eq.s32.totalorder %v31, %v188
  %vm408 = vcmp.eq.s32.totalorder %v32, %v188
  %vm409 = vcmp.eq.s32.totalorder %v33, %v188
  %vm410 = vcmp.eq.s32.totalorder %v34, %v188
  %vm411 = vcmp.eq.s32.totalorder %v31, %v191
  %vm412 = vcmp.eq.s32.totalorder %v32, %v191
  %vm413 = vcmp.eq.s32.totalorder %v33, %v191
  %vm414 = vcmp.eq.s32.totalorder %v34, %v191
  %vm415 = vcmp.eq.s32.totalorder %v31, %v194
  %vm416 = vcmp.eq.s32.totalorder %v32, %v194
  %vm417 = vcmp.eq.s32.totalorder %v33, %v194
  %vm418 = vcmp.eq.s32.totalorder %v34, %v194
  %vm419 = vcmp.eq.s32.totalorder %v31, %v197
  %vm420 = vcmp.eq.s32.totalorder %v32, %v197
  %vm421 = vcmp.eq.s32.totalorder %v33, %v197
  %vm422 = vcmp.eq.s32.totalorder %v34, %v197
  %vm423 = vcmp.eq.s32.totalorder %v31, %v200
  %vm424 = vcmp.eq.s32.totalorder %v32, %v200
  %vm425 = vcmp.eq.s32.totalorder %v33, %v200
  %vm426 = vcmp.eq.s32.totalorder %v34, %v200
  %vm427 = vcmp.eq.s32.totalorder %v31, %v203
  %vm428 = vcmp.eq.s32.totalorder %v32, %v203
  %vm429 = vcmp.eq.s32.totalorder %v33, %v203
  %vm430 = vcmp.eq.s32.totalorder %v34, %v203
  %vm431 = vcmp.eq.s32.totalorder %v31, %v206
  %vm432 = vcmp.eq.s32.totalorder %v32, %v206
  %vm433 = vcmp.eq.s32.totalorder %v33, %v206
  %vm434 = vcmp.eq.s32.totalorder %v34, %v206
  %vm435 = vcmp.eq.s32.totalorder %v31, %v209
  %vm436 = vcmp.eq.s32.totalorder %v32, %v209
  %vm437 = vcmp.eq.s32.totalorder %v33, %v209
  %vm438 = vcmp.eq.s32.totalorder %v34, %v209
  %vm439 = vcmp.eq.s32.totalorder %v31, %v212
  %vm440 = vcmp.eq.s32.totalorder %v32, %v212
  %vm441 = vcmp.eq.s32.totalorder %v33, %v212
  %vm442 = vcmp.eq.s32.totalorder %v34, %v212
  %vm443 = vcmp.eq.s32.totalorder %v31, %v215
  %vm444 = vcmp.eq.s32.totalorder %v32, %v215
  %vm445 = vcmp.eq.s32.totalorder %v33, %v215
  %vm446 = vcmp.eq.s32.totalorder %v34, %v215
  %vm447 = vcmp.eq.s32.totalorder %v31, %v218
  %vm448 = vcmp.eq.s32.totalorder %v32, %v218
  %vm449 = vcmp.eq.s32.totalorder %v33, %v218
  %vm450 = vcmp.eq.s32.totalorder %v34, %v218
  %vm451 = vcmp.eq.s32.totalorder %v31, %v221
  %vm452 = vcmp.eq.s32.totalorder %v32, %v221
  %vm453 = vcmp.eq.s32.totalorder %v33, %v221
  %vm454 = vcmp.eq.s32.totalorder %v34, %v221
  %vm455 = vcmp.eq.s32.totalorder %v31, %v224
  %vm456 = vcmp.eq.s32.totalorder %v32, %v224
  %vm457 = vcmp.eq.s32.totalorder %v33, %v224
  %vm458 = vcmp.eq.s32.totalorder %v34, %v224
  %vm459 = vcmp.eq.s32.totalorder %v31, %v227
  %vm460 = vcmp.eq.s32.totalorder %v32, %v227
  %vm461 = vcmp.eq.s32.totalorder %v33, %v227
  %vm462 = vcmp.eq.s32.totalorder %v34, %v227
  %vm463 = vcmp.eq.s32.totalorder %v31, %v230
  %vm464 = vcmp.eq.s32.totalorder %v32, %v230
  %vm465 = vcmp.eq.s32.totalorder %v33, %v230
  %vm466 = vcmp.eq.s32.totalorder %v34, %v230
  %vm467 = vcmp.eq.s32.totalorder %v31, %v233
  %vm468 = vcmp.eq.s32.totalorder %v32, %v233
  %vm469 = vcmp.eq.s32.totalorder %v33, %v233
  %vm470 = vcmp.eq.s32.totalorder %v34, %v233
  %vm471 = vcmp.eq.s32.totalorder %v31, %v236
  %vm472 = vcmp.eq.s32.totalorder %v32, %v236
  %vm473 = vcmp.eq.s32.totalorder %v33, %v236
  %vm474 = vcmp.eq.s32.totalorder %v34, %v236
  %vm475 = vcmp.eq.s32.totalorder %v31, %v239
  %vm476 = vcmp.eq.s32.totalorder %v32, %v239
  %vm477 = vcmp.eq.s32.totalorder %v33, %v239
  %vm478 = vcmp.eq.s32.totalorder %v34, %v239
  %vm479 = vcmp.eq.s32.totalorder %v31, %v242
  %vm480 = vcmp.eq.s32.totalorder %v32, %v242
  %vm481 = vcmp.eq.s32.totalorder %v33, %v242
  %vm482 = vcmp.eq.s32.totalorder %v34, %v242
  %vm483 = vcmp.eq.s32.totalorder %v31, %v245
  %vm484 = vcmp.eq.s32.totalorder %v32, %v245
  %vm485 = vcmp.eq.s32.totalorder %v33, %v245
  %vm486 = vcmp.eq.s32.totalorder %v34, %v245
  %vm487 = vcmp.eq.s32.totalorder %v31, %v248
  %vm488 = vcmp.eq.s32.totalorder %v32, %v248
  %vm489 = vcmp.eq.s32.totalorder %v33, %v248
  %vm490 = vcmp.eq.s32.totalorder %v34, %v248
  %vm491 = vcmp.eq.s32.totalorder %v31, %v251
  %vm492 = vcmp.eq.s32.totalorder %v32, %v251
  %vm493 = vcmp.eq.s32.totalorder %v33, %v251
  %vm494 = vcmp.eq.s32.totalorder %v34, %v251
  %vm495 = vcmp.eq.s32.totalorder %v31, %v254
  %vm496 = vcmp.eq.s32.totalorder %v32, %v254
  %vm497 = vcmp.eq.s32.totalorder %v33, %v254
  %vm498 = vcmp.eq.s32.totalorder %v34, %v254
  %vm499 = vcmp.eq.s32.totalorder %v31, %v257
  %vm500 = vcmp.eq.s32.totalorder %v32, %v257
  %vm501 = vcmp.eq.s32.totalorder %v33, %v257
  %vm502 = vcmp.eq.s32.totalorder %v34, %v257
  %vm503 = vcmp.eq.s32.totalorder %v31, %v260
  %vm504 = vcmp.eq.s32.totalorder %v32, %v260
  %vm505 = vcmp.eq.s32.totalorder %v33, %v260
  %vm506 = vcmp.eq.s32.totalorder %v34, %v260
  %vm507 = vcmp.eq.s32.totalorder %v31, %v263
  %vm508 = vcmp.eq.s32.totalorder %v32, %v263
  %vm509 = vcmp.eq.s32.totalorder %v33, %v263
  %vm510 = vcmp.eq.s32.totalorder %v34, %v263
  %vm511 = vcmp.eq.s32.totalorder %v31, %v266
  %vm512 = vcmp.eq.s32.totalorder %v32, %v266
  %vm513 = vcmp.eq.s32.totalorder %v33, %v266
  %vm514 = vcmp.eq.s32.totalorder %v34, %v266
  %vm515 = vcmp.eq.s32.totalorder %v31, %v269
  %vm516 = vcmp.eq.s32.totalorder %v32, %v269
  %vm517 = vcmp.eq.s32.totalorder %v33, %v269
  %vm518 = vcmp.eq.s32.totalorder %v34, %v269
  %vm519 = vcmp.eq.s32.totalorder %v31, %v272
  %vm520 = vcmp.eq.s32.totalorder %v32, %v272
  %vm521 = vcmp.eq.s32.totalorder %v33, %v272
  %vm522 = vcmp.eq.s32.totalorder %v34, %v272
  %vm523 = vcmp.eq.s32.totalorder %v31, %v275
  %vm524 = vcmp.eq.s32.totalorder %v32, %v275
  %vm525 = vcmp.eq.s32.totalorder %v33, %v275
  %vm526 = vcmp.eq.s32.totalorder %v34, %v275
  %vm527 = vcmp.eq.s32.totalorder %v31, %v278
  %vm528 = vcmp.eq.s32.totalorder %v32, %v278
  %vm529 = vcmp.eq.s32.totalorder %v33, %v278
  %vm530 = vcmp.eq.s32.totalorder %v34, %v278
  %vm531 = vcmp.eq.s32.totalorder %v31, %v281
  %vm532 = vcmp.eq.s32.totalorder %v32, %v281
  %vm533 = vcmp.eq.s32.totalorder %v33, %v281
  %vm534 = vcmp.eq.s32.totalorder %v34, %v281
  %vm535 = vcmp.eq.s32.totalorder %v31, %v284
  %vm536 = vcmp.eq.s32.totalorder %v32, %v284
  %vm537 = vcmp.eq.s32.totalorder %v33, %v284
  %vm538 = vcmp.eq.s32.totalorder %v34, %v284
  %vm539 = vcmp.eq.s32.totalorder %v31, %v287
  %vm540 = vcmp.eq.s32.totalorder %v32, %v287
  %vm541 = vcmp.eq.s32.totalorder %v33, %v287
  %vm542 = vcmp.eq.s32.totalorder %v34, %v287
  %vm543 = vcmp.eq.s32.totalorder %v31, %v290
  %vm544 = vcmp.eq.s32.totalorder %v32, %v290
  %vm545 = vcmp.eq.s32.totalorder %v33, %v290
  %vm546 = vcmp.eq.s32.totalorder %v34, %v290
  %v547 = vsel %vm291, 1.0, 0.0
  %v548 = vsel %vm292, 1.0, 0.0
  %v549 = vsel %vm293, 1.0, 0.0
  %v550 = vsel %vm294, 1.0, 0.0
  %v551 = vsel %vm295, 1.0, 0.0
  %v552 = vsel %vm296, 1.0, 0.0
  %v553 = vsel %vm297, 1.0, 0.0
  %v554 = vsel %vm298, 1.0, 0.0
  %v555 = vsel %vm299, 1.0, 0.0
  %v556 = vsel %vm300, 1.0, 0.0
  %v557 = vsel %vm301, 1.0, 0.0
  %v558 = vsel %vm302, 1.0, 0.0
  %v559 = vsel %vm303, 1.0, 0.0
  %v560 = vsel %vm304, 1.0, 0.0
  %v561 = vsel %vm305, 1.0, 0.0
  %v562 = vsel %vm306, 1.0, 0.0
  %v563 = vsel %vm307, 1.0, 0.0
  %v564 = vsel %vm308, 1.0, 0.0
  %v565 = vsel %vm309, 1.0, 0.0
  %v566 = vsel %vm310, 1.0, 0.0
  %v567 = vsel %vm311, 1.0, 0.0
  %v568 = vsel %vm312, 1.0, 0.0
  %v569 = vsel %vm313, 1.0, 0.0
  %v570 = vsel %vm314, 1.0, 0.0
  %v571 = vsel %vm315, 1.0, 0.0
  %v572 = vsel %vm316, 1.0, 0.0
  %v573 = vsel %vm317, 1.0, 0.0
  %v574 = vsel %vm318, 1.0, 0.0
  %v575 = vsel %vm319, 1.0, 0.0
  %v576 = vsel %vm320, 1.0, 0.0
  %v577 = vsel %vm321, 1.0, 0.0
  %v578 = vsel %vm322, 1.0, 0.0
  %v579 = vsel %vm323, 1.0, 0.0
  %v580 = vsel %vm324, 1.0, 0.0
  %v581 = vsel %vm325, 1.0, 0.0
  %v582 = vsel %vm326, 1.0, 0.0
  %v583 = vsel %vm327, 1.0, 0.0
  %v584 = vsel %vm328, 1.0, 0.0
  %v585 = vsel %vm329, 1.0, 0.0
  %v586 = vsel %vm330, 1.0, 0.0
  %v587 = vsel %vm331, 1.0, 0.0
  %v588 = vsel %vm332, 1.0, 0.0
  %v589 = vsel %vm333, 1.0, 0.0
  %v590 = vsel %vm334, 1.0, 0.0
  %v591 = vsel %vm335, 1.0, 0.0
  %v592 = vsel %vm336, 1.0, 0.0
  %v593 = vsel %vm337, 1.0, 0.0
  %v594 = vsel %vm338, 1.0, 0.0
  %v595 = vsel %vm339, 1.0, 0.0
  %v596 = vsel %vm340, 1.0, 0.0
  %v597 = vsel %vm341, 1.0, 0.0
  %v598 = vsel %vm342, 1.0, 0.0
  %v599 = vsel %vm343, 1.0, 0.0
  %v600 = vsel %vm344, 1.0, 0.0
  %v601 = vsel %vm345, 1.0, 0.0
  %v602 = vsel %vm346, 1.0, 0.0
  %v603 = vsel %vm347, 1.0, 0.0
  %v604 = vsel %vm348, 1.0, 0.0
  %v605 = vsel %vm349, 1.0, 0.0
  %v606 = vsel %vm350, 1.0, 0.0
  %v607 = vsel %vm351, 1.0, 0.0
  %v608 = vsel %vm352, 1.0, 0.0
  %v609 = vsel %vm353, 1.0, 0.0
  %v610 = vsel %vm354, 1.0, 0.0
  %v611 = vsel %vm355, 1.0, 0.0
  %v612 = vsel %vm356, 1.0, 0.0
  %v613 = vsel %vm357, 1.0, 0.0
  %v614 = vsel %vm358, 1.0, 0.0
  %v615 = vsel %vm359, 1.0, 0.0
  %v616 = vsel %vm360, 1.0, 0.0
  %v617 = vsel %vm361, 1.0, 0.0
  %v618 = vsel %vm362, 1.0, 0.0
  %v619 = vsel %vm363, 1.0, 0.0
  %v620 = vsel %vm364, 1.0, 0.0
  %v621 = vsel %vm365, 1.0, 0.0
  %v622 = vsel %vm366, 1.0, 0.0
  %v623 = vsel %vm367, 1.0, 0.0
  %v624 = vsel %vm368, 1.0, 0.0
  %v625 = vsel %vm369, 1.0, 0.0
  %v626 = vsel %vm370, 1.0, 0.0
  %v627 = vsel %vm371, 1.0, 0.0
  %v628 = vsel %vm372, 1.0, 0.0
  %v629 = vsel %vm373, 1.0, 0.0
  %v630 = vsel %vm374, 1.0, 0.0
  %v631 = vsel %vm375, 1.0, 0.0
  %v632 = vsel %vm376, 1.0, 0.0
  %v633 = vsel %vm377, 1.0, 0.0
  %v634 = vsel %vm378, 1.0, 0.0
  %v635 = vsel %vm379, 1.0, 0.0
  %v636 = vsel %vm380, 1.0, 0.0
  %v637 = vsel %vm381, 1.0, 0.0
  %v638 = vsel %vm382, 1.0, 0.0
  %v639 = vsel %vm383, 1.0, 0.0
  %v640 = vsel %vm384, 1.0, 0.0
  %v641 = vsel %vm385, 1.0, 0.0
  %v642 = vsel %vm386, 1.0, 0.0
  %v643 = vsel %vm387, 1.0, 0.0
  %v644 = vsel %vm388, 1.0, 0.0
  %v645 = vsel %vm389, 1.0, 0.0
  %v646 = vsel %vm390, 1.0, 0.0
  %v647 = vsel %vm391, 1.0, 0.0
  %v648 = vsel %vm392, 1.0, 0.0
  %v649 = vsel %vm393, 1.0, 0.0
  %v650 = vsel %vm394, 1.0, 0.0
  %v651 = vsel %vm395, 1.0, 0.0
  %v652 = vsel %vm396, 1.0, 0.0
  %v653 = vsel %vm397, 1.0, 0.0
  %v654 = vsel %vm398, 1.0, 0.0
  %v655 = vsel %vm399, 1.0, 0.0
  %v656 = vsel %vm400, 1.0, 0.0
  %v657 = vsel %vm401, 1.0, 0.0
  %v658 = vsel %vm402, 1.0, 0.0
  %v659 = vsel %vm403, 1.0, 0.0
  %v660 = vsel %vm404, 1.0, 0.0
  %v661 = vsel %vm405, 1.0, 0.0
  %v662 = vsel %vm406, 1.0, 0.0
  %v663 = vsel %vm407, 1.0, 0.0
  %v664 = vsel %vm408, 1.0, 0.0
  %v665 = vsel %vm409, 1.0, 0.0
  %v666 = vsel %vm410, 1.0, 0.0
  %v667 = vsel %vm411, 1.0, 0.0
  %v668 = vsel %vm412, 1.0, 0.0
  %v669 = vsel %vm413, 1.0, 0.0
  %v670 = vsel %vm414, 1.0, 0.0
  %v671 = vsel %vm415, 1.0, 0.0
  %v672 = vsel %vm416, 1.0, 0.0
  %v673 = vsel %vm417, 1.0, 0.0
  %v674 = vsel %vm418, 1.0, 0.0
  %v675 = vsel %vm419, 1.0, 0.0
  %v676 = vsel %vm420, 1.0, 0.0
  %v677 = vsel %vm421, 1.0, 0.0
  %v678 = vsel %vm422, 1.0, 0.0
  %v679 = vsel %vm423, 1.0, 0.0
  %v680 = vsel %vm424, 1.0, 0.0
  %v681 = vsel %vm425, 1.0, 0.0
  %v682 = vsel %vm426, 1.0, 0.0
  %v683 = vsel %vm427, 1.0, 0.0
  %v684 = vsel %vm428, 1.0, 0.0
  %v685 = vsel %vm429, 1.0, 0.0
  %v686 = vsel %vm430, 1.0, 0.0
  %v687 = vsel %vm431, 1.0, 0.0
  %v688 = vsel %vm432, 1.0, 0.0
  %v689 = vsel %vm433, 1.0, 0.0
  %v690 = vsel %vm434, 1.0, 0.0
  %v691 = vsel %vm435, 1.0, 0.0
  %v692 = vsel %vm436, 1.0, 0.0
  %v693 = vsel %vm437, 1.0, 0.0
  %v694 = vsel %vm438, 1.0, 0.0
  %v695 = vsel %vm439, 1.0, 0.0
  %v696 = vsel %vm440, 1.0, 0.0
  %v697 = vsel %vm441, 1.0, 0.0
  %v698 = vsel %vm442, 1.0, 0.0
  %v699 = vsel %vm443, 1.0, 0.0
  %v700 = vsel %vm444, 1.0, 0.0
  %v701 = vsel %vm445, 1.0, 0.0
  %v702 = vsel %vm446, 1.0, 0.0
  %v703 = vsel %vm447, 1.0, 0.0
  %v704 = vsel %vm448, 1.0, 0.0
  %v705 = vsel %vm449, 1.0, 0.0
  %v706 = vsel %vm450, 1.0, 0.0
  %v707 = vsel %vm451, 1.0, 0.0
  %v708 = vsel %vm452, 1.0, 0.0
  %v709 = vsel %vm453, 1.0, 0.0
  %v710 = vsel %vm454, 1.0, 0.0
  %v711 = vsel %vm455, 1.0, 0.0
  %v712 = vsel %vm456, 1.0, 0.0
  %v713 = vsel %vm457, 1.0, 0.0
  %v714 = vsel %vm458, 1.0, 0.0
  %v715 = vsel %vm459, 1.0, 0.0
  %v716 = vsel %vm460, 1.0, 0.0
  %v717 = vsel %vm461, 1.0, 0.0
  %v718 = vsel %vm462, 1.0, 0.0
  %v719 = vsel %vm463, 1.0, 0.0
  %v720 = vsel %vm464, 1.0, 0.0
  %v721 = vsel %vm465, 1.0, 0.0
  %v722 = vsel %vm466, 1.0, 0.0
  %v723 = vsel %vm467, 1.0, 0.0
  %v724 = vsel %vm468, 1.0, 0.0
  %v725 = vsel %vm469, 1.0, 0.0
  %v726 = vsel %vm470, 1.0, 0.0
  %v727 = vsel %vm471, 1.0, 0.0
  %v728 = vsel %vm472, 1.0, 0.0
  %v729 = vsel %vm473, 1.0, 0.0
  %v730 = vsel %vm474, 1.0, 0.0
  %v731 = vsel %vm475, 1.0, 0.0
  %v732 = vsel %vm476, 1.0, 0.0
  %v733 = vsel %vm477, 1.0, 0.0
  %v734 = vsel %vm478, 1.0, 0.0
  %v735 = vsel %vm479, 1.0, 0.0
  %v736 = vsel %vm480, 1.0, 0.0
  %v737 = vsel %vm481, 1.0, 0.0
  %v738 = vsel %vm482, 1.0, 0.0
  %v739 = vsel %vm483, 1.0, 0.0
  %v740 = vsel %vm484, 1.0, 0.0
  %v741 = vsel %vm485, 1.0, 0.0
  %v742 = vsel %vm486, 1.0, 0.0
  %v743 = vsel %vm487, 1.0, 0.0
  %v744 = vsel %vm488, 1.0, 0.0
  %v745 = vsel %vm489, 1.0, 0.0
  %v746 = vsel %vm490, 1.0, 0.0
  %v747 = vsel %vm491, 1.0, 0.0
  %v748 = vsel %vm492, 1.0, 0.0
  %v749 = vsel %vm493, 1.0, 0.0
  %v750 = vsel %vm494, 1.0, 0.0
  %v751 = vsel %vm495, 1.0, 0.0
  %v752 = vsel %vm496, 1.0, 0.0
  %v753 = vsel %vm497, 1.0, 0.0
  %v754 = vsel %vm498, 1.0, 0.0
  %v755 = vsel %vm499, 1.0, 0.0
  %v756 = vsel %vm500, 1.0, 0.0
  %v757 = vsel %vm501, 1.0, 0.0
  %v758 = vsel %vm502, 1.0, 0.0
  %v759 = vsel %vm503, 1.0, 0.0
  %v760 = vsel %vm504, 1.0, 0.0
  %v761 = vsel %vm505, 1.0, 0.0
  %v762 = vsel %vm506, 1.0, 0.0
  %v763 = vsel %vm507, 1.0, 0.0
  %v764 = vsel %vm508, 1.0, 0.0
  %v765 = vsel %vm509, 1.0, 0.0
  %v766 = vsel %vm510, 1.0, 0.0
  %v767 = vsel %vm511, 1.0, 0.0
  %v768 = vsel %vm512, 1.0, 0.0
  %v769 = vsel %vm513, 1.0, 0.0
  %v770 = vsel %vm514, 1.0, 0.0
  %v771 = vsel %vm515, 1.0, 0.0
  %v772 = vsel %vm516, 1.0, 0.0
  %v773 = vsel %vm517, 1.0, 0.0
  %v774 = vsel %vm518, 1.0, 0.0
  %v775 = vsel %vm519, 1.0, 0.0
  %v776 = vsel %vm520, 1.0, 0.0
  %v777 = vsel %vm521, 1.0, 0.0
  %v778 = vsel %vm522, 1.0, 0.0
  %v779 = vsel %vm523, 1.0, 0.0
  %v780 = vsel %vm524, 1.0, 0.0
  %v781 = vsel %vm525, 1.0, 0.0
  %v782 = vsel %vm526, 1.0, 0.0
  %v783 = vsel %vm527, 1.0, 0.0
  %v784 = vsel %vm528, 1.0, 0.0
  %v785 = vsel %vm529, 1.0, 0.0
  %v786 = vsel %vm530, 1.0, 0.0
  %v787 = vsel %vm531, 1.0, 0.0
  %v788 = vsel %vm532, 1.0, 0.0
  %v789 = vsel %vm533, 1.0, 0.0
  %v790 = vsel %vm534, 1.0, 0.0
  %v791 = vsel %vm535, 1.0, 0.0
  %v792 = vsel %vm536, 1.0, 0.0
  %v793 = vsel %vm537, 1.0, 0.0
  %v794 = vsel %vm538, 1.0, 0.0
  %v795 = vsel %vm539, 1.0, 0.0
  %v796 = vsel %vm540, 1.0, 0.0
  %v797 = vsel %vm541, 1.0, 0.0
  %v798 = vsel %vm542, 1.0, 0.0
  %v799 = vsel %vm543, 1.0, 0.0
  %v800 = vsel %vm544, 1.0, 0.0
  %v801 = vsel %vm545, 1.0, 0.0
  %v802 = vsel %vm546, 1.0, 0.0
  %v803 = vpack.c.bf16 %v551, %v547
  %v804 = vpack.c.bf16 %v552, %v548
  %v805 = vpack.c.bf16 %v553, %v549
  %v806 = vpack.c.bf16 %v554, %v550
  %v807 = vpack.c.bf16 %v559, %v555
  %v808 = vpack.c.bf16 %v560, %v556
  %v809 = vpack.c.bf16 %v561, %v557
  %v810 = vpack.c.bf16 %v562, %v558
  %v811 = vpack.c.bf16 %v567, %v563
  %v812 = vpack.c.bf16 %v568, %v564
  %v813 = vpack.c.bf16 %v569, %v565
  %v814 = vpack.c.bf16 %v570, %v566
  %v815 = vpack.c.bf16 %v575, %v571
  %v816 = vpack.c.bf16 %v576, %v572
  %v817 = vpack.c.bf16 %v577, %v573
  %v818 = vpack.c.bf16 %v578, %v574
  %v819 = vpack.c.bf16 %v583, %v579
  %v820 = vpack.c.bf16 %v584, %v580
  %v821 = vpack.c.bf16 %v585, %v581
  %v822 = vpack.c.bf16 %v586, %v582
  %v823 = vpack.c.bf16 %v591, %v587
  %v824 = vpack.c.bf16 %v592, %v588
  %v825 = vpack.c.bf16 %v593, %v589
  %v826 = vpack.c.bf16 %v594, %v590
  %v827 = vpack.c.bf16 %v599, %v595
  %v828 = vpack.c.bf16 %v600, %v596
  %v829 = vpack.c.bf16 %v601, %v597
  %v830 = vpack.c.bf16 %v602, %v598
  %v831 = vpack.c.bf16 %v607, %v603
  %v832 = vpack.c.bf16 %v608, %v604
  %v833 = vpack.c.bf16 %v609, %v605
  %v834 = vpack.c.bf16 %v610, %v606
  %v835 = vpack.c.bf16 %v615, %v611
  %v836 = vpack.c.bf16 %v616, %v612
  %v837 = vpack.c.bf16 %v617, %v613
  %v838 = vpack.c.bf16 %v618, %v614
  %v839 = vpack.c.bf16 %v623, %v619
  %v840 = vpack.c.bf16 %v624, %v620
  %v841 = vpack.c.bf16 %v625, %v621
  %v842 = vpack.c.bf16 %v626, %v622
  %v843 = vpack.c.bf16 %v631, %v627
  %v844 = vpack.c.bf16 %v632, %v628
  %v845 = vpack.c.bf16 %v633, %v629
  %v846 = vpack.c.bf16 %v634, %v630
  %v847 = vpack.c.bf16 %v639, %v635
  %v848 = vpack.c.bf16 %v640, %v636
  %v849 = vpack.c.bf16 %v641, %v637
  %v850 = vpack.c.bf16 %v642, %v638
  %v851 = vpack.c.bf16 %v647, %v643
  %v852 = vpack.c.bf16 %v648, %v644
  %v853 = vpack.c.bf16 %v649, %v645
  %v854 = vpack.c.bf16 %v650, %v646
  %v855 = vpack.c.bf16 %v655, %v651
  %v856 = vpack.c.bf16 %v656, %v652
  %v857 = vpack.c.bf16 %v657, %v653
  %v858 = vpack.c.bf16 %v658, %v654
  %v859 = vpack.c.bf16 %v663, %v659
  %v860 = vpack.c.bf16 %v664, %v660
  %v861 = vpack.c.bf16 %v665, %v661
  %v862 = vpack.c.bf16 %v666, %v662
  %v863 = vpack.c.bf16 %v671, %v667
  %v864 = vpack.c.bf16 %v672, %v668
  %v865 = vpack.c.bf16 %v673, %v669
  %v866 = vpack.c.bf16 %v674, %v670
  %v867 = vpack.c.bf16 %v679, %v675
  %v868 = vpack.c.bf16 %v680, %v676
  %v869 = vpack.c.bf16 %v681, %v677
  %v870 = vpack.c.bf16 %v682, %v678
  %v871 = vpack.c.bf16 %v687, %v683
  %v872 = vpack.c.bf16 %v688, %v684
  %v873 = vpack.c.bf16 %v689, %v685
  %v874 = vpack.c.bf16 %v690, %v686
  %v875 = vpack.c.bf16 %v695, %v691
  %v876 = vpack.c.bf16 %v696, %v692
  %v877 = vpack.c.bf16 %v697, %v693
  %v878 = vpack.c.bf16 %v698, %v694
  %v879 = vpack.c.bf16 %v703, %v699
  %v880 = vpack.c.bf16 %v704, %v700
  %v881 = vpack.c.bf16 %v705, %v701
  %v882 = vpack.c.bf16 %v706, %v702
  %v883 = vpack.c.bf16 %v711, %v707
  %v884 = vpack.c.bf16 %v712, %v708
  %v885 = vpack.c.bf16 %v713, %v709
  %v886 = vpack.c.bf16 %v714, %v710
  %v887 = vpack.c.bf16 %v719, %v715
  %v888 = vpack.c.bf16 %v720, %v716
  %v889 = vpack.c.bf16 %v721, %v717
  %v890 = vpack.c.bf16 %v722, %v718
  %v891 = vpack.c.bf16 %v727, %v723
  %v892 = vpack.c.bf16 %v728, %v724
  %v893 = vpack.c.bf16 %v729, %v725
  %v894 = vpack.c.bf16 %v730, %v726
  %v895 = vpack.c.bf16 %v735, %v731
  %v896 = vpack.c.bf16 %v736, %v732
  %v897 = vpack.c.bf16 %v737, %v733
  %v898 = vpack.c.bf16 %v738, %v734
  %v899 = vpack.c.bf16 %v743, %v739
  %v900 = vpack.c.bf16 %v744, %v740
  %v901 = vpack.c.bf16 %v745, %v741
  %v902 = vpack.c.bf16 %v746, %v742
  %v903 = vpack.c.bf16 %v751, %v747
  %v904 = vpack.c.bf16 %v752, %v748
  %v905 = vpack.c.bf16 %v753, %v749
  %v906 = vpack.c.bf16 %v754, %v750
  %v907 = vpack.c.bf16 %v759, %v755
  %v908 = vpack.c.bf16 %v760, %v756
  %v909 = vpack.c.bf16 %v761, %v757
  %v910 = vpack.c.bf16 %v762, %v758
  %v911 = vpack.c.bf16 %v767, %v763
  %v912 = vpack.c.bf16 %v768, %v764
  %v913 = vpack.c.bf16 %v769, %v765
  %v914 = vpack.c.bf16 %v770, %v766
  %v915 = vpack.c.bf16 %v775, %v771
  %v916 = vpack.c.bf16 %v776, %v772
  %v917 = vpack.c.bf16 %v777, %v773
  %v918 = vpack.c.bf16 %v778, %v774
  %v919 = vpack.c.bf16 %v783, %v779
  %v920 = vpack.c.bf16 %v784, %v780
  %v921 = vpack.c.bf16 %v785, %v781
  %v922 = vpack.c.bf16 %v786, %v782
  %v923 = vpack.c.bf16 %v791, %v787
  %v924 = vpack.c.bf16 %v792, %v788
  %v925 = vpack.c.bf16 %v793, %v789
  %v926 = vpack.c.bf16 %v794, %v790
  %v927 = vpack.c.bf16 %v799, %v795
  %v928 = vpack.c.bf16 %v800, %v796
  %v929 = vpack.c.bf16 %v801, %v797
  %v930 = vpack.c.bf16 %v802, %v798
  %v931 = vld [vmem:[%s1] sm:$0xf]
  %v932 = vld [vmem:[%s1 + $0x4] sm:$0xf]
  %v933 = vld [vmem:[%s1 + $0x8] sm:$0xf]
  %v934 = vld [vmem:[%s1 + $0xc] sm:$0xf]
  %v935 = vld [vmem:[%s1 + $0x10] sm:$0xf]
  %v936 = vld [vmem:[%s1 + $0x14] sm:$0xf]
  %v937 = vld [vmem:[%s1 + $0x18] sm:$0xf]
  %v938 = vld [vmem:[%s1 + $0x1c] sm:$0xf]
  %v939 = vld [vmem:[%s1 + $0x20] sm:$0xf]
  %v940 = vld [vmem:[%s1 + $0x24] sm:$0xf]
  %v941 = vld [vmem:[%s1 + $0x28] sm:$0xf]
  %v942 = vld [vmem:[%s1 + $0x2c] sm:$0xf]
  %v943 = vld [vmem:[%s1 + $0x30] sm:$0xf]
  %v944 = vld [vmem:[%s1 + $0x34] sm:$0xf]
  %v945 = vld [vmem:[%s1 + $0x38] sm:$0xf]
  %v946 = vld [vmem:[%s1 + $0x3c] sm:$0xf]
  %v947 = vld [vmem:[%s1 + $0x40] sm:$0xf]
  %v948 = vld [vmem:[%s1 + $0x44] sm:$0xf]
  %v949 = vld [vmem:[%s1 + $0x48] sm:$0xf]
  %v950 = vld [vmem:[%s1 + $0x4c] sm:$0xf]
  %v951 = vld [vmem:[%s1 + $0x50] sm:$0xf]
  %v952 = vld [vmem:[%s1 + $0x54] sm:$0xf]
  %v953 = vld [vmem:[%s1 + $0x58] sm:$0xf]
  %v954 = vld [vmem:[%s1 + $0x5c] sm:$0xf]
  %v955 = vld [vmem:[%s1 + $0x60] sm:$0xf]
  %v956 = vld [vmem:[%s1 + $0x64] sm:$0xf]
  %v957 = vld [vmem:[%s1 + $0x68] sm:$0xf]
  %v958 = vld [vmem:[%s1 + $0x6c] sm:$0xf]
  %v959 = vld [vmem:[%s1 + $0x70] sm:$0xf]
  %v960 = vld [vmem:[%s1 + $0x74] sm:$0xf]
  %v961 = vld [vmem:[%s1 + $0x78] sm:$0xf]
  %v962 = vld [vmem:[%s1 + $0x7c] sm:$0xf]
  %v963 = vld [vmem:[%s1 + $0x80] sm:$0xf]
  %v964 = vld [vmem:[%s1 + $0x84] sm:$0xf]
  %v965 = vld [vmem:[%s1 + $0x88] sm:$0xf]
  %v966 = vld [vmem:[%s1 + $0x8c] sm:$0xf]
  %v967 = vld [vmem:[%s1 + $0x90] sm:$0xf]
  %v968 = vld [vmem:[%s1 + $0x94] sm:$0xf]
  %v969 = vld [vmem:[%s1 + $0x98] sm:$0xf]
  %v970 = vld [vmem:[%s1 + $0x9c] sm:$0xf]
  %v971 = vld [vmem:[%s1 + $0xa0] sm:$0xf]
  %v972 = vld [vmem:[%s1 + $0xa4] sm:$0xf]
  %v973 = vld [vmem:[%s1 + $0xa8] sm:$0xf]
  %v974 = vld [vmem:[%s1 + $0xac] sm:$0xf]
  %v975 = vld [vmem:[%s1 + $0xb0] sm:$0xf]
  %v976 = vld [vmem:[%s1 + $0xb4] sm:$0xf]
  %v977 = vld [vmem:[%s1 + $0xb8] sm:$0xf]
  %v978 = vld [vmem:[%s1 + $0xbc] sm:$0xf]
  %v979 = vld [vmem:[%s1 + $0xc0] sm:$0xf]
  %v980 = vld [vmem:[%s1 + $0xc4] sm:$0xf]
  %v981 = vld [vmem:[%s1 + $0xc8] sm:$0xf]
  %v982 = vld [vmem:[%s1 + $0xcc] sm:$0xf]
  %v983 = vld [vmem:[%s1 + $0xd0] sm:$0xf]
  %v984 = vld [vmem:[%s1 + $0xd4] sm:$0xf]
  %v985 = vld [vmem:[%s1 + $0xd8] sm:$0xf]
  %v986 = vld [vmem:[%s1 + $0xdc] sm:$0xf]
  %v987 = vld [vmem:[%s1 + $0xe0] sm:$0xf]
  %v988 = vld [vmem:[%s1 + $0xe4] sm:$0xf]
  %v989 = vld [vmem:[%s1 + $0xe8] sm:$0xf]
  %v990 = vld [vmem:[%s1 + $0xec] sm:$0xf]
  %v991 = vld [vmem:[%s1 + $0xf0] sm:$0xf]
  %v992 = vld [vmem:[%s1 + $0xf4] sm:$0xf]
  %v993 = vld [vmem:[%s1 + $0xf8] sm:$0xf]
  %v994 = vld [vmem:[%s1 + $0xfc] sm:$0xf]
  %v1059 = vunpack.c.l.b16 %v931
  %v1060 = vunpack.c.l.b16 %v932
  %v1061 = vunpack.c.l.b16 %v933
  %v1062 = vunpack.c.l.b16 %v934
  %v1063 = vunpack.c.l.b16 %v935
  %v1064 = vunpack.c.l.b16 %v936
  %v1065 = vunpack.c.l.b16 %v937
  %v1066 = vunpack.c.l.b16 %v938
  %v1067 = vunpack.c.l.b16 %v939
  %v1068 = vunpack.c.l.b16 %v940
  %v1069 = vunpack.c.l.b16 %v941
  %v1070 = vunpack.c.l.b16 %v942
  %v1071 = vunpack.c.l.b16 %v943
  %v1072 = vunpack.c.l.b16 %v944
  %v1073 = vunpack.c.l.b16 %v945
  %v1074 = vunpack.c.l.b16 %v946
  %v1075 = vunpack.c.l.b16 %v947
  %v1076 = vunpack.c.l.b16 %v948
  %v1077 = vunpack.c.l.b16 %v949
  %v1078 = vunpack.c.l.b16 %v950
  %v1079 = vunpack.c.l.b16 %v951
  %v1080 = vunpack.c.l.b16 %v952
  %v1081 = vunpack.c.l.b16 %v953
  %v1082 = vunpack.c.l.b16 %v954
  %v1083 = vunpack.c.l.b16 %v955
  %v1084 = vunpack.c.l.b16 %v956
  %v1085 = vunpack.c.l.b16 %v957
  %v1086 = vunpack.c.l.b16 %v958
  %v1087 = vunpack.c.l.b16 %v959
  %v1088 = vunpack.c.l.b16 %v960
  %v1089 = vunpack.c.l.b16 %v961
  %v1090 = vunpack.c.l.b16 %v962
  %v1091 = vunpack.c.l.b16 %v963
  %v1092 = vunpack.c.l.b16 %v964
  %v1093 = vunpack.c.l.b16 %v965
  %v1094 = vunpack.c.l.b16 %v966
  %v1095 = vunpack.c.l.b16 %v967
  %v1096 = vunpack.c.l.b16 %v968
  %v1097 = vunpack.c.l.b16 %v969
  %v1098 = vunpack.c.l.b16 %v970
  %v1099 = vunpack.c.l.b16 %v971
  %v1100 = vunpack.c.l.b16 %v972
  %v1101 = vunpack.c.l.b16 %v973
  %v1102 = vunpack.c.l.b16 %v974
  %v1103 = vunpack.c.l.b16 %v975
  %v1104 = vunpack.c.l.b16 %v976
  %v1105 = vunpack.c.l.b16 %v977
  %v1106 = vunpack.c.l.b16 %v978
  %v1107 = vunpack.c.l.b16 %v979
  %v1108 = vunpack.c.l.b16 %v980
  %v1109 = vunpack.c.l.b16 %v981
  %v1110 = vunpack.c.l.b16 %v982
  %v1111 = vunpack.c.l.b16 %v983
  %v1112 = vunpack.c.l.b16 %v984
  %v1113 = vunpack.c.l.b16 %v985
  %v1114 = vunpack.c.l.b16 %v986
  %v1115 = vunpack.c.l.b16 %v987
  %v1116 = vunpack.c.l.b16 %v988
  %v1117 = vunpack.c.l.b16 %v989
  %v1118 = vunpack.c.l.b16 %v990
  %v1119 = vunpack.c.l.b16 %v991
  %v1120 = vunpack.c.l.b16 %v992
  %v1121 = vunpack.c.l.b16 %v993
  %v1122 = vunpack.c.l.b16 %v994
  %v1123 = vpack.c.b16 %v1060, %v1059
  %v1124 = vpack.c.b16 %v1062, %v1061
  %v1125 = vpack.c.b16 %v1064, %v1063
  %v1126 = vpack.c.b16 %v1066, %v1065
  %v1127 = vpack.c.b16 %v1068, %v1067
  %v1128 = vpack.c.b16 %v1070, %v1069
  %v1129 = vpack.c.b16 %v1072, %v1071
  %v1130 = vpack.c.b16 %v1074, %v1073
  %v1131 = vpack.c.b16 %v1076, %v1075
  %v1132 = vpack.c.b16 %v1078, %v1077
  %v1133 = vpack.c.b16 %v1080, %v1079
  %v1134 = vpack.c.b16 %v1082, %v1081
  %v1135 = vpack.c.b16 %v1084, %v1083
  %v1136 = vpack.c.b16 %v1086, %v1085
  %v1137 = vpack.c.b16 %v1088, %v1087
  %v1138 = vpack.c.b16 %v1090, %v1089
  %v1139 = vpack.c.b16 %v1092, %v1091
  %v1140 = vpack.c.b16 %v1094, %v1093
  %v1141 = vpack.c.b16 %v1096, %v1095
  %v1142 = vpack.c.b16 %v1098, %v1097
  %v1143 = vpack.c.b16 %v1100, %v1099
  %v1144 = vpack.c.b16 %v1102, %v1101
  %v1145 = vpack.c.b16 %v1104, %v1103
  %v1146 = vpack.c.b16 %v1106, %v1105
  %v1147 = vpack.c.b16 %v1108, %v1107
  %v1148 = vpack.c.b16 %v1110, %v1109
  %v1149 = vpack.c.b16 %v1112, %v1111
  %v1150 = vpack.c.b16 %v1114, %v1113
  %v1151 = vpack.c.b16 %v1116, %v1115
  %v1152 = vpack.c.b16 %v1118, %v1117
  %v1153 = vpack.c.b16 %v1120, %v1119
  %v1154 = vpack.c.b16 %v1122, %v1121
  %1187 = vmatprep.subr.bf16.mxu0 0
  %1188 = vmatpush1.bf16.msra.mxu0 %v1130
  %1189 = vmatprep.subr.bf16.mxu0 0
  %1190 = vmatpush1.bf16.msra.mxu0 %v1129
  %1191 = vmatprep.subr.bf16.mxu0 0
  %1192 = vmatpush1.bf16.msra.mxu0 %v1128
  %1193 = vmatprep.subr.bf16.mxu0 0
  %1194 = vmatpush1.bf16.msra.mxu0 %v1127
  %1195 = vmatprep.subr.bf16.mxu0 0
  %1196 = vmatpush1.bf16.msra.mxu0 %v1126
  %1197 = vmatprep.subr.bf16.mxu0 0
  %1198 = vmatpush1.bf16.msra.mxu0 %v1125
  %1199 = vmatprep.subr.bf16.mxu0 0
  %1200 = vmatpush1.bf16.msra.mxu0 %v1124
  %1201 = vmatprep.subr.bf16.mxu0 0
  %1202 = vmatpush1.bf16.msra.mxu0 %v1123
  %1203 = vmatprep.subr.bf16.mxu0 0
  %1204 = vmatpush2.bf16.msra.mxu0 %v1138
  %1205 = vmatprep.subr.bf16.mxu0 0
  %1206 = vmatpush2.bf16.msra.mxu0 %v1137
  %1207 = vmatprep.subr.bf16.mxu0 0
  %1208 = vmatpush2.bf16.msra.mxu0 %v1136
  %1209 = vmatprep.subr.bf16.mxu0 0
  %1210 = vmatpush2.bf16.msra.mxu0 %v1135
  %1211 = vmatprep.subr.bf16.mxu0 0
  %1212 = vmatpush2.bf16.msra.mxu0 %v1134
  %1213 = vmatprep.subr.bf16.mxu0 0
  %1214 = vmatpush2.bf16.msra.mxu0 %v1133
  %1215 = vmatprep.subr.bf16.mxu0 0
  %1216 = vmatpush2.bf16.msra.mxu0 %v1132
  %1217 = vmatprep.subr.bf16.mxu0 0
  %1218 = vmatpush2.bf16.msra.mxu0 %v1131
  %1219 = vmatprep.mubr.bf16.mxu0 %v804
  %1220 = vmatmul.mubr.bf16.gmra.mxu0 %v803
  %v1221 = vpop.f32.mrf.mxu0
  %v1222 = vadd.f32 0.0, %v1221
  %v1223 = vpop.f32.mrf.mxu0
  %v1224 = vpop.f32.mrf.mxu0
  %v1225 = vadd.f32 0.0, %v1224
  %v1226 = vpop.f32.mrf.mxu0
  %1227 = vmatprep.mubr.bf16.mxu0 %v808
  %1228 = vmatmul.mubr.bf16.gmra.mxu0 %v807
  %v1229 = vpop.f32.mrf.mxu0
  %v1230 = vadd.f32 0.0, %v1229
  %v1231 = vpop.f32.mrf.mxu0
  %v1232 = vpop.f32.mrf.mxu0
  %v1233 = vadd.f32 0.0, %v1232
  %v1234 = vpop.f32.mrf.mxu0
  %1235 = vmatprep.mubr.bf16.mxu0 %v812
  %1236 = vmatmul.mubr.bf16.gmra.mxu0 %v811
  %v1237 = vpop.f32.mrf.mxu0
  %v1238 = vadd.f32 0.0, %v1237
  %v1239 = vpop.f32.mrf.mxu0
  %v1240 = vpop.f32.mrf.mxu0
  %v1241 = vadd.f32 0.0, %v1240
  %v1242 = vpop.f32.mrf.mxu0
  %1243 = vmatprep.mubr.bf16.mxu0 %v816
  %1244 = vmatmul.mubr.bf16.gmra.mxu0 %v815
  %v1245 = vpop.f32.mrf.mxu0
  %v1246 = vadd.f32 0.0, %v1245
  %v1247 = vpop.f32.mrf.mxu0
  %v1248 = vpop.f32.mrf.mxu0
  %v1249 = vadd.f32 0.0, %v1248
  %v1250 = vpop.f32.mrf.mxu0
  %1251 = vmatprep.mubr.bf16.mxu0 %v820
  %1252 = vmatmul.mubr.bf16.gmra.mxu0 %v819
  %v1253 = vpop.f32.mrf.mxu0
  %v1254 = vadd.f32 0.0, %v1253
  %v1255 = vpop.f32.mrf.mxu0
  %v1256 = vpop.f32.mrf.mxu0
  %v1257 = vadd.f32 0.0, %v1256
  %v1258 = vpop.f32.mrf.mxu0
  %1259 = vmatprep.mubr.bf16.mxu0 %v824
  %1260 = vmatmul.mubr.bf16.gmra.mxu0 %v823
  %v1261 = vpop.f32.mrf.mxu0
  %v1262 = vadd.f32 0.0, %v1261
  %v1263 = vpop.f32.mrf.mxu0
  %v1264 = vpop.f32.mrf.mxu0
  %v1265 = vadd.f32 0.0, %v1264
  %v1266 = vpop.f32.mrf.mxu0
  %1267 = vmatprep.mubr.bf16.mxu0 %v828
  %1268 = vmatmul.mubr.bf16.gmra.mxu0 %v827
  %v1269 = vpop.f32.mrf.mxu0
  %v1270 = vadd.f32 0.0, %v1269
  %v1271 = vpop.f32.mrf.mxu0
  %v1272 = vpop.f32.mrf.mxu0
  %v1273 = vadd.f32 0.0, %v1272
  %v1274 = vpop.f32.mrf.mxu0
  %1275 = vmatprep.mubr.bf16.mxu0 %v832
  %1276 = vmatmul.mubr.bf16.gmra.mxu0 %v831
  %v1277 = vpop.f32.mrf.mxu0
  %v1278 = vadd.f32 0.0, %v1277
  %v1279 = vpop.f32.mrf.mxu0
  %v1280 = vpop.f32.mrf.mxu0
  %v1281 = vadd.f32 0.0, %v1280
  %v1282 = vpop.f32.mrf.mxu0
  %1283 = vmatprep.mubr.bf16.mxu0 %v836
  %1284 = vmatmul.mubr.bf16.gmra.mxu0 %v835
  %v1285 = vpop.f32.mrf.mxu0
  %v1286 = vadd.f32 0.0, %v1285
  %v1287 = vpop.f32.mrf.mxu0
  %v1288 = vpop.f32.mrf.mxu0
  %v1289 = vadd.f32 0.0, %v1288
  %v1290 = vpop.f32.mrf.mxu0
  %1291 = vmatprep.mubr.bf16.mxu0 %v840
  %1292 = vmatmul.mubr.bf16.gmra.mxu0 %v839
  %v1293 = vpop.f32.mrf.mxu0
  %v1294 = vadd.f32 0.0, %v1293
  %v1295 = vpop.f32.mrf.mxu0
  %v1296 = vpop.f32.mrf.mxu0
  %v1297 = vadd.f32 0.0, %v1296
  %v1298 = vpop.f32.mrf.mxu0
  %1299 = vmatprep.mubr.bf16.mxu0 %v844
  %1300 = vmatmul.mubr.bf16.gmra.mxu0 %v843
  %v1301 = vpop.f32.mrf.mxu0
  %v1302 = vadd.f32 0.0, %v1301
  %v1303 = vpop.f32.mrf.mxu0
  %v1304 = vpop.f32.mrf.mxu0
  %v1305 = vadd.f32 0.0, %v1304
  %v1306 = vpop.f32.mrf.mxu0
  %1307 = vmatprep.mubr.bf16.mxu0 %v848
  %1308 = vmatmul.mubr.bf16.gmra.mxu0 %v847
  %v1309 = vpop.f32.mrf.mxu0
  %v1310 = vadd.f32 0.0, %v1309
  %v1311 = vpop.f32.mrf.mxu0
  %v1312 = vpop.f32.mrf.mxu0
  %v1313 = vadd.f32 0.0, %v1312
  %v1314 = vpop.f32.mrf.mxu0
  %1315 = vmatprep.mubr.bf16.mxu0 %v852
  %1316 = vmatmul.mubr.bf16.gmra.mxu0 %v851
  %v1317 = vpop.f32.mrf.mxu0
  %v1318 = vadd.f32 0.0, %v1317
  %v1319 = vpop.f32.mrf.mxu0
  %v1320 = vpop.f32.mrf.mxu0
  %v1321 = vadd.f32 0.0, %v1320
  %v1322 = vpop.f32.mrf.mxu0
  %1323 = vmatprep.mubr.bf16.mxu0 %v856
  %1324 = vmatmul.mubr.bf16.gmra.mxu0 %v855
  %v1325 = vpop.f32.mrf.mxu0
  %v1326 = vadd.f32 0.0, %v1325
  %v1327 = vpop.f32.mrf.mxu0
  %v1328 = vpop.f32.mrf.mxu0
  %v1329 = vadd.f32 0.0, %v1328
  %v1330 = vpop.f32.mrf.mxu0
  %1331 = vmatprep.mubr.bf16.mxu0 %v860
  %1332 = vmatmul.mubr.bf16.gmra.mxu0 %v859
  %v1333 = vpop.f32.mrf.mxu0
  %v1334 = vadd.f32 0.0, %v1333
  %v1335 = vpop.f32.mrf.mxu0
  %v1336 = vpop.f32.mrf.mxu0
  %v1337 = vadd.f32 0.0, %v1336
  %v1338 = vpop.f32.mrf.mxu0
  %1339 = vmatprep.mubr.bf16.mxu0 %v864
  %1340 = vmatmul.mubr.bf16.gmra.mxu0 %v863
  %v1341 = vpop.f32.mrf.mxu0
  %v1342 = vadd.f32 0.0, %v1341
  %v1343 = vpop.f32.mrf.mxu0
  %v1344 = vpop.f32.mrf.mxu0
  %v1345 = vadd.f32 0.0, %v1344
  %v1346 = vpop.f32.mrf.mxu0
  %1347 = vmatprep.mubr.bf16.mxu0 %v868
  %1348 = vmatmul.mubr.bf16.gmra.mxu0 %v867
  %v1349 = vpop.f32.mrf.mxu0
  %v1350 = vadd.f32 0.0, %v1349
  %v1351 = vpop.f32.mrf.mxu0
  %v1352 = vpop.f32.mrf.mxu0
  %v1353 = vadd.f32 0.0, %v1352
  %v1354 = vpop.f32.mrf.mxu0
  %1355 = vmatprep.mubr.bf16.mxu0 %v872
  %1356 = vmatmul.mubr.bf16.gmra.mxu0 %v871
  %v1357 = vpop.f32.mrf.mxu0
  %v1358 = vadd.f32 0.0, %v1357
  %v1359 = vpop.f32.mrf.mxu0
  %v1360 = vpop.f32.mrf.mxu0
  %v1361 = vadd.f32 0.0, %v1360
  %v1362 = vpop.f32.mrf.mxu0
  %1363 = vmatprep.mubr.bf16.mxu0 %v876
  %1364 = vmatmul.mubr.bf16.gmra.mxu0 %v875
  %v1365 = vpop.f32.mrf.mxu0
  %v1366 = vadd.f32 0.0, %v1365
  %v1367 = vpop.f32.mrf.mxu0
  %v1368 = vpop.f32.mrf.mxu0
  %v1369 = vadd.f32 0.0, %v1368
  %v1370 = vpop.f32.mrf.mxu0
  %1371 = vmatprep.mubr.bf16.mxu0 %v880
  %1372 = vmatmul.mubr.bf16.gmra.mxu0 %v879
  %v1373 = vpop.f32.mrf.mxu0
  %v1374 = vadd.f32 0.0, %v1373
  %v1375 = vpop.f32.mrf.mxu0
  %v1376 = vpop.f32.mrf.mxu0
  %v1377 = vadd.f32 0.0, %v1376
  %v1378 = vpop.f32.mrf.mxu0
  %1379 = vmatprep.mubr.bf16.mxu0 %v884
  %1380 = vmatmul.mubr.bf16.gmra.mxu0 %v883
  %v1381 = vpop.f32.mrf.mxu0
  %v1382 = vadd.f32 0.0, %v1381
  %v1383 = vpop.f32.mrf.mxu0
  %v1384 = vpop.f32.mrf.mxu0
  %v1385 = vadd.f32 0.0, %v1384
  %v1386 = vpop.f32.mrf.mxu0
  %1387 = vmatprep.mubr.bf16.mxu0 %v888
  %1388 = vmatmul.mubr.bf16.gmra.mxu0 %v887
  %v1389 = vpop.f32.mrf.mxu0
  %v1390 = vadd.f32 0.0, %v1389
  %v1391 = vpop.f32.mrf.mxu0
  %v1392 = vpop.f32.mrf.mxu0
  %v1393 = vadd.f32 0.0, %v1392
  %v1394 = vpop.f32.mrf.mxu0
  %1395 = vmatprep.mubr.bf16.mxu0 %v892
  %1396 = vmatmul.mubr.bf16.gmra.mxu0 %v891
  %v1397 = vpop.f32.mrf.mxu0
  %v1398 = vadd.f32 0.0, %v1397
  %v1399 = vpop.f32.mrf.mxu0
  %v1400 = vpop.f32.mrf.mxu0
  %v1401 = vadd.f32 0.0, %v1400
  %v1402 = vpop.f32.mrf.mxu0
  %1403 = vmatprep.mubr.bf16.mxu0 %v896
  %1404 = vmatmul.mubr.bf16.gmra.mxu0 %v895
  %v1405 = vpop.f32.mrf.mxu0
  %v1406 = vadd.f32 0.0, %v1405
  %v1407 = vpop.f32.mrf.mxu0
  %v1408 = vpop.f32.mrf.mxu0
  %v1409 = vadd.f32 0.0, %v1408
  %v1410 = vpop.f32.mrf.mxu0
  %1411 = vmatprep.mubr.bf16.mxu0 %v900
  %1412 = vmatmul.mubr.bf16.gmra.mxu0 %v899
  %v1413 = vpop.f32.mrf.mxu0
  %v1414 = vadd.f32 0.0, %v1413
  %v1415 = vpop.f32.mrf.mxu0
  %v1416 = vpop.f32.mrf.mxu0
  %v1417 = vadd.f32 0.0, %v1416
  %v1418 = vpop.f32.mrf.mxu0
  %1419 = vmatprep.mubr.bf16.mxu0 %v904
  %1420 = vmatmul.mubr.bf16.gmra.mxu0 %v903
  %v1421 = vpop.f32.mrf.mxu0
  %v1422 = vadd.f32 0.0, %v1421
  %v1423 = vpop.f32.mrf.mxu0
  %v1424 = vpop.f32.mrf.mxu0
  %v1425 = vadd.f32 0.0, %v1424
  %v1426 = vpop.f32.mrf.mxu0
  %1427 = vmatprep.mubr.bf16.mxu0 %v908
  %1428 = vmatmul.mubr.bf16.gmra.mxu0 %v907
  %v1429 = vpop.f32.mrf.mxu0
  %v1430 = vadd.f32 0.0, %v1429
  %v1431 = vpop.f32.mrf.mxu0
  %v1432 = vpop.f32.mrf.mxu0
  %v1433 = vadd.f32 0.0, %v1432
  %v1434 = vpop.f32.mrf.mxu0
  %1435 = vmatprep.mubr.bf16.mxu0 %v912
  %1436 = vmatmul.mubr.bf16.gmra.mxu0 %v911
  %v1437 = vpop.f32.mrf.mxu0
  %v1438 = vadd.f32 0.0, %v1437
  %v1439 = vpop.f32.mrf.mxu0
  %v1440 = vpop.f32.mrf.mxu0
  %v1441 = vadd.f32 0.0, %v1440
  %v1442 = vpop.f32.mrf.mxu0
  %1443 = vmatprep.mubr.bf16.mxu0 %v916
  %1444 = vmatmul.mubr.bf16.gmra.mxu0 %v915
  %v1445 = vpop.f32.mrf.mxu0
  %v1446 = vadd.f32 0.0, %v1445
  %v1447 = vpop.f32.mrf.mxu0
  %v1448 = vpop.f32.mrf.mxu0
  %v1449 = vadd.f32 0.0, %v1448
  %v1450 = vpop.f32.mrf.mxu0
  %1451 = vmatprep.mubr.bf16.mxu0 %v920
  %1452 = vmatmul.mubr.bf16.gmra.mxu0 %v919
  %v1453 = vpop.f32.mrf.mxu0
  %v1454 = vadd.f32 0.0, %v1453
  %v1455 = vpop.f32.mrf.mxu0
  %v1456 = vpop.f32.mrf.mxu0
  %v1457 = vadd.f32 0.0, %v1456
  %v1458 = vpop.f32.mrf.mxu0
  %1459 = vmatprep.mubr.bf16.mxu0 %v924
  %1460 = vmatmul.mubr.bf16.gmra.mxu0 %v923
  %v1461 = vpop.f32.mrf.mxu0
  %v1462 = vadd.f32 0.0, %v1461
  %v1463 = vpop.f32.mrf.mxu0
  %v1464 = vpop.f32.mrf.mxu0
  %v1465 = vadd.f32 0.0, %v1464
  %v1466 = vpop.f32.mrf.mxu0
  %1467 = vmatprep.mubr.bf16.mxu0 %v928
  %1468 = vmatmul.mubr.bf16.gmra.mxu0 %v927
  %v1469 = vpop.f32.mrf.mxu0
  %v1470 = vadd.f32 0.0, %v1469
  %v1471 = vpop.f32.mrf.mxu0
  %v1472 = vpop.f32.mrf.mxu0
  %v1473 = vadd.f32 0.0, %v1472
  %v1474 = vpop.f32.mrf.mxu0
  %1475 = vdwg.mxu0
  %1476 = vmatprep.subr.bf16.mxu0 0
  %1477 = vmatpush1.bf16.msra.mxu0 %v1146
  %1478 = vmatprep.subr.bf16.mxu0 0
  %1479 = vmatpush1.bf16.msra.mxu0 %v1145
  %1480 = vmatprep.subr.bf16.mxu0 0
  %1481 = vmatpush1.bf16.msra.mxu0 %v1144
  %1482 = vmatprep.subr.bf16.mxu0 0
  %1483 = vmatpush1.bf16.msra.mxu0 %v1143
  %1484 = vmatprep.subr.bf16.mxu0 0
  %1485 = vmatpush1.bf16.msra.mxu0 %v1142
  %1486 = vmatprep.subr.bf16.mxu0 0
  %1487 = vmatpush1.bf16.msra.mxu0 %v1141
  %1488 = vmatprep.subr.bf16.mxu0 0
  %1489 = vmatpush1.bf16.msra.mxu0 %v1140
  %1490 = vmatprep.subr.bf16.mxu0 0
  %1491 = vmatpush1.bf16.msra.mxu0 %v1139
  %1492 = vmatprep.subr.bf16.mxu0 0
  %1493 = vmatpush2.bf16.msra.mxu0 %v1154
  %1494 = vmatprep.subr.bf16.mxu0 0
  %1495 = vmatpush2.bf16.msra.mxu0 %v1153
  %1496 = vmatprep.subr.bf16.mxu0 0
  %1497 = vmatpush2.bf16.msra.mxu0 %v1152
  %1498 = vmatprep.subr.bf16.mxu0 0
  %1499 = vmatpush2.bf16.msra.mxu0 %v1151
  %1500 = vmatprep.subr.bf16.mxu0 0
  %1501 = vmatpush2.bf16.msra.mxu0 %v1150
  %1502 = vmatprep.subr.bf16.mxu0 0
  %1503 = vmatpush2.bf16.msra.mxu0 %v1149
  %1504 = vmatprep.subr.bf16.mxu0 0
  %1505 = vmatpush2.bf16.msra.mxu0 %v1148
  %1506 = vmatprep.subr.bf16.mxu0 0
  %1507 = vmatpush2.bf16.msra.mxu0 %v1147
  %1508 = vmatprep.mubr.bf16.mxu0 %v806
  %1509 = vmatmul.mubr.bf16.gmra.mxu0 %v805
  %v1510 = vpop.f32.mrf.mxu0
  %v1511 = vadd.f32 %v1222, %v1510
  %v1512 = vpop.f32.mrf.mxu0
  %v1513 = vpop.f32.mrf.mxu0
  %v1514 = vadd.f32 %v1225, %v1513
  %v1515 = vpop.f32.mrf.mxu0
  %1516 = vmatprep.mubr.bf16.mxu0 %v810
  %1517 = vmatmul.mubr.bf16.gmra.mxu0 %v809
  %v1518 = vpop.f32.mrf.mxu0
  %v1519 = vadd.f32 %v1230, %v1518
  %v1520 = vpop.f32.mrf.mxu0
  %v1521 = vpop.f32.mrf.mxu0
  %v1522 = vadd.f32 %v1233, %v1521
  %v1523 = vpop.f32.mrf.mxu0
  %1524 = vmatprep.mubr.bf16.mxu0 %v814
  %1525 = vmatmul.mubr.bf16.gmra.mxu0 %v813
  %v1526 = vpop.f32.mrf.mxu0
  %v1527 = vadd.f32 %v1238, %v1526
  %v1528 = vpop.f32.mrf.mxu0
  %v1529 = vpop.f32.mrf.mxu0
  %v1530 = vadd.f32 %v1241, %v1529
  %v1531 = vpop.f32.mrf.mxu0
  %1532 = vmatprep.mubr.bf16.mxu0 %v818
  %1533 = vmatmul.mubr.bf16.gmra.mxu0 %v817
  %v1534 = vpop.f32.mrf.mxu0
  %v1535 = vadd.f32 %v1246, %v1534
  %v1536 = vpop.f32.mrf.mxu0
  %v1537 = vpop.f32.mrf.mxu0
  %v1538 = vadd.f32 %v1249, %v1537
  %v1539 = vpop.f32.mrf.mxu0
  %1540 = vmatprep.mubr.bf16.mxu0 %v822
  %1541 = vmatmul.mubr.bf16.gmra.mxu0 %v821
  %v1542 = vpop.f32.mrf.mxu0
  %v1543 = vadd.f32 %v1254, %v1542
  %v1544 = vpop.f32.mrf.mxu0
  %v1545 = vpop.f32.mrf.mxu0
  %v1546 = vadd.f32 %v1257, %v1545
  %v1547 = vpop.f32.mrf.mxu0
  %1548 = vmatprep.mubr.bf16.mxu0 %v826
  %1549 = vmatmul.mubr.bf16.gmra.mxu0 %v825
  %v1550 = vpop.f32.mrf.mxu0
  %v1551 = vadd.f32 %v1262, %v1550
  %v1552 = vpop.f32.mrf.mxu0
  %v1553 = vpop.f32.mrf.mxu0
  %v1554 = vadd.f32 %v1265, %v1553
  %v1555 = vpop.f32.mrf.mxu0
  %1556 = vmatprep.mubr.bf16.mxu0 %v830
  %1557 = vmatmul.mubr.bf16.gmra.mxu0 %v829
  %v1558 = vpop.f32.mrf.mxu0
  %v1559 = vadd.f32 %v1270, %v1558
  %v1560 = vpop.f32.mrf.mxu0
  %v1561 = vpop.f32.mrf.mxu0
  %v1562 = vadd.f32 %v1273, %v1561
  %v1563 = vpop.f32.mrf.mxu0
  %1564 = vmatprep.mubr.bf16.mxu0 %v834
  %1565 = vmatmul.mubr.bf16.gmra.mxu0 %v833
  %v1566 = vpop.f32.mrf.mxu0
  %v1567 = vadd.f32 %v1278, %v1566
  %v1568 = vpop.f32.mrf.mxu0
  %v1569 = vpop.f32.mrf.mxu0
  %v1570 = vadd.f32 %v1281, %v1569
  %v1571 = vpop.f32.mrf.mxu0
  %1572 = vmatprep.mubr.bf16.mxu0 %v838
  %1573 = vmatmul.mubr.bf16.gmra.mxu0 %v837
  %v1574 = vpop.f32.mrf.mxu0
  %v1575 = vadd.f32 %v1286, %v1574
  %v1576 = vpop.f32.mrf.mxu0
  %v1577 = vpop.f32.mrf.mxu0
  %v1578 = vadd.f32 %v1289, %v1577
  %v1579 = vpop.f32.mrf.mxu0
  %1580 = vmatprep.mubr.bf16.mxu0 %v842
  %1581 = vmatmul.mubr.bf16.gmra.mxu0 %v841
  %v1582 = vpop.f32.mrf.mxu0
  %v1583 = vadd.f32 %v1294, %v1582
  %v1584 = vpop.f32.mrf.mxu0
  %v1585 = vpop.f32.mrf.mxu0
  %v1586 = vadd.f32 %v1297, %v1585
  %v1587 = vpop.f32.mrf.mxu0
  %1588 = vmatprep.mubr.bf16.mxu0 %v846
  %1589 = vmatmul.mubr.bf16.gmra.mxu0 %v845
  %v1590 = vpop.f32.mrf.mxu0
  %v1591 = vadd.f32 %v1302, %v1590
  %v1592 = vpop.f32.mrf.mxu0
  %v1593 = vpop.f32.mrf.mxu0
  %v1594 = vadd.f32 %v1305, %v1593
  %v1595 = vpop.f32.mrf.mxu0
  %1596 = vmatprep.mubr.bf16.mxu0 %v850
  %1597 = vmatmul.mubr.bf16.gmra.mxu0 %v849
  %v1598 = vpop.f32.mrf.mxu0
  %v1599 = vadd.f32 %v1310, %v1598
  %v1600 = vpop.f32.mrf.mxu0
  %v1601 = vpop.f32.mrf.mxu0
  %v1602 = vadd.f32 %v1313, %v1601
  %v1603 = vpop.f32.mrf.mxu0
  %1604 = vmatprep.mubr.bf16.mxu0 %v854
  %1605 = vmatmul.mubr.bf16.gmra.mxu0 %v853
  %v1606 = vpop.f32.mrf.mxu0
  %v1607 = vadd.f32 %v1318, %v1606
  %v1608 = vpop.f32.mrf.mxu0
  %v1609 = vpop.f32.mrf.mxu0
  %v1610 = vadd.f32 %v1321, %v1609
  %v1611 = vpop.f32.mrf.mxu0
  %1612 = vmatprep.mubr.bf16.mxu0 %v858
  %1613 = vmatmul.mubr.bf16.gmra.mxu0 %v857
  %v1614 = vpop.f32.mrf.mxu0
  %v1615 = vadd.f32 %v1326, %v1614
  %v1616 = vpop.f32.mrf.mxu0
  %v1617 = vpop.f32.mrf.mxu0
  %v1618 = vadd.f32 %v1329, %v1617
  %v1619 = vpop.f32.mrf.mxu0
  %1620 = vmatprep.mubr.bf16.mxu0 %v862
  %1621 = vmatmul.mubr.bf16.gmra.mxu0 %v861
  %v1622 = vpop.f32.mrf.mxu0
  %v1623 = vadd.f32 %v1334, %v1622
  %v1624 = vpop.f32.mrf.mxu0
  %v1625 = vpop.f32.mrf.mxu0
  %v1626 = vadd.f32 %v1337, %v1625
  %v1627 = vpop.f32.mrf.mxu0
  %1628 = vmatprep.mubr.bf16.mxu0 %v866
  %1629 = vmatmul.mubr.bf16.gmra.mxu0 %v865
  %v1630 = vpop.f32.mrf.mxu0
  %v1631 = vadd.f32 %v1342, %v1630
  %v1632 = vpop.f32.mrf.mxu0
  %v1633 = vpop.f32.mrf.mxu0
  %v1634 = vadd.f32 %v1345, %v1633
  %v1635 = vpop.f32.mrf.mxu0
  %1636 = vmatprep.mubr.bf16.mxu0 %v870
  %1637 = vmatmul.mubr.bf16.gmra.mxu0 %v869
  %v1638 = vpop.f32.mrf.mxu0
  %v1639 = vadd.f32 %v1350, %v1638
  %v1640 = vpop.f32.mrf.mxu0
  %v1641 = vpop.f32.mrf.mxu0
  %v1642 = vadd.f32 %v1353, %v1641
  %v1643 = vpop.f32.mrf.mxu0
  %1644 = vmatprep.mubr.bf16.mxu0 %v874
  %1645 = vmatmul.mubr.bf16.gmra.mxu0 %v873
  %v1646 = vpop.f32.mrf.mxu0
  %v1647 = vadd.f32 %v1358, %v1646
  %v1648 = vpop.f32.mrf.mxu0
  %v1649 = vpop.f32.mrf.mxu0
  %v1650 = vadd.f32 %v1361, %v1649
  %v1651 = vpop.f32.mrf.mxu0
  %1652 = vmatprep.mubr.bf16.mxu0 %v878
  %1653 = vmatmul.mubr.bf16.gmra.mxu0 %v877
  %v1654 = vpop.f32.mrf.mxu0
  %v1655 = vadd.f32 %v1366, %v1654
  %v1656 = vpop.f32.mrf.mxu0
  %v1657 = vpop.f32.mrf.mxu0
  %v1658 = vadd.f32 %v1369, %v1657
  %v1659 = vpop.f32.mrf.mxu0
  %1660 = vmatprep.mubr.bf16.mxu0 %v882
  %1661 = vmatmul.mubr.bf16.gmra.mxu0 %v881
  %v1662 = vpop.f32.mrf.mxu0
  %v1663 = vadd.f32 %v1374, %v1662
  %v1664 = vpop.f32.mrf.mxu0
  %v1665 = vpop.f32.mrf.mxu0
  %v1666 = vadd.f32 %v1377, %v1665
  %v1667 = vpop.f32.mrf.mxu0
  %1668 = vmatprep.mubr.bf16.mxu0 %v886
  %1669 = vmatmul.mubr.bf16.gmra.mxu0 %v885
  %v1670 = vpop.f32.mrf.mxu0
  %v1671 = vadd.f32 %v1382, %v1670
  %v1672 = vpop.f32.mrf.mxu0
  %v1673 = vpop.f32.mrf.mxu0
  %v1674 = vadd.f32 %v1385, %v1673
  %v1675 = vpop.f32.mrf.mxu0
  %1676 = vmatprep.mubr.bf16.mxu0 %v890
  %1677 = vmatmul.mubr.bf16.gmra.mxu0 %v889
  %v1678 = vpop.f32.mrf.mxu0
  %v1679 = vadd.f32 %v1390, %v1678
  %v1680 = vpop.f32.mrf.mxu0
  %v1681 = vpop.f32.mrf.mxu0
  %v1682 = vadd.f32 %v1393, %v1681
  %v1683 = vpop.f32.mrf.mxu0
  %1684 = vmatprep.mubr.bf16.mxu0 %v894
  %1685 = vmatmul.mubr.bf16.gmra.mxu0 %v893
  %v1686 = vpop.f32.mrf.mxu0
  %v1687 = vadd.f32 %v1398, %v1686
  %v1688 = vpop.f32.mrf.mxu0
  %v1689 = vpop.f32.mrf.mxu0
  %v1690 = vadd.f32 %v1401, %v1689
  %v1691 = vpop.f32.mrf.mxu0
  %1692 = vmatprep.mubr.bf16.mxu0 %v898
  %1693 = vmatmul.mubr.bf16.gmra.mxu0 %v897
  %v1694 = vpop.f32.mrf.mxu0
  %v1695 = vadd.f32 %v1406, %v1694
  %v1696 = vpop.f32.mrf.mxu0
  %v1697 = vpop.f32.mrf.mxu0
  %v1698 = vadd.f32 %v1409, %v1697
  %v1699 = vpop.f32.mrf.mxu0
  %1700 = vmatprep.mubr.bf16.mxu0 %v902
  %1701 = vmatmul.mubr.bf16.gmra.mxu0 %v901
  %v1702 = vpop.f32.mrf.mxu0
  %v1703 = vadd.f32 %v1414, %v1702
  %v1704 = vpop.f32.mrf.mxu0
  %v1705 = vpop.f32.mrf.mxu0
  %v1706 = vadd.f32 %v1417, %v1705
  %v1707 = vpop.f32.mrf.mxu0
  %1708 = vmatprep.mubr.bf16.mxu0 %v906
  %1709 = vmatmul.mubr.bf16.gmra.mxu0 %v905
  %v1710 = vpop.f32.mrf.mxu0
  %v1711 = vadd.f32 %v1422, %v1710
  %v1712 = vpop.f32.mrf.mxu0
  %v1713 = vpop.f32.mrf.mxu0
  %v1714 = vadd.f32 %v1425, %v1713
  %v1715 = vpop.f32.mrf.mxu0
  %1716 = vmatprep.mubr.bf16.mxu0 %v910
  %1717 = vmatmul.mubr.bf16.gmra.mxu0 %v909
  %v1718 = vpop.f32.mrf.mxu0
  %v1719 = vadd.f32 %v1430, %v1718
  %v1720 = vpop.f32.mrf.mxu0
  %v1721 = vpop.f32.mrf.mxu0
  %v1722 = vadd.f32 %v1433, %v1721
  %v1723 = vpop.f32.mrf.mxu0
  %1724 = vmatprep.mubr.bf16.mxu0 %v914
  %1725 = vmatmul.mubr.bf16.gmra.mxu0 %v913
  %v1726 = vpop.f32.mrf.mxu0
  %v1727 = vadd.f32 %v1438, %v1726
  %v1728 = vpop.f32.mrf.mxu0
  %v1729 = vpop.f32.mrf.mxu0
  %v1730 = vadd.f32 %v1441, %v1729
  %v1731 = vpop.f32.mrf.mxu0
  %1732 = vmatprep.mubr.bf16.mxu0 %v918
  %1733 = vmatmul.mubr.bf16.gmra.mxu0 %v917
  %v1734 = vpop.f32.mrf.mxu0
  %v1735 = vadd.f32 %v1446, %v1734
  %v1736 = vpop.f32.mrf.mxu0
  %v1737 = vpop.f32.mrf.mxu0
  %v1738 = vadd.f32 %v1449, %v1737
  %v1739 = vpop.f32.mrf.mxu0
  %1740 = vmatprep.mubr.bf16.mxu0 %v922
  %1741 = vmatmul.mubr.bf16.gmra.mxu0 %v921
  %v1742 = vpop.f32.mrf.mxu0
  %v1743 = vadd.f32 %v1454, %v1742
  %v1744 = vpop.f32.mrf.mxu0
  %v1745 = vpop.f32.mrf.mxu0
  %v1746 = vadd.f32 %v1457, %v1745
  %v1747 = vpop.f32.mrf.mxu0
  %1748 = vmatprep.mubr.bf16.mxu0 %v926
  %1749 = vmatmul.mubr.bf16.gmra.mxu0 %v925
  %v1750 = vpop.f32.mrf.mxu0
  %v1751 = vadd.f32 %v1462, %v1750
  %v1752 = vpop.f32.mrf.mxu0
  %v1753 = vpop.f32.mrf.mxu0
  %v1754 = vadd.f32 %v1465, %v1753
  %v1755 = vpop.f32.mrf.mxu0
  %1756 = vmatprep.mubr.bf16.mxu0 %v930
  %1757 = vmatmul.mubr.bf16.gmra.mxu0 %v929
  %v1758 = vpop.f32.mrf.mxu0
  %v1759 = vadd.f32 %v1470, %v1758
  %v1760 = vpop.f32.mrf.mxu0
  %v1761 = vpop.f32.mrf.mxu0
  %v1762 = vadd.f32 %v1473, %v1761
  %v1763 = vpop.f32.mrf.mxu0
  %1764 = vdwg.mxu0
  %v1765 = vpack.c.bf16 %v1514, %v1511
  %v1766 = vpack.c.bf16 %v1522, %v1519
  %v1767 = vpack.c.bf16 %v1530, %v1527
  %v1768 = vpack.c.bf16 %v1538, %v1535
  %v1769 = vpack.c.bf16 %v1546, %v1543
  %v1770 = vpack.c.bf16 %v1554, %v1551
  %v1771 = vpack.c.bf16 %v1562, %v1559
  %v1772 = vpack.c.bf16 %v1570, %v1567
  %v1773 = vpack.c.bf16 %v1578, %v1575
  %v1774 = vpack.c.bf16 %v1586, %v1583
  %v1775 = vpack.c.bf16 %v1594, %v1591
  %v1776 = vpack.c.bf16 %v1602, %v1599
  %v1777 = vpack.c.bf16 %v1610, %v1607
  %v1778 = vpack.c.bf16 %v1618, %v1615
  %v1779 = vpack.c.bf16 %v1626, %v1623
  %v1780 = vpack.c.bf16 %v1634, %v1631
  %v1781 = vpack.c.bf16 %v1642, %v1639
  %v1782 = vpack.c.bf16 %v1650, %v1647
  %v1783 = vpack.c.bf16 %v1658, %v1655
  %v1784 = vpack.c.bf16 %v1666, %v1663
  %v1785 = vpack.c.bf16 %v1674, %v1671
  %v1786 = vpack.c.bf16 %v1682, %v1679
  %v1787 = vpack.c.bf16 %v1690, %v1687
  %v1788 = vpack.c.bf16 %v1698, %v1695
  %v1789 = vpack.c.bf16 %v1706, %v1703
  %v1790 = vpack.c.bf16 %v1714, %v1711
  %v1791 = vpack.c.bf16 %v1722, %v1719
  %v1792 = vpack.c.bf16 %v1730, %v1727
  %v1793 = vpack.c.bf16 %v1738, %v1735
  %v1794 = vpack.c.bf16 %v1746, %v1743
  %v1795 = vpack.c.bf16 %v1754, %v1751
  %v1796 = vpack.c.bf16 %v1762, %v1759
  %v1797 = vld [vmem:[%s2] sm:$0xff]
  %v1798 = vld [vmem:[%s2 + $0x8] sm:$0xff]
  %v1799 = vld [vmem:[%s2 + $0x10] sm:$0xff]
  %v1800 = vld [vmem:[%s2 + $0x18] sm:$0xff]
  %v1801 = vld [vmem:[%s2 + $0x20] sm:$0xff]
  %v1802 = vld [vmem:[%s2 + $0x28] sm:$0xff]
  %v1803 = vld [vmem:[%s2 + $0x30] sm:$0xff]
  %v1804 = vld [vmem:[%s2 + $0x38] sm:$0xff]
  %v1805 = vld [vmem:[%s2 + $0x40] sm:$0xff]
  %v1806 = vld [vmem:[%s2 + $0x48] sm:$0xff]
  %v1807 = vld [vmem:[%s2 + $0x50] sm:$0xff]
  %v1808 = vld [vmem:[%s2 + $0x58] sm:$0xff]
  %v1809 = vld [vmem:[%s2 + $0x60] sm:$0xff]
  %v1810 = vld [vmem:[%s2 + $0x68] sm:$0xff]
  %v1811 = vld [vmem:[%s2 + $0x70] sm:$0xff]
  %v1812 = vld [vmem:[%s2 + $0x78] sm:$0xff]
  %v1813 = vld [vmem:[%s2 + $0x80] sm:$0xff]
  %v1814 = vld [vmem:[%s2 + $0x88] sm:$0xff]
  %v1815 = vld [vmem:[%s2 + $0x90] sm:$0xff]
  %v1816 = vld [vmem:[%s2 + $0x98] sm:$0xff]
  %v1817 = vld [vmem:[%s2 + $0xa0] sm:$0xff]
  %v1818 = vld [vmem:[%s2 + $0xa8] sm:$0xff]
  %v1819 = vld [vmem:[%s2 + $0xb0] sm:$0xff]
  %v1820 = vld [vmem:[%s2 + $0xb8] sm:$0xff]
  %v1821 = vld [vmem:[%s2 + $0xc0] sm:$0xff]
  %v1822 = vld [vmem:[%s2 + $0xc8] sm:$0xff]
  %v1823 = vld [vmem:[%s2 + $0xd0] sm:$0xff]
  %v1824 = vld [vmem:[%s2 + $0xd8] sm:$0xff]
  %v1825 = vld [vmem:[%s2 + $0xe0] sm:$0xff]
  %v1826 = vld [vmem:[%s2 + $0xe8] sm:$0xff]
  %v1827 = vld [vmem:[%s2 + $0xf0] sm:$0xff]
  %v1828 = vld [vmem:[%s2 + $0xf8] sm:$0xff]
  %v1829 = vld [vmem:[%s3] sm:$0xf]
  %v1831 = vlaneseq
  %v1832 = vshrl.u32 %v1831, 7
  %v1833 = vsub.s32 0, %v1832
  %v1834 = vrot.slane %v1829, %v1833
  %v1835 = vlaneseq
  %v1836 = vshrl.u32 %v1835, 7
  %v1837 = vsub.s32 1, %v1836
  %v1838 = vrot.slane %v1829, %v1837
  %v1839 = vlaneseq
  %v1840 = vshrl.u32 %v1839, 7
  %v1841 = vsub.s32 2, %v1840
  %v1842 = vrot.slane %v1829, %v1841
  %v1843 = vlaneseq
  %v1844 = vshrl.u32 %v1843, 7
  %v1845 = vsub.s32 3, %v1844
  %v1846 = vrot.slane %v1829, %v1845
  %v1883 = vunpack.c.l.b16 %v1797
  %v1884 = vunpack.c.h.b16 %v1797
  %v1885 = vunpack.c.l.b16 %v1798
  %v1886 = vunpack.c.h.b16 %v1798
  %v1887 = vunpack.c.l.b16 %v1799
  %v1888 = vunpack.c.h.b16 %v1799
  %v1889 = vunpack.c.l.b16 %v1800
  %v1890 = vunpack.c.h.b16 %v1800
  %v1891 = vunpack.c.l.b16 %v1801
  %v1892 = vunpack.c.h.b16 %v1801
  %v1893 = vunpack.c.l.b16 %v1802
  %v1894 = vunpack.c.h.b16 %v1802
  %v1895 = vunpack.c.l.b16 %v1803
  %v1896 = vunpack.c.h.b16 %v1803
  %v1897 = vunpack.c.l.b16 %v1804
  %v1898 = vunpack.c.h.b16 %v1804
  %v1899 = vunpack.c.l.b16 %v1805
  %v1900 = vunpack.c.h.b16 %v1805
  %v1901 = vunpack.c.l.b16 %v1806
  %v1902 = vunpack.c.h.b16 %v1806
  %v1903 = vunpack.c.l.b16 %v1807
  %v1904 = vunpack.c.h.b16 %v1807
  %v1905 = vunpack.c.l.b16 %v1808
  %v1906 = vunpack.c.h.b16 %v1808
  %v1907 = vunpack.c.l.b16 %v1809
  %v1908 = vunpack.c.h.b16 %v1809
  %v1909 = vunpack.c.l.b16 %v1810
  %v1910 = vunpack.c.h.b16 %v1810
  %v1911 = vunpack.c.l.b16 %v1811
  %v1912 = vunpack.c.h.b16 %v1811
  %v1913 = vunpack.c.l.b16 %v1812
  %v1914 = vunpack.c.h.b16 %v1812
  %v1915 = vunpack.c.l.b16 %v1813
  %v1916 = vunpack.c.h.b16 %v1813
  %v1917 = vunpack.c.l.b16 %v1814
  %v1918 = vunpack.c.h.b16 %v1814
  %v1919 = vunpack.c.l.b16 %v1815
  %v1920 = vunpack.c.h.b16 %v1815
  %v1921 = vunpack.c.l.b16 %v1816
  %v1922 = vunpack.c.h.b16 %v1816
  %v1923 = vunpack.c.l.b16 %v1817
  %v1924 = vunpack.c.h.b16 %v1817
  %v1925 = vunpack.c.l.b16 %v1818
  %v1926 = vunpack.c.h.b16 %v1818
  %v1927 = vunpack.c.l.b16 %v1819
  %v1928 = vunpack.c.h.b16 %v1819
  %v1929 = vunpack.c.l.b16 %v1820
  %v1930 = vunpack.c.h.b16 %v1820
  %v1931 = vunpack.c.l.b16 %v1821
  %v1932 = vunpack.c.h.b16 %v1821
  %v1933 = vunpack.c.l.b16 %v1822
  %v1934 = vunpack.c.h.b16 %v1822
  %v1935 = vunpack.c.l.b16 %v1823
  %v1936 = vunpack.c.h.b16 %v1823
  %v1937 = vunpack.c.l.b16 %v1824
  %v1938 = vunpack.c.h.b16 %v1824
  %v1939 = vunpack.c.l.b16 %v1825
  %v1940 = vunpack.c.h.b16 %v1825
  %v1941 = vunpack.c.l.b16 %v1826
  %v1942 = vunpack.c.h.b16 %v1826
  %v1943 = vunpack.c.l.b16 %v1827
  %v1944 = vunpack.c.h.b16 %v1827
  %v1945 = vunpack.c.l.b16 %v1828
  %v1946 = vunpack.c.h.b16 %v1828
  %v1947 = vpack.c.b16 %v1887, %v1883
  %v1948 = vpack.c.b16 %v1888, %v1884
  %v1949 = vpack.c.b16 %v1889, %v1885
  %v1950 = vpack.c.b16 %v1890, %v1886
  %v1951 = vpack.c.b16 %v1895, %v1891
  %v1952 = vpack.c.b16 %v1896, %v1892
  %v1953 = vpack.c.b16 %v1897, %v1893
  %v1954 = vpack.c.b16 %v1898, %v1894
  %v1955 = vpack.c.b16 %v1903, %v1899
  %v1956 = vpack.c.b16 %v1904, %v1900
  %v1957 = vpack.c.b16 %v1905, %v1901
  %v1958 = vpack.c.b16 %v1906, %v1902
  %v1959 = vpack.c.b16 %v1911, %v1907
  %v1960 = vpack.c.b16 %v1912, %v1908
  %v1961 = vpack.c.b16 %v1913, %v1909
  %v1962 = vpack.c.b16 %v1914, %v1910
  %v1963 = vpack.c.b16 %v1919, %v1915
  %v1964 = vpack.c.b16 %v1920, %v1916
  %v1965 = vpack.c.b16 %v1921, %v1917
  %v1966 = vpack.c.b16 %v1922, %v1918
  %v1967 = vpack.c.b16 %v1927, %v1923
  %v1968 = vpack.c.b16 %v1928, %v1924
  %v1969 = vpack.c.b16 %v1929, %v1925
  %v1970 = vpack.c.b16 %v1930, %v1926
  %v1971 = vpack.c.b16 %v1935, %v1931
  %v1972 = vpack.c.b16 %v1936, %v1932
  %v1973 = vpack.c.b16 %v1937, %v1933
  %v1974 = vpack.c.b16 %v1938, %v1934
  %v1975 = vpack.c.b16 %v1943, %v1939
  %v1976 = vpack.c.b16 %v1944, %v1940
  %v1977 = vpack.c.b16 %v1945, %v1941
  %v1978 = vpack.c.b16 %v1946, %v1942
  %2011 = vmatprep.subr.bf16.mxu0 %v1976
  %2012 = vmatpush1.bf16.msra.mxu0 %v1975
  %2013 = vmatprep.subr.bf16.mxu0 %v1972
  %2014 = vmatpush1.bf16.msra.mxu0 %v1971
  %2015 = vmatprep.subr.bf16.mxu0 %v1968
  %2016 = vmatpush1.bf16.msra.mxu0 %v1967
  %2017 = vmatprep.subr.bf16.mxu0 %v1964
  %2018 = vmatpush1.bf16.msra.mxu0 %v1963
  %2019 = vmatprep.subr.bf16.mxu0 %v1960
  %2020 = vmatpush1.bf16.msra.mxu0 %v1959
  %2021 = vmatprep.subr.bf16.mxu0 %v1956
  %2022 = vmatpush1.bf16.msra.mxu0 %v1955
  %2023 = vmatprep.subr.bf16.mxu0 %v1952
  %2024 = vmatpush1.bf16.msra.mxu0 %v1951
  %2025 = vmatprep.subr.bf16.mxu0 %v1948
  %2026 = vmatpush1.bf16.msra.mxu0 %v1947
  %2027 = vmatprep.subr.bf16.mxu0 0
  %2028 = vmatpush2.bf16.msra.mxu0 0
  %2029 = vmatprep.subr.bf16.mxu0 0
  %2030 = vmatpush2.bf16.msra.mxu0 0
  %2031 = vmatprep.subr.bf16.mxu0 0
  %2032 = vmatpush2.bf16.msra.mxu0 0
  %2033 = vmatprep.subr.bf16.mxu0 0
  %2034 = vmatpush2.bf16.msra.mxu0 0
  %2035 = vmatprep.subr.bf16.mxu0 0
  %2036 = vmatpush2.bf16.msra.mxu0 0
  %2037 = vmatprep.subr.bf16.mxu0 0
  %2038 = vmatpush2.bf16.msra.mxu0 0
  %2039 = vmatprep.subr.bf16.mxu0 0
  %2040 = vmatpush2.bf16.msra.mxu0 0
  %2041 = vmatprep.subr.bf16.mxu0 0
  %2042 = vmatpush2.bf16.msra.mxu0 0
  %2043 = vmatprep.mubr.bf16.mxu0 0
  %2044 = vmatmul.mubr.bf16.gmra.mxu0 %v1765
  %v2045 = vpop.f32.mrf.mxu0
  %v2046 = vadd.f32 %v1834, %v2045
  %v2047 = vpop.f32.mrf.mxu0
  %v2048 = vadd.f32 %v1838, %v2047
  %v2049 = vpop.f32.mrf.mxu0
  %v2050 = vadd.f32 %v1834, %v2049
  %v2051 = vpop.f32.mrf.mxu0
  %v2052 = vadd.f32 %v1838, %v2051
  %2053 = vmatprep.mubr.bf16.mxu0 0
  %2054 = vmatmul.mubr.bf16.gmra.mxu0 %v1766
  %v2055 = vpop.f32.mrf.mxu0
  %v2056 = vadd.f32 %v1834, %v2055
  %v2057 = vpop.f32.mrf.mxu0
  %v2058 = vadd.f32 %v1838, %v2057
  %v2059 = vpop.f32.mrf.mxu0
  %v2060 = vadd.f32 %v1834, %v2059
  %v2061 = vpop.f32.mrf.mxu0
  %v2062 = vadd.f32 %v1838, %v2061
  %2063 = vmatprep.mubr.bf16.mxu0 0
  %2064 = vmatmul.mubr.bf16.gmra.mxu0 %v1767
  %v2065 = vpop.f32.mrf.mxu0
  %v2066 = vadd.f32 %v1834, %v2065
  %v2067 = vpop.f32.mrf.mxu0
  %v2068 = vadd.f32 %v1838, %v2067
  %v2069 = vpop.f32.mrf.mxu0
  %v2070 = vadd.f32 %v1834, %v2069
  %v2071 = vpop.f32.mrf.mxu0
  %v2072 = vadd.f32 %v1838, %v2071
  %2073 = vmatprep.mubr.bf16.mxu0 0
  %2074 = vmatmul.mubr.bf16.gmra.mxu0 %v1768
  %v2075 = vpop.f32.mrf.mxu0
  %v2076 = vadd.f32 %v1834, %v2075
  %v2077 = vpop.f32.mrf.mxu0
  %v2078 = vadd.f32 %v1838, %v2077
  %v2079 = vpop.f32.mrf.mxu0
  %v2080 = vadd.f32 %v1834, %v2079
  %v2081 = vpop.f32.mrf.mxu0
  %v2082 = vadd.f32 %v1838, %v2081
  %2083 = vmatprep.mubr.bf16.mxu0 0
  %2084 = vmatmul.mubr.bf16.gmra.mxu0 %v1769
  %v2085 = vpop.f32.mrf.mxu0
  %v2086 = vadd.f32 %v1834, %v2085
  %v2087 = vpop.f32.mrf.mxu0
  %v2088 = vadd.f32 %v1838, %v2087
  %v2089 = vpop.f32.mrf.mxu0
  %v2090 = vadd.f32 %v1834, %v2089
  %v2091 = vpop.f32.mrf.mxu0
  %v2092 = vadd.f32 %v1838, %v2091
  %2093 = vmatprep.mubr.bf16.mxu0 0
  %2094 = vmatmul.mubr.bf16.gmra.mxu0 %v1770
  %v2095 = vpop.f32.mrf.mxu0
  %v2096 = vadd.f32 %v1834, %v2095
  %v2097 = vpop.f32.mrf.mxu0
  %v2098 = vadd.f32 %v1838, %v2097
  %v2099 = vpop.f32.mrf.mxu0
  %v2100 = vadd.f32 %v1834, %v2099
  %v2101 = vpop.f32.mrf.mxu0
  %v2102 = vadd.f32 %v1838, %v2101
  %2103 = vmatprep.mubr.bf16.mxu0 0
  %2104 = vmatmul.mubr.bf16.gmra.mxu0 %v1771
  %v2105 = vpop.f32.mrf.mxu0
  %v2106 = vadd.f32 %v1834, %v2105
  %v2107 = vpop.f32.mrf.mxu0
  %v2108 = vadd.f32 %v1838, %v2107
  %v2109 = vpop.f32.mrf.mxu0
  %v2110 = vadd.f32 %v1834, %v2109
  %v2111 = vpop.f32.mrf.mxu0
  %v2112 = vadd.f32 %v1838, %v2111
  %2113 = vmatprep.mubr.bf16.mxu0 0
  %2114 = vmatmul.mubr.bf16.gmra.mxu0 %v1772
  %v2115 = vpop.f32.mrf.mxu0
  %v2116 = vadd.f32 %v1834, %v2115
  %v2117 = vpop.f32.mrf.mxu0
  %v2118 = vadd.f32 %v1838, %v2117
  %v2119 = vpop.f32.mrf.mxu0
  %v2120 = vadd.f32 %v1834, %v2119
  %v2121 = vpop.f32.mrf.mxu0
  %v2122 = vadd.f32 %v1838, %v2121
  %2123 = vmatprep.mubr.bf16.mxu0 0
  %2124 = vmatmul.mubr.bf16.gmra.mxu0 %v1773
  %v2125 = vpop.f32.mrf.mxu0
  %v2126 = vadd.f32 %v1834, %v2125
  %v2127 = vpop.f32.mrf.mxu0
  %v2128 = vadd.f32 %v1838, %v2127
  %v2129 = vpop.f32.mrf.mxu0
  %v2130 = vadd.f32 %v1834, %v2129
  %v2131 = vpop.f32.mrf.mxu0
  %v2132 = vadd.f32 %v1838, %v2131
  %2133 = vmatprep.mubr.bf16.mxu0 0
  %2134 = vmatmul.mubr.bf16.gmra.mxu0 %v1774
  %v2135 = vpop.f32.mrf.mxu0
  %v2136 = vadd.f32 %v1834, %v2135
  %v2137 = vpop.f32.mrf.mxu0
  %v2138 = vadd.f32 %v1838, %v2137
  %v2139 = vpop.f32.mrf.mxu0
  %v2140 = vadd.f32 %v1834, %v2139
  %v2141 = vpop.f32.mrf.mxu0
  %v2142 = vadd.f32 %v1838, %v2141
  %2143 = vmatprep.mubr.bf16.mxu0 0
  %2144 = vmatmul.mubr.bf16.gmra.mxu0 %v1775
  %v2145 = vpop.f32.mrf.mxu0
  %v2146 = vadd.f32 %v1834, %v2145
  %v2147 = vpop.f32.mrf.mxu0
  %v2148 = vadd.f32 %v1838, %v2147
  %v2149 = vpop.f32.mrf.mxu0
  %v2150 = vadd.f32 %v1834, %v2149
  %v2151 = vpop.f32.mrf.mxu0
  %v2152 = vadd.f32 %v1838, %v2151
  %2153 = vmatprep.mubr.bf16.mxu0 0
  %2154 = vmatmul.mubr.bf16.gmra.mxu0 %v1776
  %v2155 = vpop.f32.mrf.mxu0
  %v2156 = vadd.f32 %v1834, %v2155
  %v2157 = vpop.f32.mrf.mxu0
  %v2158 = vadd.f32 %v1838, %v2157
  %v2159 = vpop.f32.mrf.mxu0
  %v2160 = vadd.f32 %v1834, %v2159
  %v2161 = vpop.f32.mrf.mxu0
  %v2162 = vadd.f32 %v1838, %v2161
  %2163 = vmatprep.mubr.bf16.mxu0 0
  %2164 = vmatmul.mubr.bf16.gmra.mxu0 %v1777
  %v2165 = vpop.f32.mrf.mxu0
  %v2166 = vadd.f32 %v1834, %v2165
  %v2167 = vpop.f32.mrf.mxu0
  %v2168 = vadd.f32 %v1838, %v2167
  %v2169 = vpop.f32.mrf.mxu0
  %v2170 = vadd.f32 %v1834, %v2169
  %v2171 = vpop.f32.mrf.mxu0
  %v2172 = vadd.f32 %v1838, %v2171
  %2173 = vmatprep.mubr.bf16.mxu0 0
  %2174 = vmatmul.mubr.bf16.gmra.mxu0 %v1778
  %v2175 = vpop.f32.mrf.mxu0
  %v2176 = vadd.f32 %v1834, %v2175
  %v2177 = vpop.f32.mrf.mxu0
  %v2178 = vadd.f32 %v1838, %v2177
  %v2179 = vpop.f32.mrf.mxu0
  %v2180 = vadd.f32 %v1834, %v2179
  %v2181 = vpop.f32.mrf.mxu0
  %v2182 = vadd.f32 %v1838, %v2181
  %2183 = vmatprep.mubr.bf16.mxu0 0
  %2184 = vmatmul.mubr.bf16.gmra.mxu0 %v1779
  %v2185 = vpop.f32.mrf.mxu0
  %v2186 = vadd.f32 %v1834, %v2185
  %v2187 = vpop.f32.mrf.mxu0
  %v2188 = vadd.f32 %v1838, %v2187
  %v2189 = vpop.f32.mrf.mxu0
  %v2190 = vadd.f32 %v1834, %v2189
  %v2191 = vpop.f32.mrf.mxu0
  %v2192 = vadd.f32 %v1838, %v2191
  %2193 = vmatprep.mubr.bf16.mxu0 0
  %2194 = vmatmul.mubr.bf16.gmra.mxu0 %v1780
  %v2195 = vpop.f32.mrf.mxu0
  %v2196 = vadd.f32 %v1834, %v2195
  %v2197 = vpop.f32.mrf.mxu0
  %v2198 = vadd.f32 %v1838, %v2197
  %v2199 = vpop.f32.mrf.mxu0
  %v2200 = vadd.f32 %v1834, %v2199
  %v2201 = vpop.f32.mrf.mxu0
  %v2202 = vadd.f32 %v1838, %v2201
  %2203 = vmatprep.mubr.bf16.mxu0 0
  %2204 = vmatmul.mubr.bf16.gmra.mxu0 %v1781
  %v2205 = vpop.f32.mrf.mxu0
  %v2206 = vadd.f32 %v1834, %v2205
  %v2207 = vpop.f32.mrf.mxu0
  %v2208 = vadd.f32 %v1838, %v2207
  %v2209 = vpop.f32.mrf.mxu0
  %v2210 = vadd.f32 %v1834, %v2209
  %v2211 = vpop.f32.mrf.mxu0
  %v2212 = vadd.f32 %v1838, %v2211
  %2213 = vmatprep.mubr.bf16.mxu0 0
  %2214 = vmatmul.mubr.bf16.gmra.mxu0 %v1782
  %v2215 = vpop.f32.mrf.mxu0
  %v2216 = vadd.f32 %v1834, %v2215
  %v2217 = vpop.f32.mrf.mxu0
  %v2218 = vadd.f32 %v1838, %v2217
  %v2219 = vpop.f32.mrf.mxu0
  %v2220 = vadd.f32 %v1834, %v2219
  %v2221 = vpop.f32.mrf.mxu0
  %v2222 = vadd.f32 %v1838, %v2221
  %2223 = vmatprep.mubr.bf16.mxu0 0
  %2224 = vmatmul.mubr.bf16.gmra.mxu0 %v1783
  %v2225 = vpop.f32.mrf.mxu0
  %v2226 = vadd.f32 %v1834, %v2225
  %v2227 = vpop.f32.mrf.mxu0
  %v2228 = vadd.f32 %v1838, %v2227
  %v2229 = vpop.f32.mrf.mxu0
  %v2230 = vadd.f32 %v1834, %v2229
  %v2231 = vpop.f32.mrf.mxu0
  %v2232 = vadd.f32 %v1838, %v2231
  %2233 = vmatprep.mubr.bf16.mxu0 0
  %2234 = vmatmul.mubr.bf16.gmra.mxu0 %v1784
  %v2235 = vpop.f32.mrf.mxu0
  %v2236 = vadd.f32 %v1834, %v2235
  %v2237 = vpop.f32.mrf.mxu0
  %v2238 = vadd.f32 %v1838, %v2237
  %v2239 = vpop.f32.mrf.mxu0
  %v2240 = vadd.f32 %v1834, %v2239
  %v2241 = vpop.f32.mrf.mxu0
  %v2242 = vadd.f32 %v1838, %v2241
  %2243 = vmatprep.mubr.bf16.mxu0 0
  %2244 = vmatmul.mubr.bf16.gmra.mxu0 %v1785
  %v2245 = vpop.f32.mrf.mxu0
  %v2246 = vadd.f32 %v1834, %v2245
  %v2247 = vpop.f32.mrf.mxu0
  %v2248 = vadd.f32 %v1838, %v2247
  %v2249 = vpop.f32.mrf.mxu0
  %v2250 = vadd.f32 %v1834, %v2249
  %v2251 = vpop.f32.mrf.mxu0
  %v2252 = vadd.f32 %v1838, %v2251
  %2253 = vmatprep.mubr.bf16.mxu0 0
  %2254 = vmatmul.mubr.bf16.gmra.mxu0 %v1786
  %v2255 = vpop.f32.mrf.mxu0
  %v2256 = vadd.f32 %v1834, %v2255
  %v2257 = vpop.f32.mrf.mxu0
  %v2258 = vadd.f32 %v1838, %v2257
  %v2259 = vpop.f32.mrf.mxu0
  %v2260 = vadd.f32 %v1834, %v2259
  %v2261 = vpop.f32.mrf.mxu0
  %v2262 = vadd.f32 %v1838, %v2261
  %2263 = vmatprep.mubr.bf16.mxu0 0
  %2264 = vmatmul.mubr.bf16.gmra.mxu0 %v1787
  %v2265 = vpop.f32.mrf.mxu0
  %v2266 = vadd.f32 %v1834, %v2265
  %v2267 = vpop.f32.mrf.mxu0
  %v2268 = vadd.f32 %v1838, %v2267
  %v2269 = vpop.f32.mrf.mxu0
  %v2270 = vadd.f32 %v1834, %v2269
  %v2271 = vpop.f32.mrf.mxu0
  %v2272 = vadd.f32 %v1838, %v2271
  %2273 = vmatprep.mubr.bf16.mxu0 0
  %2274 = vmatmul.mubr.bf16.gmra.mxu0 %v1788
  %v2275 = vpop.f32.mrf.mxu0
  %v2276 = vadd.f32 %v1834, %v2275
  %v2277 = vpop.f32.mrf.mxu0
  %v2278 = vadd.f32 %v1838, %v2277
  %v2279 = vpop.f32.mrf.mxu0
  %v2280 = vadd.f32 %v1834, %v2279
  %v2281 = vpop.f32.mrf.mxu0
  %v2282 = vadd.f32 %v1838, %v2281
  %2283 = vmatprep.mubr.bf16.mxu0 0
  %2284 = vmatmul.mubr.bf16.gmra.mxu0 %v1789
  %v2285 = vpop.f32.mrf.mxu0
  %v2286 = vadd.f32 %v1834, %v2285
  %v2287 = vpop.f32.mrf.mxu0
  %v2288 = vadd.f32 %v1838, %v2287
  %v2289 = vpop.f32.mrf.mxu0
  %v2290 = vadd.f32 %v1834, %v2289
  %v2291 = vpop.f32.mrf.mxu0
  %v2292 = vadd.f32 %v1838, %v2291
  %2293 = vmatprep.mubr.bf16.mxu0 0
  %2294 = vmatmul.mubr.bf16.gmra.mxu0 %v1790
  %v2295 = vpop.f32.mrf.mxu0
  %v2296 = vadd.f32 %v1834, %v2295
  %v2297 = vpop.f32.mrf.mxu0
  %v2298 = vadd.f32 %v1838, %v2297
  %v2299 = vpop.f32.mrf.mxu0
  %v2300 = vadd.f32 %v1834, %v2299
  %v2301 = vpop.f32.mrf.mxu0
  %v2302 = vadd.f32 %v1838, %v2301
  %2303 = vmatprep.mubr.bf16.mxu0 0
  %2304 = vmatmul.mubr.bf16.gmra.mxu0 %v1791
  %v2305 = vpop.f32.mrf.mxu0
  %v2306 = vadd.f32 %v1834, %v2305
  %v2307 = vpop.f32.mrf.mxu0
  %v2308 = vadd.f32 %v1838, %v2307
  %v2309 = vpop.f32.mrf.mxu0
  %v2310 = vadd.f32 %v1834, %v2309
  %v2311 = vpop.f32.mrf.mxu0
  %v2312 = vadd.f32 %v1838, %v2311
  %2313 = vmatprep.mubr.bf16.mxu0 0
  %2314 = vmatmul.mubr.bf16.gmra.mxu0 %v1792
  %v2315 = vpop.f32.mrf.mxu0
  %v2316 = vadd.f32 %v1834, %v2315
  %v2317 = vpop.f32.mrf.mxu0
  %v2318 = vadd.f32 %v1838, %v2317
  %v2319 = vpop.f32.mrf.mxu0
  %v2320 = vadd.f32 %v1834, %v2319
  %v2321 = vpop.f32.mrf.mxu0
  %v2322 = vadd.f32 %v1838, %v2321
  %2323 = vmatprep.mubr.bf16.mxu0 0
  %2324 = vmatmul.mubr.bf16.gmra.mxu0 %v1793
  %v2325 = vpop.f32.mrf.mxu0
  %v2326 = vadd.f32 %v1834, %v2325
  %v2327 = vpop.f32.mrf.mxu0
  %v2328 = vadd.f32 %v1838, %v2327
  %v2329 = vpop.f32.mrf.mxu0
  %v2330 = vadd.f32 %v1834, %v2329
  %v2331 = vpop.f32.mrf.mxu0
  %v2332 = vadd.f32 %v1838, %v2331
  %2333 = vmatprep.mubr.bf16.mxu0 0
  %2334 = vmatmul.mubr.bf16.gmra.mxu0 %v1794
  %v2335 = vpop.f32.mrf.mxu0
  %v2336 = vadd.f32 %v1834, %v2335
  %v2337 = vpop.f32.mrf.mxu0
  %v2338 = vadd.f32 %v1838, %v2337
  %v2339 = vpop.f32.mrf.mxu0
  %v2340 = vadd.f32 %v1834, %v2339
  %v2341 = vpop.f32.mrf.mxu0
  %v2342 = vadd.f32 %v1838, %v2341
  %2343 = vmatprep.mubr.bf16.mxu0 0
  %2344 = vmatmul.mubr.bf16.gmra.mxu0 %v1795
  %v2345 = vpop.f32.mrf.mxu0
  %v2346 = vadd.f32 %v1834, %v2345
  %v2347 = vpop.f32.mrf.mxu0
  %v2348 = vadd.f32 %v1838, %v2347
  %v2349 = vpop.f32.mrf.mxu0
  %v2350 = vadd.f32 %v1834, %v2349
  %v2351 = vpop.f32.mrf.mxu0
  %v2352 = vadd.f32 %v1838, %v2351
  %2353 = vmatprep.mubr.bf16.mxu0 0
  %2354 = vmatmul.mubr.bf16.gmra.mxu0 %v1796
  %v2355 = vpop.f32.mrf.mxu0
  %v2356 = vadd.f32 %v1834, %v2355
  %v2357 = vpop.f32.mrf.mxu0
  %v2358 = vadd.f32 %v1838, %v2357
  %v2359 = vpop.f32.mrf.mxu0
  %v2360 = vadd.f32 %v1834, %v2359
  %v2361 = vpop.f32.mrf.mxu0
  %v2362 = vadd.f32 %v1838, %v2361
  %2363 = vdwg.mxu0
  %2364 = vmatprep.subr.bf16.mxu0 %v1978
  %2365 = vmatpush1.bf16.msra.mxu0 %v1977
  %2366 = vmatprep.subr.bf16.mxu0 %v1974
  %2367 = vmatpush1.bf16.msra.mxu0 %v1973
  %2368 = vmatprep.subr.bf16.mxu0 %v1970
  %2369 = vmatpush1.bf16.msra.mxu0 %v1969
  %2370 = vmatprep.subr.bf16.mxu0 %v1966
  %2371 = vmatpush1.bf16.msra.mxu0 %v1965
  %2372 = vmatprep.subr.bf16.mxu0 %v1962
  %2373 = vmatpush1.bf16.msra.mxu0 %v1961
  %2374 = vmatprep.subr.bf16.mxu0 %v1958
  %2375 = vmatpush1.bf16.msra.mxu0 %v1957
  %2376 = vmatprep.subr.bf16.mxu0 %v1954
  %2377 = vmatpush1.bf16.msra.mxu0 %v1953
  %2378 = vmatprep.subr.bf16.mxu0 %v1950
  %2379 = vmatpush1.bf16.msra.mxu0 %v1949
  %2380 = vmatprep.subr.bf16.mxu0 0
  %2381 = vmatpush2.bf16.msra.mxu0 0
  %2382 = vmatprep.subr.bf16.mxu0 0
  %2383 = vmatpush2.bf16.msra.mxu0 0
  %2384 = vmatprep.subr.bf16.mxu0 0
  %2385 = vmatpush2.bf16.msra.mxu0 0
  %2386 = vmatprep.subr.bf16.mxu0 0
  %2387 = vmatpush2.bf16.msra.mxu0 0
  %2388 = vmatprep.subr.bf16.mxu0 0
  %2389 = vmatpush2.bf16.msra.mxu0 0
  %2390 = vmatprep.subr.bf16.mxu0 0
  %2391 = vmatpush2.bf16.msra.mxu0 0
  %2392 = vmatprep.subr.bf16.mxu0 0
  %2393 = vmatpush2.bf16.msra.mxu0 0
  %2394 = vmatprep.subr.bf16.mxu0 0
  %2395 = vmatpush2.bf16.msra.mxu0 0
  %2396 = vmatprep.mubr.bf16.mxu0 0
  %2397 = vmatmul.mubr.bf16.gmra.mxu0 %v1765
  %v2398 = vpop.f32.mrf.mxu0
  %v2399 = vadd.f32 %v1842, %v2398
  %v2400 = vpop.f32.mrf.mxu0
  %v2401 = vadd.f32 %v1846, %v2400
  %v2402 = vpop.f32.mrf.mxu0
  %v2403 = vadd.f32 %v1842, %v2402
  %v2404 = vpop.f32.mrf.mxu0
  %v2405 = vadd.f32 %v1846, %v2404
  %2406 = vmatprep.mubr.bf16.mxu0 0
  %2407 = vmatmul.mubr.bf16.gmra.mxu0 %v1766
  %v2408 = vpop.f32.mrf.mxu0
  %v2409 = vadd.f32 %v1842, %v2408
  %v2410 = vpop.f32.mrf.mxu0
  %v2411 = vadd.f32 %v1846, %v2410
  %v2412 = vpop.f32.mrf.mxu0
  %v2413 = vadd.f32 %v1842, %v2412
  %v2414 = vpop.f32.mrf.mxu0
  %v2415 = vadd.f32 %v1846, %v2414
  %2416 = vmatprep.mubr.bf16.mxu0 0
  %2417 = vmatmul.mubr.bf16.gmra.mxu0 %v1767
  %v2418 = vpop.f32.mrf.mxu0
  %v2419 = vadd.f32 %v1842, %v2418
  %v2420 = vpop.f32.mrf.mxu0
  %v2421 = vadd.f32 %v1846, %v2420
  %v2422 = vpop.f32.mrf.mxu0
  %v2423 = vadd.f32 %v1842, %v2422
  %v2424 = vpop.f32.mrf.mxu0
  %v2425 = vadd.f32 %v1846, %v2424
  %2426 = vmatprep.mubr.bf16.mxu0 0
  %2427 = vmatmul.mubr.bf16.gmra.mxu0 %v1768
  %v2428 = vpop.f32.mrf.mxu0
  %v2429 = vadd.f32 %v1842, %v2428
  %v2430 = vpop.f32.mrf.mxu0
  %v2431 = vadd.f32 %v1846, %v2430
  %v2432 = vpop.f32.mrf.mxu0
  %v2433 = vadd.f32 %v1842, %v2432
  %v2434 = vpop.f32.mrf.mxu0
  %v2435 = vadd.f32 %v1846, %v2434
  %2436 = vmatprep.mubr.bf16.mxu0 0
  %2437 = vmatmul.mubr.bf16.gmra.mxu0 %v1769
  %v2438 = vpop.f32.mrf.mxu0
  %v2439 = vadd.f32 %v1842, %v2438
  %v2440 = vpop.f32.mrf.mxu0
  %v2441 = vadd.f32 %v1846, %v2440
  %v2442 = vpop.f32.mrf.mxu0
  %v2443 = vadd.f32 %v1842, %v2442
  %v2444 = vpop.f32.mrf.mxu0
  %v2445 = vadd.f32 %v1846, %v2444
  %2446 = vmatprep.mubr.bf16.mxu0 0
  %2447 = vmatmul.mubr.bf16.gmra.mxu0 %v1770
  %v2448 = vpop.f32.mrf.mxu0
  %v2449 = vadd.f32 %v1842, %v2448
  %v2450 = vpop.f32.mrf.mxu0
  %v2451 = vadd.f32 %v1846, %v2450
  %v2452 = vpop.f32.mrf.mxu0
  %v2453 = vadd.f32 %v1842, %v2452
  %v2454 = vpop.f32.mrf.mxu0
  %v2455 = vadd.f32 %v1846, %v2454
  %2456 = vmatprep.mubr.bf16.mxu0 0
  %2457 = vmatmul.mubr.bf16.gmra.mxu0 %v1771
  %v2458 = vpop.f32.mrf.mxu0
  %v2459 = vadd.f32 %v1842, %v2458
  %v2460 = vpop.f32.mrf.mxu0
  %v2461 = vadd.f32 %v1846, %v2460
  %v2462 = vpop.f32.mrf.mxu0
  %v2463 = vadd.f32 %v1842, %v2462
  %v2464 = vpop.f32.mrf.mxu0
  %v2465 = vadd.f32 %v1846, %v2464
  %2466 = vmatprep.mubr.bf16.mxu0 0
  %2467 = vmatmul.mubr.bf16.gmra.mxu0 %v1772
  %v2468 = vpop.f32.mrf.mxu0
  %v2469 = vadd.f32 %v1842, %v2468
  %v2470 = vpop.f32.mrf.mxu0
  %v2471 = vadd.f32 %v1846, %v2470
  %v2472 = vpop.f32.mrf.mxu0
  %v2473 = vadd.f32 %v1842, %v2472
  %v2474 = vpop.f32.mrf.mxu0
  %v2475 = vadd.f32 %v1846, %v2474
  %2476 = vmatprep.mubr.bf16.mxu0 0
  %2477 = vmatmul.mubr.bf16.gmra.mxu0 %v1773
  %v2478 = vpop.f32.mrf.mxu0
  %v2479 = vadd.f32 %v1842, %v2478
  %v2480 = vpop.f32.mrf.mxu0
  %v2481 = vadd.f32 %v1846, %v2480
  %v2482 = vpop.f32.mrf.mxu0
  %v2483 = vadd.f32 %v1842, %v2482
  %v2484 = vpop.f32.mrf.mxu0
  %v2485 = vadd.f32 %v1846, %v2484
  %2486 = vmatprep.mubr.bf16.mxu0 0
  %2487 = vmatmul.mubr.bf16.gmra.mxu0 %v1774
  %v2488 = vpop.f32.mrf.mxu0
  %v2489 = vadd.f32 %v1842, %v2488
  %v2490 = vpop.f32.mrf.mxu0
  %v2491 = vadd.f32 %v1846, %v2490
  %v2492 = vpop.f32.mrf.mxu0
  %v2493 = vadd.f32 %v1842, %v2492
  %v2494 = vpop.f32.mrf.mxu0
  %v2495 = vadd.f32 %v1846, %v2494
  %2496 = vmatprep.mubr.bf16.mxu0 0
  %2497 = vmatmul.mubr.bf16.gmra.mxu0 %v1775
  %v2498 = vpop.f32.mrf.mxu0
  %v2499 = vadd.f32 %v1842, %v2498
  %v2500 = vpop.f32.mrf.mxu0
  %v2501 = vadd.f32 %v1846, %v2500
  %v2502 = vpop.f32.mrf.mxu0
  %v2503 = vadd.f32 %v1842, %v2502
  %v2504 = vpop.f32.mrf.mxu0
  %v2505 = vadd.f32 %v1846, %v2504
  %2506 = vmatprep.mubr.bf16.mxu0 0
  %2507 = vmatmul.mubr.bf16.gmra.mxu0 %v1776
  %v2508 = vpop.f32.mrf.mxu0
  %v2509 = vadd.f32 %v1842, %v2508
  %v2510 = vpop.f32.mrf.mxu0
  %v2511 = vadd.f32 %v1846, %v2510
  %v2512 = vpop.f32.mrf.mxu0
  %v2513 = vadd.f32 %v1842, %v2512
  %v2514 = vpop.f32.mrf.mxu0
  %v2515 = vadd.f32 %v1846, %v2514
  %2516 = vmatprep.mubr.bf16.mxu0 0
  %2517 = vmatmul.mubr.bf16.gmra.mxu0 %v1777
  %v2518 = vpop.f32.mrf.mxu0
  %v2519 = vadd.f32 %v1842, %v2518
  %v2520 = vpop.f32.mrf.mxu0
  %v2521 = vadd.f32 %v1846, %v2520
  %v2522 = vpop.f32.mrf.mxu0
  %v2523 = vadd.f32 %v1842, %v2522
  %v2524 = vpop.f32.mrf.mxu0
  %v2525 = vadd.f32 %v1846, %v2524
  %2526 = vmatprep.mubr.bf16.mxu0 0
  %2527 = vmatmul.mubr.bf16.gmra.mxu0 %v1778
  %v2528 = vpop.f32.mrf.mxu0
  %v2529 = vadd.f32 %v1842, %v2528
  %v2530 = vpop.f32.mrf.mxu0
  %v2531 = vadd.f32 %v1846, %v2530
  %v2532 = vpop.f32.mrf.mxu0
  %v2533 = vadd.f32 %v1842, %v2532
  %v2534 = vpop.f32.mrf.mxu0
  %v2535 = vadd.f32 %v1846, %v2534
  %2536 = vmatprep.mubr.bf16.mxu0 0
  %2537 = vmatmul.mubr.bf16.gmra.mxu0 %v1779
  %v2538 = vpop.f32.mrf.mxu0
  %v2539 = vadd.f32 %v1842, %v2538
  %v2540 = vpop.f32.mrf.mxu0
  %v2541 = vadd.f32 %v1846, %v2540
  %v2542 = vpop.f32.mrf.mxu0
  %v2543 = vadd.f32 %v1842, %v2542
  %v2544 = vpop.f32.mrf.mxu0
  %v2545 = vadd.f32 %v1846, %v2544
  %2546 = vmatprep.mubr.bf16.mxu0 0
  %2547 = vmatmul.mubr.bf16.gmra.mxu0 %v1780
  %v2548 = vpop.f32.mrf.mxu0
  %v2549 = vadd.f32 %v1842, %v2548
  %v2550 = vpop.f32.mrf.mxu0
  %v2551 = vadd.f32 %v1846, %v2550
  %v2552 = vpop.f32.mrf.mxu0
  %v2553 = vadd.f32 %v1842, %v2552
  %v2554 = vpop.f32.mrf.mxu0
  %v2555 = vadd.f32 %v1846, %v2554
  %2556 = vmatprep.mubr.bf16.mxu0 0
  %2557 = vmatmul.mubr.bf16.gmra.mxu0 %v1781
  %v2558 = vpop.f32.mrf.mxu0
  %v2559 = vadd.f32 %v1842, %v2558
  %v2560 = vpop.f32.mrf.mxu0
  %v2561 = vadd.f32 %v1846, %v2560
  %v2562 = vpop.f32.mrf.mxu0
  %v2563 = vadd.f32 %v1842, %v2562
  %v2564 = vpop.f32.mrf.mxu0
  %v2565 = vadd.f32 %v1846, %v2564
  %2566 = vmatprep.mubr.bf16.mxu0 0
  %2567 = vmatmul.mubr.bf16.gmra.mxu0 %v1782
  %v2568 = vpop.f32.mrf.mxu0
  %v2569 = vadd.f32 %v1842, %v2568
  %v2570 = vpop.f32.mrf.mxu0
  %v2571 = vadd.f32 %v1846, %v2570
  %v2572 = vpop.f32.mrf.mxu0
  %v2573 = vadd.f32 %v1842, %v2572
  %v2574 = vpop.f32.mrf.mxu0
  %v2575 = vadd.f32 %v1846, %v2574
  %2576 = vmatprep.mubr.bf16.mxu0 0
  %2577 = vmatmul.mubr.bf16.gmra.mxu0 %v1783
  %v2578 = vpop.f32.mrf.mxu0
  %v2579 = vadd.f32 %v1842, %v2578
  %v2580 = vpop.f32.mrf.mxu0
  %v2581 = vadd.f32 %v1846, %v2580
  %v2582 = vpop.f32.mrf.mxu0
  %v2583 = vadd.f32 %v1842, %v2582
  %v2584 = vpop.f32.mrf.mxu0
  %v2585 = vadd.f32 %v1846, %v2584
  %2586 = vmatprep.mubr.bf16.mxu0 0
  %2587 = vmatmul.mubr.bf16.gmra.mxu0 %v1784
  %v2588 = vpop.f32.mrf.mxu0
  %v2589 = vadd.f32 %v1842, %v2588
  %v2590 = vpop.f32.mrf.mxu0
  %v2591 = vadd.f32 %v1846, %v2590
  %v2592 = vpop.f32.mrf.mxu0
  %v2593 = vadd.f32 %v1842, %v2592
  %v2594 = vpop.f32.mrf.mxu0
  %v2595 = vadd.f32 %v1846, %v2594
  %2596 = vmatprep.mubr.bf16.mxu0 0
  %2597 = vmatmul.mubr.bf16.gmra.mxu0 %v1785
  %v2598 = vpop.f32.mrf.mxu0
  %v2599 = vadd.f32 %v1842, %v2598
  %v2600 = vpop.f32.mrf.mxu0
  %v2601 = vadd.f32 %v1846, %v2600
  %v2602 = vpop.f32.mrf.mxu0
  %v2603 = vadd.f32 %v1842, %v2602
  %v2604 = vpop.f32.mrf.mxu0
  %v2605 = vadd.f32 %v1846, %v2604
  %2606 = vmatprep.mubr.bf16.mxu0 0
  %2607 = vmatmul.mubr.bf16.gmra.mxu0 %v1786
  %v2608 = vpop.f32.mrf.mxu0
  %v2609 = vadd.f32 %v1842, %v2608
  %v2610 = vpop.f32.mrf.mxu0
  %v2611 = vadd.f32 %v1846, %v2610
  %v2612 = vpop.f32.mrf.mxu0
  %v2613 = vadd.f32 %v1842, %v2612
  %v2614 = vpop.f32.mrf.mxu0
  %v2615 = vadd.f32 %v1846, %v2614
  %2616 = vmatprep.mubr.bf16.mxu0 0
  %2617 = vmatmul.mubr.bf16.gmra.mxu0 %v1787
  %v2618 = vpop.f32.mrf.mxu0
  %v2619 = vadd.f32 %v1842, %v2618
  %v2620 = vpop.f32.mrf.mxu0
  %v2621 = vadd.f32 %v1846, %v2620
  %v2622 = vpop.f32.mrf.mxu0
  %v2623 = vadd.f32 %v1842, %v2622
  %v2624 = vpop.f32.mrf.mxu0
  %v2625 = vadd.f32 %v1846, %v2624
  %2626 = vmatprep.mubr.bf16.mxu0 0
  %2627 = vmatmul.mubr.bf16.gmra.mxu0 %v1788
  %v2628 = vpop.f32.mrf.mxu0
  %v2629 = vadd.f32 %v1842, %v2628
  %v2630 = vpop.f32.mrf.mxu0
  %v2631 = vadd.f32 %v1846, %v2630
  %v2632 = vpop.f32.mrf.mxu0
  %v2633 = vadd.f32 %v1842, %v2632
  %v2634 = vpop.f32.mrf.mxu0
  %v2635 = vadd.f32 %v1846, %v2634
  %2636 = vmatprep.mubr.bf16.mxu0 0
  %2637 = vmatmul.mubr.bf16.gmra.mxu0 %v1789
  %v2638 = vpop.f32.mrf.mxu0
  %v2639 = vadd.f32 %v1842, %v2638
  %v2640 = vpop.f32.mrf.mxu0
  %v2641 = vadd.f32 %v1846, %v2640
  %v2642 = vpop.f32.mrf.mxu0
  %v2643 = vadd.f32 %v1842, %v2642
  %v2644 = vpop.f32.mrf.mxu0
  %v2645 = vadd.f32 %v1846, %v2644
  %2646 = vmatprep.mubr.bf16.mxu0 0
  %2647 = vmatmul.mubr.bf16.gmra.mxu0 %v1790
  %v2648 = vpop.f32.mrf.mxu0
  %v2649 = vadd.f32 %v1842, %v2648
  %v2650 = vpop.f32.mrf.mxu0
  %v2651 = vadd.f32 %v1846, %v2650
  %v2652 = vpop.f32.mrf.mxu0
  %v2653 = vadd.f32 %v1842, %v2652
  %v2654 = vpop.f32.mrf.mxu0
  %v2655 = vadd.f32 %v1846, %v2654
  %2656 = vmatprep.mubr.bf16.mxu0 0
  %2657 = vmatmul.mubr.bf16.gmra.mxu0 %v1791
  %v2658 = vpop.f32.mrf.mxu0
  %v2659 = vadd.f32 %v1842, %v2658
  %v2660 = vpop.f32.mrf.mxu0
  %v2661 = vadd.f32 %v1846, %v2660
  %v2662 = vpop.f32.mrf.mxu0
  %v2663 = vadd.f32 %v1842, %v2662
  %v2664 = vpop.f32.mrf.mxu0
  %v2665 = vadd.f32 %v1846, %v2664
  %2666 = vmatprep.mubr.bf16.mxu0 0
  %2667 = vmatmul.mubr.bf16.gmra.mxu0 %v1792
  %v2668 = vpop.f32.mrf.mxu0
  %v2669 = vadd.f32 %v1842, %v2668
  %v2670 = vpop.f32.mrf.mxu0
  %v2671 = vadd.f32 %v1846, %v2670
  %v2672 = vpop.f32.mrf.mxu0
  %v2673 = vadd.f32 %v1842, %v2672
  %v2674 = vpop.f32.mrf.mxu0
  %v2675 = vadd.f32 %v1846, %v2674
  %2676 = vmatprep.mubr.bf16.mxu0 0
  %2677 = vmatmul.mubr.bf16.gmra.mxu0 %v1793
  %v2678 = vpop.f32.mrf.mxu0
  %v2679 = vadd.f32 %v1842, %v2678
  %v2680 = vpop.f32.mrf.mxu0
  %v2681 = vadd.f32 %v1846, %v2680
  %v2682 = vpop.f32.mrf.mxu0
  %v2683 = vadd.f32 %v1842, %v2682
  %v2684 = vpop.f32.mrf.mxu0
  %v2685 = vadd.f32 %v1846, %v2684
  %2686 = vmatprep.mubr.bf16.mxu0 0
  %2687 = vmatmul.mubr.bf16.gmra.mxu0 %v1794
  %v2688 = vpop.f32.mrf.mxu0
  %v2689 = vadd.f32 %v1842, %v2688
  %v2690 = vpop.f32.mrf.mxu0
  %v2691 = vadd.f32 %v1846, %v2690
  %v2692 = vpop.f32.mrf.mxu0
  %v2693 = vadd.f32 %v1842, %v2692
  %v2694 = vpop.f32.mrf.mxu0
  %v2695 = vadd.f32 %v1846, %v2694
  %2696 = vmatprep.mubr.bf16.mxu0 0
  %2697 = vmatmul.mubr.bf16.gmra.mxu0 %v1795
  %v2698 = vpop.f32.mrf.mxu0
  %v2699 = vadd.f32 %v1842, %v2698
  %v2700 = vpop.f32.mrf.mxu0
  %v2701 = vadd.f32 %v1846, %v2700
  %v2702 = vpop.f32.mrf.mxu0
  %v2703 = vadd.f32 %v1842, %v2702
  %v2704 = vpop.f32.mrf.mxu0
  %v2705 = vadd.f32 %v1846, %v2704
  %2706 = vmatprep.mubr.bf16.mxu0 0
  %2707 = vmatmul.mubr.bf16.gmra.mxu0 %v1796
  %v2708 = vpop.f32.mrf.mxu0
  %v2709 = vadd.f32 %v1842, %v2708
  %v2710 = vpop.f32.mrf.mxu0
  %v2711 = vadd.f32 %v1846, %v2710
  %v2712 = vpop.f32.mrf.mxu0
  %v2713 = vadd.f32 %v1842, %v2712
  %v2714 = vpop.f32.mrf.mxu0
  %v2715 = vadd.f32 %v1846, %v2714
  %2716 = vdwg.mxu0
  %2717 = vst [vmem:[#allocation2] sm:$0xff] %v2046
  %2718 = vst [vmem:[#allocation2 + $0x8] sm:$0xff] %v2048
  %2719 = vst [vmem:[#allocation2 + $0x10] sm:$0xff] %v2399
  %2720 = vst [vmem:[#allocation2 + $0x18] sm:$0xff] %v2401
  %2721 = vst [vmem:[#allocation2 + $0x20] sm:$0xff] %v2050
  %2722 = vst [vmem:[#allocation2 + $0x28] sm:$0xff] %v2052
  %2723 = vst [vmem:[#allocation2 + $0x30] sm:$0xff] %v2403
  %2724 = vst [vmem:[#allocation2 + $0x38] sm:$0xff] %v2405
  %2725 = vst [vmem:[#allocation2 + $0x40] sm:$0xff] %v2056
  %2726 = vst [vmem:[#allocation2 + $0x48] sm:$0xff] %v2058
  %2727 = vst [vmem:[#allocation2 + $0x50] sm:$0xff] %v2409
  %2728 = vst [vmem:[#allocation2 + $0x58] sm:$0xff] %v2411
  %2729 = vst [vmem:[#allocation2 + $0x60] sm:$0xff] %v2060
  %2730 = vst [vmem:[#allocation2 + $0x68] sm:$0xff] %v2062
  %2731 = vst [vmem:[#allocation2 + $0x70] sm:$0xff] %v2413
  %2732 = vst [vmem:[#allocation2 + $0x78] sm:$0xff] %v2415
  %2733 = vst [vmem:[#allocation2 + $0x80] sm:$0xff] %v2066
  %2734 = vst [vmem:[#allocation2 + $0x88] sm:$0xff] %v2068
  %2735 = vst [vmem:[#allocation2 + $0x90] sm:$0xff] %v2419
  %2736 = vst [vmem:[#allocation2 + $0x98] sm:$0xff] %v2421
  %2737 = vst [vmem:[#allocation2 + $0xa0] sm:$0xff] %v2070
  %2738 = vst [vmem:[#allocation2 + $0xa8] sm:$0xff] %v2072
  %2739 = vst [vmem:[#allocation2 + $0xb0] sm:$0xff] %v2423
  %2740 = vst [vmem:[#allocation2 + $0xb8] sm:$0xff] %v2425
  %2741 = vst [vmem:[#allocation2 + $0xc0] sm:$0xff] %v2076
  %2742 = vst [vmem:[#allocation2 + $0xc8] sm:$0xff] %v2078
  %2743 = vst [vmem:[#allocation2 + $0xd0] sm:$0xff] %v2429
  %2744 = vst [vmem:[#allocation2 + $0xd8] sm:$0xff] %v2431
  %2745 = vst [vmem:[#allocation2 + $0xe0] sm:$0xff] %v2080
  %2746 = vst [vmem:[#allocation2 + $0xe8] sm:$0xff] %v2082
  %2747 = vst [vmem:[#allocation2 + $0xf0] sm:$0xff] %v2433
  %2748 = vst [vmem:[#allocation2 + $0xf8] sm:$0xff] %v2435
  %2749 = vst [vmem:[#allocation2 + $0x100] sm:$0xff] %v2086
  %2750 = vst [vmem:[#allocation2 + $0x108] sm:$0xff] %v2088
  %2751 = vst [vmem:[#allocation2 + $0x110] sm:$0xff] %v2439
  %2752 = vst [vmem:[#allocation2 + $0x118] sm:$0xff] %v2441
  %2753 = vst [vmem:[#allocation2 + $0x120] sm:$0xff] %v2090
  %2754 = vst [vmem:[#allocation2 + $0x128] sm:$0xff] %v2092
  %2755 = vst [vmem:[#allocation2 + $0x130] sm:$0xff] %v2443
  %2756 = vst [vmem:[#allocation2 + $0x138] sm:$0xff] %v2445
  %2757 = vst [vmem:[#allocation2 + $0x140] sm:$0xff] %v2096
  %2758 = vst [vmem:[#allocation2 + $0x148] sm:$0xff] %v2098
  %2759 = vst [vmem:[#allocation2 + $0x150] sm:$0xff] %v2449
  %2760 = vst [vmem:[#allocation2 + $0x158] sm:$0xff] %v2451
  %2761 = vst [vmem:[#allocation2 + $0x160] sm:$0xff] %v2100
  %2762 = vst [vmem:[#allocation2 + $0x168] sm:$0xff] %v2102
  %2763 = vst [vmem:[#allocation2 + $0x170] sm:$0xff] %v2453
  %2764 = vst [vmem:[#allocation2 + $0x178] sm:$0xff] %v2455
  %2765 = vst [vmem:[#allocation2 + $0x180] sm:$0xff] %v2106
  %2766 = vst [vmem:[#allocation2 + $0x188] sm:$0xff] %v2108
  %2767 = vst [vmem:[#allocation2 + $0x190] sm:$0xff] %v2459
  %2768 = vst [vmem:[#allocation2 + $0x198] sm:$0xff] %v2461
  %2769 = vst [vmem:[#allocation2 + $0x1a0] sm:$0xff] %v2110
  %2770 = vst [vmem:[#allocation2 + $0x1a8] sm:$0xff] %v2112
  %2771 = vst [vmem:[#allocation2 + $0x1b0] sm:$0xff] %v2463
  %2772 = vst [vmem:[#allocation2 + $0x1b8] sm:$0xff] %v2465
  %2773 = vst [vmem:[#allocation2 + $0x1c0] sm:$0xff] %v2116
  %2774 = vst [vmem:[#allocation2 + $0x1c8] sm:$0xff] %v2118
  %2775 = vst [vmem:[#allocation2 + $0x1d0] sm:$0xff] %v2469
  %2776 = vst [vmem:[#allocation2 + $0x1d8] sm:$0xff] %v2471
  %2777 = vst [vmem:[#allocation2 + $0x1e0] sm:$0xff] %v2120
  %2778 = vst [vmem:[#allocation2 + $0x1e8] sm:$0xff] %v2122
  %2779 = vst [vmem:[#allocation2 + $0x1f0] sm:$0xff] %v2473
  %2780 = vst [vmem:[#allocation2 + $0x1f8] sm:$0xff] %v2475
  %2781 = vst [vmem:[#allocation2 + $0x200] sm:$0xff] %v2126
  %2782 = vst [vmem:[#allocation2 + $0x208] sm:$0xff] %v2128
  %2783 = vst [vmem:[#allocation2 + $0x210] sm:$0xff] %v2479
  %2784 = vst [vmem:[#allocation2 + $0x218] sm:$0xff] %v2481
  %2785 = vst [vmem:[#allocation2 + $0x220] sm:$0xff] %v2130
  %2786 = vst [vmem:[#allocation2 + $0x228] sm:$0xff] %v2132
  %2787 = vst [vmem:[#allocation2 + $0x230] sm:$0xff] %v2483
  %2788 = vst [vmem:[#allocation2 + $0x238] sm:$0xff] %v2485
  %2789 = vst [vmem:[#allocation2 + $0x240] sm:$0xff] %v2136
  %2790 = vst [vmem:[#allocation2 + $0x248] sm:$0xff] %v2138
  %2791 = vst [vmem:[#allocation2 + $0x250] sm:$0xff] %v2489
  %2792 = vst [vmem:[#allocation2 + $0x258] sm:$0xff] %v2491
  %2793 = vst [vmem:[#allocation2 + $0x260] sm:$0xff] %v2140
  %2794 = vst [vmem:[#allocation2 + $0x268] sm:$0xff] %v2142
  %2795 = vst [vmem:[#allocation2 + $0x270] sm:$0xff] %v2493
  %2796 = vst [vmem:[#allocation2 + $0x278] sm:$0xff] %v2495
  %2797 = vst [vmem:[#allocation2 + $0x280] sm:$0xff] %v2146
  %2798 = vst [vmem:[#allocation2 + $0x288] sm:$0xff] %v2148
  %2799 = vst [vmem:[#allocation2 + $0x290] sm:$0xff] %v2499
  %2800 = vst [vmem:[#allocation2 + $0x298] sm:$0xff] %v2501
  %2801 = vst [vmem:[#allocation2 + $0x2a0] sm:$0xff] %v2150
  %2802 = vst [vmem:[#allocation2 + $0x2a8] sm:$0xff] %v2152
  %2803 = vst [vmem:[#allocation2 + $0x2b0] sm:$0xff] %v2503
  %2804 = vst [vmem:[#allocation2 + $0x2b8] sm:$0xff] %v2505
  %2805 = vst [vmem:[#allocation2 + $0x2c0] sm:$0xff] %v2156
  %2806 = vst [vmem:[#allocation2 + $0x2c8] sm:$0xff] %v2158
  %2807 = vst [vmem:[#allocation2 + $0x2d0] sm:$0xff] %v2509
  %2808 = vst [vmem:[#allocation2 + $0x2d8] sm:$0xff] %v2511
  %2809 = vst [vmem:[#allocation2 + $0x2e0] sm:$0xff] %v2160
  %2810 = vst [vmem:[#allocation2 + $0x2e8] sm:$0xff] %v2162
  %2811 = vst [vmem:[#allocation2 + $0x2f0] sm:$0xff] %v2513
  %2812 = vst [vmem:[#allocation2 + $0x2f8] sm:$0xff] %v2515
  %2813 = vst [vmem:[#allocation2 + $0x300] sm:$0xff] %v2166
  %2814 = vst [vmem:[#allocation2 + $0x308] sm:$0xff] %v2168
  %2815 = vst [vmem:[#allocation2 + $0x310] sm:$0xff] %v2519
  %2816 = vst [vmem:[#allocation2 + $0x318] sm:$0xff] %v2521
  %2817 = vst [vmem:[#allocation2 + $0x320] sm:$0xff] %v2170
  %2818 = vst [vmem:[#allocation2 + $0x328] sm:$0xff] %v2172
  %2819 = vst [vmem:[#allocation2 + $0x330] sm:$0xff] %v2523
  %2820 = vst [vmem:[#allocation2 + $0x338] sm:$0xff] %v2525
  %2821 = vst [vmem:[#allocation2 + $0x340] sm:$0xff] %v2176
  %2822 = vst [vmem:[#allocation2 + $0x348] sm:$0xff] %v2178
  %2823 = vst [vmem:[#allocation2 + $0x350] sm:$0xff] %v2529
  %2824 = vst [vmem:[#allocation2 + $0x358] sm:$0xff] %v2531
  %2825 = vst [vmem:[#allocation2 + $0x360] sm:$0xff] %v2180
  %2826 = vst [vmem:[#allocation2 + $0x368] sm:$0xff] %v2182
  %2827 = vst [vmem:[#allocation2 + $0x370] sm:$0xff] %v2533
  %2828 = vst [vmem:[#allocation2 + $0x378] sm:$0xff] %v2535
  %2829 = vst [vmem:[#allocation2 + $0x380] sm:$0xff] %v2186
  %2830 = vst [vmem:[#allocation2 + $0x388] sm:$0xff] %v2188
  %2831 = vst [vmem:[#allocation2 + $0x390] sm:$0xff] %v2539
  %2832 = vst [vmem:[#allocation2 + $0x398] sm:$0xff] %v2541
  %2833 = vst [vmem:[#allocation2 + $0x3a0] sm:$0xff] %v2190
  %2834 = vst [vmem:[#allocation2 + $0x3a8] sm:$0xff] %v2192
  %2835 = vst [vmem:[#allocation2 + $0x3b0] sm:$0xff] %v2543
  %2836 = vst [vmem:[#allocation2 + $0x3b8] sm:$0xff] %v2545
  %2837 = vst [vmem:[#allocation2 + $0x3c0] sm:$0xff] %v2196
  %2838 = vst [vmem:[#allocation2 + $0x3c8] sm:$0xff] %v2198
  %2839 = vst [vmem:[#allocation2 + $0x3d0] sm:$0xff] %v2549
  %2840 = vst [vmem:[#allocation2 + $0x3d8] sm:$0xff] %v2551
  %2841 = vst [vmem:[#allocation2 + $0x3e0] sm:$0xff] %v2200
  %2842 = vst [vmem:[#allocation2 + $0x3e8] sm:$0xff] %v2202
  %2843 = vst [vmem:[#allocation2 + $0x3f0] sm:$0xff] %v2553
  %2844 = vst [vmem:[#allocation2 + $0x3f8] sm:$0xff] %v2555
  %2845 = vst [vmem:[#allocation2 + $0x400] sm:$0xff] %v2206
  %2846 = vst [vmem:[#allocation2 + $0x408] sm:$0xff] %v2208
  %2847 = vst [vmem:[#allocation2 + $0x410] sm:$0xff] %v2559
  %2848 = vst [vmem:[#allocation2 + $0x418] sm:$0xff] %v2561
  %2849 = vst [vmem:[#allocation2 + $0x420] sm:$0xff] %v2210
  %2850 = vst [vmem:[#allocation2 + $0x428] sm:$0xff] %v2212
  %2851 = vst [vmem:[#allocation2 + $0x430] sm:$0xff] %v2563
  %2852 = vst [vmem:[#allocation2 + $0x438] sm:$0xff] %v2565
  %2853 = vst [vmem:[#allocation2 + $0x440] sm:$0xff] %v2216
  %2854 = vst [vmem:[#allocation2 + $0x448] sm:$0xff] %v2218
  %2855 = vst [vmem:[#allocation2 + $0x450] sm:$0xff] %v2569
  %2856 = vst [vmem:[#allocation2 + $0x458] sm:$0xff] %v2571
  %2857 = vst [vmem:[#allocation2 + $0x460] sm:$0xff] %v2220
  %2858 = vst [vmem:[#allocation2 + $0x468] sm:$0xff] %v2222
  %2859 = vst [vmem:[#allocation2 + $0x470] sm:$0xff] %v2573
  %2860 = vst [vmem:[#allocation2 + $0x478] sm:$0xff] %v2575
  %2861 = vst [vmem:[#allocation2 + $0x480] sm:$0xff] %v2226
  %2862 = vst [vmem:[#allocation2 + $0x488] sm:$0xff] %v2228
  %2863 = vst [vmem:[#allocation2 + $0x490] sm:$0xff] %v2579
  %2864 = vst [vmem:[#allocation2 + $0x498] sm:$0xff] %v2581
  %2865 = vst [vmem:[#allocation2 + $0x4a0] sm:$0xff] %v2230
  %2866 = vst [vmem:[#allocation2 + $0x4a8] sm:$0xff] %v2232
  %2867 = vst [vmem:[#allocation2 + $0x4b0] sm:$0xff] %v2583
  %2868 = vst [vmem:[#allocation2 + $0x4b8] sm:$0xff] %v2585
  %2869 = vst [vmem:[#allocation2 + $0x4c0] sm:$0xff] %v2236
  %2870 = vst [vmem:[#allocation2 + $0x4c8] sm:$0xff] %v2238
  %2871 = vst [vmem:[#allocation2 + $0x4d0] sm:$0xff] %v2589
  %2872 = vst [vmem:[#allocation2 + $0x4d8] sm:$0xff] %v2591
  %2873 = vst [vmem:[#allocation2 + $0x4e0] sm:$0xff] %v2240
  %2874 = vst [vmem:[#allocation2 + $0x4e8] sm:$0xff] %v2242
  %2875 = vst [vmem:[#allocation2 + $0x4f0] sm:$0xff] %v2593
  %2876 = vst [vmem:[#allocation2 + $0x4f8] sm:$0xff] %v2595
  %2877 = vst [vmem:[#allocation2 + $0x500] sm:$0xff] %v2246
  %2878 = vst [vmem:[#allocation2 + $0x508] sm:$0xff] %v2248
  %2879 = vst [vmem:[#allocation2 + $0x510] sm:$0xff] %v2599
  %2880 = vst [vmem:[#allocation2 + $0x518] sm:$0xff] %v2601
  %2881 = vst [vmem:[#allocation2 + $0x520] sm:$0xff] %v2250
  %2882 = vst [vmem:[#allocation2 + $0x528] sm:$0xff] %v2252
  %2883 = vst [vmem:[#allocation2 + $0x530] sm:$0xff] %v2603
  %2884 = vst [vmem:[#allocation2 + $0x538] sm:$0xff] %v2605
  %2885 = vst [vmem:[#allocation2 + $0x540] sm:$0xff] %v2256
  %2886 = vst [vmem:[#allocation2 + $0x548] sm:$0xff] %v2258
  %2887 = vst [vmem:[#allocation2 + $0x550] sm:$0xff] %v2609
  %2888 = vst [vmem:[#allocation2 + $0x558] sm:$0xff] %v2611
  %2889 = vst [vmem:[#allocation2 + $0x560] sm:$0xff] %v2260
  %2890 = vst [vmem:[#allocation2 + $0x568] sm:$0xff] %v2262
  %2891 = vst [vmem:[#allocation2 + $0x570] sm:$0xff] %v2613
  %2892 = vst [vmem:[#allocation2 + $0x578] sm:$0xff] %v2615
  %2893 = vst [vmem:[#allocation2 + $0x580] sm:$0xff] %v2266
  %2894 = vst [vmem:[#allocation2 + $0x588] sm:$0xff] %v2268
  %2895 = vst [vmem:[#allocation2 + $0x590] sm:$0xff] %v2619
  %2896 = vst [vmem:[#allocation2 + $0x598] sm:$0xff] %v2621
  %2897 = vst [vmem:[#allocation2 + $0x5a0] sm:$0xff] %v2270
  %2898 = vst [vmem:[#allocation2 + $0x5a8] sm:$0xff] %v2272
  %2899 = vst [vmem:[#allocation2 + $0x5b0] sm:$0xff] %v2623
  %2900 = vst [vmem:[#allocation2 + $0x5b8] sm:$0xff] %v2625
  %2901 = vst [vmem:[#allocation2 + $0x5c0] sm:$0xff] %v2276
  %2902 = vst [vmem:[#allocation2 + $0x5c8] sm:$0xff] %v2278
  %2903 = vst [vmem:[#allocation2 + $0x5d0] sm:$0xff] %v2629
  %2904 = vst [vmem:[#allocation2 + $0x5d8] sm:$0xff] %v2631
  %2905 = vst [vmem:[#allocation2 + $0x5e0] sm:$0xff] %v2280
  %2906 = vst [vmem:[#allocation2 + $0x5e8] sm:$0xff] %v2282
  %2907 = vst [vmem:[#allocation2 + $0x5f0] sm:$0xff] %v2633
  %2908 = vst [vmem:[#allocation2 + $0x5f8] sm:$0xff] %v2635
  %2909 = vst [vmem:[#allocation2 + $0x600] sm:$0xff] %v2286
  %2910 = vst [vmem:[#allocation2 + $0x608] sm:$0xff] %v2288
  %2911 = vst [vmem:[#allocation2 + $0x610] sm:$0xff] %v2639
  %2912 = vst [vmem:[#allocation2 + $0x618] sm:$0xff] %v2641
  %2913 = vst [vmem:[#allocation2 + $0x620] sm:$0xff] %v2290
  %2914 = vst [vmem:[#allocation2 + $0x628] sm:$0xff] %v2292
  %2915 = vst [vmem:[#allocation2 + $0x630] sm:$0xff] %v2643
  %2916 = vst [vmem:[#allocation2 + $0x638] sm:$0xff] %v2645
  %2917 = vst [vmem:[#allocation2 + $0x640] sm:$0xff] %v2296
  %2918 = vst [vmem:[#allocation2 + $0x648] sm:$0xff] %v2298
  %2919 = vst [vmem:[#allocation2 + $0x650] sm:$0xff] %v2649
  %2920 = vst [vmem:[#allocation2 + $0x658] sm:$0xff] %v2651
  %2921 = vst [vmem:[#allocation2 + $0x660] sm:$0xff] %v2300
  %2922 = vst [vmem:[#allocation2 + $0x668] sm:$0xff] %v2302
  %2923 = vst [vmem:[#allocation2 + $0x670] sm:$0xff] %v2653
  %2924 = vst [vmem:[#allocation2 + $0x678] sm:$0xff] %v2655
  %2925 = vst [vmem:[#allocation2 + $0x680] sm:$0xff] %v2306
  %2926 = vst [vmem:[#allocation2 + $0x688] sm:$0xff] %v2308
  %2927 = vst [vmem:[#allocation2 + $0x690] sm:$0xff] %v2659
  %2928 = vst [vmem:[#allocation2 + $0x698] sm:$0xff] %v2661
  %2929 = vst [vmem:[#allocation2 + $0x6a0] sm:$0xff] %v2310
  %2930 = vst [vmem:[#allocation2 + $0x6a8] sm:$0xff] %v2312
  %2931 = vst [vmem:[#allocation2 + $0x6b0] sm:$0xff] %v2663
  %2932 = vst [vmem:[#allocation2 + $0x6b8] sm:$0xff] %v2665
  %2933 = vst [vmem:[#allocation2 + $0x6c0] sm:$0xff] %v2316
  %2934 = vst [vmem:[#allocation2 + $0x6c8] sm:$0xff] %v2318
  %2935 = vst [vmem:[#allocation2 + $0x6d0] sm:$0xff] %v2669
  %2936 = vst [vmem:[#allocation2 + $0x6d8] sm:$0xff] %v2671
  %2937 = vst [vmem:[#allocation2 + $0x6e0] sm:$0xff] %v2320
  %2938 = vst [vmem:[#allocation2 + $0x6e8] sm:$0xff] %v2322
  %2939 = vst [vmem:[#allocation2 + $0x6f0] sm:$0xff] %v2673
  %2940 = vst [vmem:[#allocation2 + $0x6f8] sm:$0xff] %v2675
  %2941 = vst [vmem:[#allocation2 + $0x700] sm:$0xff] %v2326
  %2942 = vst [vmem:[#allocation2 + $0x708] sm:$0xff] %v2328
  %2943 = vst [vmem:[#allocation2 + $0x710] sm:$0xff] %v2679
  %2944 = vst [vmem:[#allocation2 + $0x718] sm:$0xff] %v2681
  %2945 = vst [vmem:[#allocation2 + $0x720] sm:$0xff] %v2330
  %2946 = vst [vmem:[#allocation2 + $0x728] sm:$0xff] %v2332
  %2947 = vst [vmem:[#allocation2 + $0x730] sm:$0xff] %v2683
  %2948 = vst [vmem:[#allocation2 + $0x738] sm:$0xff] %v2685
  %2949 = vst [vmem:[#allocation2 + $0x740] sm:$0xff] %v2336
  %2950 = vst [vmem:[#allocation2 + $0x748] sm:$0xff] %v2338
  %2951 = vst [vmem:[#allocation2 + $0x750] sm:$0xff] %v2689
  %2952 = vst [vmem:[#allocation2 + $0x758] sm:$0xff] %v2691
  %2953 = vst [vmem:[#allocation2 + $0x760] sm:$0xff] %v2340
  %2954 = vst [vmem:[#allocation2 + $0x768] sm:$0xff] %v2342
  %2955 = vst [vmem:[#allocation2 + $0x770] sm:$0xff] %v2693
  %2956 = vst [vmem:[#allocation2 + $0x778] sm:$0xff] %v2695
  %2957 = vst [vmem:[#allocation2 + $0x780] sm:$0xff] %v2346
  %2958 = vst [vmem:[#allocation2 + $0x788] sm:$0xff] %v2348
  %2959 = vst [vmem:[#allocation2 + $0x790] sm:$0xff] %v2699
  %2960 = vst [vmem:[#allocation2 + $0x798] sm:$0xff] %v2701
  %2961 = vst [vmem:[#allocation2 + $0x7a0] sm:$0xff] %v2350
  %2962 = vst [vmem:[#allocation2 + $0x7a8] sm:$0xff] %v2352
  %2963 = vst [vmem:[#allocation2 + $0x7b0] sm:$0xff] %v2703
  %2964 = vst [vmem:[#allocation2 + $0x7b8] sm:$0xff] %v2705
  %2965 = vst [vmem:[#allocation2 + $0x7c0] sm:$0xff] %v2356
  %2966 = vst [vmem:[#allocation2 + $0x7c8] sm:$0xff] %v2358
  %2967 = vst [vmem:[#allocation2 + $0x7d0] sm:$0xff] %v2709
  %2968 = vst [vmem:[#allocation2 + $0x7d8] sm:$0xff] %v2711
  %2969 = vst [vmem:[#allocation2 + $0x7e0] sm:$0xff] %v2360
  %2970 = vst [vmem:[#allocation2 + $0x7e8] sm:$0xff] %v2362
  %2971 = vst [vmem:[#allocation2 + $0x7f0] sm:$0xff] %v2713
  %2972 = vst [vmem:[#allocation2 + $0x7f8] sm:$0xff] %v2715
  %v2973 = vld [vmem:[%s4] sm:$0xff]
  %v2974 = vld [vmem:[%s4 + $0x8] sm:$0xff]
  %v2975 = vld [vmem:[%s4 + $0x10] sm:$0xff]
  %v2976 = vld [vmem:[%s4 + $0x18] sm:$0xff]
  %v2977 = vld [vmem:[%s4 + $0x20] sm:$0xff]
  %v2978 = vld [vmem:[%s4 + $0x28] sm:$0xff]
  %v2979 = vld [vmem:[%s4 + $0x30] sm:$0xff]
  %v2980 = vld [vmem:[%s4 + $0x38] sm:$0xff]
  %v2981 = vld [vmem:[%s4 + $0x40] sm:$0xff]
  %v2982 = vld [vmem:[%s4 + $0x48] sm:$0xff]
  %v2983 = vld [vmem:[%s4 + $0x50] sm:$0xff]
  %v2984 = vld [vmem:[%s4 + $0x58] sm:$0xff]
  %v2985 = vld [vmem:[%s4 + $0x60] sm:$0xff]
  %v2986 = vld [vmem:[%s4 + $0x68] sm:$0xff]
  %v2987 = vld [vmem:[%s4 + $0x70] sm:$0xff]
  %v2988 = vld [vmem:[%s4 + $0x78] sm:$0xff]
  %v2989 = vld [vmem:[%s4 + $0x80] sm:$0xff]
  %v2990 = vld [vmem:[%s4 + $0x88] sm:$0xff]
  %v2991 = vld [vmem:[%s4 + $0x90] sm:$0xff]
  %v2992 = vld [vmem:[%s4 + $0x98] sm:$0xff]
  %v2993 = vld [vmem:[%s4 + $0xa0] sm:$0xff]
  %v2994 = vld [vmem:[%s4 + $0xa8] sm:$0xff]
  %v2995 = vld [vmem:[%s4 + $0xb0] sm:$0xff]
  %v2996 = vld [vmem:[%s4 + $0xb8] sm:$0xff]
  %v2997 = vld [vmem:[%s4 + $0xc0] sm:$0xff]
  %v2998 = vld [vmem:[%s4 + $0xc8] sm:$0xff]
  %v2999 = vld [vmem:[%s4 + $0xd0] sm:$0xff]
  %v3000 = vld [vmem:[%s4 + $0xd8] sm:$0xff]
  %v3001 = vld [vmem:[%s4 + $0xe0] sm:$0xff]
  %v3002 = vld [vmem:[%s4 + $0xe8] sm:$0xff]
  %v3003 = vld [vmem:[%s4 + $0xf0] sm:$0xff]
  %v3004 = vld [vmem:[%s4 + $0xf8] sm:$0xff]
  %v3005 = vld [vmem:[%s4 + $0x100] sm:$0xff]
  %v3006 = vld [vmem:[%s4 + $0x108] sm:$0xff]
  %v3007 = vld [vmem:[%s4 + $0x110] sm:$0xff]
  %v3008 = vld [vmem:[%s4 + $0x118] sm:$0xff]
  %v3009 = vld [vmem:[%s4 + $0x120] sm:$0xff]
  %v3010 = vld [vmem:[%s4 + $0x128] sm:$0xff]
  %v3011 = vld [vmem:[%s4 + $0x130] sm:$0xff]
  %v3012 = vld [vmem:[%s4 + $0x138] sm:$0xff]
  %v3013 = vld [vmem:[%s4 + $0x140] sm:$0xff]
  %v3014 = vld [vmem:[%s4 + $0x148] sm:$0xff]
  %v3015 = vld [vmem:[%s4 + $0x150] sm:$0xff]
  %v3016 = vld [vmem:[%s4 + $0x158] sm:$0xff]
  %v3017 = vld [vmem:[%s4 + $0x160] sm:$0xff]
  %v3018 = vld [vmem:[%s4 + $0x168] sm:$0xff]
  %v3019 = vld [vmem:[%s4 + $0x170] sm:$0xff]
  %v3020 = vld [vmem:[%s4 + $0x178] sm:$0xff]
  %v3021 = vld [vmem:[%s4 + $0x180] sm:$0xff]
  %v3022 = vld [vmem:[%s4 + $0x188] sm:$0xff]
  %v3023 = vld [vmem:[%s4 + $0x190] sm:$0xff]
  %v3024 = vld [vmem:[%s4 + $0x198] sm:$0xff]
  %v3025 = vld [vmem:[%s4 + $0x1a0] sm:$0xff]
  %v3026 = vld [vmem:[%s4 + $0x1a8] sm:$0xff]
  %v3027 = vld [vmem:[%s4 + $0x1b0] sm:$0xff]
  %v3028 = vld [vmem:[%s4 + $0x1b8] sm:$0xff]
  %v3029 = vld [vmem:[%s4 + $0x1c0] sm:$0xff]
  %v3030 = vld [vmem:[%s4 + $0x1c8] sm:$0xff]
  %v3031 = vld [vmem:[%s4 + $0x1d0] sm:$0xff]
  %v3032 = vld [vmem:[%s4 + $0x1d8] sm:$0xff]
  %v3033 = vld [vmem:[%s4 + $0x1e0] sm:$0xff]
  %v3034 = vld [vmem:[%s4 + $0x1e8] sm:$0xff]
  %v3035 = vld [vmem:[%s4 + $0x1f0] sm:$0xff]
  %v3036 = vld [vmem:[%s4 + $0x1f8] sm:$0xff]
  %v3037 = vld [vmem:[%s4 + $0x200] sm:$0xff]
  %v3038 = vld [vmem:[%s4 + $0x208] sm:$0xff]
  %v3039 = vld [vmem:[%s4 + $0x210] sm:$0xff]
  %v3040 = vld [vmem:[%s4 + $0x218] sm:$0xff]
  %v3041 = vld [vmem:[%s4 + $0x220] sm:$0xff]
  %v3042 = vld [vmem:[%s4 + $0x228] sm:$0xff]
  %v3043 = vld [vmem:[%s4 + $0x230] sm:$0xff]
  %v3044 = vld [vmem:[%s4 + $0x238] sm:$0xff]
  %v3045 = vld [vmem:[%s4 + $0x240] sm:$0xff]
  %v3046 = vld [vmem:[%s4 + $0x248] sm:$0xff]
  %v3047 = vld [vmem:[%s4 + $0x250] sm:$0xff]
  %v3048 = vld [vmem:[%s4 + $0x258] sm:$0xff]
  %v3049 = vld [vmem:[%s4 + $0x260] sm:$0xff]
  %v3050 = vld [vmem:[%s4 + $0x268] sm:$0xff]
  %v3051 = vld [vmem:[%s4 + $0x270] sm:$0xff]
  %v3052 = vld [vmem:[%s4 + $0x278] sm:$0xff]
  %v3053 = vld [vmem:[%s4 + $0x280] sm:$0xff]
  %v3054 = vld [vmem:[%s4 + $0x288] sm:$0xff]
  %v3055 = vld [vmem:[%s4 + $0x290] sm:$0xff]
  %v3056 = vld [vmem:[%s4 + $0x298] sm:$0xff]
  %v3057 = vld [vmem:[%s4 + $0x2a0] sm:$0xff]
  %v3058 = vld [vmem:[%s4 + $0x2a8] sm:$0xff]
  %v3059 = vld [vmem:[%s4 + $0x2b0] sm:$0xff]
  %v3060 = vld [vmem:[%s4 + $0x2b8] sm:$0xff]
  %v3061 = vld [vmem:[%s4 + $0x2c0] sm:$0xff]
  %v3062 = vld [vmem:[%s4 + $0x2c8] sm:$0xff]
  %v3063 = vld [vmem:[%s4 + $0x2d0] sm:$0xff]
  %v3064 = vld [vmem:[%s4 + $0x2d8] sm:$0xff]
  %v3065 = vld [vmem:[%s4 + $0x2e0] sm:$0xff]
  %v3066 = vld [vmem:[%s4 + $0x2e8] sm:$0xff]
  %v3067 = vld [vmem:[%s4 + $0x2f0] sm:$0xff]
  %v3068 = vld [vmem:[%s4 + $0x2f8] sm:$0xff]
  %v3069 = vld [vmem:[%s4 + $0x300] sm:$0xff]
  %v3070 = vld [vmem:[%s4 + $0x308] sm:$0xff]
  %v3071 = vld [vmem:[%s4 + $0x310] sm:$0xff]
  %v3072 = vld [vmem:[%s4 + $0x318] sm:$0xff]
  %v3073 = vld [vmem:[%s4 + $0x320] sm:$0xff]
  %v3074 = vld [vmem:[%s4 + $0x328] sm:$0xff]
  %v3075 = vld [vmem:[%s4 + $0x330] sm:$0xff]
  %v3076 = vld [vmem:[%s4 + $0x338] sm:$0xff]
  %v3077 = vld [vmem:[%s4 + $0x340] sm:$0xff]
  %v3078 = vld [vmem:[%s4 + $0x348] sm:$0xff]
  %v3079 = vld [vmem:[%s4 + $0x350] sm:$0xff]
  %v3080 = vld [vmem:[%s4 + $0x358] sm:$0xff]
  %v3081 = vld [vmem:[%s4 + $0x360] sm:$0xff]
  %v3082 = vld [vmem:[%s4 + $0x368] sm:$0xff]
  %v3083 = vld [vmem:[%s4 + $0x370] sm:$0xff]
  %v3084 = vld [vmem:[%s4 + $0x378] sm:$0xff]
  %v3085 = vld [vmem:[%s4 + $0x380] sm:$0xff]
  %v3086 = vld [vmem:[%s4 + $0x388] sm:$0xff]
  %v3087 = vld [vmem:[%s4 + $0x390] sm:$0xff]
  %v3088 = vld [vmem:[%s4 + $0x398] sm:$0xff]
  %v3089 = vld [vmem:[%s4 + $0x3a0] sm:$0xff]
  %v3090 = vld [vmem:[%s4 + $0x3a8] sm:$0xff]
  %v3091 = vld [vmem:[%s4 + $0x3b0] sm:$0xff]
  %v3092 = vld [vmem:[%s4 + $0x3b8] sm:$0xff]
  %v3093 = vld [vmem:[%s4 + $0x3c0] sm:$0xff]
  %v3094 = vld [vmem:[%s4 + $0x3c8] sm:$0xff]
  %v3095 = vld [vmem:[%s4 + $0x3d0] sm:$0xff]
  %v3096 = vld [vmem:[%s4 + $0x3d8] sm:$0xff]
  %v3097 = vld [vmem:[%s4 + $0x3e0] sm:$0xff]
  %v3098 = vld [vmem:[%s4 + $0x3e8] sm:$0xff]
  %v3099 = vld [vmem:[%s4 + $0x3f0] sm:$0xff]
  %v3100 = vld [vmem:[%s4 + $0x3f8] sm:$0xff]
  %v3101 = vld [vmem:[%s5] sm:$0xf]
  %v3103 = vlaneseq
  %v3104 = vshrl.u32 %v3103, 7
  %v3105 = vsub.s32 0, %v3104
  %v3106 = vrot.slane %v3101, %v3105
  %v3107 = vlaneseq
  %v3108 = vshrl.u32 %v3107, 7
  %v3109 = vsub.s32 1, %v3108
  %v3110 = vrot.slane %v3101, %v3109
  %v3111 = vlaneseq
  %v3112 = vshrl.u32 %v3111, 7
  %v3113 = vsub.s32 2, %v3112
  %v3114 = vrot.slane %v3101, %v3113
  %v3115 = vlaneseq
  %v3116 = vshrl.u32 %v3115, 7
  %v3117 = vsub.s32 3, %v3116
  %v3118 = vrot.slane %v3101, %v3117
  %v3123 = vld [vmem:[#allocation2] sm:$0xff]
  %v3124 = vld [vmem:[#allocation2 + $0x8] sm:$0xff]
  %v3125 = vld [vmem:[#allocation2 + $0x10] sm:$0xff]
  %v3126 = vld [vmem:[#allocation2 + $0x18] sm:$0xff]
  %v3127 = vld [vmem:[#allocation2 + $0x20] sm:$0xff]
  %v3128 = vld [vmem:[#allocation2 + $0x28] sm:$0xff]
  %v3129 = vld [vmem:[#allocation2 + $0x30] sm:$0xff]
  %v3130 = vld [vmem:[#allocation2 + $0x38] sm:$0xff]
  %v3131 = vld [vmem:[#allocation2 + $0x40] sm:$0xff]
  %v3132 = vld [vmem:[#allocation2 + $0x48] sm:$0xff]
  %v3133 = vld [vmem:[#allocation2 + $0x50] sm:$0xff]
  %v3134 = vld [vmem:[#allocation2 + $0x58] sm:$0xff]
  %v3135 = vld [vmem:[#allocation2 + $0x60] sm:$0xff]
  %v3136 = vld [vmem:[#allocation2 + $0x68] sm:$0xff]
  %v3137 = vld [vmem:[#allocation2 + $0x70] sm:$0xff]
  %v3138 = vld [vmem:[#allocation2 + $0x78] sm:$0xff]
  %v3139 = vld [vmem:[#allocation2 + $0x80] sm:$0xff]
  %v3140 = vld [vmem:[#allocation2 + $0x88] sm:$0xff]
  %v3141 = vld [vmem:[#allocation2 + $0x90] sm:$0xff]
  %v3142 = vld [vmem:[#allocation2 + $0x98] sm:$0xff]
  %v3143 = vld [vmem:[#allocation2 + $0xa0] sm:$0xff]
  %v3144 = vld [vmem:[#allocation2 + $0xa8] sm:$0xff]
  %v3145 = vld [vmem:[#allocation2 + $0xb0] sm:$0xff]
  %v3146 = vld [vmem:[#allocation2 + $0xb8] sm:$0xff]
  %v3147 = vld [vmem:[#allocation2 + $0xc0] sm:$0xff]
  %v3148 = vld [vmem:[#allocation2 + $0xc8] sm:$0xff]
  %v3149 = vld [vmem:[#allocation2 + $0xd0] sm:$0xff]
  %v3150 = vld [vmem:[#allocation2 + $0xd8] sm:$0xff]
  %v3151 = vld [vmem:[#allocation2 + $0xe0] sm:$0xff]
  %v3152 = vld [vmem:[#allocation2 + $0xe8] sm:$0xff]
  %v3153 = vld [vmem:[#allocation2 + $0xf0] sm:$0xff]
  %v3154 = vld [vmem:[#allocation2 + $0xf8] sm:$0xff]
  %v3155 = vadd.f32 %v3123, 0.0
  %v3156 = vadd.f32 %v3124, 0.0
  %v3157 = vadd.f32 %v3125, 0.0
  %v3158 = vadd.f32 %v3126, 0.0
  %v3159 = vadd.f32 %v3127, 0.0
  %v3160 = vadd.f32 %v3128, 0.0
  %v3161 = vadd.f32 %v3129, 0.0
  %v3162 = vadd.f32 %v3130, 0.0
  %v3163 = vadd.f32 %v3131, 0.0
  %v3164 = vadd.f32 %v3132, 0.0
  %v3165 = vadd.f32 %v3133, 0.0
  %v3166 = vadd.f32 %v3134, 0.0
  %v3167 = vadd.f32 %v3135, 0.0
  %v3168 = vadd.f32 %v3136, 0.0
  %v3169 = vadd.f32 %v3137, 0.0
  %v3170 = vadd.f32 %v3138, 0.0
  %v3171 = vadd.f32 %v3139, 0.0
  %v3172 = vadd.f32 %v3140, 0.0
  %v3173 = vadd.f32 %v3141, 0.0
  %v3174 = vadd.f32 %v3142, 0.0
  %v3175 = vadd.f32 %v3143, 0.0
  %v3176 = vadd.f32 %v3144, 0.0
  %v3177 = vadd.f32 %v3145, 0.0
  %v3178 = vadd.f32 %v3146, 0.0
  %v3179 = vadd.f32 %v3147, 0.0
  %v3180 = vadd.f32 %v3148, 0.0
  %v3181 = vadd.f32 %v3149, 0.0
  %v3182 = vadd.f32 %v3150, 0.0
  %v3183 = vadd.f32 %v3151, 0.0
  %v3184 = vadd.f32 %v3152, 0.0
  %v3185 = vadd.f32 %v3153, 0.0
  %v3186 = vadd.f32 %v3154, 0.0
  %v3187 = vxor.u32 %v3155, 2147483648
  %v3188 = vxor.u32 %v3159, 2147483648
  %v3189 = vxor.u32 %v3163, 2147483648
  %v3190 = vxor.u32 %v3167, 2147483648
  %v3191 = vxor.u32 %v3171, 2147483648
  %v3192 = vxor.u32 %v3175, 2147483648
  %v3193 = vxor.u32 %v3179, 2147483648
  %v3194 = vxor.u32 %v3183, 2147483648
  %v3195 = vmul.f32 %v3187, 1.442695
  %v3196 = vpow.pop %v3195
  %v3197 = vmul.f32 %v3188, 1.442695
  %v3198 = vpow.pop %v3197
  %v3199 = vmul.f32 %v3189, 1.442695
  %v3200 = vpow.pop %v3199
  %v3201 = vmul.f32 %v3190, 1.442695
  %v3202 = vpow.pop %v3201
  %v3203 = vmul.f32 %v3191, 1.442695
  %v3204 = vpow.pop %v3203
  %v3205 = vmul.f32 %v3192, 1.442695
  %v3206 = vpow.pop %v3205
  %v3207 = vmul.f32 %v3193, 1.442695
  %v3208 = vpow.pop %v3207
  %v3209 = vmul.f32 %v3194, 1.442695
  %v3210 = vpow.pop %v3209
  %v3211 = vadd.f32 %v3196, 1.0
  %v3212 = vadd.f32 %v3198, 1.0
  %v3213 = vadd.f32 %v3200, 1.0
  %v3214 = vadd.f32 %v3202, 1.0
  %v3215 = vadd.f32 %v3204, 1.0
  %v3216 = vadd.f32 %v3206, 1.0
  %v3217 = vadd.f32 %v3208, 1.0
  %v3218 = vadd.f32 %v3210, 1.0
  %v3219 = vrcp.pop %v3211
  %v3220 = vmul.f32 1.0, %v3219
  %v3221 = vrcp.pop %v3212
  %v3222 = vmul.f32 1.0, %v3221
  %v3223 = vrcp.pop %v3213
  %v3224 = vmul.f32 1.0, %v3223
  %v3225 = vrcp.pop %v3214
  %v3226 = vmul.f32 1.0, %v3225
  %v3227 = vrcp.pop %v3215
  %v3228 = vmul.f32 1.0, %v3227
  %v3229 = vrcp.pop %v3216
  %v3230 = vmul.f32 1.0, %v3229
  %v3231 = vrcp.pop %v3217
  %v3232 = vmul.f32 1.0, %v3231
  %v3233 = vrcp.pop %v3218
  %v3234 = vmul.f32 1.0, %v3233
  %v3235 = vxor.u32 %v3156, 2147483648
  %v3236 = vxor.u32 %v3160, 2147483648
  %v3237 = vxor.u32 %v3164, 2147483648
  %v3238 = vxor.u32 %v3168, 2147483648
  %v3239 = vxor.u32 %v3172, 2147483648
  %v3240 = vxor.u32 %v3176, 2147483648
  %v3241 = vxor.u32 %v3180, 2147483648
  %v3242 = vxor.u32 %v3184, 2147483648
  %v3243 = vmul.f32 %v3235, 1.442695
  %v3244 = vpow.pop %v3243
  %v3245 = vmul.f32 %v3236, 1.442695
  %v3246 = vpow.pop %v3245
  %v3247 = vmul.f32 %v3237, 1.442695
  %v3248 = vpow.pop %v3247
  %v3249 = vmul.f32 %v3238, 1.442695
  %v3250 = vpow.pop %v3249
  %v3251 = vmul.f32 %v3239, 1.442695
  %v3252 = vpow.pop %v3251
  %v3253 = vmul.f32 %v3240, 1.442695
  %v3254 = vpow.pop %v3253
  %v3255 = vmul.f32 %v3241, 1.442695
  %v3256 = vpow.pop %v3255
  %v3257 = vmul.f32 %v3242, 1.442695
  %v3258 = vpow.pop %v3257
  %v3259 = vadd.f32 %v3244, 1.0
  %v3260 = vadd.f32 %v3246, 1.0
  %v3261 = vadd.f32 %v3248, 1.0
  %v3262 = vadd.f32 %v3250, 1.0
  %v3263 = vadd.f32 %v3252, 1.0
  %v3264 = vadd.f32 %v3254, 1.0
  %v3265 = vadd.f32 %v3256, 1.0
  %v3266 = vadd.f32 %v3258, 1.0
  %v3267 = vrcp.pop %v3259
  %v3268 = vmul.f32 1.0, %v3267
  %v3269 = vrcp.pop %v3260
  %v3270 = vmul.f32 1.0, %v3269
  %v3271 = vrcp.pop %v3261
  %v3272 = vmul.f32 1.0, %v3271
  %v3273 = vrcp.pop %v3262
  %v3274 = vmul.f32 1.0, %v3273
  %v3275 = vrcp.pop %v3263
  %v3276 = vmul.f32 1.0, %v3275
  %v3277 = vrcp.pop %v3264
  %v3278 = vmul.f32 1.0, %v3277
  %v3279 = vrcp.pop %v3265
  %v3280 = vmul.f32 1.0, %v3279
  %v3281 = vrcp.pop %v3266
  %v3282 = vmul.f32 1.0, %v3281
  %v3283 = vtanh.pop %v3157
  %v3284 = vtanh.pop %v3161
  %v3285 = vtanh.pop %v3165
  %v3286 = vtanh.pop %v3169
  %v3287 = vtanh.pop %v3173
  %v3288 = vtanh.pop %v3177
  %v3289 = vtanh.pop %v3181
  %v3290 = vtanh.pop %v3185
  %v3291 = vxor.u32 %v3158, 2147483648
  %v3292 = vxor.u32 %v3162, 2147483648
  %v3293 = vxor.u32 %v3166, 2147483648
  %v3294 = vxor.u32 %v3170, 2147483648
  %v3295 = vxor.u32 %v3174, 2147483648
  %v3296 = vxor.u32 %v3178, 2147483648
  %v3297 = vxor.u32 %v3182, 2147483648
  %v3298 = vxor.u32 %v3186, 2147483648
  %v3299 = vmul.f32 %v3291, 1.442695
  %v3300 = vpow.pop %v3299
  %v3301 = vmul.f32 %v3292, 1.442695
  %v3302 = vpow.pop %v3301
  %v3303 = vmul.f32 %v3293, 1.442695
  %v3304 = vpow.pop %v3303
  %v3305 = vmul.f32 %v3294, 1.442695
  %v3306 = vpow.pop %v3305
  %v3307 = vmul.f32 %v3295, 1.442695
  %v3308 = vpow.pop %v3307
  %v3309 = vmul.f32 %v3296, 1.442695
  %v3310 = vpow.pop %v3309
  %v3311 = vmul.f32 %v3297, 1.442695
  %v3312 = vpow.pop %v3311
  %v3313 = vmul.f32 %v3298, 1.442695
  %v3314 = vpow.pop %v3313
  %v3315 = vadd.f32 %v3300, 1.0
  %v3316 = vadd.f32 %v3302, 1.0
  %v3317 = vadd.f32 %v3304, 1.0
  %v3318 = vadd.f32 %v3306, 1.0
  %v3319 = vadd.f32 %v3308, 1.0
  %v3320 = vadd.f32 %v3310, 1.0
  %v3321 = vadd.f32 %v3312, 1.0
  %v3322 = vadd.f32 %v3314, 1.0
  %v3323 = vrcp.pop %v3315
  %v3324 = vmul.f32 1.0, %v3323
  %v3325 = vrcp.pop %v3316
  %v3326 = vmul.f32 1.0, %v3325
  %v3327 = vrcp.pop %v3317
  %v3328 = vmul.f32 1.0, %v3327
  %v3329 = vrcp.pop %v3318
  %v3330 = vmul.f32 1.0, %v3329
  %v3331 = vrcp.pop %v3319
  %v3332 = vmul.f32 1.0, %v3331
  %v3333 = vrcp.pop %v3320
  %v3334 = vmul.f32 1.0, %v3333
  %v3335 = vrcp.pop %v3321
  %v3336 = vmul.f32 1.0, %v3335
  %v3337 = vrcp.pop %v3322
  %v3338 = vmul.f32 1.0, %v3337
  %v3339 = vmul.f32 %v3268, 0.0
  %v3340 = vmul.f32 %v3270, 0.0
  %v3341 = vmul.f32 %v3272, 0.0
  %v3342 = vmul.f32 %v3274, 0.0
  %v3343 = vmul.f32 %v3276, 0.0
  %v3344 = vmul.f32 %v3278, 0.0
  %v3345 = vmul.f32 %v3280, 0.0
  %v3346 = vmul.f32 %v3282, 0.0
  %v3347 = vmul.f32 %v3220, %v3283
  %v3348 = vmul.f32 %v3222, %v3284
  %v3349 = vmul.f32 %v3224, %v3285
  %v3350 = vmul.f32 %v3226, %v3286
  %v3351 = vmul.f32 %v3228, %v3287
  %v3352 = vmul.f32 %v3230, %v3288
  %v3353 = vmul.f32 %v3232, %v3289
  %v3354 = vmul.f32 %v3234, %v3290
  %v3355 = vadd.f32 %v3339, %v3347
  %v3356 = vadd.f32 %v3340, %v3348
  %v3357 = vadd.f32 %v3341, %v3349
  %v3358 = vadd.f32 %v3342, %v3350
  %v3359 = vadd.f32 %v3343, %v3351
  %v3360 = vadd.f32 %v3344, %v3352
  %v3361 = vadd.f32 %v3345, %v3353
  %v3362 = vadd.f32 %v3346, %v3354
  %v3363 = vtanh.pop %v3355
  %v3364 = vtanh.pop %v3356
  %v3365 = vtanh.pop %v3357
  %v3366 = vtanh.pop %v3358
  %v3367 = vtanh.pop %v3359
  %v3368 = vtanh.pop %v3360
  %v3369 = vtanh.pop %v3361
  %v3370 = vtanh.pop %v3362
  %v3371 = vmul.f32 %v3324, %v3363
  %v3372 = vmul.f32 %v3326, %v3364
  %v3373 = vmul.f32 %v3328, %v3365
  %v3374 = vmul.f32 %v3330, %v3366
  %v3375 = vmul.f32 %v3332, %v3367
  %v3376 = vmul.f32 %v3334, %v3368
  %v3377 = vmul.f32 %v3336, %v3369
  %v3378 = vmul.f32 %v3338, %v3370
  %v3379 = vpack.c.bf16 %v3372, %v3371
  %v3380 = vpack.c.bf16 %v3374, %v3373
  %v3381 = vpack.c.bf16 %v3376, %v3375
  %v3382 = vpack.c.bf16 %v3378, %v3377
  %v3511 = vunpack.c.l.b16 %v2973
  %v3512 = vunpack.c.h.b16 %v2973
  %v3513 = vunpack.c.l.b16 %v2974
  %v3514 = vunpack.c.h.b16 %v2974
  %v3515 = vunpack.c.l.b16 %v2975
  %v3516 = vunpack.c.h.b16 %v2975
  %v3517 = vunpack.c.l.b16 %v2976
  %v3518 = vunpack.c.h.b16 %v2976
  %v3519 = vunpack.c.l.b16 %v2977
  %v3520 = vunpack.c.h.b16 %v2977
  %v3521 = vunpack.c.l.b16 %v2978
  %v3522 = vunpack.c.h.b16 %v2978
  %v3523 = vunpack.c.l.b16 %v2979
  %v3524 = vunpack.c.h.b16 %v2979
  %v3525 = vunpack.c.l.b16 %v2980
  %v3526 = vunpack.c.h.b16 %v2980
  %v3527 = vunpack.c.l.b16 %v2981
  %v3528 = vunpack.c.h.b16 %v2981
  %v3529 = vunpack.c.l.b16 %v2982
  %v3530 = vunpack.c.h.b16 %v2982
  %v3531 = vunpack.c.l.b16 %v2983
  %v3532 = vunpack.c.h.b16 %v2983
  %v3533 = vunpack.c.l.b16 %v2984
  %v3534 = vunpack.c.h.b16 %v2984
  %v3535 = vunpack.c.l.b16 %v2985
  %v3536 = vunpack.c.h.b16 %v2985
  %v3537 = vunpack.c.l.b16 %v2986
  %v3538 = vunpack.c.h.b16 %v2986
  %v3539 = vunpack.c.l.b16 %v2987
  %v3540 = vunpack.c.h.b16 %v2987
  %v3541 = vunpack.c.l.b16 %v2988
  %v3542 = vunpack.c.h.b16 %v2988
  %v3543 = vunpack.c.l.b16 %v2989
  %v3544 = vunpack.c.h.b16 %v2989
  %v3545 = vunpack.c.l.b16 %v2990
  %v3546 = vunpack.c.h.b16 %v2990
  %v3547 = vunpack.c.l.b16 %v2991
  %v3548 = vunpack.c.h.b16 %v2991
  %v3549 = vunpack.c.l.b16 %v2992
  %v3550 = vunpack.c.h.b16 %v2992
  %v3551 = vunpack.c.l.b16 %v2993
  %v3552 = vunpack.c.h.b16 %v2993
  %v3553 = vunpack.c.l.b16 %v2994
  %v3554 = vunpack.c.h.b16 %v2994
  %v3555 = vunpack.c.l.b16 %v2995
  %v3556 = vunpack.c.h.b16 %v2995
  %v3557 = vunpack.c.l.b16 %v2996
  %v3558 = vunpack.c.h.b16 %v2996
  %v3559 = vunpack.c.l.b16 %v2997
  %v3560 = vunpack.c.h.b16 %v2997
  %v3561 = vunpack.c.l.b16 %v2998
  %v3562 = vunpack.c.h.b16 %v2998
  %v3563 = vunpack.c.l.b16 %v2999
  %v3564 = vunpack.c.h.b16 %v2999
  %v3565 = vunpack.c.l.b16 %v3000
  %v3566 = vunpack.c.h.b16 %v3000
  %v3567 = vunpack.c.l.b16 %v3001
  %v3568 = vunpack.c.h.b16 %v3001
  %v3569 = vunpack.c.l.b16 %v3002
  %v3570 = vunpack.c.h.b16 %v3002
  %v3571 = vunpack.c.l.b16 %v3003
  %v3572 = vunpack.c.h.b16 %v3003
  %v3573 = vunpack.c.l.b16 %v3004
  %v3574 = vunpack.c.h.b16 %v3004
  %v3575 = vunpack.c.l.b16 %v3005
  %v3576 = vunpack.c.h.b16 %v3005
  %v3577 = vunpack.c.l.b16 %v3006
  %v3578 = vunpack.c.h.b16 %v3006
  %v3579 = vunpack.c.l.b16 %v3007
  %v3580 = vunpack.c.h.b16 %v3007
  %v3581 = vunpack.c.l.b16 %v3008
  %v3582 = vunpack.c.h.b16 %v3008
  %v3583 = vunpack.c.l.b16 %v3009
  %v3584 = vunpack.c.h.b16 %v3009
  %v3585 = vunpack.c.l.b16 %v3010
  %v3586 = vunpack.c.h.b16 %v3010
  %v3587 = vunpack.c.l.b16 %v3011
  %v3588 = vunpack.c.h.b16 %v3011
  %v3589 = vunpack.c.l.b16 %v3012
  %v3590 = vunpack.c.h.b16 %v3012
  %v3591 = vunpack.c.l.b16 %v3013
  %v3592 = vunpack.c.h.b16 %v3013
  %v3593 = vunpack.c.l.b16 %v3014
  %v3594 = vunpack.c.h.b16 %v3014
  %v3595 = vunpack.c.l.b16 %v3015
  %v3596 = vunpack.c.h.b16 %v3015
  %v3597 = vunpack.c.l.b16 %v3016
  %v3598 = vunpack.c.h.b16 %v3016
  %v3599 = vunpack.c.l.b16 %v3017
  %v3600 = vunpack.c.h.b16 %v3017
  %v3601 = vunpack.c.l.b16 %v3018
  %v3602 = vunpack.c.h.b16 %v3018
  %v3603 = vunpack.c.l.b16 %v3019
  %v3604 = vunpack.c.h.b16 %v3019
  %v3605 = vunpack.c.l.b16 %v3020
  %v3606 = vunpack.c.h.b16 %v3020
  %v3607 = vunpack.c.l.b16 %v3021
  %v3608 = vunpack.c.h.b16 %v3021
  %v3609 = vunpack.c.l.b16 %v3022
  %v3610 = vunpack.c.h.b16 %v3022
  %v3611 = vunpack.c.l.b16 %v3023
  %v3612 = vunpack.c.h.b16 %v3023
  %v3613 = vunpack.c.l.b16 %v3024
  %v3614 = vunpack.c.h.b16 %v3024
  %v3615 = vunpack.c.l.b16 %v3025
  %v3616 = vunpack.c.h.b16 %v3025
  %v3617 = vunpack.c.l.b16 %v3026
  %v3618 = vunpack.c.h.b16 %v3026
  %v3619 = vunpack.c.l.b16 %v3027
  %v3620 = vunpack.c.h.b16 %v3027
  %v3621 = vunpack.c.l.b16 %v3028
  %v3622 = vunpack.c.h.b16 %v3028
  %v3623 = vunpack.c.l.b16 %v3029
  %v3624 = vunpack.c.h.b16 %v3029
  %v3625 = vunpack.c.l.b16 %v3030
  %v3626 = vunpack.c.h.b16 %v3030
  %v3627 = vunpack.c.l.b16 %v3031
  %v3628 = vunpack.c.h.b16 %v3031
  %v3629 = vunpack.c.l.b16 %v3032
  %v3630 = vunpack.c.h.b16 %v3032
  %v3631 = vunpack.c.l.b16 %v3033
  %v3632 = vunpack.c.h.b16 %v3033
  %v3633 = vunpack.c.l.b16 %v3034
  %v3634 = vunpack.c.h.b16 %v3034
  %v3635 = vunpack.c.l.b16 %v3035
  %v3636 = vunpack.c.h.b16 %v3035
  %v3637 = vunpack.c.l.b16 %v3036
  %v3638 = vunpack.c.h.b16 %v3036
  %v3639 = vunpack.c.l.b16 %v3037
  %v3640 = vunpack.c.h.b16 %v3037
  %v3641 = vunpack.c.l.b16 %v3038
  %v3642 = vunpack.c.h.b16 %v3038
  %v3643 = vunpack.c.l.b16 %v3039
  %v3644 = vunpack.c.h.b16 %v3039
  %v3645 = vunpack.c.l.b16 %v3040
  %v3646 = vunpack.c.h.b16 %v3040
  %v3647 = vunpack.c.l.b16 %v3041
  %v3648 = vunpack.c.h.b16 %v3041
  %v3649 = vunpack.c.l.b16 %v3042
  %v3650 = vunpack.c.h.b16 %v3042
  %v3651 = vunpack.c.l.b16 %v3043
  %v3652 = vunpack.c.h.b16 %v3043
  %v3653 = vunpack.c.l.b16 %v3044
  %v3654 = vunpack.c.h.b16 %v3044
  %v3655 = vunpack.c.l.b16 %v3045
  %v3656 = vunpack.c.h.b16 %v3045
  %v3657 = vunpack.c.l.b16 %v3046
  %v3658 = vunpack.c.h.b16 %v3046
  %v3659 = vunpack.c.l.b16 %v3047
  %v3660 = vunpack.c.h.b16 %v3047
  %v3661 = vunpack.c.l.b16 %v3048
  %v3662 = vunpack.c.h.b16 %v3048
  %v3663 = vunpack.c.l.b16 %v3049
  %v3664 = vunpack.c.h.b16 %v3049
  %v3665 = vunpack.c.l.b16 %v3050
  %v3666 = vunpack.c.h.b16 %v3050
  %v3667 = vunpack.c.l.b16 %v3051
  %v3668 = vunpack.c.h.b16 %v3051
  %v3669 = vunpack.c.l.b16 %v3052
  %v3670 = vunpack.c.h.b16 %v3052
  %v3671 = vunpack.c.l.b16 %v3053
  %v3672 = vunpack.c.h.b16 %v3053
  %v3673 = vunpack.c.l.b16 %v3054
  %v3674 = vunpack.c.h.b16 %v3054
  %v3675 = vunpack.c.l.b16 %v3055
  %v3676 = vunpack.c.h.b16 %v3055
  %v3677 = vunpack.c.l.b16 %v3056
  %v3678 = vunpack.c.h.b16 %v3056
  %v3679 = vunpack.c.l.b16 %v3057
  %v3680 = vunpack.c.h.b16 %v3057
  %v3681 = vunpack.c.l.b16 %v3058
  %v3682 = vunpack.c.h.b16 %v3058
  %v3683 = vunpack.c.l.b16 %v3059
  %v3684 = vunpack.c.h.b16 %v3059
  %v3685 = vunpack.c.l.b16 %v3060
  %v3686 = vunpack.c.h.b16 %v3060
  %v3687 = vunpack.c.l.b16 %v3061
  %v3688 = vunpack.c.h.b16 %v3061
  %v3689 = vunpack.c.l.b16 %v3062
  %v3690 = vunpack.c.h.b16 %v3062
  %v3691 = vunpack.c.l.b16 %v3063
  %v3692 = vunpack.c.h.b16 %v3063
  %v3693 = vunpack.c.l.b16 %v3064
  %v3694 = vunpack.c.h.b16 %v3064
  %v3695 = vunpack.c.l.b16 %v3065
  %v3696 = vunpack.c.h.b16 %v3065
  %v3697 = vunpack.c.l.b16 %v3066
  %v3698 = vunpack.c.h.b16 %v3066
  %v3699 = vunpack.c.l.b16 %v3067
  %v3700 = vunpack.c.h.b16 %v3067
  %v3701 = vunpack.c.l.b16 %v3068
  %v3702 = vunpack.c.h.b16 %v3068
  %v3703 = vunpack.c.l.b16 %v3069
  %v3704 = vunpack.c.h.b16 %v3069
  %v3705 = vunpack.c.l.b16 %v3070
  %v3706 = vunpack.c.h.b16 %v3070
  %v3707 = vunpack.c.l.b16 %v3071
  %v3708 = vunpack.c.h.b16 %v3071
  %v3709 = vunpack.c.l.b16 %v3072
  %v3710 = vunpack.c.h.b16 %v3072
  %v3711 = vunpack.c.l.b16 %v3073
  %v3712 = vunpack.c.h.b16 %v3073
  %v3713 = vunpack.c.l.b16 %v3074
  %v3714 = vunpack.c.h.b16 %v3074
  %v3715 = vunpack.c.l.b16 %v3075
  %v3716 = vunpack.c.h.b16 %v3075
  %v3717 = vunpack.c.l.b16 %v3076
  %v3718 = vunpack.c.h.b16 %v3076
  %v3719 = vunpack.c.l.b16 %v3077
  %v3720 = vunpack.c.h.b16 %v3077
  %v3721 = vunpack.c.l.b16 %v3078
  %v3722 = vunpack.c.h.b16 %v3078
  %v3723 = vunpack.c.l.b16 %v3079
  %v3724 = vunpack.c.h.b16 %v3079
  %v3725 = vunpack.c.l.b16 %v3080
  %v3726 = vunpack.c.h.b16 %v3080
  %v3727 = vunpack.c.l.b16 %v3081
  %v3728 = vunpack.c.h.b16 %v3081
  %v3729 = vunpack.c.l.b16 %v3082
  %v3730 = vunpack.c.h.b16 %v3082
  %v3731 = vunpack.c.l.b16 %v3083
  %v3732 = vunpack.c.h.b16 %v3083
  %v3733 = vunpack.c.l.b16 %v3084
  %v3734 = vunpack.c.h.b16 %v3084
  %v3735 = vunpack.c.l.b16 %v3085
  %v3736 = vunpack.c.h.b16 %v3085
  %v3737 = vunpack.c.l.b16 %v3086
  %v3738 = vunpack.c.h.b16 %v3086
  %v3739 = vunpack.c.l.b16 %v3087
  %v3740 = vunpack.c.h.b16 %v3087
  %v3741 = vunpack.c.l.b16 %v3088
  %v3742 = vunpack.c.h.b16 %v3088
  %v3743 = vunpack.c.l.b16 %v3089
  %v3744 = vunpack.c.h.b16 %v3089
  %v3745 = vunpack.c.l.b16 %v3090
  %v3746 = vunpack.c.h.b16 %v3090
  %v3747 = vunpack.c.l.b16 %v3091
  %v3748 = vunpack.c.h.b16 %v3091
  %v3749 = vunpack.c.l.b16 %v3092
  %v3750 = vunpack.c.h.b16 %v3092
  %v3751 = vunpack.c.l.b16 %v3093
  %v3752 = vunpack.c.h.b16 %v3093
  %v3753 = vunpack.c.l.b16 %v3094
  %v3754 = vunpack.c.h.b16 %v3094
  %v3755 = vunpack.c.l.b16 %v3095
  %v3756 = vunpack.c.h.b16 %v3095
  %v3757 = vunpack.c.l.b16 %v3096
  %v3758 = vunpack.c.h.b16 %v3096
  %v3759 = vunpack.c.l.b16 %v3097
  %v3760 = vunpack.c.h.b16 %v3097
  %v3761 = vunpack.c.l.b16 %v3098
  %v3762 = vunpack.c.h.b16 %v3098
  %v3763 = vunpack.c.l.b16 %v3099
  %v3764 = vunpack.c.h.b16 %v3099
  %v3765 = vunpack.c.l.b16 %v3100
  %v3766 = vunpack.c.h.b16 %v3100
  %v3767 = vpack.c.b16 %v3519, %v3511
  %v3768 = vpack.c.b16 %v3520, %v3512
  %v3769 = vpack.c.b16 %v3521, %v3513
  %v3770 = vpack.c.b16 %v3522, %v3514
  %v3771 = vpack.c.b16 %v3523, %v3515
  %v3772 = vpack.c.b16 %v3524, %v3516
  %v3773 = vpack.c.b16 %v3525, %v3517
  %v3774 = vpack.c.b16 %v3526, %v3518
  %v3775 = vpack.c.b16 %v3535, %v3527
  %v3776 = vpack.c.b16 %v3536, %v3528
  %v3777 = vpack.c.b16 %v3537, %v3529
  %v3778 = vpack.c.b16 %v3538, %v3530
  %v3779 = vpack.c.b16 %v3539, %v3531
  %v3780 = vpack.c.b16 %v3540, %v3532
  %v3781 = vpack.c.b16 %v3541, %v3533
  %v3782 = vpack.c.b16 %v3542, %v3534
  %v3783 = vpack.c.b16 %v3551, %v3543
  %v3784 = vpack.c.b16 %v3552, %v3544
  %v3785 = vpack.c.b16 %v3553, %v3545
  %v3786 = vpack.c.b16 %v3554, %v3546
  %v3787 = vpack.c.b16 %v3555, %v3547
  %v3788 = vpack.c.b16 %v3556, %v3548
  %v3789 = vpack.c.b16 %v3557, %v3549
  %v3790 = vpack.c.b16 %v3558, %v3550
  %v3791 = vpack.c.b16 %v3567, %v3559
  %v3792 = vpack.c.b16 %v3568, %v3560
  %v3793 = vpack.c.b16 %v3569, %v3561
  %v3794 = vpack.c.b16 %v3570, %v3562
  %v3795 = vpack.c.b16 %v3571, %v3563
  %v3796 = vpack.c.b16 %v3572, %v3564
  %v3797 = vpack.c.b16 %v3573, %v3565
  %v3798 = vpack.c.b16 %v3574, %v3566
  %v3799 = vpack.c.b16 %v3583, %v3575
  %v3800 = vpack.c.b16 %v3584, %v3576
  %v3801 = vpack.c.b16 %v3585, %v3577
  %v3802 = vpack.c.b16 %v3586, %v3578
  %v3803 = vpack.c.b16 %v3587, %v3579
  %v3804 = vpack.c.b16 %v3588, %v3580
  %v3805 = vpack.c.b16 %v3589, %v3581
  %v3806 = vpack.c.b16 %v3590, %v3582
  %v3807 = vpack.c.b16 %v3599, %v3591
  %v3808 = vpack.c.b16 %v3600, %v3592
  %v3809 = vpack.c.b16 %v3601, %v3593
  %v3810 = vpack.c.b16 %v3602, %v3594
  %v3811 = vpack.c.b16 %v3603, %v3595
  %v3812 = vpack.c.b16 %v3604, %v3596
  %v3813 = vpack.c.b16 %v3605, %v3597
  %v3814 = vpack.c.b16 %v3606, %v3598
  %v3815 = vpack.c.b16 %v3615, %v3607
  %v3816 = vpack.c.b16 %v3616, %v3608
  %v3817 = vpack.c.b16 %v3617, %v3609
  %v3818 = vpack.c.b16 %v3618, %v3610
  %v3819 = vpack.c.b16 %v3619, %v3611
  %v3820 = vpack.c.b16 %v3620, %v3612
  %v3821 = vpack.c.b16 %v3621, %v3613
  %v3822 = vpack.c.b16 %v3622, %v3614
  %v3823 = vpack.c.b16 %v3631, %v3623
  %v3824 = vpack.c.b16 %v3632, %v3624
  %v3825 = vpack.c.b16 %v3633, %v3625
  %v3826 = vpack.c.b16 %v3634, %v3626
  %v3827 = vpack.c.b16 %v3635, %v3627
  %v3828 = vpack.c.b16 %v3636, %v3628
  %v3829 = vpack.c.b16 %v3637, %v3629
  %v3830 = vpack.c.b16 %v3638, %v3630
  %v3831 = vpack.c.b16 %v3647, %v3639
  %v3832 = vpack.c.b16 %v3648, %v3640
  %v3833 = vpack.c.b16 %v3649, %v3641
  %v3834 = vpack.c.b16 %v3650, %v3642
  %v3835 = vpack.c.b16 %v3651, %v3643
  %v3836 = vpack.c.b16 %v3652, %v3644
  %v3837 = vpack.c.b16 %v3653, %v3645
  %v3838 = vpack.c.b16 %v3654, %v3646
  %v3839 = vpack.c.b16 %v3663, %v3655
  %v3840 = vpack.c.b16 %v3664, %v3656
  %v3841 = vpack.c.b16 %v3665, %v3657
  %v3842 = vpack.c.b16 %v3666, %v3658
  %v3843 = vpack.c.b16 %v3667, %v3659
  %v3844 = vpack.c.b16 %v3668, %v3660
  %v3845 = vpack.c.b16 %v3669, %v3661
  %v3846 = vpack.c.b16 %v3670, %v3662
  %v3847 = vpack.c.b16 %v3679, %v3671
  %v3848 = vpack.c.b16 %v3680, %v3672
  %v3849 = vpack.c.b16 %v3681, %v3673
  %v3850 = vpack.c.b16 %v3682, %v3674
  %v3851 = vpack.c.b16 %v3683, %v3675
  %v3852 = vpack.c.b16 %v3684, %v3676
  %v3853 = vpack.c.b16 %v3685, %v3677
  %v3854 = vpack.c.b16 %v3686, %v3678
  %v3855 = vpack.c.b16 %v3695, %v3687
  %v3856 = vpack.c.b16 %v3696, %v3688
  %v3857 = vpack.c.b16 %v3697, %v3689
  %v3858 = vpack.c.b16 %v3698, %v3690
  %v3859 = vpack.c.b16 %v3699, %v3691
  %v3860 = vpack.c.b16 %v3700, %v3692
  %v3861 = vpack.c.b16 %v3701, %v3693
  %v3862 = vpack.c.b16 %v3702, %v3694
  %v3863 = vpack.c.b16 %v3711, %v3703
  %v3864 = vpack.c.b16 %v3712, %v3704
  %v3865 = vpack.c.b16 %v3713, %v3705
  %v3866 = vpack.c.b16 %v3714, %v3706
  %v3867 = vpack.c.b16 %v3715, %v3707
  %v3868 = vpack.c.b16 %v3716, %v3708
  %v3869 = vpack.c.b16 %v3717, %v3709
  %v3870 = vpack.c.b16 %v3718, %v3710
  %v3871 = vpack.c.b16 %v3727, %v3719
  %v3872 = vpack.c.b16 %v3728, %v3720
  %v3873 = vpack.c.b16 %v3729, %v3721
  %v3874 = vpack.c.b16 %v3730, %v3722
  %v3875 = vpack.c.b16 %v3731, %v3723
  %v3876 = vpack.c.b16 %v3732, %v3724
  %v3877 = vpack.c.b16 %v3733, %v3725
  %v3878 = vpack.c.b16 %v3734, %v3726
  %v3879 = vpack.c.b16 %v3743, %v3735
  %v3880 = vpack.c.b16 %v3744, %v3736
  %v3881 = vpack.c.b16 %v3745, %v3737
  %v3882 = vpack.c.b16 %v3746, %v3738
  %v3883 = vpack.c.b16 %v3747, %v3739
  %v3884 = vpack.c.b16 %v3748, %v3740
  %v3885 = vpack.c.b16 %v3749, %v3741
  %v3886 = vpack.c.b16 %v3750, %v3742
  %v3887 = vpack.c.b16 %v3759, %v3751
  %v3888 = vpack.c.b16 %v3760, %v3752
  %v3889 = vpack.c.b16 %v3761, %v3753
  %v3890 = vpack.c.b16 %v3762, %v3754
  %v3891 = vpack.c.b16 %v3763, %v3755
  %v3892 = vpack.c.b16 %v3764, %v3756
  %v3893 = vpack.c.b16 %v3765, %v3757
  %v3894 = vpack.c.b16 %v3766, %v3758
  %4023 = vmatprep.subr.bf16.mxu0 %v3824
  %4024 = vmatpush1.bf16.msra.mxu0 %v3823
  %4025 = vmatprep.subr.bf16.mxu0 %v3816
  %4026 = vmatpush1.bf16.msra.mxu0 %v3815
  %4027 = vmatprep.subr.bf16.mxu0 %v3808
  %4028 = vmatpush1.bf16.msra.mxu0 %v3807
  %4029 = vmatprep.subr.bf16.mxu0 %v3800
  %4030 = vmatpush1.bf16.msra.mxu0 %v3799
  %4031 = vmatprep.subr.bf16.mxu0 %v3792
  %4032 = vmatpush1.bf16.msra.mxu0 %v3791
  %4033 = vmatprep.subr.bf16.mxu0 %v3784
  %4034 = vmatpush1.bf16.msra.mxu0 %v3783
  %4035 = vmatprep.subr.bf16.mxu0 %v3776
  %4036 = vmatpush1.bf16.msra.mxu0 %v3775
  %4037 = vmatprep.subr.bf16.mxu0 %v3768
  %4038 = vmatpush1.bf16.msra.mxu0 %v3767
  %4039 = vmatprep.subr.bf16.mxu0 %v3888
  %4040 = vmatpush2.bf16.msra.mxu0 %v3887
  %4041 = vmatprep.subr.bf16.mxu0 %v3880
  %4042 = vmatpush2.bf16.msra.mxu0 %v3879
  %4043 = vmatprep.subr.bf16.mxu0 %v3872
  %4044 = vmatpush2.bf16.msra.mxu0 %v3871
  %4045 = vmatprep.subr.bf16.mxu0 %v3864
  %4046 = vmatpush2.bf16.msra.mxu0 %v3863
  %4047 = vmatprep.subr.bf16.mxu0 %v3856
  %4048 = vmatpush2.bf16.msra.mxu0 %v3855
  %4049 = vmatprep.subr.bf16.mxu0 %v3848
  %4050 = vmatpush2.bf16.msra.mxu0 %v3847
  %4051 = vmatprep.subr.bf16.mxu0 %v3840
  %4052 = vmatpush2.bf16.msra.mxu0 %v3839
  %4053 = vmatprep.subr.bf16.mxu0 %v3832
  %4054 = vmatpush2.bf16.msra.mxu0 %v3831
  %4055 = vmatprep.mubr.bf16.mxu0 0
  %4056 = vmatmul.mubr.bf16.gmra.mxu0 %v3379
  %v4057 = vpop.f32.mrf.mxu0
  %v4058 = vadd.f32 0.0, %v4057
  %v4059 = vpop.f32.mrf.mxu0
  %v4060 = vadd.f32 0.0, %v4059
  %v4061 = vpop.f32.mrf.mxu0
  %v4062 = vadd.f32 0.0, %v4061
  %v4063 = vpop.f32.mrf.mxu0
  %v4064 = vadd.f32 0.0, %v4063
  %4065 = vmatprep.mubr.bf16.mxu0 0
  %4066 = vmatmul.mubr.bf16.gmra.mxu0 %v3380
  %v4067 = vpop.f32.mrf.mxu0
  %v4068 = vadd.f32 0.0, %v4067
  %v4069 = vpop.f32.mrf.mxu0
  %v4070 = vadd.f32 0.0, %v4069
  %v4071 = vpop.f32.mrf.mxu0
  %v4072 = vadd.f32 0.0, %v4071
  %v4073 = vpop.f32.mrf.mxu0
  %v4074 = vadd.f32 0.0, %v4073
  %4075 = vmatprep.mubr.bf16.mxu0 0
  %4076 = vmatmul.mubr.bf16.gmra.mxu0 %v3381
  %v4077 = vpop.f32.mrf.mxu0
  %v4078 = vadd.f32 0.0, %v4077
  %v4079 = vpop.f32.mrf.mxu0
  %v4080 = vadd.f32 0.0, %v4079
  %v4081 = vpop.f32.mrf.mxu0
  %v4082 = vadd.f32 0.0, %v4081
  %v4083 = vpop.f32.mrf.mxu0
  %v4084 = vadd.f32 0.0, %v4083
  %4085 = vmatprep.mubr.bf16.mxu0 0
  %4086 = vmatmul.mubr.bf16.gmra.mxu0 %v3382
  %v4087 = vpop.f32.mrf.mxu0
  %v4088 = vadd.f32 0.0, %v4087
  %v4089 = vpop.f32.mrf.mxu0
  %v4090 = vadd.f32 0.0, %v4089
  %v4091 = vpop.f32.mrf.mxu0
  %v4092 = vadd.f32 0.0, %v4091
  %v4093 = vpop.f32.mrf.mxu0
  %v4094 = vadd.f32 0.0, %v4093
  %4095 = vdwg.mxu0
  %4096 = vmatprep.subr.bf16.mxu0 %v3826
  %4097 = vmatpush1.bf16.msra.mxu0 %v3825
  %4098 = vmatprep.subr.bf16.mxu0 %v3818
  %4099 = vmatpush1.bf16.msra.mxu0 %v3817
  %4100 = vmatprep.subr.bf16.mxu0 %v3810
  %4101 = vmatpush1.bf16.msra.mxu0 %v3809
  %4102 = vmatprep.subr.bf16.mxu0 %v3802
  %4103 = vmatpush1.bf16.msra.mxu0 %v3801
  %4104 = vmatprep.subr.bf16.mxu0 %v3794
  %4105 = vmatpush1.bf16.msra.mxu0 %v3793
  %4106 = vmatprep.subr.bf16.mxu0 %v3786
  %4107 = vmatpush1.bf16.msra.mxu0 %v3785
  %4108 = vmatprep.subr.bf16.mxu0 %v3778
  %4109 = vmatpush1.bf16.msra.mxu0 %v3777
  %4110 = vmatprep.subr.bf16.mxu0 %v3770
  %4111 = vmatpush1.bf16.msra.mxu0 %v3769
  %4112 = vmatprep.subr.bf16.mxu0 %v3890
  %4113 = vmatpush2.bf16.msra.mxu0 %v3889
  %4114 = vmatprep.subr.bf16.mxu0 %v3882
  %4115 = vmatpush2.bf16.msra.mxu0 %v3881
  %4116 = vmatprep.subr.bf16.mxu0 %v3874
  %4117 = vmatpush2.bf16.msra.mxu0 %v3873
  %4118 = vmatprep.subr.bf16.mxu0 %v3866
  %4119 = vmatpush2.bf16.msra.mxu0 %v3865
  %4120 = vmatprep.subr.bf16.mxu0 %v3858
  %4121 = vmatpush2.bf16.msra.mxu0 %v3857
  %4122 = vmatprep.subr.bf16.mxu0 %v3850
  %4123 = vmatpush2.bf16.msra.mxu0 %v3849
  %4124 = vmatprep.subr.bf16.mxu0 %v3842
  %4125 = vmatpush2.bf16.msra.mxu0 %v3841
  %4126 = vmatprep.subr.bf16.mxu0 %v3834
  %4127 = vmatpush2.bf16.msra.mxu0 %v3833
  %4128 = vmatprep.mubr.bf16.mxu0 0
  %4129 = vmatmul.mubr.bf16.gmra.mxu0 %v3379
  %v4130 = vpop.f32.mrf.mxu0
  %v4131 = vadd.f32 0.0, %v4130
  %v4132 = vpop.f32.mrf.mxu0
  %v4133 = vadd.f32 0.0, %v4132
  %v4134 = vpop.f32.mrf.mxu0
  %v4135 = vadd.f32 0.0, %v4134
  %v4136 = vpop.f32.mrf.mxu0
  %v4137 = vadd.f32 0.0, %v4136
  %4138 = vmatprep.mubr.bf16.mxu0 0
  %4139 = vmatmul.mubr.bf16.gmra.mxu0 %v3380
  %v4140 = vpop.f32.mrf.mxu0
  %v4141 = vadd.f32 0.0, %v4140
  %v4142 = vpop.f32.mrf.mxu0
  %v4143 = vadd.f32 0.0, %v4142
  %v4144 = vpop.f32.mrf.mxu0
  %v4145 = vadd.f32 0.0, %v4144
  %v4146 = vpop.f32.mrf.mxu0
  %v4147 = vadd.f32 0.0, %v4146
  %4148 = vmatprep.mubr.bf16.mxu0 0
  %4149 = vmatmul.mubr.bf16.gmra.mxu0 %v3381
  %v4150 = vpop.f32.mrf.mxu0
  %v4151 = vadd.f32 0.0, %v4150
  %v4152 = vpop.f32.mrf.mxu0
  %v4153 = vadd.f32 0.0, %v4152
  %v4154 = vpop.f32.mrf.mxu0
  %v4155 = vadd.f32 0.0, %v4154
  %v4156 = vpop.f32.mrf.mxu0
  %v4157 = vadd.f32 0.0, %v4156
  %4158 = vmatprep.mubr.bf16.mxu0 0
  %4159 = vmatmul.mubr.bf16.gmra.mxu0 %v3382
  %v4160 = vpop.f32.mrf.mxu0
  %v4161 = vadd.f32 0.0, %v4160
  %v4162 = vpop.f32.mrf.mxu0
  %v4163 = vadd.f32 0.0, %v4162
  %v4164 = vpop.f32.mrf.mxu0
  %v4165 = vadd.f32 0.0, %v4164
  %v4166 = vpop.f32.mrf.mxu0
  %v4167 = vadd.f32 0.0, %v4166
  %4168 = vdwg.mxu0
  %4169 = vmatprep.subr.bf16.mxu0 %v3828
  %4170 = vmatpush1.bf16.msra.mxu0 %v3827
  %4171 = vmatprep.subr.bf16.mxu0 %v3820
  %4172 = vmatpush1.bf16.msra.mxu0 %v3819
  %4173 = vmatprep.subr.bf16.mxu0 %v3812
  %4174 = vmatpush1.bf16.msra.mxu0 %v3811
  %4175 = vmatprep.subr.bf16.mxu0 %v3804
  %4176 = vmatpush1.bf16.msra.mxu0 %v3803
  %4177 = vmatprep.subr.bf16.mxu0 %v3796
  %4178 = vmatpush1.bf16.msra.mxu0 %v3795
  %4179 = vmatprep.subr.bf16.mxu0 %v3788
  %4180 = vmatpush1.bf16.msra.mxu0 %v3787
  %4181 = vmatprep.subr.bf16.mxu0 %v3780
  %4182 = vmatpush1.bf16.msra.mxu0 %v3779
  %4183 = vmatprep.subr.bf16.mxu0 %v3772
  %4184 = vmatpush1.bf16.msra.mxu0 %v3771
  %4185 = vmatprep.subr.bf16.mxu0 %v3892
  %4186 = vmatpush2.bf16.msra.mxu0 %v3891
  %4187 = vmatprep.subr.bf16.mxu0 %v3884
  %4188 = vmatpush2.bf16.msra.mxu0 %v3883
  %4189 = vmatprep.subr.bf16.mxu0 %v3876
  %4190 = vmatpush2.bf16.msra.mxu0 %v3875
  %4191 = vmatprep.subr.bf16.mxu0 %v3868
  %4192 = vmatpush2.bf16.msra.mxu0 %v3867
  %4193 = vmatprep.subr.bf16.mxu0 %v3860
  %4194 = vmatpush2.bf16.msra.mxu0 %v3859
  %4195 = vmatprep.subr.bf16.mxu0 %v3852
  %4196 = vmatpush2.bf16.msra.mxu0 %v3851
  %4197 = vmatprep.subr.bf16.mxu0 %v3844
  %4198 = vmatpush2.bf16.msra.mxu0 %v3843
  %4199 = vmatprep.subr.bf16.mxu0 %v3836
  %4200 = vmatpush2.bf16.msra.mxu0 %v3835
  %4201 = vmatprep.mubr.bf16.mxu0 0
  %4202 = vmatmul.mubr.bf16.gmra.mxu0 %v3379
  %v4203 = vpop.f32.mrf.mxu0
  %v4204 = vadd.f32 0.0, %v4203
  %v4205 = vpop.f32.mrf.mxu0
  %v4206 = vadd.f32 0.0, %v4205
  %v4207 = vpop.f32.mrf.mxu0
  %v4208 = vadd.f32 0.0, %v4207
  %v4209 = vpop.f32.mrf.mxu0
  %v4210 = vadd.f32 0.0, %v4209
  %4211 = vmatprep.mubr.bf16.mxu0 0
  %4212 = vmatmul.mubr.bf16.gmra.mxu0 %v3380
  %v4213 = vpop.f32.mrf.mxu0
  %v4214 = vadd.f32 0.0, %v4213
  %v4215 = vpop.f32.mrf.mxu0
  %v4216 = vadd.f32 0.0, %v4215
  %v4217 = vpop.f32.mrf.mxu0
  %v4218 = vadd.f32 0.0, %v4217
  %v4219 = vpop.f32.mrf.mxu0
  %v4220 = vadd.f32 0.0, %v4219
  %4221 = vmatprep.mubr.bf16.mxu0 0
  %4222 = vmatmul.mubr.bf16.gmra.mxu0 %v3381
  %v4223 = vpop.f32.mrf.mxu0
  %v4224 = vadd.f32 0.0, %v4223
  %v4225 = vpop.f32.mrf.mxu0
  %v4226 = vadd.f32 0.0, %v4225
  %v4227 = vpop.f32.mrf.mxu0
  %v4228 = vadd.f32 0.0, %v4227
  %v4229 = vpop.f32.mrf.mxu0
  %v4230 = vadd.f32 0.0, %v4229
  %4231 = vmatprep.mubr.bf16.mxu0 0
  %4232 = vmatmul.mubr.bf16.gmra.mxu0 %v3382
  %v4233 = vpop.f32.mrf.mxu0
  %v4234 = vadd.f32 0.0, %v4233
  %v4235 = vpop.f32.mrf.mxu0
  %v4236 = vadd.f32 0.0, %v4235
  %v4237 = vpop.f32.mrf.mxu0
  %v4238 = vadd.f32 0.0, %v4237
  %v4239 = vpop.f32.mrf.mxu0
  %v4240 = vadd.f32 0.0, %v4239
  %4241 = vdwg.mxu0
  %4242 = vmatprep.subr.bf16.mxu0 %v3830
  %4243 = vmatpush1.bf16.msra.mxu0 %v3829
  %4244 = vmatprep.subr.bf16.mxu0 %v3822
  %4245 = vmatpush1.bf16.msra.mxu0 %v3821
  %4246 = vmatprep.subr.bf16.mxu0 %v3814
  %4247 = vmatpush1.bf16.msra.mxu0 %v3813
  %4248 = vmatprep.subr.bf16.mxu0 %v3806
  %4249 = vmatpush1.bf16.msra.mxu0 %v3805
  %4250 = vmatprep.subr.bf16.mxu0 %v3798
  %4251 = vmatpush1.bf16.msra.mxu0 %v3797
  %4252 = vmatprep.subr.bf16.mxu0 %v3790
  %4253 = vmatpush1.bf16.msra.mxu0 %v3789
  %4254 = vmatprep.subr.bf16.mxu0 %v3782
  %4255 = vmatpush1.bf16.msra.mxu0 %v3781
  %4256 = vmatprep.subr.bf16.mxu0 %v3774
  %4257 = vmatpush1.bf16.msra.mxu0 %v3773
  %4258 = vmatprep.subr.bf16.mxu0 %v3894
  %4259 = vmatpush2.bf16.msra.mxu0 %v3893
  %4260 = vmatprep.subr.bf16.mxu0 %v3886
  %4261 = vmatpush2.bf16.msra.mxu0 %v3885
  %4262 = vmatprep.subr.bf16.mxu0 %v3878
  %4263 = vmatpush2.bf16.msra.mxu0 %v3877
  %4264 = vmatprep.subr.bf16.mxu0 %v3870
  %4265 = vmatpush2.bf16.msra.mxu0 %v3869
  %4266 = vmatprep.subr.bf16.mxu0 %v3862
  %4267 = vmatpush2.bf16.msra.mxu0 %v3861
  %4268 = vmatprep.subr.bf16.mxu0 %v3854
  %4269 = vmatpush2.bf16.msra.mxu0 %v3853
  %4270 = vmatprep.subr.bf16.mxu0 %v3846
  %4271 = vmatpush2.bf16.msra.mxu0 %v3845
  %4272 = vmatprep.subr.bf16.mxu0 %v3838
  %4273 = vmatpush2.bf16.msra.mxu0 %v3837
  %4274 = vmatprep.mubr.bf16.mxu0 0
  %4275 = vmatmul.mubr.bf16.gmra.mxu0 %v3379
  %v4276 = vpop.f32.mrf.mxu0
  %v4277 = vadd.f32 0.0, %v4276
  %v4278 = vpop.f32.mrf.mxu0
  %v4279 = vadd.f32 0.0, %v4278
  %v4280 = vpop.f32.mrf.mxu0
  %v4281 = vadd.f32 0.0, %v4280
  %v4282 = vpop.f32.mrf.mxu0
  %v4283 = vadd.f32 0.0, %v4282
  %4284 = vmatprep.mubr.bf16.mxu0 0
  %4285 = vmatmul.mubr.bf16.gmra.mxu0 %v3380
  %v4286 = vpop.f32.mrf.mxu0
  %v4287 = vadd.f32 0.0, %v4286
  %v4288 = vpop.f32.mrf.mxu0
  %v4289 = vadd.f32 0.0, %v4288
  %v4290 = vpop.f32.mrf.mxu0
  %v4291 = vadd.f32 0.0, %v4290
  %v4292 = vpop.f32.mrf.mxu0
  %v4293 = vadd.f32 0.0, %v4292
  %4294 = vmatprep.mubr.bf16.mxu0 0
  %4295 = vmatmul.mubr.bf16.gmra.mxu0 %v3381
  %v4296 = vpop.f32.mrf.mxu0
  %v4297 = vadd.f32 0.0, %v4296
  %v4298 = vpop.f32.mrf.mxu0
  %v4299 = vadd.f32 0.0, %v4298
  %v4300 = vpop.f32.mrf.mxu0
  %v4301 = vadd.f32 0.0, %v4300
  %v4302 = vpop.f32.mrf.mxu0
  %v4303 = vadd.f32 0.0, %v4302
  %4304 = vmatprep.mubr.bf16.mxu0 0
  %4305 = vmatmul.mubr.bf16.gmra.mxu0 %v3382
  %v4306 = vpop.f32.mrf.mxu0
  %v4307 = vadd.f32 0.0, %v4306
  %v4308 = vpop.f32.mrf.mxu0
  %v4309 = vadd.f32 0.0, %v4308
  %v4310 = vpop.f32.mrf.mxu0
  %v4311 = vadd.f32 0.0, %v4310
  %v4312 = vpop.f32.mrf.mxu0
  %v4313 = vadd.f32 0.0, %v4312
  %4314 = vdwg.mxu0
  %v4315 = vadd.f32 %v4058, %v3106
  %v4316 = vadd.f32 %v4060, %v3110
  %v4317 = vadd.f32 %v4131, %v3114
  %v4318 = vadd.f32 %v4133, %v3118
  %v4319 = vadd.f32 %v4062, %v3106
  %v4320 = vadd.f32 %v4064, %v3110
  %v4321 = vadd.f32 %v4135, %v3114
  %v4322 = vadd.f32 %v4137, %v3118
  %v4323 = vadd.f32 %v4068, %v3106
  %v4324 = vadd.f32 %v4070, %v3110
  %v4325 = vadd.f32 %v4141, %v3114
  %v4326 = vadd.f32 %v4143, %v3118
  %v4327 = vadd.f32 %v4072, %v3106
  %v4328 = vadd.f32 %v4074, %v3110
  %v4329 = vadd.f32 %v4145, %v3114
  %v4330 = vadd.f32 %v4147, %v3118
  %v4331 = vadd.f32 %v4078, %v3106
  %v4332 = vadd.f32 %v4080, %v3110
  %v4333 = vadd.f32 %v4151, %v3114
  %v4334 = vadd.f32 %v4153, %v3118
  %v4335 = vadd.f32 %v4082, %v3106
  %v4336 = vadd.f32 %v4084, %v3110
  %v4337 = vadd.f32 %v4155, %v3114
  %v4338 = vadd.f32 %v4157, %v3118
  %v4339 = vadd.f32 %v4088, %v3106
  %v4340 = vadd.f32 %v4090, %v3110
  %v4341 = vadd.f32 %v4161, %v3114
  %v4342 = vadd.f32 %v4163, %v3118
  %v4343 = vadd.f32 %v4092, %v3106
  %v4344 = vadd.f32 %v4094, %v3110
  %v4345 = vadd.f32 %v4165, %v3114
  %v4346 = vadd.f32 %v4167, %v3118
  %v4347 = vxor.u32 %v4315, 2147483648
  %v4348 = vxor.u32 %v4319, 2147483648
  %v4349 = vxor.u32 %v4323, 2147483648
  %v4350 = vxor.u32 %v4327, 2147483648
  %v4351 = vxor.u32 %v4331, 2147483648
  %v4352 = vxor.u32 %v4335, 2147483648
  %v4353 = vxor.u32 %v4339, 2147483648
  %v4354 = vxor.u32 %v4343, 2147483648
  %v4355 = vmul.f32 %v4347, 1.442695
  %v4356 = vpow.pop %v4355
  %v4357 = vmul.f32 %v4348, 1.442695
  %v4358 = vpow.pop %v4357
  %v4359 = vmul.f32 %v4349, 1.442695
  %v4360 = vpow.pop %v4359
  %v4361 = vmul.f32 %v4350, 1.442695
  %v4362 = vpow.pop %v4361
  %v4363 = vmul.f32 %v4351, 1.442695
  %v4364 = vpow.pop %v4363
  %v4365 = vmul.f32 %v4352, 1.442695
  %v4366 = vpow.pop %v4365
  %v4367 = vmul.f32 %v4353, 1.442695
  %v4368 = vpow.pop %v4367
  %v4369 = vmul.f32 %v4354, 1.442695
  %v4370 = vpow.pop %v4369
  %v4371 = vadd.f32 %v4356, 1.0
  %v4372 = vadd.f32 %v4358, 1.0
  %v4373 = vadd.f32 %v4360, 1.0
  %v4374 = vadd.f32 %v4362, 1.0
  %v4375 = vadd.f32 %v4364, 1.0
  %v4376 = vadd.f32 %v4366, 1.0
  %v4377 = vadd.f32 %v4368, 1.0
  %v4378 = vadd.f32 %v4370, 1.0
  %v4379 = vrcp.pop %v4371
  %v4380 = vmul.f32 1.0, %v4379
  %v4381 = vrcp.pop %v4372
  %v4382 = vmul.f32 1.0, %v4381
  %v4383 = vrcp.pop %v4373
  %v4384 = vmul.f32 1.0, %v4383
  %v4385 = vrcp.pop %v4374
  %v4386 = vmul.f32 1.0, %v4385
  %v4387 = vrcp.pop %v4375
  %v4388 = vmul.f32 1.0, %v4387
  %v4389 = vrcp.pop %v4376
  %v4390 = vmul.f32 1.0, %v4389
  %v4391 = vrcp.pop %v4377
  %v4392 = vmul.f32 1.0, %v4391
  %v4393 = vrcp.pop %v4378
  %v4394 = vmul.f32 1.0, %v4393
  %v4395 = vxor.u32 %v4316, 2147483648
  %v4396 = vxor.u32 %v4320, 2147483648
  %v4397 = vxor.u32 %v4324, 2147483648
  %v4398 = vxor.u32 %v4328, 2147483648
  %v4399 = vxor.u32 %v4332, 2147483648
  %v4400 = vxor.u32 %v4336, 2147483648
  %v4401 = vxor.u32 %v4340, 2147483648
  %v4402 = vxor.u32 %v4344, 2147483648
  %v4403 = vmul.f32 %v4395, 1.442695
  %v4404 = vpow.pop %v4403
  %v4405 = vmul.f32 %v4396, 1.442695
  %v4406 = vpow.pop %v4405
  %v4407 = vmul.f32 %v4397, 1.442695
  %v4408 = vpow.pop %v4407
  %v4409 = vmul.f32 %v4398, 1.442695
  %v4410 = vpow.pop %v4409
  %v4411 = vmul.f32 %v4399, 1.442695
  %v4412 = vpow.pop %v4411
  %v4413 = vmul.f32 %v4400, 1.442695
  %v4414 = vpow.pop %v4413
  %v4415 = vmul.f32 %v4401, 1.442695
  %v4416 = vpow.pop %v4415
  %v4417 = vmul.f32 %v4402, 1.442695
  %v4418 = vpow.pop %v4417
  %v4419 = vadd.f32 %v4404, 1.0
  %v4420 = vadd.f32 %v4406, 1.0
  %v4421 = vadd.f32 %v4408, 1.0
  %v4422 = vadd.f32 %v4410, 1.0
  %v4423 = vadd.f32 %v4412, 1.0
  %v4424 = vadd.f32 %v4414, 1.0
  %v4425 = vadd.f32 %v4416, 1.0
  %v4426 = vadd.f32 %v4418, 1.0
  %v4427 = vrcp.pop %v4419
  %v4428 = vmul.f32 1.0, %v4427
  %v4429 = vrcp.pop %v4420
  %v4430 = vmul.f32 1.0, %v4429
  %v4431 = vrcp.pop %v4421
  %v4432 = vmul.f32 1.0, %v4431
  %v4433 = vrcp.pop %v4422
  %v4434 = vmul.f32 1.0, %v4433
  %v4435 = vrcp.pop %v4423
  %v4436 = vmul.f32 1.0, %v4435
  %v4437 = vrcp.pop %v4424
  %v4438 = vmul.f32 1.0, %v4437
  %v4439 = vrcp.pop %v4425
  %v4440 = vmul.f32 1.0, %v4439
  %v4441 = vrcp.pop %v4426
  %v4442 = vmul.f32 1.0, %v4441
  %v4443 = vtanh.pop %v4317
  %v4444 = vtanh.pop %v4321
  %v4445 = vtanh.pop %v4325
  %v4446 = vtanh.pop %v4329
  %v4447 = vtanh.pop %v4333
  %v4448 = vtanh.pop %v4337
  %v4449 = vtanh.pop %v4341
  %v4450 = vtanh.pop %v4345
  %v4451 = vxor.u32 %v4318, 2147483648
  %v4452 = vxor.u32 %v4322, 2147483648
  %v4453 = vxor.u32 %v4326, 2147483648
  %v4454 = vxor.u32 %v4330, 2147483648
  %v4455 = vxor.u32 %v4334, 2147483648
  %v4456 = vxor.u32 %v4338, 2147483648
  %v4457 = vxor.u32 %v4342, 2147483648
  %v4458 = vxor.u32 %v4346, 2147483648
  %v4459 = vmul.f32 %v4451, 1.442695
  %v4460 = vpow.pop %v4459
  %v4461 = vmul.f32 %v4452, 1.442695
  %v4462 = vpow.pop %v4461
  %v4463 = vmul.f32 %v4453, 1.442695
  %v4464 = vpow.pop %v4463
  %v4465 = vmul.f32 %v4454, 1.442695
  %v4466 = vpow.pop %v4465
  %v4467 = vmul.f32 %v4455, 1.442695
  %v4468 = vpow.pop %v4467
  %v4469 = vmul.f32 %v4456, 1.442695
  %v4470 = vpow.pop %v4469
  %v4471 = vmul.f32 %v4457, 1.442695
  %v4472 = vpow.pop %v4471
  %v4473 = vmul.f32 %v4458, 1.442695
  %v4474 = vpow.pop %v4473
  %v4475 = vadd.f32 %v4460, 1.0
  %v4476 = vadd.f32 %v4462, 1.0
  %v4477 = vadd.f32 %v4464, 1.0
  %v4478 = vadd.f32 %v4466, 1.0
  %v4479 = vadd.f32 %v4468, 1.0
  %v4480 = vadd.f32 %v4470, 1.0
  %v4481 = vadd.f32 %v4472, 1.0
  %v4482 = vadd.f32 %v4474, 1.0
  %v4483 = vrcp.pop %v4475
  %v4484 = vmul.f32 1.0, %v4483
  %v4485 = vrcp.pop %v4476
  %v4486 = vmul.f32 1.0, %v4485
  %v4487 = vrcp.pop %v4477
  %v4488 = vmul.f32 1.0, %v4487
  %v4489 = vrcp.pop %v4478
  %v4490 = vmul.f32 1.0, %v4489
  %v4491 = vrcp.pop %v4479
  %v4492 = vmul.f32 1.0, %v4491
  %v4493 = vrcp.pop %v4480
  %v4494 = vmul.f32 1.0, %v4493
  %v4495 = vrcp.pop %v4481
  %v4496 = vmul.f32 1.0, %v4495
  %v4497 = vrcp.pop %v4482
  %v4498 = vmul.f32 1.0, %v4497
  %v4499 = vmul.f32 %v4428, 0.0
  %v4500 = vmul.f32 %v4430, 0.0
  %v4501 = vmul.f32 %v4432, 0.0
  %v4502 = vmul.f32 %v4434, 0.0
  %v4503 = vmul.f32 %v4436, 0.0
  %v4504 = vmul.f32 %v4438, 0.0
  %v4505 = vmul.f32 %v4440, 0.0
  %v4506 = vmul.f32 %v4442, 0.0
  %v4507 = vmul.f32 %v4380, %v4443
  %v4508 = vmul.f32 %v4382, %v4444
  %v4509 = vmul.f32 %v4384, %v4445
  %v4510 = vmul.f32 %v4386, %v4446
  %v4511 = vmul.f32 %v4388, %v4447
  %v4512 = vmul.f32 %v4390, %v4448
  %v4513 = vmul.f32 %v4392, %v4449
  %v4514 = vmul.f32 %v4394, %v4450
  %v4515 = vadd.f32 %v4499, %v4507
  %v4516 = vadd.f32 %v4500, %v4508
  %v4517 = vadd.f32 %v4501, %v4509
  %v4518 = vadd.f32 %v4502, %v4510
  %v4519 = vadd.f32 %v4503, %v4511
  %v4520 = vadd.f32 %v4504, %v4512
  %v4521 = vadd.f32 %v4505, %v4513
  %v4522 = vadd.f32 %v4506, %v4514
  %v4523 = vtanh.pop %v4515
  %v4524 = vtanh.pop %v4516
  %v4525 = vtanh.pop %v4517
  %v4526 = vtanh.pop %v4518
  %v4527 = vtanh.pop %v4519
  %v4528 = vtanh.pop %v4520
  %v4529 = vtanh.pop %v4521
  %v4530 = vtanh.pop %v4522
  %v4531 = vmul.f32 %v4484, %v4523
  %v4532 = vmul.f32 %v4486, %v4524
  %v4533 = vmul.f32 %v4488, %v4525
  %v4534 = vmul.f32 %v4490, %v4526
  %v4535 = vmul.f32 %v4492, %v4527
  %v4536 = vmul.f32 %v4494, %v4528
  %v4537 = vmul.f32 %v4496, %v4529
  %v4538 = vmul.f32 %v4498, %v4530
  %v4539 = vpack.c.bf16 %v4532, %v4531
  %v4540 = vpack.c.bf16 %v4534, %v4533
  %v4541 = vpack.c.bf16 %v4536, %v4535
  %v4542 = vpack.c.bf16 %v4538, %v4537
  %v4543 = vld [vmem:[#allocation2 + $0x100] sm:$0xff]
  %v4544 = vld [vmem:[#allocation2 + $0x108] sm:$0xff]
  %v4545 = vld [vmem:[#allocation2 + $0x110] sm:$0xff]
  %v4546 = vld [vmem:[#allocation2 + $0x118] sm:$0xff]
  %v4547 = vld [vmem:[#allocation2 + $0x120] sm:$0xff]
  %v4548 = vld [vmem:[#allocation2 + $0x128] sm:$0xff]
  %v4549 = vld [vmem:[#allocation2 + $0x130] sm:$0xff]
  %v4550 = vld [vmem:[#allocation2 + $0x138] sm:$0xff]
  %v4551 = vld [vmem:[#allocation2 + $0x140] sm:$0xff]
  %v4552 = vld [vmem:[#allocation2 + $0x148] sm:$0xff]
  %v4553 = vld [vmem:[#allocation2 + $0x150] sm:$0xff]
  %v4554 = vld [vmem:[#allocation2 + $0x158] sm:$0xff]
  %v4555 = vld [vmem:[#allocation2 + $0x160] sm:$0xff]
  %v4556 = vld [vmem:[#allocation2 + $0x168] sm:$0xff]
  %v4557 = vld [vmem:[#allocation2 + $0x170] sm:$0xff]
  %v4558 = vld [vmem:[#allocation2 + $0x178] sm:$0xff]
  %v4559 = vld [vmem:[#allocation2 + $0x180] sm:$0xff]
  %v4560 = vld [vmem:[#allocation2 + $0x188] sm:$0xff]
  %v4561 = vld [vmem:[#allocation2 + $0x190] sm:$0xff]
  %v4562 = vld [vmem:[#allocation2 + $0x198] sm:$0xff]
  %v4563 = vld [vmem:[#allocation2 + $0x1a0] sm:$0xff]
  %v4564 = vld [vmem:[#allocation2 + $0x1a8] sm:$0xff]
  %v4565 = vld [vmem:[#allocation2 + $0x1b0] sm:$0xff]
  %v4566 = vld [vmem:[#allocation2 + $0x1b8] sm:$0xff]
  %v4567 = vld [vmem:[#allocation2 + $0x1c0] sm:$0xff]
  %v4568 = vld [vmem:[#allocation2 + $0x1c8] sm:$0xff]
  %v4569 = vld [vmem:[#allocation2 + $0x1d0] sm:$0xff]
  %v4570 = vld [vmem:[#allocation2 + $0x1d8] sm:$0xff]
  %v4571 = vld [vmem:[#allocation2 + $0x1e0] sm:$0xff]
  %v4572 = vld [vmem:[#allocation2 + $0x1e8] sm:$0xff]
  %v4573 = vld [vmem:[#allocation2 + $0x1f0] sm:$0xff]
  %v4574 = vld [vmem:[#allocation2 + $0x1f8] sm:$0xff]
  %v4575 = vadd.f32 %v4204, %v4543
  %v4576 = vadd.f32 %v4206, %v4544
  %v4577 = vadd.f32 %v4277, %v4545
  %v4578 = vadd.f32 %v4279, %v4546
  %v4579 = vadd.f32 %v4208, %v4547
  %v4580 = vadd.f32 %v4210, %v4548
  %v4581 = vadd.f32 %v4281, %v4549
  %v4582 = vadd.f32 %v4283, %v4550
  %v4583 = vadd.f32 %v4214, %v4551
  %v4584 = vadd.f32 %v4216, %v4552
  %v4585 = vadd.f32 %v4287, %v4553
  %v4586 = vadd.f32 %v4289, %v4554
  %v4587 = vadd.f32 %v4218, %v4555
  %v4588 = vadd.f32 %v4220, %v4556
  %v4589 = vadd.f32 %v4291, %v4557
  %v4590 = vadd.f32 %v4293, %v4558
  %v4591 = vadd.f32 %v4224, %v4559
  %v4592 = vadd.f32 %v4226, %v4560
  %v4593 = vadd.f32 %v4297, %v4561
  %v4594 = vadd.f32 %v4299, %v4562
  %v4595 = vadd.f32 %v4228, %v4563
  %v4596 = vadd.f32 %v4230, %v4564
  %v4597 = vadd.f32 %v4301, %v4565
  %v4598 = vadd.f32 %v4303, %v4566
  %v4599 = vadd.f32 %v4234, %v4567
  %v4600 = vadd.f32 %v4236, %v4568
  %v4601 = vadd.f32 %v4307, %v4569
  %v4602 = vadd.f32 %v4309, %v4570
  %v4603 = vadd.f32 %v4238, %v4571
  %v4604 = vadd.f32 %v4240, %v4572
  %v4605 = vadd.f32 %v4311, %v4573
  %v4606 = vadd.f32 %v4313, %v4574
  %v4607 = vxor.u32 %v4575, 2147483648
  %v4608 = vxor.u32 %v4579, 2147483648
  %v4609 = vxor.u32 %v4583, 2147483648
  %v4610 = vxor.u32 %v4587, 2147483648
  %v4611 = vxor.u32 %v4591, 2147483648
  %v4612 = vxor.u32 %v4595, 2147483648
  %v4613 = vxor.u32 %v4599, 2147483648
  %v4614 = vxor.u32 %v4603, 2147483648
  %v4615 = vmul.f32 %v4607, 1.442695
  %v4616 = vpow.pop %v4615
  %v4617 = vmul.f32 %v4608, 1.442695
  %v4618 = vpow.pop %v4617
  %v4619 = vmul.f32 %v4609, 1.442695
  %v4620 = vpow.pop %v4619
  %v4621 = vmul.f32 %v4610, 1.442695
  %v4622 = vpow.pop %v4621
  %v4623 = vmul.f32 %v4611, 1.442695
  %v4624 = vpow.pop %v4623
  %v4625 = vmul.f32 %v4612, 1.442695
  %v4626 = vpow.pop %v4625
  %v4627 = vmul.f32 %v4613, 1.442695
  %v4628 = vpow.pop %v4627
  %v4629 = vmul.f32 %v4614, 1.442695
  %v4630 = vpow.pop %v4629
  %v4631 = vadd.f32 %v4616, 1.0
  %v4632 = vadd.f32 %v4618, 1.0
  %v4633 = vadd.f32 %v4620, 1.0
  %v4634 = vadd.f32 %v4622, 1.0
  %v4635 = vadd.f32 %v4624, 1.0
  %v4636 = vadd.f32 %v4626, 1.0
  %v4637 = vadd.f32 %v4628, 1.0
  %v4638 = vadd.f32 %v4630, 1.0
  %v4639 = vrcp.pop %v4631
  %v4640 = vmul.f32 1.0, %v4639
  %v4641 = vrcp.pop %v4632
  %v4642 = vmul.f32 1.0, %v4641
  %v4643 = vrcp.pop %v4633
  %v4644 = vmul.f32 1.0, %v4643
  %v4645 = vrcp.pop %v4634
  %v4646 = vmul.f32 1.0, %v4645
  %v4647 = vrcp.pop %v4635
  %v4648 = vmul.f32 1.0, %v4647
  %v4649 = vrcp.pop %v4636
  %v4650 = vmul.f32 1.0, %v4649
  %v4651 = vrcp.pop %v4637
  %v4652 = vmul.f32 1.0, %v4651
  %v4653 = vrcp.pop %v4638
  %v4654 = vmul.f32 1.0, %v4653
  %v4655 = vxor.u32 %v4576, 2147483648
  %v4656 = vxor.u32 %v4580, 2147483648
  %v4657 = vxor.u32 %v4584, 2147483648
  %v4658 = vxor.u32 %v4588, 2147483648
  %v4659 = vxor.u32 %v4592, 2147483648
  %v4660 = vxor.u32 %v4596, 2147483648
  %v4661 = vxor.u32 %v4600, 2147483648
  %v4662 = vxor.u32 %v4604, 2147483648
  %v4663 = vmul.f32 %v4655, 1.442695
  %v4664 = vpow.pop %v4663
  %v4665 = vmul.f32 %v4656, 1.442695
  %v4666 = vpow.pop %v4665
  %v4667 = vmul.f32 %v4657, 1.442695
  %v4668 = vpow.pop %v4667
  %v4669 = vmul.f32 %v4658, 1.442695
  %v4670 = vpow.pop %v4669
  %v4671 = vmul.f32 %v4659, 1.442695
  %v4672 = vpow.pop %v4671
  %v4673 = vmul.f32 %v4660, 1.442695
  %v4674 = vpow.pop %v4673
  %v4675 = vmul.f32 %v4661, 1.442695
  %v4676 = vpow.pop %v4675
  %v4677 = vmul.f32 %v4662, 1.442695
  %v4678 = vpow.pop %v4677
  %v4679 = vadd.f32 %v4664, 1.0
  %v4680 = vadd.f32 %v4666, 1.0
  %v4681 = vadd.f32 %v4668, 1.0
  %v4682 = vadd.f32 %v4670, 1.0
  %v4683 = vadd.f32 %v4672, 1.0
  %v4684 = vadd.f32 %v4674, 1.0
  %v4685 = vadd.f32 %v4676, 1.0
  %v4686 = vadd.f32 %v4678, 1.0
  %v4687 = vrcp.pop %v4679
  %v4688 = vmul.f32 1.0, %v4687
  %v4689 = vrcp.pop %v4680
  %v4690 = vmul.f32 1.0, %v4689
  %v4691 = vrcp.pop %v4681
  %v4692 = vmul.f32 1.0, %v4691
  %v4693 = vrcp.pop %v4682
  %v4694 = vmul.f32 1.0, %v4693
  %v4695 = vrcp.pop %v4683
  %v4696 = vmul.f32 1.0, %v4695
  %v4697 = vrcp.pop %v4684
  %v4698 = vmul.f32 1.0, %v4697
  %v4699 = vrcp.pop %v4685
  %v4700 = vmul.f32 1.0, %v4699
  %v4701 = vrcp.pop %v4686
  %v4702 = vmul.f32 1.0, %v4701
  %v4703 = vtanh.pop %v4577
  %v4704 = vtanh.pop %v4581
  %v4705 = vtanh.pop %v4585
  %v4706 = vtanh.pop %v4589
  %v4707 = vtanh.pop %v4593
  %v4708 = vtanh.pop %v4597
  %v4709 = vtanh.pop %v4601
  %v4710 = vtanh.pop %v4605
  %v4711 = vxor.u32 %v4578, 2147483648
  %v4712 = vxor.u32 %v4582, 2147483648
  %v4713 = vxor.u32 %v4586, 2147483648
  %v4714 = vxor.u32 %v4590, 2147483648
  %v4715 = vxor.u32 %v4594, 2147483648
  %v4716 = vxor.u32 %v4598, 2147483648
  %v4717 = vxor.u32 %v4602, 2147483648
  %v4718 = vxor.u32 %v4606, 2147483648
  %v4719 = vmul.f32 %v4711, 1.442695
  %v4720 = vpow.pop %v4719
  %v4721 = vmul.f32 %v4712, 1.442695
  %v4722 = vpow.pop %v4721
  %v4723 = vmul.f32 %v4713, 1.442695
  %v4724 = vpow.pop %v4723
  %v4725 = vmul.f32 %v4714, 1.442695
  %v4726 = vpow.pop %v4725
  %v4727 = vmul.f32 %v4715, 1.442695
  %v4728 = vpow.pop %v4727
  %v4729 = vmul.f32 %v4716, 1.442695
  %v4730 = vpow.pop %v4729
  %v4731 = vmul.f32 %v4717, 1.442695
  %v4732 = vpow.pop %v4731
  %v4733 = vmul.f32 %v4718, 1.442695
  %v4734 = vpow.pop %v4733
  %v4735 = vadd.f32 %v4720, 1.0
  %v4736 = vadd.f32 %v4722, 1.0
  %v4737 = vadd.f32 %v4724, 1.0
  %v4738 = vadd.f32 %v4726, 1.0
  %v4739 = vadd.f32 %v4728, 1.0
  %v4740 = vadd.f32 %v4730, 1.0
  %v4741 = vadd.f32 %v4732, 1.0
  %v4742 = vadd.f32 %v4734, 1.0
  %v4743 = vrcp.pop %v4735
  %v4744 = vmul.f32 1.0, %v4743
  %v4745 = vrcp.pop %v4736
  %v4746 = vmul.f32 1.0, %v4745
  %v4747 = vrcp.pop %v4737
  %v4748 = vmul.f32 1.0, %v4747
  %v4749 = vrcp.pop %v4738
  %v4750 = vmul.f32 1.0, %v4749
  %v4751 = vrcp.pop %v4739
  %v4752 = vmul.f32 1.0, %v4751
  %v4753 = vrcp.pop %v4740
  %v4754 = vmul.f32 1.0, %v4753
  %v4755 = vrcp.pop %v4741
  %v4756 = vmul.f32 1.0, %v4755
  %v4757 = vrcp.pop %v4742
  %v4758 = vmul.f32 1.0, %v4757
  %v4759 = vmul.f32 %v4688, %v3355
  %v4760 = vmul.f32 %v4690, %v3356
  %v4761 = vmul.f32 %v4692, %v3357
  %v4762 = vmul.f32 %v4694, %v3358
  %v4763 = vmul.f32 %v4696, %v3359
  %v4764 = vmul.f32 %v4698, %v3360
  %v4765 = vmul.f32 %v4700, %v3361
  %v4766 = vmul.f32 %v4702, %v3362
  %v4767 = vmul.f32 %v4640, %v4703
  %v4768 = vmul.f32 %v4642, %v4704
  %v4769 = vmul.f32 %v4644, %v4705
  %v4770 = vmul.f32 %v4646, %v4706
  %v4771 = vmul.f32 %v4648, %v4707
  %v4772 = vmul.f32 %v4650, %v4708
  %v4773 = vmul.f32 %v4652, %v4709
  %v4774 = vmul.f32 %v4654, %v4710
  %v4775 = vadd.f32 %v4759, %v4767
  %v4776 = vadd.f32 %v4760, %v4768
  %v4777 = vadd.f32 %v4761, %v4769
  %v4778 = vadd.f32 %v4762, %v4770
  %v4779 = vadd.f32 %v4763, %v4771
  %v4780 = vadd.f32 %v4764, %v4772
  %v4781 = vadd.f32 %v4765, %v4773
  %v4782 = vadd.f32 %v4766, %v4774
  %v4783 = vtanh.pop %v4775
  %v4784 = vtanh.pop %v4776
  %v4785 = vtanh.pop %v4777
  %v4786 = vtanh.pop %v4778
  %v4787 = vtanh.pop %v4779
  %v4788 = vtanh.pop %v4780
  %v4789 = vtanh.pop %v4781
  %v4790 = vtanh.pop %v4782
  %v4791 = vmul.f32 %v4744, %v4783
  %v4792 = vmul.f32 %v4746, %v4784
  %v4793 = vmul.f32 %v4748, %v4785
  %v4794 = vmul.f32 %v4750, %v4786
  %v4795 = vmul.f32 %v4752, %v4787
  %v4796 = vmul.f32 %v4754, %v4788
  %v4797 = vmul.f32 %v4756, %v4789
  %v4798 = vmul.f32 %v4758, %v4790
  %v4799 = vpack.c.bf16 %v4792, %v4791
  %v4800 = vpack.c.bf16 %v4794, %v4793
  %v4801 = vpack.c.bf16 %v4796, %v4795
  %v4802 = vpack.c.bf16 %v4798, %v4797
  %4803 = vmatprep.subr.bf16.mxu0 %v3824
  %4804 = vmatpush1.bf16.msra.mxu0 %v3823
  %4805 = vmatprep.subr.bf16.mxu0 %v3816
  %4806 = vmatpush1.bf16.msra.mxu0 %v3815
  %4807 = vmatprep.subr.bf16.mxu0 %v3808
  %4808 = vmatpush1.bf16.msra.mxu0 %v3807
  %4809 = vmatprep.subr.bf16.mxu0 %v3800
  %4810 = vmatpush1.bf16.msra.mxu0 %v3799
  %4811 = vmatprep.subr.bf16.mxu0 %v3792
  %4812 = vmatpush1.bf16.msra.mxu0 %v3791
  %4813 = vmatprep.subr.bf16.mxu0 %v3784
  %4814 = vmatpush1.bf16.msra.mxu0 %v3783
  %4815 = vmatprep.subr.bf16.mxu0 %v3776
  %4816 = vmatpush1.bf16.msra.mxu0 %v3775
  %4817 = vmatprep.subr.bf16.mxu0 %v3768
  %4818 = vmatpush1.bf16.msra.mxu0 %v3767
  %4819 = vmatprep.subr.bf16.mxu0 %v3888
  %4820 = vmatpush2.bf16.msra.mxu0 %v3887
  %4821 = vmatprep.subr.bf16.mxu0 %v3880
  %4822 = vmatpush2.bf16.msra.mxu0 %v3879
  %4823 = vmatprep.subr.bf16.mxu0 %v3872
  %4824 = vmatpush2.bf16.msra.mxu0 %v3871
  %4825 = vmatprep.subr.bf16.mxu0 %v3864
  %4826 = vmatpush2.bf16.msra.mxu0 %v3863
  %4827 = vmatprep.subr.bf16.mxu0 %v3856
  %4828 = vmatpush2.bf16.msra.mxu0 %v3855
  %4829 = vmatprep.subr.bf16.mxu0 %v3848
  %4830 = vmatpush2.bf16.msra.mxu0 %v3847
  %4831 = vmatprep.subr.bf16.mxu0 %v3840
  %4832 = vmatpush2.bf16.msra.mxu0 %v3839
  %4833 = vmatprep.subr.bf16.mxu0 %v3832
  %4834 = vmatpush2.bf16.msra.mxu0 %v3831
  %4835 = vmatprep.mubr.bf16.mxu0 %v4539
  %4836 = vmatmul.mubr.bf16.gmra.mxu0 %v4799
  %v4837 = vpop.f32.mrf.mxu0
  %v4838 = vadd.f32 0.0, %v4837
  %v4839 = vpop.f32.mrf.mxu0
  %v4840 = vadd.f32 0.0, %v4839
  %v4841 = vpop.f32.mrf.mxu0
  %v4842 = vadd.f32 0.0, %v4841
  %v4843 = vpop.f32.mrf.mxu0
  %v4844 = vadd.f32 0.0, %v4843
  %4845 = vmatprep.mubr.bf16.mxu0 %v4540
  %4846 = vmatmul.mubr.bf16.gmra.mxu0 %v4800
  %v4847 = vpop.f32.mrf.mxu0
  %v4848 = vadd.f32 0.0, %v4847
  %v4849 = vpop.f32.mrf.mxu0
  %v4850 = vadd.f32 0.0, %v4849
  %v4851 = vpop.f32.mrf.mxu0
  %v4852 = vadd.f32 0.0, %v4851
  %v4853 = vpop.f32.mrf.mxu0
  %v4854 = vadd.f32 0.0, %v4853
  %4855 = vmatprep.mubr.bf16.mxu0 %v4541
  %4856 = vmatmul.mubr.bf16.gmra.mxu0 %v4801
  %v4857 = vpop.f32.mrf.mxu0
  %v4858 = vadd.f32 0.0, %v4857
  %v4859 = vpop.f32.mrf.mxu0
  %v4860 = vadd.f32 0.0, %v4859
  %v4861 = vpop.f32.mrf.mxu0
  %v4862 = vadd.f32 0.0, %v4861
  %v4863 = vpop.f32.mrf.mxu0
  %v4864 = vadd.f32 0.0, %v4863
  %4865 = vmatprep.mubr.bf16.mxu0 %v4542
  %4866 = vmatmul.mubr.bf16.gmra.mxu0 %v4802
  %v4867 = vpop.f32.mrf.mxu0
  %v4868 = vadd.f32 0.0, %v4867
  %v4869 = vpop.f32.mrf.mxu0
  %v4870 = vadd.f32 0.0, %v4869
  %v4871 = vpop.f32.mrf.mxu0
  %v4872 = vadd.f32 0.0, %v4871
  %v4873 = vpop.f32.mrf.mxu0
  %v4874 = vadd.f32 0.0, %v4873
  %4875 = vdwg.mxu0
  %4876 = vmatprep.subr.bf16.mxu0 %v3826
  %4877 = vmatpush1.bf16.msra.mxu0 %v3825
  %4878 = vmatprep.subr.bf16.mxu0 %v3818
  %4879 = vmatpush1.bf16.msra.mxu0 %v3817
  %4880 = vmatprep.subr.bf16.mxu0 %v3810
  %4881 = vmatpush1.bf16.msra.mxu0 %v3809
  %4882 = vmatprep.subr.bf16.mxu0 %v3802
  %4883 = vmatpush1.bf16.msra.mxu0 %v3801
  %4884 = vmatprep.subr.bf16.mxu0 %v3794
  %4885 = vmatpush1.bf16.msra.mxu0 %v3793
  %4886 = vmatprep.subr.bf16.mxu0 %v3786
  %4887 = vmatpush1.bf16.msra.mxu0 %v3785
  %4888 = vmatprep.subr.bf16.mxu0 %v3778
  %4889 = vmatpush1.bf16.msra.mxu0 %v3777
  %4890 = vmatprep.subr.bf16.mxu0 %v3770
  %4891 = vmatpush1.bf16.msra.mxu0 %v3769
  %4892 = vmatprep.subr.bf16.mxu0 %v3890
  %4893 = vmatpush2.bf16.msra.mxu0 %v3889
  %4894 = vmatprep.subr.bf16.mxu0 %v3882
  %4895 = vmatpush2.bf16.msra.mxu0 %v3881
  %4896 = vmatprep.subr.bf16.mxu0 %v3874
  %4897 = vmatpush2.bf16.msra.mxu0 %v3873
  %4898 = vmatprep.subr.bf16.mxu0 %v3866
  %4899 = vmatpush2.bf16.msra.mxu0 %v3865
  %4900 = vmatprep.subr.bf16.mxu0 %v3858
  %4901 = vmatpush2.bf16.msra.mxu0 %v3857
  %4902 = vmatprep.subr.bf16.mxu0 %v3850
  %4903 = vmatpush2.bf16.msra.mxu0 %v3849
  %4904 = vmatprep.subr.bf16.mxu0 %v3842
  %4905 = vmatpush2.bf16.msra.mxu0 %v3841
  %4906 = vmatprep.subr.bf16.mxu0 %v3834
  %4907 = vmatpush2.bf16.msra.mxu0 %v3833
  %4908 = vmatprep.mubr.bf16.mxu0 %v4539
  %4909 = vmatmul.mubr.bf16.gmra.mxu0 %v4799
  %v4910 = vpop.f32.mrf.mxu0
  %v4911 = vadd.f32 0.0, %v4910
  %v4912 = vpop.f32.mrf.mxu0
  %v4913 = vadd.f32 0.0, %v4912
  %v4914 = vpop.f32.mrf.mxu0
  %v4915 = vadd.f32 0.0, %v4914
  %v4916 = vpop.f32.mrf.mxu0
  %v4917 = vadd.f32 0.0, %v4916
  %4918 = vmatprep.mubr.bf16.mxu0 %v4540
  %4919 = vmatmul.mubr.bf16.gmra.mxu0 %v4800
  %v4920 = vpop.f32.mrf.mxu0
  %v4921 = vadd.f32 0.0, %v4920
  %v4922 = vpop.f32.mrf.mxu0
  %v4923 = vadd.f32 0.0, %v4922
  %v4924 = vpop.f32.mrf.mxu0
  %v4925 = vadd.f32 0.0, %v4924
  %v4926 = vpop.f32.mrf.mxu0
  %v4927 = vadd.f32 0.0, %v4926
  %4928 = vmatprep.mubr.bf16.mxu0 %v4541
  %4929 = vmatmul.mubr.bf16.gmra.mxu0 %v4801
  %v4930 = vpop.f32.mrf.mxu0
  %v4931 = vadd.f32 0.0, %v4930
  %v4932 = vpop.f32.mrf.mxu0
  %v4933 = vadd.f32 0.0, %v4932
  %v4934 = vpop.f32.mrf.mxu0
  %v4935 = vadd.f32 0.0, %v4934
  %v4936 = vpop.f32.mrf.mxu0
  %v4937 = vadd.f32 0.0, %v4936
  %4938 = vmatprep.mubr.bf16.mxu0 %v4542
  %4939 = vmatmul.mubr.bf16.gmra.mxu0 %v4802
  %v4940 = vpop.f32.mrf.mxu0
  %v4941 = vadd.f32 0.0, %v4940
  %v4942 = vpop.f32.mrf.mxu0
  %v4943 = vadd.f32 0.0, %v4942
  %v4944 = vpop.f32.mrf.mxu0
  %v4945 = vadd.f32 0.0, %v4944
  %v4946 = vpop.f32.mrf.mxu0
  %v4947 = vadd.f32 0.0, %v4946
  %4948 = vdwg.mxu0
  %4949 = vmatprep.subr.bf16.mxu0 %v3828
  %4950 = vmatpush1.bf16.msra.mxu0 %v3827
  %4951 = vmatprep.subr.bf16.mxu0 %v3820
  %4952 = vmatpush1.bf16.msra.mxu0 %v3819
  %4953 = vmatprep.subr.bf16.mxu0 %v3812
  %4954 = vmatpush1.bf16.msra.mxu0 %v3811
  %4955 = vmatprep.subr.bf16.mxu0 %v3804
  %4956 = vmatpush1.bf16.msra.mxu0 %v3803
  %4957 = vmatprep.subr.bf16.mxu0 %v3796
  %4958 = vmatpush1.bf16.msra.mxu0 %v3795
  %4959 = vmatprep.subr.bf16.mxu0 %v3788
  %4960 = vmatpush1.bf16.msra.mxu0 %v3787
  %4961 = vmatprep.subr.bf16.mxu0 %v3780
  %4962 = vmatpush1.bf16.msra.mxu0 %v3779
  %4963 = vmatprep.subr.bf16.mxu0 %v3772
  %4964 = vmatpush1.bf16.msra.mxu0 %v3771
  %4965 = vmatprep.subr.bf16.mxu0 %v3892
  %4966 = vmatpush2.bf16.msra.mxu0 %v3891
  %4967 = vmatprep.subr.bf16.mxu0 %v3884
  %4968 = vmatpush2.bf16.msra.mxu0 %v3883
  %4969 = vmatprep.subr.bf16.mxu0 %v3876
  %4970 = vmatpush2.bf16.msra.mxu0 %v3875
  %4971 = vmatprep.subr.bf16.mxu0 %v3868
  %4972 = vmatpush2.bf16.msra.mxu0 %v3867
  %4973 = vmatprep.subr.bf16.mxu0 %v3860
  %4974 = vmatpush2.bf16.msra.mxu0 %v3859
  %4975 = vmatprep.subr.bf16.mxu0 %v3852
  %4976 = vmatpush2.bf16.msra.mxu0 %v3851
  %4977 = vmatprep.subr.bf16.mxu0 %v3844
  %4978 = vmatpush2.bf16.msra.mxu0 %v3843
  %4979 = vmatprep.subr.bf16.mxu0 %v3836
  %4980 = vmatpush2.bf16.msra.mxu0 %v3835
  %4981 = vmatprep.mubr.bf16.mxu0 %v4539
  %4982 = vmatmul.mubr.bf16.gmra.mxu0 %v4799
  %v4983 = vpop.f32.mrf.mxu0
  %v4984 = vadd.f32 0.0, %v4983
  %v4985 = vpop.f32.mrf.mxu0
  %v4986 = vadd.f32 0.0, %v4985
  %v4987 = vpop.f32.mrf.mxu0
  %v4988 = vadd.f32 0.0, %v4987
  %v4989 = vpop.f32.mrf.mxu0
  %v4990 = vadd.f32 0.0, %v4989
  %4991 = vmatprep.mubr.bf16.mxu0 %v4540
  %4992 = vmatmul.mubr.bf16.gmra.mxu0 %v4800
  %v4993 = vpop.f32.mrf.mxu0
  %v4994 = vadd.f32 0.0, %v4993
  %v4995 = vpop.f32.mrf.mxu0
  %v4996 = vadd.f32 0.0, %v4995
  %v4997 = vpop.f32.mrf.mxu0
  %v4998 = vadd.f32 0.0, %v4997
  %v4999 = vpop.f32.mrf.mxu0
  %v5000 = vadd.f32 0.0, %v4999
  %5001 = vmatprep.mubr.bf16.mxu0 %v4541
  %5002 = vmatmul.mubr.bf16.gmra.mxu0 %v4801
  %v5003 = vpop.f32.mrf.mxu0
  %v5004 = vadd.f32 0.0, %v5003
  %v5005 = vpop.f32.mrf.mxu0
  %v5006 = vadd.f32 0.0, %v5005
  %v5007 = vpop.f32.mrf.mxu0
  %v5008 = vadd.f32 0.0, %v5007
  %v5009 = vpop.f32.mrf.mxu0
  %v5010 = vadd.f32 0.0, %v5009
  %5011 = vmatprep.mubr.bf16.mxu0 %v4542
  %5012 = vmatmul.mubr.bf16.gmra.mxu0 %v4802
  %v5013 = vpop.f32.mrf.mxu0
  %v5014 = vadd.f32 0.0, %v5013
  %v5015 = vpop.f32.mrf.mxu0
  %v5016 = vadd.f32 0.0, %v5015
  %v5017 = vpop.f32.mrf.mxu0
  %v5018 = vadd.f32 0.0, %v5017
  %v5019 = vpop.f32.mrf.mxu0
  %v5020 = vadd.f32 0.0, %v5019
  %5021 = vdwg.mxu0
  %5022 = vmatprep.subr.bf16.mxu0 %v3830
  %5023 = vmatpush1.bf16.msra.mxu0 %v3829
  %5024 = vmatprep.subr.bf16.mxu0 %v3822
  %5025 = vmatpush1.bf16.msra.mxu0 %v3821
  %5026 = vmatprep.subr.bf16.mxu0 %v3814
  %5027 = vmatpush1.bf16.msra.mxu0 %v3813
  %5028 = vmatprep.subr.bf16.mxu0 %v3806
  %5029 = vmatpush1.bf16.msra.mxu0 %v3805
  %5030 = vmatprep.subr.bf16.mxu0 %v3798
  %5031 = vmatpush1.bf16.msra.mxu0 %v3797
  %5032 = vmatprep.subr.bf16.mxu0 %v3790
  %5033 = vmatpush1.bf16.msra.mxu0 %v3789
  %5034 = vmatprep.subr.bf16.mxu0 %v3782
  %5035 = vmatpush1.bf16.msra.mxu0 %v3781
  %5036 = vmatprep.subr.bf16.mxu0 %v3774
  %5037 = vmatpush1.bf16.msra.mxu0 %v3773
  %5038 = vmatprep.subr.bf16.mxu0 %v3894
  %5039 = vmatpush2.bf16.msra.mxu0 %v3893
  %5040 = vmatprep.subr.bf16.mxu0 %v3886
  %5041 = vmatpush2.bf16.msra.mxu0 %v3885
  %5042 = vmatprep.subr.bf16.mxu0 %v3878
  %5043 = vmatpush2.bf16.msra.mxu0 %v3877
  %5044 = vmatprep.subr.bf16.mxu0 %v3870
  %5045 = vmatpush2.bf16.msra.mxu0 %v3869
  %5046 = vmatprep.subr.bf16.mxu0 %v3862
  %5047 = vmatpush2.bf16.msra.mxu0 %v3861
  %5048 = vmatprep.subr.bf16.mxu0 %v3854
  %5049 = vmatpush2.bf16.msra.mxu0 %v3853
  %5050 = vmatprep.subr.bf16.mxu0 %v3846
  %5051 = vmatpush2.bf16.msra.mxu0 %v3845
  %5052 = vmatprep.subr.bf16.mxu0 %v3838
  %5053 = vmatpush2.bf16.msra.mxu0 %v3837
  %5054 = vmatprep.mubr.bf16.mxu0 %v4539
  %5055 = vmatmul.mubr.bf16.gmra.mxu0 %v4799
  %v5056 = vpop.f32.mrf.mxu0
  %v5057 = vadd.f32 0.0, %v5056
  %v5058 = vpop.f32.mrf.mxu0
  %v5059 = vadd.f32 0.0, %v5058
  %v5060 = vpop.f32.mrf.mxu0
  %v5061 = vadd.f32 0.0, %v5060
  %v5062 = vpop.f32.mrf.mxu0
  %v5063 = vadd.f32 0.0, %v5062
  %5064 = vmatprep.mubr.bf16.mxu0 %v4540
  %5065 = vmatmul.mubr.bf16.gmra.mxu0 %v4800
  %v5066 = vpop.f32.mrf.mxu0
  %v5067 = vadd.f32 0.0, %v5066
  %v5068 = vpop.f32.mrf.mxu0
  %v5069 = vadd.f32 0.0, %v5068
  %v5070 = vpop.f32.mrf.mxu0
  %v5071 = vadd.f32 0.0, %v5070
  %v5072 = vpop.f32.mrf.mxu0
  %v5073 = vadd.f32 0.0, %v5072
  %5074 = vmatprep.mubr.bf16.mxu0 %v4541
  %5075 = vmatmul.mubr.bf16.gmra.mxu0 %v4801
  %v5076 = vpop.f32.mrf.mxu0
  %v5077 = vadd.f32 0.0, %v5076
  %v5078 = vpop.f32.mrf.mxu0
  %v5079 = vadd.f32 0.0, %v5078
  %v5080 = vpop.f32.mrf.mxu0
  %v5081 = vadd.f32 0.0, %v5080
  %v5082 = vpop.f32.mrf.mxu0
  %v5083 = vadd.f32 0.0, %v5082
  %5084 = vmatprep.mubr.bf16.mxu0 %v4542
  %5085 = vmatmul.mubr.bf16.gmra.mxu0 %v4802
  %v5086 = vpop.f32.mrf.mxu0
  %v5087 = vadd.f32 0.0, %v5086
  %v5088 = vpop.f32.mrf.mxu0
  %v5089 = vadd.f32 0.0, %v5088
  %v5090 = vpop.f32.mrf.mxu0
  %v5091 = vadd.f32 0.0, %v5090
  %v5092 = vpop.f32.mrf.mxu0
  %v5093 = vadd.f32 0.0, %v5092
  %5094 = vdwg.mxu0
  %v5095 = vadd.f32 %v4838, %v3106
  %v5096 = vadd.f32 %v4840, %v3110
  %v5097 = vadd.f32 %v4911, %v3114
  %v5098 = vadd.f32 %v4913, %v3118
  %v5099 = vadd.f32 %v4842, %v3106
  %v5100 = vadd.f32 %v4844, %v3110
  %v5101 = vadd.f32 %v4915, %v3114
  %v5102 = vadd.f32 %v4917, %v3118
  %v5103 = vadd.f32 %v4848, %v3106
  %v5104 = vadd.f32 %v4850, %v3110
  %v5105 = vadd.f32 %v4921, %v3114
  %v5106 = vadd.f32 %v4923, %v3118
  %v5107 = vadd.f32 %v4852, %v3106
  %v5108 = vadd.f32 %v4854, %v3110
  %v5109 = vadd.f32 %v4925, %v3114
  %v5110 = vadd.f32 %v4927, %v3118
  %v5111 = vadd.f32 %v4858, %v3106
  %v5112 = vadd.f32 %v4860, %v3110
  %v5113 = vadd.f32 %v4931, %v3114
  %v5114 = vadd.f32 %v4933, %v3118
  %v5115 = vadd.f32 %v4862, %v3106
  %v5116 = vadd.f32 %v4864, %v3110
  %v5117 = vadd.f32 %v4935, %v3114
  %v5118 = vadd.f32 %v4937, %v3118
  %v5119 = vadd.f32 %v4868, %v3106
  %v5120 = vadd.f32 %v4870, %v3110
  %v5121 = vadd.f32 %v4941, %v3114
  %v5122 = vadd.f32 %v4943, %v3118
  %v5123 = vadd.f32 %v4872, %v3106
  %v5124 = vadd.f32 %v4874, %v3110
  %v5125 = vadd.f32 %v4945, %v3114
  %v5126 = vadd.f32 %v4947, %v3118
  %v5127 = vxor.u32 %v5095, 2147483648
  %v5128 = vxor.u32 %v5099, 2147483648
  %v5129 = vxor.u32 %v5103, 2147483648
  %v5130 = vxor.u32 %v5107, 2147483648
  %v5131 = vxor.u32 %v5111, 2147483648
  %v5132 = vxor.u32 %v5115, 2147483648
  %v5133 = vxor.u32 %v5119, 2147483648
  %v5134 = vxor.u32 %v5123, 2147483648
  %v5135 = vmul.f32 %v5127, 1.442695
  %v5136 = vpow.pop %v5135
  %v5137 = vmul.f32 %v5128, 1.442695
  %v5138 = vpow.pop %v5137
  %v5139 = vmul.f32 %v5129, 1.442695
  %v5140 = vpow.pop %v5139
  %v5141 = vmul.f32 %v5130, 1.442695
  %v5142 = vpow.pop %v5141
  %v5143 = vmul.f32 %v5131, 1.442695
  %v5144 = vpow.pop %v5143
  %v5145 = vmul.f32 %v5132, 1.442695
  %v5146 = vpow.pop %v5145
  %v5147 = vmul.f32 %v5133, 1.442695
  %v5148 = vpow.pop %v5147
  %v5149 = vmul.f32 %v5134, 1.442695
  %v5150 = vpow.pop %v5149
  %v5151 = vadd.f32 %v5136, 1.0
  %v5152 = vadd.f32 %v5138, 1.0
  %v5153 = vadd.f32 %v5140, 1.0
  %v5154 = vadd.f32 %v5142, 1.0
  %v5155 = vadd.f32 %v5144, 1.0
  %v5156 = vadd.f32 %v5146, 1.0
  %v5157 = vadd.f32 %v5148, 1.0
  %v5158 = vadd.f32 %v5150, 1.0
  %v5159 = vrcp.pop %v5151
  %v5160 = vmul.f32 1.0, %v5159
  %v5161 = vrcp.pop %v5152
  %v5162 = vmul.f32 1.0, %v5161
  %v5163 = vrcp.pop %v5153
  %v5164 = vmul.f32 1.0, %v5163
  %v5165 = vrcp.pop %v5154
  %v5166 = vmul.f32 1.0, %v5165
  %v5167 = vrcp.pop %v5155
  %v5168 = vmul.f32 1.0, %v5167
  %v5169 = vrcp.pop %v5156
  %v5170 = vmul.f32 1.0, %v5169
  %v5171 = vrcp.pop %v5157
  %v5172 = vmul.f32 1.0, %v5171
  %v5173 = vrcp.pop %v5158
  %v5174 = vmul.f32 1.0, %v5173
  %v5175 = vxor.u32 %v5096, 2147483648
  %v5176 = vxor.u32 %v5100, 2147483648
  %v5177 = vxor.u32 %v5104, 2147483648
  %v5178 = vxor.u32 %v5108, 2147483648
  %v5179 = vxor.u32 %v5112, 2147483648
  %v5180 = vxor.u32 %v5116, 2147483648
  %v5181 = vxor.u32 %v5120, 2147483648
  %v5182 = vxor.u32 %v5124, 2147483648
  %v5183 = vmul.f32 %v5175, 1.442695
  %v5184 = vpow.pop %v5183
  %v5185 = vmul.f32 %v5176, 1.442695
  %v5186 = vpow.pop %v5185
  %v5187 = vmul.f32 %v5177, 1.442695
  %v5188 = vpow.pop %v5187
  %v5189 = vmul.f32 %v5178, 1.442695
  %v5190 = vpow.pop %v5189
  %v5191 = vmul.f32 %v5179, 1.442695
  %v5192 = vpow.pop %v5191
  %v5193 = vmul.f32 %v5180, 1.442695
  %v5194 = vpow.pop %v5193
  %v5195 = vmul.f32 %v5181, 1.442695
  %v5196 = vpow.pop %v5195
  %v5197 = vmul.f32 %v5182, 1.442695
  %v5198 = vpow.pop %v5197
  %v5199 = vadd.f32 %v5184, 1.0
  %v5200 = vadd.f32 %v5186, 1.0
  %v5201 = vadd.f32 %v5188, 1.0
  %v5202 = vadd.f32 %v5190, 1.0
  %v5203 = vadd.f32 %v5192, 1.0
  %v5204 = vadd.f32 %v5194, 1.0
  %v5205 = vadd.f32 %v5196, 1.0
  %v5206 = vadd.f32 %v5198, 1.0
  %v5207 = vrcp.pop %v5199
  %v5208 = vmul.f32 1.0, %v5207
  %v5209 = vrcp.pop %v5200
  %v5210 = vmul.f32 1.0, %v5209
  %v5211 = vrcp.pop %v5201
  %v5212 = vmul.f32 1.0, %v5211
  %v5213 = vrcp.pop %v5202
  %v5214 = vmul.f32 1.0, %v5213
  %v5215 = vrcp.pop %v5203
  %v5216 = vmul.f32 1.0, %v5215
  %v5217 = vrcp.pop %v5204
  %v5218 = vmul.f32 1.0, %v5217
  %v5219 = vrcp.pop %v5205
  %v5220 = vmul.f32 1.0, %v5219
  %v5221 = vrcp.pop %v5206
  %v5222 = vmul.f32 1.0, %v5221
  %v5223 = vtanh.pop %v5097
  %v5224 = vtanh.pop %v5101
  %v5225 = vtanh.pop %v5105
  %v5226 = vtanh.pop %v5109
  %v5227 = vtanh.pop %v5113
  %v5228 = vtanh.pop %v5117
  %v5229 = vtanh.pop %v5121
  %v5230 = vtanh.pop %v5125
  %v5231 = vxor.u32 %v5098, 2147483648
  %v5232 = vxor.u32 %v5102, 2147483648
  %v5233 = vxor.u32 %v5106, 2147483648
  %v5234 = vxor.u32 %v5110, 2147483648
  %v5235 = vxor.u32 %v5114, 2147483648
  %v5236 = vxor.u32 %v5118, 2147483648
  %v5237 = vxor.u32 %v5122, 2147483648
  %v5238 = vxor.u32 %v5126, 2147483648
  %v5239 = vmul.f32 %v5231, 1.442695
  %v5240 = vpow.pop %v5239
  %v5241 = vmul.f32 %v5232, 1.442695
  %v5242 = vpow.pop %v5241
  %v5243 = vmul.f32 %v5233, 1.442695
  %v5244 = vpow.pop %v5243
  %v5245 = vmul.f32 %v5234, 1.442695
  %v5246 = vpow.pop %v5245
  %v5247 = vmul.f32 %v5235, 1.442695
  %v5248 = vpow.pop %v5247
  %v5249 = vmul.f32 %v5236, 1.442695
  %v5250 = vpow.pop %v5249
  %v5251 = vmul.f32 %v5237, 1.442695
  %v5252 = vpow.pop %v5251
  %v5253 = vmul.f32 %v5238, 1.442695
  %v5254 = vpow.pop %v5253
  %v5255 = vadd.f32 %v5240, 1.0
  %v5256 = vadd.f32 %v5242, 1.0
  %v5257 = vadd.f32 %v5244, 1.0
  %v5258 = vadd.f32 %v5246, 1.0
  %v5259 = vadd.f32 %v5248, 1.0
  %v5260 = vadd.f32 %v5250, 1.0
  %v5261 = vadd.f32 %v5252, 1.0
  %v5262 = vadd.f32 %v5254, 1.0
  %v5263 = vrcp.pop %v5255
  %v5264 = vmul.f32 1.0, %v5263
  %v5265 = vrcp.pop %v5256
  %v5266 = vmul.f32 1.0, %v5265
  %v5267 = vrcp.pop %v5257
  %v5268 = vmul.f32 1.0, %v5267
  %v5269 = vrcp.pop %v5258
  %v5270 = vmul.f32 1.0, %v5269
  %v5271 = vrcp.pop %v5259
  %v5272 = vmul.f32 1.0, %v5271
  %v5273 = vrcp.pop %v5260
  %v5274 = vmul.f32 1.0, %v5273
  %v5275 = vrcp.pop %v5261
  %v5276 = vmul.f32 1.0, %v5275
  %v5277 = vrcp.pop %v5262
  %v5278 = vmul.f32 1.0, %v5277
  %v5279 = vmul.f32 %v5208, %v4515
  %v5280 = vmul.f32 %v5210, %v4516
  %v5281 = vmul.f32 %v5212, %v4517
  %v5282 = vmul.f32 %v5214, %v4518
  %v5283 = vmul.f32 %v5216, %v4519
  %v5284 = vmul.f32 %v5218, %v4520
  %v5285 = vmul.f32 %v5220, %v4521
  %v5286 = vmul.f32 %v5222, %v4522
  %v5287 = vmul.f32 %v5160, %v5223
  %v5288 = vmul.f32 %v5162, %v5224
  %v5289 = vmul.f32 %v5164, %v5225
  %v5290 = vmul.f32 %v5166, %v5226
  %v5291 = vmul.f32 %v5168, %v5227
  %v5292 = vmul.f32 %v5170, %v5228
  %v5293 = vmul.f32 %v5172, %v5229
  %v5294 = vmul.f32 %v5174, %v5230
  %v5295 = vadd.f32 %v5279, %v5287
  %v5296 = vadd.f32 %v5280, %v5288
  %v5297 = vadd.f32 %v5281, %v5289
  %v5298 = vadd.f32 %v5282, %v5290
  %v5299 = vadd.f32 %v5283, %v5291
  %v5300 = vadd.f32 %v5284, %v5292
  %v5301 = vadd.f32 %v5285, %v5293
  %v5302 = vadd.f32 %v5286, %v5294
  %v5303 = vtanh.pop %v5295
  %v5304 = vtanh.pop %v5296
  %v5305 = vtanh.pop %v5297
  %v5306 = vtanh.pop %v5298
  %v5307 = vtanh.pop %v5299
  %v5308 = vtanh.pop %v5300
  %v5309 = vtanh.pop %v5301
  %v5310 = vtanh.pop %v5302
  %v5311 = vmul.f32 %v5264, %v5303
  %v5312 = vmul.f32 %v5266, %v5304
  %v5313 = vmul.f32 %v5268, %v5305
  %v5314 = vmul.f32 %v5270, %v5306
  %v5315 = vmul.f32 %v5272, %v5307
  %v5316 = vmul.f32 %v5274, %v5308
  %v5317 = vmul.f32 %v5276, %v5309
  %v5318 = vmul.f32 %v5278, %v5310
  %v5319 = vpack.c.bf16 %v5312, %v5311
  %v5320 = vpack.c.bf16 %v5314, %v5313
  %v5321 = vpack.c.bf16 %v5316, %v5315
  %v5322 = vpack.c.bf16 %v5318, %v5317
  %v5323 = vld [vmem:[#allocation2 + $0x200] sm:$0xff]
  %v5324 = vld [vmem:[#allocation2 + $0x208] sm:$0xff]
  %v5325 = vld [vmem:[#allocation2 + $0x210] sm:$0xff]
  %v5326 = vld [vmem:[#allocation2 + $0x218] sm:$0xff]
  %v5327 = vld [vmem:[#allocation2 + $0x220] sm:$0xff]
  %v5328 = vld [vmem:[#allocation2 + $0x228] sm:$0xff]
  %v5329 = vld [vmem:[#allocation2 + $0x230] sm:$0xff]
  %v5330 = vld [vmem:[#allocation2 + $0x238] sm:$0xff]
  %v5331 = vld [vmem:[#allocation2 + $0x240] sm:$0xff]
  %v5332 = vld [vmem:[#allocation2 + $0x248] sm:$0xff]
  %v5333 = vld [vmem:[#allocation2 + $0x250] sm:$0xff]
  %v5334 = vld [vmem:[#allocation2 + $0x258] sm:$0xff]
  %v5335 = vld [vmem:[#allocation2 + $0x260] sm:$0xff]
  %v5336 = vld [vmem:[#allocation2 + $0x268] sm:$0xff]
  %v5337 = vld [vmem:[#allocation2 + $0x270] sm:$0xff]
  %v5338 = vld [vmem:[#allocation2 + $0x278] sm:$0xff]
  %v5339 = vld [vmem:[#allocation2 + $0x280] sm:$0xff]
  %v5340 = vld [vmem:[#allocation2 + $0x288] sm:$0xff]
  %v5341 = vld [vmem:[#allocation2 + $0x290] sm:$0xff]
  %v5342 = vld [vmem:[#allocation2 + $0x298] sm:$0xff]
  %v5343 = vld [vmem:[#allocation2 + $0x2a0] sm:$0xff]
  %v5344 = vld [vmem:[#allocation2 + $0x2a8] sm:$0xff]
  %v5345 = vld [vmem:[#allocation2 + $0x2b0] sm:$0xff]
  %v5346 = vld [vmem:[#allocation2 + $0x2b8] sm:$0xff]
  %v5347 = vld [vmem:[#allocation2 + $0x2c0] sm:$0xff]
  %v5348 = vld [vmem:[#allocation2 + $0x2c8] sm:$0xff]
  %v5349 = vld [vmem:[#allocation2 + $0x2d0] sm:$0xff]
  %v5350 = vld [vmem:[#allocation2 + $0x2d8] sm:$0xff]
  %v5351 = vld [vmem:[#allocation2 + $0x2e0] sm:$0xff]
  %v5352 = vld [vmem:[#allocation2 + $0x2e8] sm:$0xff]
  %v5353 = vld [vmem:[#allocation2 + $0x2f0] sm:$0xff]
  %v5354 = vld [vmem:[#allocation2 + $0x2f8] sm:$0xff]
  %v5355 = vadd.f32 %v4984, %v5323
  %v5356 = vadd.f32 %v4986, %v5324
  %v5357 = vadd.f32 %v5057, %v5325
  %v5358 = vadd.f32 %v5059, %v5326
  %v5359 = vadd.f32 %v4988, %v5327
  %v5360 = vadd.f32 %v4990, %v5328
  %v5361 = vadd.f32 %v5061, %v5329
  %v5362 = vadd.f32 %v5063, %v5330
  %v5363 = vadd.f32 %v4994, %v5331
  %v5364 = vadd.f32 %v4996, %v5332
  %v5365 = vadd.f32 %v5067, %v5333
  %v5366 = vadd.f32 %v5069, %v5334
  %v5367 = vadd.f32 %v4998, %v5335
  %v5368 = vadd.f32 %v5000, %v5336
  %v5369 = vadd.f32 %v5071, %v5337
  %v5370 = vadd.f32 %v5073, %v5338
  %v5371 = vadd.f32 %v5004, %v5339
  %v5372 = vadd.f32 %v5006, %v5340
  %v5373 = vadd.f32 %v5077, %v5341
  %v5374 = vadd.f32 %v5079, %v5342
  %v5375 = vadd.f32 %v5008, %v5343
  %v5376 = vadd.f32 %v5010, %v5344
  %v5377 = vadd.f32 %v5081, %v5345
  %v5378 = vadd.f32 %v5083, %v5346
  %v5379 = vadd.f32 %v5014, %v5347
  %v5380 = vadd.f32 %v5016, %v5348
  %v5381 = vadd.f32 %v5087, %v5349
  %v5382 = vadd.f32 %v5089, %v5350
  %v5383 = vadd.f32 %v5018, %v5351
  %v5384 = vadd.f32 %v5020, %v5352
  %v5385 = vadd.f32 %v5091, %v5353
  %v5386 = vadd.f32 %v5093, %v5354
  %v5387 = vxor.u32 %v5355, 2147483648
  %v5388 = vxor.u32 %v5359, 2147483648
  %v5389 = vxor.u32 %v5363, 2147483648
  %v5390 = vxor.u32 %v5367, 2147483648
  %v5391 = vxor.u32 %v5371, 2147483648
  %v5392 = vxor.u32 %v5375, 2147483648
  %v5393 = vxor.u32 %v5379, 2147483648
  %v5394 = vxor.u32 %v5383, 2147483648
  %v5395 = vmul.f32 %v5387, 1.442695
  %v5396 = vpow.pop %v5395
  %v5397 = vmul.f32 %v5388, 1.442695
  %v5398 = vpow.pop %v5397
  %v5399 = vmul.f32 %v5389, 1.442695
  %v5400 = vpow.pop %v5399
  %v5401 = vmul.f32 %v5390, 1.442695
  %v5402 = vpow.pop %v5401
  %v5403 = vmul.f32 %v5391, 1.442695
  %v5404 = vpow.pop %v5403
  %v5405 = vmul.f32 %v5392, 1.442695
  %v5406 = vpow.pop %v5405
  %v5407 = vmul.f32 %v5393, 1.442695
  %v5408 = vpow.pop %v5407
  %v5409 = vmul.f32 %v5394, 1.442695
  %v5410 = vpow.pop %v5409
  %v5411 = vadd.f32 %v5396, 1.0
  %v5412 = vadd.f32 %v5398, 1.0
  %v5413 = vadd.f32 %v5400, 1.0
  %v5414 = vadd.f32 %v5402, 1.0
  %v5415 = vadd.f32 %v5404, 1.0
  %v5416 = vadd.f32 %v5406, 1.0
  %v5417 = vadd.f32 %v5408, 1.0
  %v5418 = vadd.f32 %v5410, 1.0
  %v5419 = vrcp.pop %v5411
  %v5420 = vmul.f32 1.0, %v5419
  %v5421 = vrcp.pop %v5412
  %v5422 = vmul.f32 1.0, %v5421
  %v5423 = vrcp.pop %v5413
  %v5424 = vmul.f32 1.0, %v5423
  %v5425 = vrcp.pop %v5414
  %v5426 = vmul.f32 1.0, %v5425
  %v5427 = vrcp.pop %v5415
  %v5428 = vmul.f32 1.0, %v5427
  %v5429 = vrcp.pop %v5416
  %v5430 = vmul.f32 1.0, %v5429
  %v5431 = vrcp.pop %v5417
  %v5432 = vmul.f32 1.0, %v5431
  %v5433 = vrcp.pop %v5418
  %v5434 = vmul.f32 1.0, %v5433
  %v5435 = vxor.u32 %v5356, 2147483648
  %v5436 = vxor.u32 %v5360, 2147483648
  %v5437 = vxor.u32 %v5364, 2147483648
  %v5438 = vxor.u32 %v5368, 2147483648
  %v5439 = vxor.u32 %v5372, 2147483648
  %v5440 = vxor.u32 %v5376, 2147483648
  %v5441 = vxor.u32 %v5380, 2147483648
  %v5442 = vxor.u32 %v5384, 2147483648
  %v5443 = vmul.f32 %v5435, 1.442695
  %v5444 = vpow.pop %v5443
  %v5445 = vmul.f32 %v5436, 1.442695
  %v5446 = vpow.pop %v5445
  %v5447 = vmul.f32 %v5437, 1.442695
  %v5448 = vpow.pop %v5447
  %v5449 = vmul.f32 %v5438, 1.442695
  %v5450 = vpow.pop %v5449
  %v5451 = vmul.f32 %v5439, 1.442695
  %v5452 = vpow.pop %v5451
  %v5453 = vmul.f32 %v5440, 1.442695
  %v5454 = vpow.pop %v5453
  %v5455 = vmul.f32 %v5441, 1.442695
  %v5456 = vpow.pop %v5455
  %v5457 = vmul.f32 %v5442, 1.442695
  %v5458 = vpow.pop %v5457
  %v5459 = vadd.f32 %v5444, 1.0
  %v5460 = vadd.f32 %v5446, 1.0
  %v5461 = vadd.f32 %v5448, 1.0
  %v5462 = vadd.f32 %v5450, 1.0
  %v5463 = vadd.f32 %v5452, 1.0
  %v5464 = vadd.f32 %v5454, 1.0
  %v5465 = vadd.f32 %v5456, 1.0
  %v5466 = vadd.f32 %v5458, 1.0
  %v5467 = vrcp.pop %v5459
  %v5468 = vmul.f32 1.0, %v5467
  %v5469 = vrcp.pop %v5460
  %v5470 = vmul.f32 1.0, %v5469
  %v5471 = vrcp.pop %v5461
  %v5472 = vmul.f32 1.0, %v5471
  %v5473 = vrcp.pop %v5462
  %v5474 = vmul.f32 1.0, %v5473
  %v5475 = vrcp.pop %v5463
  %v5476 = vmul.f32 1.0, %v5475
  %v5477 = vrcp.pop %v5464
  %v5478 = vmul.f32 1.0, %v5477
  %v5479 = vrcp.pop %v5465
  %v5480 = vmul.f32 1.0, %v5479
  %v5481 = vrcp.pop %v5466
  %v5482 = vmul.f32 1.0, %v5481
  %v5483 = vtanh.pop %v5357
  %v5484 = vtanh.pop %v5361
  %v5485 = vtanh.pop %v5365
  %v5486 = vtanh.pop %v5369
  %v5487 = vtanh.pop %v5373
  %v5488 = vtanh.pop %v5377
  %v5489 = vtanh.pop %v5381
  %v5490 = vtanh.pop %v5385
  %v5491 = vxor.u32 %v5358, 2147483648
  %v5492 = vxor.u32 %v5362, 2147483648
  %v5493 = vxor.u32 %v5366, 2147483648
  %v5494 = vxor.u32 %v5370, 2147483648
  %v5495 = vxor.u32 %v5374, 2147483648
  %v5496 = vxor.u32 %v5378, 2147483648
  %v5497 = vxor.u32 %v5382, 2147483648
  %v5498 = vxor.u32 %v5386, 2147483648
  %v5499 = vmul.f32 %v5491, 1.442695
  %v5500 = vpow.pop %v5499
  %v5501 = vmul.f32 %v5492, 1.442695
  %v5502 = vpow.pop %v5501
  %v5503 = vmul.f32 %v5493, 1.442695
  %v5504 = vpow.pop %v5503
  %v5505 = vmul.f32 %v5494, 1.442695
  %v5506 = vpow.pop %v5505
  %v5507 = vmul.f32 %v5495, 1.442695
  %v5508 = vpow.pop %v5507
  %v5509 = vmul.f32 %v5496, 1.442695
  %v5510 = vpow.pop %v5509
  %v5511 = vmul.f32 %v5497, 1.442695
  %v5512 = vpow.pop %v5511
  %v5513 = vmul.f32 %v5498, 1.442695
  %v5514 = vpow.pop %v5513
  %v5515 = vadd.f32 %v5500, 1.0
  %v5516 = vadd.f32 %v5502, 1.0
  %v5517 = vadd.f32 %v5504, 1.0
  %v5518 = vadd.f32 %v5506, 1.0
  %v5519 = vadd.f32 %v5508, 1.0
  %v5520 = vadd.f32 %v5510, 1.0
  %v5521 = vadd.f32 %v5512, 1.0
  %v5522 = vadd.f32 %v5514, 1.0
  %v5523 = vrcp.pop %v5515
  %v5524 = vmul.f32 1.0, %v5523
  %v5525 = vrcp.pop %v5516
  %v5526 = vmul.f32 1.0, %v5525
  %v5527 = vrcp.pop %v5517
  %v5528 = vmul.f32 1.0, %v5527
  %v5529 = vrcp.pop %v5518
  %v5530 = vmul.f32 1.0, %v5529
  %v5531 = vrcp.pop %v5519
  %v5532 = vmul.f32 1.0, %v5531
  %v5533 = vrcp.pop %v5520
  %v5534 = vmul.f32 1.0, %v5533
  %v5535 = vrcp.pop %v5521
  %v5536 = vmul.f32 1.0, %v5535
  %v5537 = vrcp.pop %v5522
  %v5538 = vmul.f32 1.0, %v5537
  %v5539 = vmul.f32 %v5468, %v4775
  %v5540 = vmul.f32 %v5470, %v4776
  %v5541 = vmul.f32 %v5472, %v4777
  %v5542 = vmul.f32 %v5474, %v4778
  %v5543 = vmul.f32 %v5476, %v4779
  %v5544 = vmul.f32 %v5478, %v4780
  %v5545 = vmul.f32 %v5480, %v4781
  %v5546 = vmul.f32 %v5482, %v4782
  %v5547 = vmul.f32 %v5420, %v5483
  %v5548 = vmul.f32 %v5422, %v5484
  %v5549 = vmul.f32 %v5424, %v5485
  %v5550 = vmul.f32 %v5426, %v5486
  %v5551 = vmul.f32 %v5428, %v5487
  %v5552 = vmul.f32 %v5430, %v5488
  %v5553 = vmul.f32 %v5432, %v5489
  %v5554 = vmul.f32 %v5434, %v5490
  %v5555 = vadd.f32 %v5539, %v5547
  %v5556 = vadd.f32 %v5540, %v5548
  %v5557 = vadd.f32 %v5541, %v5549
  %v5558 = vadd.f32 %v5542, %v5550
  %v5559 = vadd.f32 %v5543, %v5551
  %v5560 = vadd.f32 %v5544, %v5552
  %v5561 = vadd.f32 %v5545, %v5553
  %v5562 = vadd.f32 %v5546, %v5554
  %v5563 = vtanh.pop %v5555
  %v5564 = vtanh.pop %v5556
  %v5565 = vtanh.pop %v5557
  %v5566 = vtanh.pop %v5558
  %v5567 = vtanh.pop %v5559
  %v5568 = vtanh.pop %v5560
  %v5569 = vtanh.pop %v5561
  %v5570 = vtanh.pop %v5562
  %v5571 = vmul.f32 %v5524, %v5563
  %v5572 = vmul.f32 %v5526, %v5564
  %v5573 = vmul.f32 %v5528, %v5565
  %v5574 = vmul.f32 %v5530, %v5566
  %v5575 = vmul.f32 %v5532, %v5567
  %v5576 = vmul.f32 %v5534, %v5568
  %v5577 = vmul.f32 %v5536, %v5569
  %v5578 = vmul.f32 %v5538, %v5570
  %v5579 = vpack.c.bf16 %v5572, %v5571
  %v5580 = vpack.c.bf16 %v5574, %v5573
  %v5581 = vpack.c.bf16 %v5576, %v5575
  %v5582 = vpack.c.bf16 %v5578, %v5577
  %5583 = vmatprep.subr.bf16.mxu0 %v3824
  %5584 = vmatpush1.bf16.msra.mxu0 %v3823
  %5585 = vmatprep.subr.bf16.mxu0 %v3816
  %5586 = vmatpush1.bf16.msra.mxu0 %v3815
  %5587 = vmatprep.subr.bf16.mxu0 %v3808
  %5588 = vmatpush1.bf16.msra.mxu0 %v3807
  %5589 = vmatprep.subr.bf16.mxu0 %v3800
  %5590 = vmatpush1.bf16.msra.mxu0 %v3799
  %5591 = vmatprep.subr.bf16.mxu0 %v3792
  %5592 = vmatpush1.bf16.msra.mxu0 %v3791
  %5593 = vmatprep.subr.bf16.mxu0 %v3784
  %5594 = vmatpush1.bf16.msra.mxu0 %v3783
  %5595 = vmatprep.subr.bf16.mxu0 %v3776
  %5596 = vmatpush1.bf16.msra.mxu0 %v3775
  %5597 = vmatprep.subr.bf16.mxu0 %v3768
  %5598 = vmatpush1.bf16.msra.mxu0 %v3767
  %5599 = vmatprep.subr.bf16.mxu0 %v3888
  %5600 = vmatpush2.bf16.msra.mxu0 %v3887
  %5601 = vmatprep.subr.bf16.mxu0 %v3880
  %5602 = vmatpush2.bf16.msra.mxu0 %v3879
  %5603 = vmatprep.subr.bf16.mxu0 %v3872
  %5604 = vmatpush2.bf16.msra.mxu0 %v3871
  %5605 = vmatprep.subr.bf16.mxu0 %v3864
  %5606 = vmatpush2.bf16.msra.mxu0 %v3863
  %5607 = vmatprep.subr.bf16.mxu0 %v3856
  %5608 = vmatpush2.bf16.msra.mxu0 %v3855
  %5609 = vmatprep.subr.bf16.mxu0 %v3848
  %5610 = vmatpush2.bf16.msra.mxu0 %v3847
  %5611 = vmatprep.subr.bf16.mxu0 %v3840
  %5612 = vmatpush2.bf16.msra.mxu0 %v3839
  %5613 = vmatprep.subr.bf16.mxu0 %v3832
  %5614 = vmatpush2.bf16.msra.mxu0 %v3831
  %5615 = vmatprep.mubr.bf16.mxu0 %v5319
  %5616 = vmatmul.mubr.bf16.gmra.mxu0 %v5579
  %v5617 = vpop.f32.mrf.mxu0
  %v5618 = vadd.f32 0.0, %v5617
  %v5619 = vpop.f32.mrf.mxu0
  %v5620 = vadd.f32 0.0, %v5619
  %v5621 = vpop.f32.mrf.mxu0
  %v5622 = vadd.f32 0.0, %v5621
  %v5623 = vpop.f32.mrf.mxu0
  %v5624 = vadd.f32 0.0, %v5623
  %5625 = vmatprep.mubr.bf16.mxu0 %v5320
  %5626 = vmatmul.mubr.bf16.gmra.mxu0 %v5580
  %v5627 = vpop.f32.mrf.mxu0
  %v5628 = vadd.f32 0.0, %v5627
  %v5629 = vpop.f32.mrf.mxu0
  %v5630 = vadd.f32 0.0, %v5629
  %v5631 = vpop.f32.mrf.mxu0
  %v5632 = vadd.f32 0.0, %v5631
  %v5633 = vpop.f32.mrf.mxu0
  %v5634 = vadd.f32 0.0, %v5633
  %5635 = vmatprep.mubr.bf16.mxu0 %v5321
  %5636 = vmatmul.mubr.bf16.gmra.mxu0 %v5581
  %v5637 = vpop.f32.mrf.mxu0
  %v5638 = vadd.f32 0.0, %v5637
  %v5639 = vpop.f32.mrf.mxu0
  %v5640 = vadd.f32 0.0, %v5639
  %v5641 = vpop.f32.mrf.mxu0
  %v5642 = vadd.f32 0.0, %v5641
  %v5643 = vpop.f32.mrf.mxu0
  %v5644 = vadd.f32 0.0, %v5643
  %5645 = vmatprep.mubr.bf16.mxu0 %v5322
  %5646 = vmatmul.mubr.bf16.gmra.mxu0 %v5582
  %v5647 = vpop.f32.mrf.mxu0
  %v5648 = vadd.f32 0.0, %v5647
  %v5649 = vpop.f32.mrf.mxu0
  %v5650 = vadd.f32 0.0, %v5649
  %v5651 = vpop.f32.mrf.mxu0
  %v5652 = vadd.f32 0.0, %v5651
  %v5653 = vpop.f32.mrf.mxu0
  %v5654 = vadd.f32 0.0, %v5653
  %5655 = vdwg.mxu0
  %5656 = vmatprep.subr.bf16.mxu0 %v3826
  %5657 = vmatpush1.bf16.msra.mxu0 %v3825
  %5658 = vmatprep.subr.bf16.mxu0 %v3818
  %5659 = vmatpush1.bf16.msra.mxu0 %v3817
  %5660 = vmatprep.subr.bf16.mxu0 %v3810
  %5661 = vmatpush1.bf16.msra.mxu0 %v3809
  %5662 = vmatprep.subr.bf16.mxu0 %v3802
  %5663 = vmatpush1.bf16.msra.mxu0 %v3801
  %5664 = vmatprep.subr.bf16.mxu0 %v3794
  %5665 = vmatpush1.bf16.msra.mxu0 %v3793
  %5666 = vmatprep.subr.bf16.mxu0 %v3786
  %5667 = vmatpush1.bf16.msra.mxu0 %v3785
  %5668 = vmatprep.subr.bf16.mxu0 %v3778
  %5669 = vmatpush1.bf16.msra.mxu0 %v3777
  %5670 = vmatprep.subr.bf16.mxu0 %v3770
  %5671 = vmatpush1.bf16.msra.mxu0 %v3769
  %5672 = vmatprep.subr.bf16.mxu0 %v3890
  %5673 = vmatpush2.bf16.msra.mxu0 %v3889
  %5674 = vmatprep.subr.bf16.mxu0 %v3882
  %5675 = vmatpush2.bf16.msra.mxu0 %v3881
  %5676 = vmatprep.subr.bf16.mxu0 %v3874
  %5677 = vmatpush2.bf16.msra.mxu0 %v3873
  %5678 = vmatprep.subr.bf16.mxu0 %v3866
  %5679 = vmatpush2.bf16.msra.mxu0 %v3865
  %5680 = vmatprep.subr.bf16.mxu0 %v3858
  %5681 = vmatpush2.bf16.msra.mxu0 %v3857
  %5682 = vmatprep.subr.bf16.mxu0 %v3850
  %5683 = vmatpush2.bf16.msra.mxu0 %v3849
  %5684 = vmatprep.subr.bf16.mxu0 %v3842
  %5685 = vmatpush2.bf16.msra.mxu0 %v3841
  %5686 = vmatprep.subr.bf16.mxu0 %v3834
  %5687 = vmatpush2.bf16.msra.mxu0 %v3833
  %5688 = vmatprep.mubr.bf16.mxu0 %v5319
  %5689 = vmatmul.mubr.bf16.gmra.mxu0 %v5579
  %v5690 = vpop.f32.mrf.mxu0
  %v5691 = vadd.f32 0.0, %v5690
  %v5692 = vpop.f32.mrf.mxu0
  %v5693 = vadd.f32 0.0, %v5692
  %v5694 = vpop.f32.mrf.mxu0
  %v5695 = vadd.f32 0.0, %v5694
  %v5696 = vpop.f32.mrf.mxu0
  %v5697 = vadd.f32 0.0, %v5696
  %5698 = vmatprep.mubr.bf16.mxu0 %v5320
  %5699 = vmatmul.mubr.bf16.gmra.mxu0 %v5580
  %v5700 = vpop.f32.mrf.mxu0
  %v5701 = vadd.f32 0.0, %v5700
  %v5702 = vpop.f32.mrf.mxu0
  %v5703 = vadd.f32 0.0, %v5702
  %v5704 = vpop.f32.mrf.mxu0
  %v5705 = vadd.f32 0.0, %v5704
  %v5706 = vpop.f32.mrf.mxu0
  %v5707 = vadd.f32 0.0, %v5706
  %5708 = vmatprep.mubr.bf16.mxu0 %v5321
  %5709 = vmatmul.mubr.bf16.gmra.mxu0 %v5581
  %v5710 = vpop.f32.mrf.mxu0
  %v5711 = vadd.f32 0.0, %v5710
  %v5712 = vpop.f32.mrf.mxu0
  %v5713 = vadd.f32 0.0, %v5712
  %v5714 = vpop.f32.mrf.mxu0
  %v5715 = vadd.f32 0.0, %v5714
  %v5716 = vpop.f32.mrf.mxu0
  %v5717 = vadd.f32 0.0, %v5716
  %5718 = vmatprep.mubr.bf16.mxu0 %v5322
  %5719 = vmatmul.mubr.bf16.gmra.mxu0 %v5582
  %v5720 = vpop.f32.mrf.mxu0
  %v5721 = vadd.f32 0.0, %v5720
  %v5722 = vpop.f32.mrf.mxu0
  %v5723 = vadd.f32 0.0, %v5722
  %v5724 = vpop.f32.mrf.mxu0
  %v5725 = vadd.f32 0.0, %v5724
  %v5726 = vpop.f32.mrf.mxu0
  %v5727 = vadd.f32 0.0, %v5726
  %5728 = vdwg.mxu0
  %5729 = vmatprep.subr.bf16.mxu0 %v3828
  %5730 = vmatpush1.bf16.msra.mxu0 %v3827
  %5731 = vmatprep.subr.bf16.mxu0 %v3820
  %5732 = vmatpush1.bf16.msra.mxu0 %v3819
  %5733 = vmatprep.subr.bf16.mxu0 %v3812
  %5734 = vmatpush1.bf16.msra.mxu0 %v3811
  %5735 = vmatprep.subr.bf16.mxu0 %v3804
  %5736 = vmatpush1.bf16.msra.mxu0 %v3803
  %5737 = vmatprep.subr.bf16.mxu0 %v3796
  %5738 = vmatpush1.bf16.msra.mxu0 %v3795
  %5739 = vmatprep.subr.bf16.mxu0 %v3788
  %5740 = vmatpush1.bf16.msra.mxu0 %v3787
  %5741 = vmatprep.subr.bf16.mxu0 %v3780
  %5742 = vmatpush1.bf16.msra.mxu0 %v3779
  %5743 = vmatprep.subr.bf16.mxu0 %v3772
  %5744 = vmatpush1.bf16.msra.mxu0 %v3771
  %5745 = vmatprep.subr.bf16.mxu0 %v3892
  %5746 = vmatpush2.bf16.msra.mxu0 %v3891
  %5747 = vmatprep.subr.bf16.mxu0 %v3884
  %5748 = vmatpush2.bf16.msra.mxu0 %v3883
  %5749 = vmatprep.subr.bf16.mxu0 %v3876
  %5750 = vmatpush2.bf16.msra.mxu0 %v3875
  %5751 = vmatprep.subr.bf16.mxu0 %v3868
  %5752 = vmatpush2.bf16.msra.mxu0 %v3867
  %5753 = vmatprep.subr.bf16.mxu0 %v3860
  %5754 = vmatpush2.bf16.msra.mxu0 %v3859
  %5755 = vmatprep.subr.bf16.mxu0 %v3852
  %5756 = vmatpush2.bf16.msra.mxu0 %v3851
  %5757 = vmatprep.subr.bf16.mxu0 %v3844
  %5758 = vmatpush2.bf16.msra.mxu0 %v3843
  %5759 = vmatprep.subr.bf16.mxu0 %v3836
  %5760 = vmatpush2.bf16.msra.mxu0 %v3835
  %5761 = vmatprep.mubr.bf16.mxu0 %v5319
  %5762 = vmatmul.mubr.bf16.gmra.mxu0 %v5579
  %v5763 = vpop.f32.mrf.mxu0
  %v5764 = vadd.f32 0.0, %v5763
  %v5765 = vpop.f32.mrf.mxu0
  %v5766 = vadd.f32 0.0, %v5765
  %v5767 = vpop.f32.mrf.mxu0
  %v5768 = vadd.f32 0.0, %v5767
  %v5769 = vpop.f32.mrf.mxu0
  %v5770 = vadd.f32 0.0, %v5769
  %5771 = vmatprep.mubr.bf16.mxu0 %v5320
  %5772 = vmatmul.mubr.bf16.gmra.mxu0 %v5580
  %v5773 = vpop.f32.mrf.mxu0
  %v5774 = vadd.f32 0.0, %v5773
  %v5775 = vpop.f32.mrf.mxu0
  %v5776 = vadd.f32 0.0, %v5775
  %v5777 = vpop.f32.mrf.mxu0
  %v5778 = vadd.f32 0.0, %v5777
  %v5779 = vpop.f32.mrf.mxu0
  %v5780 = vadd.f32 0.0, %v5779
  %5781 = vmatprep.mubr.bf16.mxu0 %v5321
  %5782 = vmatmul.mubr.bf16.gmra.mxu0 %v5581
  %v5783 = vpop.f32.mrf.mxu0
  %v5784 = vadd.f32 0.0, %v5783
  %v5785 = vpop.f32.mrf.mxu0
  %v5786 = vadd.f32 0.0, %v5785
  %v5787 = vpop.f32.mrf.mxu0
  %v5788 = vadd.f32 0.0, %v5787
  %v5789 = vpop.f32.mrf.mxu0
  %v5790 = vadd.f32 0.0, %v5789
  %5791 = vmatprep.mubr.bf16.mxu0 %v5322
  %5792 = vmatmul.mubr.bf16.gmra.mxu0 %v5582
  %v5793 = vpop.f32.mrf.mxu0
  %v5794 = vadd.f32 0.0, %v5793
  %v5795 = vpop.f32.mrf.mxu0
  %v5796 = vadd.f32 0.0, %v5795
  %v5797 = vpop.f32.mrf.mxu0
  %v5798 = vadd.f32 0.0, %v5797
  %v5799 = vpop.f32.mrf.mxu0
  %v5800 = vadd.f32 0.0, %v5799
  %5801 = vdwg.mxu0
  %5802 = vmatprep.subr.bf16.mxu0 %v3830
  %5803 = vmatpush1.bf16.msra.mxu0 %v3829
  %5804 = vmatprep.subr.bf16.mxu0 %v3822
  %5805 = vmatpush1.bf16.msra.mxu0 %v3821
  %5806 = vmatprep.subr.bf16.mxu0 %v3814
  %5807 = vmatpush1.bf16.msra.mxu0 %v3813
  %5808 = vmatprep.subr.bf16.mxu0 %v3806
  %5809 = vmatpush1.bf16.msra.mxu0 %v3805
  %5810 = vmatprep.subr.bf16.mxu0 %v3798
  %5811 = vmatpush1.bf16.msra.mxu0 %v3797
  %5812 = vmatprep.subr.bf16.mxu0 %v3790
  %5813 = vmatpush1.bf16.msra.mxu0 %v3789
  %5814 = vmatprep.subr.bf16.mxu0 %v3782
  %5815 = vmatpush1.bf16.msra.mxu0 %v3781
  %5816 = vmatprep.subr.bf16.mxu0 %v3774
  %5817 = vmatpush1.bf16.msra.mxu0 %v3773
  %5818 = vmatprep.subr.bf16.mxu0 %v3894
  %5819 = vmatpush2.bf16.msra.mxu0 %v3893
  %5820 = vmatprep.subr.bf16.mxu0 %v3886
  %5821 = vmatpush2.bf16.msra.mxu0 %v3885
  %5822 = vmatprep.subr.bf16.mxu0 %v3878
  %5823 = vmatpush2.bf16.msra.mxu0 %v3877
  %5824 = vmatprep.subr.bf16.mxu0 %v3870
  %5825 = vmatpush2.bf16.msra.mxu0 %v3869
  %5826 = vmatprep.subr.bf16.mxu0 %v3862
  %5827 = vmatpush2.bf16.msra.mxu0 %v3861
  %5828 = vmatprep.subr.bf16.mxu0 %v3854
  %5829 = vmatpush2.bf16.msra.mxu0 %v3853
  %5830 = vmatprep.subr.bf16.mxu0 %v3846
  %5831 = vmatpush2.bf16.msra.mxu0 %v3845
  %5832 = vmatprep.subr.bf16.mxu0 %v3838
  %5833 = vmatpush2.bf16.msra.mxu0 %v3837
  %5834 = vmatprep.mubr.bf16.mxu0 %v5319
  %5835 = vmatmul.mubr.bf16.gmra.mxu0 %v5579
  %v5836 = vpop.f32.mrf.mxu0
  %v5837 = vadd.f32 0.0, %v5836
  %v5838 = vpop.f32.mrf.mxu0
  %v5839 = vadd.f32 0.0, %v5838
  %v5840 = vpop.f32.mrf.mxu0
  %v5841 = vadd.f32 0.0, %v5840
  %v5842 = vpop.f32.mrf.mxu0
  %v5843 = vadd.f32 0.0, %v5842
  %5844 = vmatprep.mubr.bf16.mxu0 %v5320
  %5845 = vmatmul.mubr.bf16.gmra.mxu0 %v5580
  %v5846 = vpop.f32.mrf.mxu0
  %v5847 = vadd.f32 0.0, %v5846
  %v5848 = vpop.f32.mrf.mxu0
  %v5849 = vadd.f32 0.0, %v5848
  %v5850 = vpop.f32.mrf.mxu0
  %v5851 = vadd.f32 0.0, %v5850
  %v5852 = vpop.f32.mrf.mxu0
  %v5853 = vadd.f32 0.0, %v5852
  %5854 = vmatprep.mubr.bf16.mxu0 %v5321
  %5855 = vmatmul.mubr.bf16.gmra.mxu0 %v5581
  %v5856 = vpop.f32.mrf.mxu0
  %v5857 = vadd.f32 0.0, %v5856
  %v5858 = vpop.f32.mrf.mxu0
  %v5859 = vadd.f32 0.0, %v5858
  %v5860 = vpop.f32.mrf.mxu0
  %v5861 = vadd.f32 0.0, %v5860
  %v5862 = vpop.f32.mrf.mxu0
  %v5863 = vadd.f32 0.0, %v5862
  %5864 = vmatprep.mubr.bf16.mxu0 %v5322
  %5865 = vmatmul.mubr.bf16.gmra.mxu0 %v5582
  %v5866 = vpop.f32.mrf.mxu0
  %v5867 = vadd.f32 0.0, %v5866
  %v5868 = vpop.f32.mrf.mxu0
  %v5869 = vadd.f32 0.0, %v5868
  %v5870 = vpop.f32.mrf.mxu0
  %v5871 = vadd.f32 0.0, %v5870
  %v5872 = vpop.f32.mrf.mxu0
  %v5873 = vadd.f32 0.0, %v5872
  %5874 = vdwg.mxu0
  %v5875 = vadd.f32 %v5618, %v3106
  %v5876 = vadd.f32 %v5620, %v3110
  %v5877 = vadd.f32 %v5691, %v3114
  %v5878 = vadd.f32 %v5693, %v3118
  %v5879 = vadd.f32 %v5622, %v3106
  %v5880 = vadd.f32 %v5624, %v3110
  %v5881 = vadd.f32 %v5695, %v3114
  %v5882 = vadd.f32 %v5697, %v3118
  %v5883 = vadd.f32 %v5628, %v3106
  %v5884 = vadd.f32 %v5630, %v3110
  %v5885 = vadd.f32 %v5701, %v3114
  %v5886 = vadd.f32 %v5703, %v3118
  %v5887 = vadd.f32 %v5632, %v3106
  %v5888 = vadd.f32 %v5634, %v3110
  %v5889 = vadd.f32 %v5705, %v3114
  %v5890 = vadd.f32 %v5707, %v3118
  %v5891 = vadd.f32 %v5638, %v3106
  %v5892 = vadd.f32 %v5640, %v3110
  %v5893 = vadd.f32 %v5711, %v3114
  %v5894 = vadd.f32 %v5713, %v3118
  %v5895 = vadd.f32 %v5642, %v3106
  %v5896 = vadd.f32 %v5644, %v3110
  %v5897 = vadd.f32 %v5715, %v3114
  %v5898 = vadd.f32 %v5717, %v3118
  %v5899 = vadd.f32 %v5648, %v3106
  %v5900 = vadd.f32 %v5650, %v3110
  %v5901 = vadd.f32 %v5721, %v3114
  %v5902 = vadd.f32 %v5723, %v3118
  %v5903 = vadd.f32 %v5652, %v3106
  %v5904 = vadd.f32 %v5654, %v3110
  %v5905 = vadd.f32 %v5725, %v3114
  %v5906 = vadd.f32 %v5727, %v3118
  %v5907 = vxor.u32 %v5875, 2147483648
  %v5908 = vxor.u32 %v5879, 2147483648
  %v5909 = vxor.u32 %v5883, 2147483648
  %v5910 = vxor.u32 %v5887, 2147483648
  %v5911 = vxor.u32 %v5891, 2147483648
  %v5912 = vxor.u32 %v5895, 2147483648
  %v5913 = vxor.u32 %v5899, 2147483648
  %v5914 = vxor.u32 %v5903, 2147483648
  %v5915 = vmul.f32 %v5907, 1.442695
  %v5916 = vpow.pop %v5915
  %v5917 = vmul.f32 %v5908, 1.442695
  %v5918 = vpow.pop %v5917
  %v5919 = vmul.f32 %v5909, 1.442695
  %v5920 = vpow.pop %v5919
  %v5921 = vmul.f32 %v5910, 1.442695
  %v5922 = vpow.pop %v5921
  %v5923 = vmul.f32 %v5911, 1.442695
  %v5924 = vpow.pop %v5923
  %v5925 = vmul.f32 %v5912, 1.442695
  %v5926 = vpow.pop %v5925
  %v5927 = vmul.f32 %v5913, 1.442695
  %v5928 = vpow.pop %v5927
  %v5929 = vmul.f32 %v5914, 1.442695
  %v5930 = vpow.pop %v5929
  %v5931 = vadd.f32 %v5916, 1.0
  %v5932 = vadd.f32 %v5918, 1.0
  %v5933 = vadd.f32 %v5920, 1.0
  %v5934 = vadd.f32 %v5922, 1.0
  %v5935 = vadd.f32 %v5924, 1.0
  %v5936 = vadd.f32 %v5926, 1.0
  %v5937 = vadd.f32 %v5928, 1.0
  %v5938 = vadd.f32 %v5930, 1.0
  %v5939 = vrcp.pop %v5931
  %v5940 = vmul.f32 1.0, %v5939
  %v5941 = vrcp.pop %v5932
  %v5942 = vmul.f32 1.0, %v5941
  %v5943 = vrcp.pop %v5933
  %v5944 = vmul.f32 1.0, %v5943
  %v5945 = vrcp.pop %v5934
  %v5946 = vmul.f32 1.0, %v5945
  %v5947 = vrcp.pop %v5935
  %v5948 = vmul.f32 1.0, %v5947
  %v5949 = vrcp.pop %v5936
  %v5950 = vmul.f32 1.0, %v5949
  %v5951 = vrcp.pop %v5937
  %v5952 = vmul.f32 1.0, %v5951
  %v5953 = vrcp.pop %v5938
  %v5954 = vmul.f32 1.0, %v5953
  %v5955 = vxor.u32 %v5876, 2147483648
  %v5956 = vxor.u32 %v5880, 2147483648
  %v5957 = vxor.u32 %v5884, 2147483648
  %v5958 = vxor.u32 %v5888, 2147483648
  %v5959 = vxor.u32 %v5892, 2147483648
  %v5960 = vxor.u32 %v5896, 2147483648
  %v5961 = vxor.u32 %v5900, 2147483648
  %v5962 = vxor.u32 %v5904, 2147483648
  %v5963 = vmul.f32 %v5955, 1.442695
  %v5964 = vpow.pop %v5963
  %v5965 = vmul.f32 %v5956, 1.442695
  %v5966 = vpow.pop %v5965
  %v5967 = vmul.f32 %v5957, 1.442695
  %v5968 = vpow.pop %v5967
  %v5969 = vmul.f32 %v5958, 1.442695
  %v5970 = vpow.pop %v5969
  %v5971 = vmul.f32 %v5959, 1.442695
  %v5972 = vpow.pop %v5971
  %v5973 = vmul.f32 %v5960, 1.442695
  %v5974 = vpow.pop %v5973
  %v5975 = vmul.f32 %v5961, 1.442695
  %v5976 = vpow.pop %v5975
  %v5977 = vmul.f32 %v5962, 1.442695
  %v5978 = vpow.pop %v5977
  %v5979 = vadd.f32 %v5964, 1.0
  %v5980 = vadd.f32 %v5966, 1.0
  %v5981 = vadd.f32 %v5968, 1.0
  %v5982 = vadd.f32 %v5970, 1.0
  %v5983 = vadd.f32 %v5972, 1.0
  %v5984 = vadd.f32 %v5974, 1.0
  %v5985 = vadd.f32 %v5976, 1.0
  %v5986 = vadd.f32 %v5978, 1.0
  %v5987 = vrcp.pop %v5979
  %v5988 = vmul.f32 1.0, %v5987
  %v5989 = vrcp.pop %v5980
  %v5990 = vmul.f32 1.0, %v5989
  %v5991 = vrcp.pop %v5981
  %v5992 = vmul.f32 1.0, %v5991
  %v5993 = vrcp.pop %v5982
  %v5994 = vmul.f32 1.0, %v5993
  %v5995 = vrcp.pop %v5983
  %v5996 = vmul.f32 1.0, %v5995
  %v5997 = vrcp.pop %v5984
  %v5998 = vmul.f32 1.0, %v5997
  %v5999 = vrcp.pop %v5985
  %v6000 = vmul.f32 1.0, %v5999
  %v6001 = vrcp.pop %v5986
  %v6002 = vmul.f32 1.0, %v6001
  %v6003 = vtanh.pop %v5877
  %v6004 = vtanh.pop %v5881
  %v6005 = vtanh.pop %v5885
  %v6006 = vtanh.pop %v5889
  %v6007 = vtanh.pop %v5893
  %v6008 = vtanh.pop %v5897
  %v6009 = vtanh.pop %v5901
  %v6010 = vtanh.pop %v5905
  %v6011 = vxor.u32 %v5878, 2147483648
  %v6012 = vxor.u32 %v5882, 2147483648
  %v6013 = vxor.u32 %v5886, 2147483648
  %v6014 = vxor.u32 %v5890, 2147483648
  %v6015 = vxor.u32 %v5894, 2147483648
  %v6016 = vxor.u32 %v5898, 2147483648
  %v6017 = vxor.u32 %v5902, 2147483648
  %v6018 = vxor.u32 %v5906, 2147483648
  %v6019 = vmul.f32 %v6011, 1.442695
  %v6020 = vpow.pop %v6019
  %v6021 = vmul.f32 %v6012, 1.442695
  %v6022 = vpow.pop %v6021
  %v6023 = vmul.f32 %v6013, 1.442695
  %v6024 = vpow.pop %v6023
  %v6025 = vmul.f32 %v6014, 1.442695
  %v6026 = vpow.pop %v6025
  %v6027 = vmul.f32 %v6015, 1.442695
  %v6028 = vpow.pop %v6027
  %v6029 = vmul.f32 %v6016, 1.442695
  %v6030 = vpow.pop %v6029
  %v6031 = vmul.f32 %v6017, 1.442695
  %v6032 = vpow.pop %v6031
  %v6033 = vmul.f32 %v6018, 1.442695
  %v6034 = vpow.pop %v6033
  %v6035 = vadd.f32 %v6020, 1.0
  %v6036 = vadd.f32 %v6022, 1.0
  %v6037 = vadd.f32 %v6024, 1.0
  %v6038 = vadd.f32 %v6026, 1.0
  %v6039 = vadd.f32 %v6028, 1.0
  %v6040 = vadd.f32 %v6030, 1.0
  %v6041 = vadd.f32 %v6032, 1.0
  %v6042 = vadd.f32 %v6034, 1.0
  %v6043 = vrcp.pop %v6035
  %v6044 = vmul.f32 1.0, %v6043
  %v6045 = vrcp.pop %v6036
  %v6046 = vmul.f32 1.0, %v6045
  %v6047 = vrcp.pop %v6037
  %v6048 = vmul.f32 1.0, %v6047
  %v6049 = vrcp.pop %v6038
  %v6050 = vmul.f32 1.0, %v6049
  %v6051 = vrcp.pop %v6039
  %v6052 = vmul.f32 1.0, %v6051
  %v6053 = vrcp.pop %v6040
  %v6054 = vmul.f32 1.0, %v6053
  %v6055 = vrcp.pop %v6041
  %v6056 = vmul.f32 1.0, %v6055
  %v6057 = vrcp.pop %v6042
  %v6058 = vmul.f32 1.0, %v6057
  %v6059 = vmul.f32 %v5988, %v5295
  %v6060 = vmul.f32 %v5990, %v5296
  %v6061 = vmul.f32 %v5992, %v5297
  %v6062 = vmul.f32 %v5994, %v5298
  %v6063 = vmul.f32 %v5996, %v5299
  %v6064 = vmul.f32 %v5998, %v5300
  %v6065 = vmul.f32 %v6000, %v5301
  %v6066 = vmul.f32 %v6002, %v5302
  %v6067 = vmul.f32 %v5940, %v6003
  %v6068 = vmul.f32 %v5942, %v6004
  %v6069 = vmul.f32 %v5944, %v6005
  %v6070 = vmul.f32 %v5946, %v6006
  %v6071 = vmul.f32 %v5948, %v6007
  %v6072 = vmul.f32 %v5950, %v6008
  %v6073 = vmul.f32 %v5952, %v6009
  %v6074 = vmul.f32 %v5954, %v6010
  %v6075 = vadd.f32 %v6059, %v6067
  %v6076 = vadd.f32 %v6060, %v6068
  %v6077 = vadd.f32 %v6061, %v6069
  %v6078 = vadd.f32 %v6062, %v6070
  %v6079 = vadd.f32 %v6063, %v6071
  %v6080 = vadd.f32 %v6064, %v6072
  %v6081 = vadd.f32 %v6065, %v6073
  %v6082 = vadd.f32 %v6066, %v6074
  %v6083 = vtanh.pop %v6075
  %v6084 = vtanh.pop %v6076
  %v6085 = vtanh.pop %v6077
  %v6086 = vtanh.pop %v6078
  %v6087 = vtanh.pop %v6079
  %v6088 = vtanh.pop %v6080
  %v6089 = vtanh.pop %v6081
  %v6090 = vtanh.pop %v6082
  %v6091 = vmul.f32 %v6044, %v6083
  %v6092 = vmul.f32 %v6046, %v6084
  %v6093 = vmul.f32 %v6048, %v6085
  %v6094 = vmul.f32 %v6050, %v6086
  %v6095 = vmul.f32 %v6052, %v6087
  %v6096 = vmul.f32 %v6054, %v6088
  %v6097 = vmul.f32 %v6056, %v6089
  %v6098 = vmul.f32 %v6058, %v6090
  %v6099 = vpack.c.bf16 %v6092, %v6091
  %v6100 = vpack.c.bf16 %v6094, %v6093
  %v6101 = vpack.c.bf16 %v6096, %v6095
  %v6102 = vpack.c.bf16 %v6098, %v6097
  %v6103 = vld [vmem:[#allocation2 + $0x300] sm:$0xff]
  %v6104 = vld [vmem:[#allocation2 + $0x308] sm:$0xff]
  %v6105 = vld [vmem:[#allocation2 + $0x310] sm:$0xff]
  %v6106 = vld [vmem:[#allocation2 + $0x318] sm:$0xff]
  %v6107 = vld [vmem:[#allocation2 + $0x320] sm:$0xff]
  %v6108 = vld [vmem:[#allocation2 + $0x328] sm:$0xff]
  %v6109 = vld [vmem:[#allocation2 + $0x330] sm:$0xff]
  %v6110 = vld [vmem:[#allocation2 + $0x338] sm:$0xff]
  %v6111 = vld [vmem:[#allocation2 + $0x340] sm:$0xff]
  %v6112 = vld [vmem:[#allocation2 + $0x348] sm:$0xff]
  %v6113 = vld [vmem:[#allocation2 + $0x350] sm:$0xff]
  %v6114 = vld [vmem:[#allocation2 + $0x358] sm:$0xff]
  %v6115 = vld [vmem:[#allocation2 + $0x360] sm:$0xff]
  %v6116 = vld [vmem:[#allocation2 + $0x368] sm:$0xff]
  %v6117 = vld [vmem:[#allocation2 + $0x370] sm:$0xff]
  %v6118 = vld [vmem:[#allocation2 + $0x378] sm:$0xff]
  %v6119 = vld [vmem:[#allocation2 + $0x380] sm:$0xff]
  %v6120 = vld [vmem:[#allocation2 + $0x388] sm:$0xff]
  %v6121 = vld [vmem:[#allocation2 + $0x390] sm:$0xff]
  %v6122 = vld [vmem:[#allocation2 + $0x398] sm:$0xff]
  %v6123 = vld [vmem:[#allocation2 + $0x3a0] sm:$0xff]
  %v6124 = vld [vmem:[#allocation2 + $0x3a8] sm:$0xff]
  %v6125 = vld [vmem:[#allocation2 + $0x3b0] sm:$0xff]
  %v6126 = vld [vmem:[#allocation2 + $0x3b8] sm:$0xff]
  %v6127 = vld [vmem:[#allocation2 + $0x3c0] sm:$0xff]
  %v6128 = vld [vmem:[#allocation2 + $0x3c8] sm:$0xff]
  %v6129 = vld [vmem:[#allocation2 + $0x3d0] sm:$0xff]
  %v6130 = vld [vmem:[#allocation2 + $0x3d8] sm:$0xff]
  %v6131 = vld [vmem:[#allocation2 + $0x3e0] sm:$0xff]
  %v6132 = vld [vmem:[#allocation2 + $0x3e8] sm:$0xff]
  %v6133 = vld [vmem:[#allocation2 + $0x3f0] sm:$0xff]
  %v6134 = vld [vmem:[#allocation2 + $0x3f8] sm:$0xff]
  %v6135 = vadd.f32 %v5764, %v6103
  %v6136 = vadd.f32 %v5766, %v6104
  %v6137 = vadd.f32 %v5837, %v6105
  %v6138 = vadd.f32 %v5839, %v6106
  %v6139 = vadd.f32 %v5768, %v6107
  %v6140 = vadd.f32 %v5770, %v6108
  %v6141 = vadd.f32 %v5841, %v6109
  %v6142 = vadd.f32 %v5843, %v6110
  %v6143 = vadd.f32 %v5774, %v6111
  %v6144 = vadd.f32 %v5776, %v6112
  %v6145 = vadd.f32 %v5847, %v6113
  %v6146 = vadd.f32 %v5849, %v6114
  %v6147 = vadd.f32 %v5778, %v6115
  %v6148 = vadd.f32 %v5780, %v6116
  %v6149 = vadd.f32 %v5851, %v6117
  %v6150 = vadd.f32 %v5853, %v6118
  %v6151 = vadd.f32 %v5784, %v6119
  %v6152 = vadd.f32 %v5786, %v6120
  %v6153 = vadd.f32 %v5857, %v6121
  %v6154 = vadd.f32 %v5859, %v6122
  %v6155 = vadd.f32 %v5788, %v6123
  %v6156 = vadd.f32 %v5790, %v6124
  %v6157 = vadd.f32 %v5861, %v6125
  %v6158 = vadd.f32 %v5863, %v6126
  %v6159 = vadd.f32 %v5794, %v6127
  %v6160 = vadd.f32 %v5796, %v6128
  %v6161 = vadd.f32 %v5867, %v6129
  %v6162 = vadd.f32 %v5869, %v6130
  %v6163 = vadd.f32 %v5798, %v6131
  %v6164 = vadd.f32 %v5800, %v6132
  %v6165 = vadd.f32 %v5871, %v6133
  %v6166 = vadd.f32 %v5873, %v6134
  %v6167 = vxor.u32 %v6135, 2147483648
  %v6168 = vxor.u32 %v6139, 2147483648
  %v6169 = vxor.u32 %v6143, 2147483648
  %v6170 = vxor.u32 %v6147, 2147483648
  %v6171 = vxor.u32 %v6151, 2147483648
  %v6172 = vxor.u32 %v6155, 2147483648
  %v6173 = vxor.u32 %v6159, 2147483648
  %v6174 = vxor.u32 %v6163, 2147483648
  %v6175 = vmul.f32 %v6167, 1.442695
  %v6176 = vpow.pop %v6175
  %v6177 = vmul.f32 %v6168, 1.442695
  %v6178 = vpow.pop %v6177
  %v6179 = vmul.f32 %v6169, 1.442695
  %v6180 = vpow.pop %v6179
  %v6181 = vmul.f32 %v6170, 1.442695
  %v6182 = vpow.pop %v6181
  %v6183 = vmul.f32 %v6171, 1.442695
  %v6184 = vpow.pop %v6183
  %v6185 = vmul.f32 %v6172, 1.442695
  %v6186 = vpow.pop %v6185
  %v6187 = vmul.f32 %v6173, 1.442695
  %v6188 = vpow.pop %v6187
  %v6189 = vmul.f32 %v6174, 1.442695
  %v6190 = vpow.pop %v6189
  %v6191 = vadd.f32 %v6176, 1.0
  %v6192 = vadd.f32 %v6178, 1.0
  %v6193 = vadd.f32 %v6180, 1.0
  %v6194 = vadd.f32 %v6182, 1.0
  %v6195 = vadd.f32 %v6184, 1.0
  %v6196 = vadd.f32 %v6186, 1.0
  %v6197 = vadd.f32 %v6188, 1.0
  %v6198 = vadd.f32 %v6190, 1.0
  %v6199 = vrcp.pop %v6191
  %v6200 = vmul.f32 1.0, %v6199
  %v6201 = vrcp.pop %v6192
  %v6202 = vmul.f32 1.0, %v6201
  %v6203 = vrcp.pop %v6193
  %v6204 = vmul.f32 1.0, %v6203
  %v6205 = vrcp.pop %v6194
  %v6206 = vmul.f32 1.0, %v6205
  %v6207 = vrcp.pop %v6195
  %v6208 = vmul.f32 1.0, %v6207
  %v6209 = vrcp.pop %v6196
  %v6210 = vmul.f32 1.0, %v6209
  %v6211 = vrcp.pop %v6197
  %v6212 = vmul.f32 1.0, %v6211
  %v6213 = vrcp.pop %v6198
  %v6214 = vmul.f32 1.0, %v6213
  %v6215 = vxor.u32 %v6136, 2147483648
  %v6216 = vxor.u32 %v6140, 2147483648
  %v6217 = vxor.u32 %v6144, 2147483648
  %v6218 = vxor.u32 %v6148, 2147483648
  %v6219 = vxor.u32 %v6152, 2147483648
  %v6220 = vxor.u32 %v6156, 2147483648
  %v6221 = vxor.u32 %v6160, 2147483648
  %v6222 = vxor.u32 %v6164, 2147483648
  %v6223 = vmul.f32 %v6215, 1.442695
  %v6224 = vpow.pop %v6223
  %v6225 = vmul.f32 %v6216, 1.442695
  %v6226 = vpow.pop %v6225
  %v6227 = vmul.f32 %v6217, 1.442695
  %v6228 = vpow.pop %v6227
  %v6229 = vmul.f32 %v6218, 1.442695
  %v6230 = vpow.pop %v6229
  %v6231 = vmul.f32 %v6219, 1.442695
  %v6232 = vpow.pop %v6231
  %v6233 = vmul.f32 %v6220, 1.442695
  %v6234 = vpow.pop %v6233
  %v6235 = vmul.f32 %v6221, 1.442695
  %v6236 = vpow.pop %v6235
  %v6237 = vmul.f32 %v6222, 1.442695
  %v6238 = vpow.pop %v6237
  %v6239 = vadd.f32 %v6224, 1.0
  %v6240 = vadd.f32 %v6226, 1.0
  %v6241 = vadd.f32 %v6228, 1.0
  %v6242 = vadd.f32 %v6230, 1.0
  %v6243 = vadd.f32 %v6232, 1.0
  %v6244 = vadd.f32 %v6234, 1.0
  %v6245 = vadd.f32 %v6236, 1.0
  %v6246 = vadd.f32 %v6238, 1.0
  %v6247 = vrcp.pop %v6239
  %v6248 = vmul.f32 1.0, %v6247
  %v6249 = vrcp.pop %v6240
  %v6250 = vmul.f32 1.0, %v6249
  %v6251 = vrcp.pop %v6241
  %v6252 = vmul.f32 1.0, %v6251
  %v6253 = vrcp.pop %v6242
  %v6254 = vmul.f32 1.0, %v6253
  %v6255 = vrcp.pop %v6243
  %v6256 = vmul.f32 1.0, %v6255
  %v6257 = vrcp.pop %v6244
  %v6258 = vmul.f32 1.0, %v6257
  %v6259 = vrcp.pop %v6245
  %v6260 = vmul.f32 1.0, %v6259
  %v6261 = vrcp.pop %v6246
  %v6262 = vmul.f32 1.0, %v6261
  %v6263 = vtanh.pop %v6137
  %v6264 = vtanh.pop %v6141
  %v6265 = vtanh.pop %v6145
  %v6266 = vtanh.pop %v6149
  %v6267 = vtanh.pop %v6153
  %v6268 = vtanh.pop %v6157
  %v6269 = vtanh.pop %v6161
  %v6270 = vtanh.pop %v6165
  %v6271 = vxor.u32 %v6138, 2147483648
  %v6272 = vxor.u32 %v6142, 2147483648
  %v6273 = vxor.u32 %v6146, 2147483648
  %v6274 = vxor.u32 %v6150, 2147483648
  %v6275 = vxor.u32 %v6154, 2147483648
  %v6276 = vxor.u32 %v6158, 2147483648
  %v6277 = vxor.u32 %v6162, 2147483648
  %v6278 = vxor.u32 %v6166, 2147483648
  %v6279 = vmul.f32 %v6271, 1.442695
  %v6280 = vpow.pop %v6279
  %v6281 = vmul.f32 %v6272, 1.442695
  %v6282 = vpow.pop %v6281
  %v6283 = vmul.f32 %v6273, 1.442695
  %v6284 = vpow.pop %v6283
  %v6285 = vmul.f32 %v6274, 1.442695
  %v6286 = vpow.pop %v6285
  %v6287 = vmul.f32 %v6275, 1.442695
  %v6288 = vpow.pop %v6287
  %v6289 = vmul.f32 %v6276, 1.442695
  %v6290 = vpow.pop %v6289
  %v6291 = vmul.f32 %v6277, 1.442695
  %v6292 = vpow.pop %v6291
  %v6293 = vmul.f32 %v6278, 1.442695
  %v6294 = vpow.pop %v6293
  %v6295 = vadd.f32 %v6280, 1.0
  %v6296 = vadd.f32 %v6282, 1.0
  %v6297 = vadd.f32 %v6284, 1.0
  %v6298 = vadd.f32 %v6286, 1.0
  %v6299 = vadd.f32 %v6288, 1.0
  %v6300 = vadd.f32 %v6290, 1.0
  %v6301 = vadd.f32 %v6292, 1.0
  %v6302 = vadd.f32 %v6294, 1.0
  %v6303 = vrcp.pop %v6295
  %v6304 = vmul.f32 1.0, %v6303
  %v6305 = vrcp.pop %v6296
  %v6306 = vmul.f32 1.0, %v6305
  %v6307 = vrcp.pop %v6297
  %v6308 = vmul.f32 1.0, %v6307
  %v6309 = vrcp.pop %v6298
  %v6310 = vmul.f32 1.0, %v6309
  %v6311 = vrcp.pop %v6299
  %v6312 = vmul.f32 1.0, %v6311
  %v6313 = vrcp.pop %v6300
  %v6314 = vmul.f32 1.0, %v6313
  %v6315 = vrcp.pop %v6301
  %v6316 = vmul.f32 1.0, %v6315
  %v6317 = vrcp.pop %v6302
  %v6318 = vmul.f32 1.0, %v6317
  %v6319 = vmul.f32 %v6248, %v5555
  %v6320 = vmul.f32 %v6250, %v5556
  %v6321 = vmul.f32 %v6252, %v5557
  %v6322 = vmul.f32 %v6254, %v5558
  %v6323 = vmul.f32 %v6256, %v5559
  %v6324 = vmul.f32 %v6258, %v5560
  %v6325 = vmul.f32 %v6260, %v5561
  %v6326 = vmul.f32 %v6262, %v5562
  %v6327 = vmul.f32 %v6200, %v6263
  %v6328 = vmul.f32 %v6202, %v6264
  %v6329 = vmul.f32 %v6204, %v6265
  %v6330 = vmul.f32 %v6206, %v6266
  %v6331 = vmul.f32 %v6208, %v6267
  %v6332 = vmul.f32 %v6210, %v6268
  %v6333 = vmul.f32 %v6212, %v6269
  %v6334 = vmul.f32 %v6214, %v6270
  %v6335 = vadd.f32 %v6319, %v6327
  %v6336 = vadd.f32 %v6320, %v6328
  %v6337 = vadd.f32 %v6321, %v6329
  %v6338 = vadd.f32 %v6322, %v6330
  %v6339 = vadd.f32 %v6323, %v6331
  %v6340 = vadd.f32 %v6324, %v6332
  %v6341 = vadd.f32 %v6325, %v6333
  %v6342 = vadd.f32 %v6326, %v6334
  %v6343 = vtanh.pop %v6335
  %v6344 = vtanh.pop %v6336
  %v6345 = vtanh.pop %v6337
  %v6346 = vtanh.pop %v6338
  %v6347 = vtanh.pop %v6339
  %v6348 = vtanh.pop %v6340
  %v6349 = vtanh.pop %v6341
  %v6350 = vtanh.pop %v6342
  %v6351 = vmul.f32 %v6304, %v6343
  %v6352 = vmul.f32 %v6306, %v6344
  %v6353 = vmul.f32 %v6308, %v6345
  %v6354 = vmul.f32 %v6310, %v6346
  %v6355 = vmul.f32 %v6312, %v6347
  %v6356 = vmul.f32 %v6314, %v6348
  %v6357 = vmul.f32 %v6316, %v6349
  %v6358 = vmul.f32 %v6318, %v6350
  %v6359 = vpack.c.bf16 %v6352, %v6351
  %v6360 = vpack.c.bf16 %v6354, %v6353
  %v6361 = vpack.c.bf16 %v6356, %v6355
  %v6362 = vpack.c.bf16 %v6358, %v6357
  %6363 = vmatprep.subr.bf16.mxu0 %v3824
  %6364 = vmatpush1.bf16.msra.mxu0 %v3823
  %6365 = vmatprep.subr.bf16.mxu0 %v3816
  %6366 = vmatpush1.bf16.msra.mxu0 %v3815
  %6367 = vmatprep.subr.bf16.mxu0 %v3808
  %6368 = vmatpush1.bf16.msra.mxu0 %v3807
  %6369 = vmatprep.subr.bf16.mxu0 %v3800
  %6370 = vmatpush1.bf16.msra.mxu0 %v3799
  %6371 = vmatprep.subr.bf16.mxu0 %v3792
  %6372 = vmatpush1.bf16.msra.mxu0 %v3791
  %6373 = vmatprep.subr.bf16.mxu0 %v3784
  %6374 = vmatpush1.bf16.msra.mxu0 %v3783
  %6375 = vmatprep.subr.bf16.mxu0 %v3776
  %6376 = vmatpush1.bf16.msra.mxu0 %v3775
  %6377 = vmatprep.subr.bf16.mxu0 %v3768
  %6378 = vmatpush1.bf16.msra.mxu0 %v3767
  %6379 = vmatprep.subr.bf16.mxu0 %v3888
  %6380 = vmatpush2.bf16.msra.mxu0 %v3887
  %6381 = vmatprep.subr.bf16.mxu0 %v3880
  %6382 = vmatpush2.bf16.msra.mxu0 %v3879
  %6383 = vmatprep.subr.bf16.mxu0 %v3872
  %6384 = vmatpush2.bf16.msra.mxu0 %v3871
  %6385 = vmatprep.subr.bf16.mxu0 %v3864
  %6386 = vmatpush2.bf16.msra.mxu0 %v3863
  %6387 = vmatprep.subr.bf16.mxu0 %v3856
  %6388 = vmatpush2.bf16.msra.mxu0 %v3855
  %6389 = vmatprep.subr.bf16.mxu0 %v3848
  %6390 = vmatpush2.bf16.msra.mxu0 %v3847
  %6391 = vmatprep.subr.bf16.mxu0 %v3840
  %6392 = vmatpush2.bf16.msra.mxu0 %v3839
  %6393 = vmatprep.subr.bf16.mxu0 %v3832
  %6394 = vmatpush2.bf16.msra.mxu0 %v3831
  %6395 = vmatprep.mubr.bf16.mxu0 %v6099
  %6396 = vmatmul.mubr.bf16.gmra.mxu0 %v6359
  %v6397 = vpop.f32.mrf.mxu0
  %v6398 = vadd.f32 0.0, %v6397
  %v6399 = vpop.f32.mrf.mxu0
  %v6400 = vadd.f32 0.0, %v6399
  %v6401 = vpop.f32.mrf.mxu0
  %v6402 = vadd.f32 0.0, %v6401
  %v6403 = vpop.f32.mrf.mxu0
  %v6404 = vadd.f32 0.0, %v6403
  %6405 = vmatprep.mubr.bf16.mxu0 %v6100
  %6406 = vmatmul.mubr.bf16.gmra.mxu0 %v6360
  %v6407 = vpop.f32.mrf.mxu0
  %v6408 = vadd.f32 0.0, %v6407
  %v6409 = vpop.f32.mrf.mxu0
  %v6410 = vadd.f32 0.0, %v6409
  %v6411 = vpop.f32.mrf.mxu0
  %v6412 = vadd.f32 0.0, %v6411
  %v6413 = vpop.f32.mrf.mxu0
  %v6414 = vadd.f32 0.0, %v6413
  %6415 = vmatprep.mubr.bf16.mxu0 %v6101
  %6416 = vmatmul.mubr.bf16.gmra.mxu0 %v6361
  %v6417 = vpop.f32.mrf.mxu0
  %v6418 = vadd.f32 0.0, %v6417
  %v6419 = vpop.f32.mrf.mxu0
  %v6420 = vadd.f32 0.0, %v6419
  %v6421 = vpop.f32.mrf.mxu0
  %v6422 = vadd.f32 0.0, %v6421
  %v6423 = vpop.f32.mrf.mxu0
  %v6424 = vadd.f32 0.0, %v6423
  %6425 = vmatprep.mubr.bf16.mxu0 %v6102
  %6426 = vmatmul.mubr.bf16.gmra.mxu0 %v6362
  %v6427 = vpop.f32.mrf.mxu0
  %v6428 = vadd.f32 0.0, %v6427
  %v6429 = vpop.f32.mrf.mxu0
  %v6430 = vadd.f32 0.0, %v6429
  %v6431 = vpop.f32.mrf.mxu0
  %v6432 = vadd.f32 0.0, %v6431
  %v6433 = vpop.f32.mrf.mxu0
  %v6434 = vadd.f32 0.0, %v6433
  %6435 = vdwg.mxu0
  %6436 = vmatprep.subr.bf16.mxu0 %v3826
  %6437 = vmatpush1.bf16.msra.mxu0 %v3825
  %6438 = vmatprep.subr.bf16.mxu0 %v3818
  %6439 = vmatpush1.bf16.msra.mxu0 %v3817
  %6440 = vmatprep.subr.bf16.mxu0 %v3810
  %6441 = vmatpush1.bf16.msra.mxu0 %v3809
  %6442 = vmatprep.subr.bf16.mxu0 %v3802
  %6443 = vmatpush1.bf16.msra.mxu0 %v3801
  %6444 = vmatprep.subr.bf16.mxu0 %v3794
  %6445 = vmatpush1.bf16.msra.mxu0 %v3793
  %6446 = vmatprep.subr.bf16.mxu0 %v3786
  %6447 = vmatpush1.bf16.msra.mxu0 %v3785
  %6448 = vmatprep.subr.bf16.mxu0 %v3778
  %6449 = vmatpush1.bf16.msra.mxu0 %v3777
  %6450 = vmatprep.subr.bf16.mxu0 %v3770
  %6451 = vmatpush1.bf16.msra.mxu0 %v3769
  %6452 = vmatprep.subr.bf16.mxu0 %v3890
  %6453 = vmatpush2.bf16.msra.mxu0 %v3889
  %6454 = vmatprep.subr.bf16.mxu0 %v3882
  %6455 = vmatpush2.bf16.msra.mxu0 %v3881
  %6456 = vmatprep.subr.bf16.mxu0 %v3874
  %6457 = vmatpush2.bf16.msra.mxu0 %v3873
  %6458 = vmatprep.subr.bf16.mxu0 %v3866
  %6459 = vmatpush2.bf16.msra.mxu0 %v3865
  %6460 = vmatprep.subr.bf16.mxu0 %v3858
  %6461 = vmatpush2.bf16.msra.mxu0 %v3857
  %6462 = vmatprep.subr.bf16.mxu0 %v3850
  %6463 = vmatpush2.bf16.msra.mxu0 %v3849
  %6464 = vmatprep.subr.bf16.mxu0 %v3842
  %6465 = vmatpush2.bf16.msra.mxu0 %v3841
  %6466 = vmatprep.subr.bf16.mxu0 %v3834
  %6467 = vmatpush2.bf16.msra.mxu0 %v3833
  %6468 = vmatprep.mubr.bf16.mxu0 %v6099
  %6469 = vmatmul.mubr.bf16.gmra.mxu0 %v6359
  %v6470 = vpop.f32.mrf.mxu0
  %v6471 = vadd.f32 0.0, %v6470
  %v6472 = vpop.f32.mrf.mxu0
  %v6473 = vadd.f32 0.0, %v6472
  %v6474 = vpop.f32.mrf.mxu0
  %v6475 = vadd.f32 0.0, %v6474
  %v6476 = vpop.f32.mrf.mxu0
  %v6477 = vadd.f32 0.0, %v6476
  %6478 = vmatprep.mubr.bf16.mxu0 %v6100
  %6479 = vmatmul.mubr.bf16.gmra.mxu0 %v6360
  %v6480 = vpop.f32.mrf.mxu0
  %v6481 = vadd.f32 0.0, %v6480
  %v6482 = vpop.f32.mrf.mxu0
  %v6483 = vadd.f32 0.0, %v6482
  %v6484 = vpop.f32.mrf.mxu0
  %v6485 = vadd.f32 0.0, %v6484
  %v6486 = vpop.f32.mrf.mxu0
  %v6487 = vadd.f32 0.0, %v6486
  %6488 = vmatprep.mubr.bf16.mxu0 %v6101
  %6489 = vmatmul.mubr.bf16.gmra.mxu0 %v6361
  %v6490 = vpop.f32.mrf.mxu0
  %v6491 = vadd.f32 0.0, %v6490
  %v6492 = vpop.f32.mrf.mxu0
  %v6493 = vadd.f32 0.0, %v6492
  %v6494 = vpop.f32.mrf.mxu0
  %v6495 = vadd.f32 0.0, %v6494
  %v6496 = vpop.f32.mrf.mxu0
  %v6497 = vadd.f32 0.0, %v6496
  %6498 = vmatprep.mubr.bf16.mxu0 %v6102
  %6499 = vmatmul.mubr.bf16.gmra.mxu0 %v6362
  %v6500 = vpop.f32.mrf.mxu0
  %v6501 = vadd.f32 0.0, %v6500
  %v6502 = vpop.f32.mrf.mxu0
  %v6503 = vadd.f32 0.0, %v6502
  %v6504 = vpop.f32.mrf.mxu0
  %v6505 = vadd.f32 0.0, %v6504
  %v6506 = vpop.f32.mrf.mxu0
  %v6507 = vadd.f32 0.0, %v6506
  %6508 = vdwg.mxu0
  %6509 = vmatprep.subr.bf16.mxu0 %v3828
  %6510 = vmatpush1.bf16.msra.mxu0 %v3827
  %6511 = vmatprep.subr.bf16.mxu0 %v3820
  %6512 = vmatpush1.bf16.msra.mxu0 %v3819
  %6513 = vmatprep.subr.bf16.mxu0 %v3812
  %6514 = vmatpush1.bf16.msra.mxu0 %v3811
  %6515 = vmatprep.subr.bf16.mxu0 %v3804
  %6516 = vmatpush1.bf16.msra.mxu0 %v3803
  %6517 = vmatprep.subr.bf16.mxu0 %v3796
  %6518 = vmatpush1.bf16.msra.mxu0 %v3795
  %6519 = vmatprep.subr.bf16.mxu0 %v3788
  %6520 = vmatpush1.bf16.msra.mxu0 %v3787
  %6521 = vmatprep.subr.bf16.mxu0 %v3780
  %6522 = vmatpush1.bf16.msra.mxu0 %v3779
  %6523 = vmatprep.subr.bf16.mxu0 %v3772
  %6524 = vmatpush1.bf16.msra.mxu0 %v3771
  %6525 = vmatprep.subr.bf16.mxu0 %v3892
  %6526 = vmatpush2.bf16.msra.mxu0 %v3891
  %6527 = vmatprep.subr.bf16.mxu0 %v3884
  %6528 = vmatpush2.bf16.msra.mxu0 %v3883
  %6529 = vmatprep.subr.bf16.mxu0 %v3876
  %6530 = vmatpush2.bf16.msra.mxu0 %v3875
  %6531 = vmatprep.subr.bf16.mxu0 %v3868
  %6532 = vmatpush2.bf16.msra.mxu0 %v3867
  %6533 = vmatprep.subr.bf16.mxu0 %v3860
  %6534 = vmatpush2.bf16.msra.mxu0 %v3859
  %6535 = vmatprep.subr.bf16.mxu0 %v3852
  %6536 = vmatpush2.bf16.msra.mxu0 %v3851
  %6537 = vmatprep.subr.bf16.mxu0 %v3844
  %6538 = vmatpush2.bf16.msra.mxu0 %v3843
  %6539 = vmatprep.subr.bf16.mxu0 %v3836
  %6540 = vmatpush2.bf16.msra.mxu0 %v3835
  %6541 = vmatprep.mubr.bf16.mxu0 %v6099
  %6542 = vmatmul.mubr.bf16.gmra.mxu0 %v6359
  %v6543 = vpop.f32.mrf.mxu0
  %v6544 = vadd.f32 0.0, %v6543
  %v6545 = vpop.f32.mrf.mxu0
  %v6546 = vadd.f32 0.0, %v6545
  %v6547 = vpop.f32.mrf.mxu0
  %v6548 = vadd.f32 0.0, %v6547
  %v6549 = vpop.f32.mrf.mxu0
  %v6550 = vadd.f32 0.0, %v6549
  %6551 = vmatprep.mubr.bf16.mxu0 %v6100
  %6552 = vmatmul.mubr.bf16.gmra.mxu0 %v6360
  %v6553 = vpop.f32.mrf.mxu0
  %v6554 = vadd.f32 0.0, %v6553
  %v6555 = vpop.f32.mrf.mxu0
  %v6556 = vadd.f32 0.0, %v6555
  %v6557 = vpop.f32.mrf.mxu0
  %v6558 = vadd.f32 0.0, %v6557
  %v6559 = vpop.f32.mrf.mxu0
  %v6560 = vadd.f32 0.0, %v6559
  %6561 = vmatprep.mubr.bf16.mxu0 %v6101
  %6562 = vmatmul.mubr.bf16.gmra.mxu0 %v6361
  %v6563 = vpop.f32.mrf.mxu0
  %v6564 = vadd.f32 0.0, %v6563
  %v6565 = vpop.f32.mrf.mxu0
  %v6566 = vadd.f32 0.0, %v6565
  %v6567 = vpop.f32.mrf.mxu0
  %v6568 = vadd.f32 0.0, %v6567
  %v6569 = vpop.f32.mrf.mxu0
  %v6570 = vadd.f32 0.0, %v6569
  %6571 = vmatprep.mubr.bf16.mxu0 %v6102
  %6572 = vmatmul.mubr.bf16.gmra.mxu0 %v6362
  %v6573 = vpop.f32.mrf.mxu0
  %v6574 = vadd.f32 0.0, %v6573
  %v6575 = vpop.f32.mrf.mxu0
  %v6576 = vadd.f32 0.0, %v6575
  %v6577 = vpop.f32.mrf.mxu0
  %v6578 = vadd.f32 0.0, %v6577
  %v6579 = vpop.f32.mrf.mxu0
  %v6580 = vadd.f32 0.0, %v6579
  %6581 = vdwg.mxu0
  %6582 = vmatprep.subr.bf16.mxu0 %v3830
  %6583 = vmatpush1.bf16.msra.mxu0 %v3829
  %6584 = vmatprep.subr.bf16.mxu0 %v3822
  %6585 = vmatpush1.bf16.msra.mxu0 %v3821
  %6586 = vmatprep.subr.bf16.mxu0 %v3814
  %6587 = vmatpush1.bf16.msra.mxu0 %v3813
  %6588 = vmatprep.subr.bf16.mxu0 %v3806
  %6589 = vmatpush1.bf16.msra.mxu0 %v3805
  %6590 = vmatprep.subr.bf16.mxu0 %v3798
  %6591 = vmatpush1.bf16.msra.mxu0 %v3797
  %6592 = vmatprep.subr.bf16.mxu0 %v3790
  %6593 = vmatpush1.bf16.msra.mxu0 %v3789
  %6594 = vmatprep.subr.bf16.mxu0 %v3782
  %6595 = vmatpush1.bf16.msra.mxu0 %v3781
  %6596 = vmatprep.subr.bf16.mxu0 %v3774
  %6597 = vmatpush1.bf16.msra.mxu0 %v3773
  %6598 = vmatprep.subr.bf16.mxu0 %v3894
  %6599 = vmatpush2.bf16.msra.mxu0 %v3893
  %6600 = vmatprep.subr.bf16.mxu0 %v3886
  %6601 = vmatpush2.bf16.msra.mxu0 %v3885
  %6602 = vmatprep.subr.bf16.mxu0 %v3878
  %6603 = vmatpush2.bf16.msra.mxu0 %v3877
  %6604 = vmatprep.subr.bf16.mxu0 %v3870
  %6605 = vmatpush2.bf16.msra.mxu0 %v3869
  %6606 = vmatprep.subr.bf16.mxu0 %v3862
  %6607 = vmatpush2.bf16.msra.mxu0 %v3861
  %6608 = vmatprep.subr.bf16.mxu0 %v3854
  %6609 = vmatpush2.bf16.msra.mxu0 %v3853
  %6610 = vmatprep.subr.bf16.mxu0 %v3846
  %6611 = vmatpush2.bf16.msra.mxu0 %v3845
  %6612 = vmatprep.subr.bf16.mxu0 %v3838
  %6613 = vmatpush2.bf16.msra.mxu0 %v3837
  %6614 = vmatprep.mubr.bf16.mxu0 %v6099
  %6615 = vmatmul.mubr.bf16.gmra.mxu0 %v6359
  %v6616 = vpop.f32.mrf.mxu0
  %v6617 = vadd.f32 0.0, %v6616
  %v6618 = vpop.f32.mrf.mxu0
  %v6619 = vadd.f32 0.0, %v6618
  %v6620 = vpop.f32.mrf.mxu0
  %v6621 = vadd.f32 0.0, %v6620
  %v6622 = vpop.f32.mrf.mxu0
  %v6623 = vadd.f32 0.0, %v6622
  %6624 = vmatprep.mubr.bf16.mxu0 %v6100
  %6625 = vmatmul.mubr.bf16.gmra.mxu0 %v6360
  %v6626 = vpop.f32.mrf.mxu0
  %v6627 = vadd.f32 0.0, %v6626
  %v6628 = vpop.f32.mrf.mxu0
  %v6629 = vadd.f32 0.0, %v6628
  %v6630 = vpop.f32.mrf.mxu0
  %v6631 = vadd.f32 0.0, %v6630
  %v6632 = vpop.f32.mrf.mxu0
  %v6633 = vadd.f32 0.0, %v6632
  %6634 = vmatprep.mubr.bf16.mxu0 %v6101
  %6635 = vmatmul.mubr.bf16.gmra.mxu0 %v6361
  %v6636 = vpop.f32.mrf.mxu0
  %v6637 = vadd.f32 0.0, %v6636
  %v6638 = vpop.f32.mrf.mxu0
  %v6639 = vadd.f32 0.0, %v6638
  %v6640 = vpop.f32.mrf.mxu0
  %v6641 = vadd.f32 0.0, %v6640
  %v6642 = vpop.f32.mrf.mxu0
  %v6643 = vadd.f32 0.0, %v6642
  %6644 = vmatprep.mubr.bf16.mxu0 %v6102
  %6645 = vmatmul.mubr.bf16.gmra.mxu0 %v6362
  %v6646 = vpop.f32.mrf.mxu0
  %v6647 = vadd.f32 0.0, %v6646
  %v6648 = vpop.f32.mrf.mxu0
  %v6649 = vadd.f32 0.0, %v6648
  %v6650 = vpop.f32.mrf.mxu0
  %v6651 = vadd.f32 0.0, %v6650
  %v6652 = vpop.f32.mrf.mxu0
  %v6653 = vadd.f32 0.0, %v6652
  %6654 = vdwg.mxu0
  %v6655 = vadd.f32 %v6398, %v3106
  %v6656 = vadd.f32 %v6400, %v3110
  %v6657 = vadd.f32 %v6471, %v3114
  %v6658 = vadd.f32 %v6473, %v3118
  %v6659 = vadd.f32 %v6402, %v3106
  %v6660 = vadd.f32 %v6404, %v3110
  %v6661 = vadd.f32 %v6475, %v3114
  %v6662 = vadd.f32 %v6477, %v3118
  %v6663 = vadd.f32 %v6408, %v3106
  %v6664 = vadd.f32 %v6410, %v3110
  %v6665 = vadd.f32 %v6481, %v3114
  %v6666 = vadd.f32 %v6483, %v3118
  %v6667 = vadd.f32 %v6412, %v3106
  %v6668 = vadd.f32 %v6414, %v3110
  %v6669 = vadd.f32 %v6485, %v3114
  %v6670 = vadd.f32 %v6487, %v3118
  %v6671 = vadd.f32 %v6418, %v3106
  %v6672 = vadd.f32 %v6420, %v3110
  %v6673 = vadd.f32 %v6491, %v3114
  %v6674 = vadd.f32 %v6493, %v3118
  %v6675 = vadd.f32 %v6422, %v3106
  %v6676 = vadd.f32 %v6424, %v3110
  %v6677 = vadd.f32 %v6495, %v3114
  %v6678 = vadd.f32 %v6497, %v3118
  %v6679 = vadd.f32 %v6428, %v3106
  %v6680 = vadd.f32 %v6430, %v3110
  %v6681 = vadd.f32 %v6501, %v3114
  %v6682 = vadd.f32 %v6503, %v3118
  %v6683 = vadd.f32 %v6432, %v3106
  %v6684 = vadd.f32 %v6434, %v3110
  %v6685 = vadd.f32 %v6505, %v3114
  %v6686 = vadd.f32 %v6507, %v3118
  %v6687 = vxor.u32 %v6655, 2147483648
  %v6688 = vxor.u32 %v6659, 2147483648
  %v6689 = vxor.u32 %v6663, 2147483648
  %v6690 = vxor.u32 %v6667, 2147483648
  %v6691 = vxor.u32 %v6671, 2147483648
  %v6692 = vxor.u32 %v6675, 2147483648
  %v6693 = vxor.u32 %v6679, 2147483648
  %v6694 = vxor.u32 %v6683, 2147483648
  %v6695 = vmul.f32 %v6687, 1.442695
  %v6696 = vpow.pop %v6695
  %v6697 = vmul.f32 %v6688, 1.442695
  %v6698 = vpow.pop %v6697
  %v6699 = vmul.f32 %v6689, 1.442695
  %v6700 = vpow.pop %v6699
  %v6701 = vmul.f32 %v6690, 1.442695
  %v6702 = vpow.pop %v6701
  %v6703 = vmul.f32 %v6691, 1.442695
  %v6704 = vpow.pop %v6703
  %v6705 = vmul.f32 %v6692, 1.442695
  %v6706 = vpow.pop %v6705
  %v6707 = vmul.f32 %v6693, 1.442695
  %v6708 = vpow.pop %v6707
  %v6709 = vmul.f32 %v6694, 1.442695
  %v6710 = vpow.pop %v6709
  %v6711 = vadd.f32 %v6696, 1.0
  %v6712 = vadd.f32 %v6698, 1.0
  %v6713 = vadd.f32 %v6700, 1.0
  %v6714 = vadd.f32 %v6702, 1.0
  %v6715 = vadd.f32 %v6704, 1.0
  %v6716 = vadd.f32 %v6706, 1.0
  %v6717 = vadd.f32 %v6708, 1.0
  %v6718 = vadd.f32 %v6710, 1.0
  %v6719 = vrcp.pop %v6711
  %v6720 = vmul.f32 1.0, %v6719
  %v6721 = vrcp.pop %v6712
  %v6722 = vmul.f32 1.0, %v6721
  %v6723 = vrcp.pop %v6713
  %v6724 = vmul.f32 1.0, %v6723
  %v6725 = vrcp.pop %v6714
  %v6726 = vmul.f32 1.0, %v6725
  %v6727 = vrcp.pop %v6715
  %v6728 = vmul.f32 1.0, %v6727
  %v6729 = vrcp.pop %v6716
  %v6730 = vmul.f32 1.0, %v6729
  %v6731 = vrcp.pop %v6717
  %v6732 = vmul.f32 1.0, %v6731
  %v6733 = vrcp.pop %v6718
  %v6734 = vmul.f32 1.0, %v6733
  %v6735 = vxor.u32 %v6656, 2147483648
  %v6736 = vxor.u32 %v6660, 2147483648
  %v6737 = vxor.u32 %v6664, 2147483648
  %v6738 = vxor.u32 %v6668, 2147483648
  %v6739 = vxor.u32 %v6672, 2147483648
  %v6740 = vxor.u32 %v6676, 2147483648
  %v6741 = vxor.u32 %v6680, 2147483648
  %v6742 = vxor.u32 %v6684, 2147483648
  %v6743 = vmul.f32 %v6735, 1.442695
  %v6744 = vpow.pop %v6743
  %v6745 = vmul.f32 %v6736, 1.442695
  %v6746 = vpow.pop %v6745
  %v6747 = vmul.f32 %v6737, 1.442695
  %v6748 = vpow.pop %v6747
  %v6749 = vmul.f32 %v6738, 1.442695
  %v6750 = vpow.pop %v6749
  %v6751 = vmul.f32 %v6739, 1.442695
  %v6752 = vpow.pop %v6751
  %v6753 = vmul.f32 %v6740, 1.442695
  %v6754 = vpow.pop %v6753
  %v6755 = vmul.f32 %v6741, 1.442695
  %v6756 = vpow.pop %v6755
  %v6757 = vmul.f32 %v6742, 1.442695
  %v6758 = vpow.pop %v6757
  %v6759 = vadd.f32 %v6744, 1.0
  %v6760 = vadd.f32 %v6746, 1.0
  %v6761 = vadd.f32 %v6748, 1.0
  %v6762 = vadd.f32 %v6750, 1.0
  %v6763 = vadd.f32 %v6752, 1.0
  %v6764 = vadd.f32 %v6754, 1.0
  %v6765 = vadd.f32 %v6756, 1.0
  %v6766 = vadd.f32 %v6758, 1.0
  %v6767 = vrcp.pop %v6759
  %v6768 = vmul.f32 1.0, %v6767
  %v6769 = vrcp.pop %v6760
  %v6770 = vmul.f32 1.0, %v6769
  %v6771 = vrcp.pop %v6761
  %v6772 = vmul.f32 1.0, %v6771
  %v6773 = vrcp.pop %v6762
  %v6774 = vmul.f32 1.0, %v6773
  %v6775 = vrcp.pop %v6763
  %v6776 = vmul.f32 1.0, %v6775
  %v6777 = vrcp.pop %v6764
  %v6778 = vmul.f32 1.0, %v6777
  %v6779 = vrcp.pop %v6765
  %v6780 = vmul.f32 1.0, %v6779
  %v6781 = vrcp.pop %v6766
  %v6782 = vmul.f32 1.0, %v6781
  %v6783 = vtanh.pop %v6657
  %v6784 = vtanh.pop %v6661
  %v6785 = vtanh.pop %v6665
  %v6786 = vtanh.pop %v6669
  %v6787 = vtanh.pop %v6673
  %v6788 = vtanh.pop %v6677
  %v6789 = vtanh.pop %v6681
  %v6790 = vtanh.pop %v6685
  %v6791 = vxor.u32 %v6658, 2147483648
  %v6792 = vxor.u32 %v6662, 2147483648
  %v6793 = vxor.u32 %v6666, 2147483648
  %v6794 = vxor.u32 %v6670, 2147483648
  %v6795 = vxor.u32 %v6674, 2147483648
  %v6796 = vxor.u32 %v6678, 2147483648
  %v6797 = vxor.u32 %v6682, 2147483648
  %v6798 = vxor.u32 %v6686, 2147483648
  %v6799 = vmul.f32 %v6791, 1.442695
  %v6800 = vpow.pop %v6799
  %v6801 = vmul.f32 %v6792, 1.442695
  %v6802 = vpow.pop %v6801
  %v6803 = vmul.f32 %v6793, 1.442695
  %v6804 = vpow.pop %v6803
  %v6805 = vmul.f32 %v6794, 1.442695
  %v6806 = vpow.pop %v6805
  %v6807 = vmul.f32 %v6795, 1.442695
  %v6808 = vpow.pop %v6807
  %v6809 = vmul.f32 %v6796, 1.442695
  %v6810 = vpow.pop %v6809
  %v6811 = vmul.f32 %v6797, 1.442695
  %v6812 = vpow.pop %v6811
  %v6813 = vmul.f32 %v6798, 1.442695
  %v6814 = vpow.pop %v6813
  %v6815 = vadd.f32 %v6800, 1.0
  %v6816 = vadd.f32 %v6802, 1.0
  %v6817 = vadd.f32 %v6804, 1.0
  %v6818 = vadd.f32 %v6806, 1.0
  %v6819 = vadd.f32 %v6808, 1.0
  %v6820 = vadd.f32 %v6810, 1.0
  %v6821 = vadd.f32 %v6812, 1.0
  %v6822 = vadd.f32 %v6814, 1.0
  %v6823 = vrcp.pop %v6815
  %v6824 = vmul.f32 1.0, %v6823
  %v6825 = vrcp.pop %v6816
  %v6826 = vmul.f32 1.0, %v6825
  %v6827 = vrcp.pop %v6817
  %v6828 = vmul.f32 1.0, %v6827
  %v6829 = vrcp.pop %v6818
  %v6830 = vmul.f32 1.0, %v6829
  %v6831 = vrcp.pop %v6819
  %v6832 = vmul.f32 1.0, %v6831
  %v6833 = vrcp.pop %v6820
  %v6834 = vmul.f32 1.0, %v6833
  %v6835 = vrcp.pop %v6821
  %v6836 = vmul.f32 1.0, %v6835
  %v6837 = vrcp.pop %v6822
  %v6838 = vmul.f32 1.0, %v6837
  %v6839 = vmul.f32 %v6768, %v6075
  %v6840 = vmul.f32 %v6770, %v6076
  %v6841 = vmul.f32 %v6772, %v6077
  %v6842 = vmul.f32 %v6774, %v6078
  %v6843 = vmul.f32 %v6776, %v6079
  %v6844 = vmul.f32 %v6778, %v6080
  %v6845 = vmul.f32 %v6780, %v6081
  %v6846 = vmul.f32 %v6782, %v6082
  %v6847 = vmul.f32 %v6720, %v6783
  %v6848 = vmul.f32 %v6722, %v6784
  %v6849 = vmul.f32 %v6724, %v6785
  %v6850 = vmul.f32 %v6726, %v6786
  %v6851 = vmul.f32 %v6728, %v6787
  %v6852 = vmul.f32 %v6730, %v6788
  %v6853 = vmul.f32 %v6732, %v6789
  %v6854 = vmul.f32 %v6734, %v6790
  %v6855 = vadd.f32 %v6839, %v6847
  %v6856 = vadd.f32 %v6840, %v6848
  %v6857 = vadd.f32 %v6841, %v6849
  %v6858 = vadd.f32 %v6842, %v6850
  %v6859 = vadd.f32 %v6843, %v6851
  %v6860 = vadd.f32 %v6844, %v6852
  %v6861 = vadd.f32 %v6845, %v6853
  %v6862 = vadd.f32 %v6846, %v6854
  %v6863 = vtanh.pop %v6855
  %v6864 = vtanh.pop %v6856
  %v6865 = vtanh.pop %v6857
  %v6866 = vtanh.pop %v6858
  %v6867 = vtanh.pop %v6859
  %v6868 = vtanh.pop %v6860
  %v6869 = vtanh.pop %v6861
  %v6870 = vtanh.pop %v6862
  %v6871 = vmul.f32 %v6824, %v6863
  %v6872 = vmul.f32 %v6826, %v6864
  %v6873 = vmul.f32 %v6828, %v6865
  %v6874 = vmul.f32 %v6830, %v6866
  %v6875 = vmul.f32 %v6832, %v6867
  %v6876 = vmul.f32 %v6834, %v6868
  %v6877 = vmul.f32 %v6836, %v6869
  %v6878 = vmul.f32 %v6838, %v6870
  %v6879 = vpack.c.bf16 %v6872, %v6871
  %v6880 = vpack.c.bf16 %v6874, %v6873
  %v6881 = vpack.c.bf16 %v6876, %v6875
  %v6882 = vpack.c.bf16 %v6878, %v6877
  %v6883 = vld [vmem:[#allocation2 + $0x400] sm:$0xff]
  %v6884 = vld [vmem:[#allocation2 + $0x408] sm:$0xff]
  %v6885 = vld [vmem:[#allocation2 + $0x410] sm:$0xff]
  %v6886 = vld [vmem:[#allocation2 + $0x418] sm:$0xff]
  %v6887 = vld [vmem:[#allocation2 + $0x420] sm:$0xff]
  %v6888 = vld [vmem:[#allocation2 + $0x428] sm:$0xff]
  %v6889 = vld [vmem:[#allocation2 + $0x430] sm:$0xff]
  %v6890 = vld [vmem:[#allocation2 + $0x438] sm:$0xff]
  %v6891 = vld [vmem:[#allocation2 + $0x440] sm:$0xff]
  %v6892 = vld [vmem:[#allocation2 + $0x448] sm:$0xff]
  %v6893 = vld [vmem:[#allocation2 + $0x450] sm:$0xff]
  %v6894 = vld [vmem:[#allocation2 + $0x458] sm:$0xff]
  %v6895 = vld [vmem:[#allocation2 + $0x460] sm:$0xff]
  %v6896 = vld [vmem:[#allocation2 + $0x468] sm:$0xff]
  %v6897 = vld [vmem:[#allocation2 + $0x470] sm:$0xff]
  %v6898 = vld [vmem:[#allocation2 + $0x478] sm:$0xff]
  %v6899 = vld [vmem:[#allocation2 + $0x480] sm:$0xff]
  %v6900 = vld [vmem:[#allocation2 + $0x488] sm:$0xff]
  %v6901 = vld [vmem:[#allocation2 + $0x490] sm:$0xff]
  %v6902 = vld [vmem:[#allocation2 + $0x498] sm:$0xff]
  %v6903 = vld [vmem:[#allocation2 + $0x4a0] sm:$0xff]
  %v6904 = vld [vmem:[#allocation2 + $0x4a8] sm:$0xff]
  %v6905 = vld [vmem:[#allocation2 + $0x4b0] sm:$0xff]
  %v6906 = vld [vmem:[#allocation2 + $0x4b8] sm:$0xff]
  %v6907 = vld [vmem:[#allocation2 + $0x4c0] sm:$0xff]
  %v6908 = vld [vmem:[#allocation2 + $0x4c8] sm:$0xff]
  %v6909 = vld [vmem:[#allocation2 + $0x4d0] sm:$0xff]
  %v6910 = vld [vmem:[#allocation2 + $0x4d8] sm:$0xff]
  %v6911 = vld [vmem:[#allocation2 + $0x4e0] sm:$0xff]
  %v6912 = vld [vmem:[#allocation2 + $0x4e8] sm:$0xff]
  %v6913 = vld [vmem:[#allocation2 + $0x4f0] sm:$0xff]
  %v6914 = vld [vmem:[#allocation2 + $0x4f8] sm:$0xff]
  %v6915 = vadd.f32 %v6544, %v6883
  %v6916 = vadd.f32 %v6546, %v6884
  %v6917 = vadd.f32 %v6617, %v6885
  %v6918 = vadd.f32 %v6619, %v6886
  %v6919 = vadd.f32 %v6548, %v6887
  %v6920 = vadd.f32 %v6550, %v6888
  %v6921 = vadd.f32 %v6621, %v6889
  %v6922 = vadd.f32 %v6623, %v6890
  %v6923 = vadd.f32 %v6554, %v6891
  %v6924 = vadd.f32 %v6556, %v6892
  %v6925 = vadd.f32 %v6627, %v6893
  %v6926 = vadd.f32 %v6629, %v6894
  %v6927 = vadd.f32 %v6558, %v6895
  %v6928 = vadd.f32 %v6560, %v6896
  %v6929 = vadd.f32 %v6631, %v6897
  %v6930 = vadd.f32 %v6633, %v6898
  %v6931 = vadd.f32 %v6564, %v6899
  %v6932 = vadd.f32 %v6566, %v6900
  %v6933 = vadd.f32 %v6637, %v6901
  %v6934 = vadd.f32 %v6639, %v6902
  %v6935 = vadd.f32 %v6568, %v6903
  %v6936 = vadd.f32 %v6570, %v6904
  %v6937 = vadd.f32 %v6641, %v6905
  %v6938 = vadd.f32 %v6643, %v6906
  %v6939 = vadd.f32 %v6574, %v6907
  %v6940 = vadd.f32 %v6576, %v6908
  %v6941 = vadd.f32 %v6647, %v6909
  %v6942 = vadd.f32 %v6649, %v6910
  %v6943 = vadd.f32 %v6578, %v6911
  %v6944 = vadd.f32 %v6580, %v6912
  %v6945 = vadd.f32 %v6651, %v6913
  %v6946 = vadd.f32 %v6653, %v6914
  %v6947 = vxor.u32 %v6915, 2147483648
  %v6948 = vxor.u32 %v6919, 2147483648
  %v6949 = vxor.u32 %v6923, 2147483648
  %v6950 = vxor.u32 %v6927, 2147483648
  %v6951 = vxor.u32 %v6931, 2147483648
  %v6952 = vxor.u32 %v6935, 2147483648
  %v6953 = vxor.u32 %v6939, 2147483648
  %v6954 = vxor.u32 %v6943, 2147483648
  %v6955 = vmul.f32 %v6947, 1.442695
  %v6956 = vpow.pop %v6955
  %v6957 = vmul.f32 %v6948, 1.442695
  %v6958 = vpow.pop %v6957
  %v6959 = vmul.f32 %v6949, 1.442695
  %v6960 = vpow.pop %v6959
  %v6961 = vmul.f32 %v6950, 1.442695
  %v6962 = vpow.pop %v6961
  %v6963 = vmul.f32 %v6951, 1.442695
  %v6964 = vpow.pop %v6963
  %v6965 = vmul.f32 %v6952, 1.442695
  %v6966 = vpow.pop %v6965
  %v6967 = vmul.f32 %v6953, 1.442695
  %v6968 = vpow.pop %v6967
  %v6969 = vmul.f32 %v6954, 1.442695
  %v6970 = vpow.pop %v6969
  %v6971 = vadd.f32 %v6956, 1.0
  %v6972 = vadd.f32 %v6958, 1.0
  %v6973 = vadd.f32 %v6960, 1.0
  %v6974 = vadd.f32 %v6962, 1.0
  %v6975 = vadd.f32 %v6964, 1.0
  %v6976 = vadd.f32 %v6966, 1.0
  %v6977 = vadd.f32 %v6968, 1.0
  %v6978 = vadd.f32 %v6970, 1.0
  %v6979 = vrcp.pop %v6971
  %v6980 = vmul.f32 1.0, %v6979
  %v6981 = vrcp.pop %v6972
  %v6982 = vmul.f32 1.0, %v6981
  %v6983 = vrcp.pop %v6973
  %v6984 = vmul.f32 1.0, %v6983
  %v6985 = vrcp.pop %v6974
  %v6986 = vmul.f32 1.0, %v6985
  %v6987 = vrcp.pop %v6975
  %v6988 = vmul.f32 1.0, %v6987
  %v6989 = vrcp.pop %v6976
  %v6990 = vmul.f32 1.0, %v6989
  %v6991 = vrcp.pop %v6977
  %v6992 = vmul.f32 1.0, %v6991
  %v6993 = vrcp.pop %v6978
  %v6994 = vmul.f32 1.0, %v6993
  %v6995 = vxor.u32 %v6916, 2147483648
  %v6996 = vxor.u32 %v6920, 2147483648
  %v6997 = vxor.u32 %v6924, 2147483648
  %v6998 = vxor.u32 %v6928, 2147483648
  %v6999 = vxor.u32 %v6932, 2147483648
  %v7000 = vxor.u32 %v6936, 2147483648
  %v7001 = vxor.u32 %v6940, 2147483648
  %v7002 = vxor.u32 %v6944, 2147483648
  %v7003 = vmul.f32 %v6995, 1.442695
  %v7004 = vpow.pop %v7003
  %v7005 = vmul.f32 %v6996, 1.442695
  %v7006 = vpow.pop %v7005
  %v7007 = vmul.f32 %v6997, 1.442695
  %v7008 = vpow.pop %v7007
  %v7009 = vmul.f32 %v6998, 1.442695
  %v7010 = vpow.pop %v7009
  %v7011 = vmul.f32 %v6999, 1.442695
  %v7012 = vpow.pop %v7011
  %v7013 = vmul.f32 %v7000, 1.442695
  %v7014 = vpow.pop %v7013
  %v7015 = vmul.f32 %v7001, 1.442695
  %v7016 = vpow.pop %v7015
  %v7017 = vmul.f32 %v7002, 1.442695
  %v7018 = vpow.pop %v7017
  %v7019 = vadd.f32 %v7004, 1.0
  %v7020 = vadd.f32 %v7006, 1.0
  %v7021 = vadd.f32 %v7008, 1.0
  %v7022 = vadd.f32 %v7010, 1.0
  %v7023 = vadd.f32 %v7012, 1.0
  %v7024 = vadd.f32 %v7014, 1.0
  %v7025 = vadd.f32 %v7016, 1.0
  %v7026 = vadd.f32 %v7018, 1.0
  %v7027 = vrcp.pop %v7019
  %v7028 = vmul.f32 1.0, %v7027
  %v7029 = vrcp.pop %v7020
  %v7030 = vmul.f32 1.0, %v7029
  %v7031 = vrcp.pop %v7021
  %v7032 = vmul.f32 1.0, %v7031
  %v7033 = vrcp.pop %v7022
  %v7034 = vmul.f32 1.0, %v7033
  %v7035 = vrcp.pop %v7023
  %v7036 = vmul.f32 1.0, %v7035
  %v7037 = vrcp.pop %v7024
  %v7038 = vmul.f32 1.0, %v7037
  %v7039 = vrcp.pop %v7025
  %v7040 = vmul.f32 1.0, %v7039
  %v7041 = vrcp.pop %v7026
  %v7042 = vmul.f32 1.0, %v7041
  %v7043 = vtanh.pop %v6917
  %v7044 = vtanh.pop %v6921
  %v7045 = vtanh.pop %v6925
  %v7046 = vtanh.pop %v6929
  %v7047 = vtanh.pop %v6933
  %v7048 = vtanh.pop %v6937
  %v7049 = vtanh.pop %v6941
  %v7050 = vtanh.pop %v6945
  %v7051 = vxor.u32 %v6918, 2147483648
  %v7052 = vxor.u32 %v6922, 2147483648
  %v7053 = vxor.u32 %v6926, 2147483648
  %v7054 = vxor.u32 %v6930, 2147483648
  %v7055 = vxor.u32 %v6934, 2147483648
  %v7056 = vxor.u32 %v6938, 2147483648
  %v7057 = vxor.u32 %v6942, 2147483648
  %v7058 = vxor.u32 %v6946, 2147483648
  %v7059 = vmul.f32 %v7051, 1.442695
  %v7060 = vpow.pop %v7059
  %v7061 = vmul.f32 %v7052, 1.442695
  %v7062 = vpow.pop %v7061
  %v7063 = vmul.f32 %v7053, 1.442695
  %v7064 = vpow.pop %v7063
  %v7065 = vmul.f32 %v7054, 1.442695
  %v7066 = vpow.pop %v7065
  %v7067 = vmul.f32 %v7055, 1.442695
  %v7068 = vpow.pop %v7067
  %v7069 = vmul.f32 %v7056, 1.442695
  %v7070 = vpow.pop %v7069
  %v7071 = vmul.f32 %v7057, 1.442695
  %v7072 = vpow.pop %v7071
  %v7073 = vmul.f32 %v7058, 1.442695
  %v7074 = vpow.pop %v7073
  %v7075 = vadd.f32 %v7060, 1.0
  %v7076 = vadd.f32 %v7062, 1.0
  %v7077 = vadd.f32 %v7064, 1.0
  %v7078 = vadd.f32 %v7066, 1.0
  %v7079 = vadd.f32 %v7068, 1.0
  %v7080 = vadd.f32 %v7070, 1.0
  %v7081 = vadd.f32 %v7072, 1.0
  %v7082 = vadd.f32 %v7074, 1.0
  %v7083 = vrcp.pop %v7075
  %v7084 = vmul.f32 1.0, %v7083
  %v7085 = vrcp.pop %v7076
  %v7086 = vmul.f32 1.0, %v7085
  %v7087 = vrcp.pop %v7077
  %v7088 = vmul.f32 1.0, %v7087
  %v7089 = vrcp.pop %v7078
  %v7090 = vmul.f32 1.0, %v7089
  %v7091 = vrcp.pop %v7079
  %v7092 = vmul.f32 1.0, %v7091
  %v7093 = vrcp.pop %v7080
  %v7094 = vmul.f32 1.0, %v7093
  %v7095 = vrcp.pop %v7081
  %v7096 = vmul.f32 1.0, %v7095
  %v7097 = vrcp.pop %v7082
  %v7098 = vmul.f32 1.0, %v7097
  %v7099 = vmul.f32 %v7028, %v6335
  %v7100 = vmul.f32 %v7030, %v6336
  %v7101 = vmul.f32 %v7032, %v6337
  %v7102 = vmul.f32 %v7034, %v6338
  %v7103 = vmul.f32 %v7036, %v6339
  %v7104 = vmul.f32 %v7038, %v6340
  %v7105 = vmul.f32 %v7040, %v6341
  %v7106 = vmul.f32 %v7042, %v6342
  %v7107 = vmul.f32 %v6980, %v7043
  %v7108 = vmul.f32 %v6982, %v7044
  %v7109 = vmul.f32 %v6984, %v7045
  %v7110 = vmul.f32 %v6986, %v7046
  %v7111 = vmul.f32 %v6988, %v7047
  %v7112 = vmul.f32 %v6990, %v7048
  %v7113 = vmul.f32 %v6992, %v7049
  %v7114 = vmul.f32 %v6994, %v7050
  %v7115 = vadd.f32 %v7099, %v7107
  %v7116 = vadd.f32 %v7100, %v7108
  %v7117 = vadd.f32 %v7101, %v7109
  %v7118 = vadd.f32 %v7102, %v7110
  %v7119 = vadd.f32 %v7103, %v7111
  %v7120 = vadd.f32 %v7104, %v7112
  %v7121 = vadd.f32 %v7105, %v7113
  %v7122 = vadd.f32 %v7106, %v7114
  %v7123 = vtanh.pop %v7115
  %v7124 = vtanh.pop %v7116
  %v7125 = vtanh.pop %v7117
  %v7126 = vtanh.pop %v7118
  %v7127 = vtanh.pop %v7119
  %v7128 = vtanh.pop %v7120
  %v7129 = vtanh.pop %v7121
  %v7130 = vtanh.pop %v7122
  %v7131 = vmul.f32 %v7084, %v7123
  %v7132 = vmul.f32 %v7086, %v7124
  %v7133 = vmul.f32 %v7088, %v7125
  %v7134 = vmul.f32 %v7090, %v7126
  %v7135 = vmul.f32 %v7092, %v7127
  %v7136 = vmul.f32 %v7094, %v7128
  %v7137 = vmul.f32 %v7096, %v7129
  %v7138 = vmul.f32 %v7098, %v7130
  %v7139 = vpack.c.bf16 %v7132, %v7131
  %v7140 = vpack.c.bf16 %v7134, %v7133
  %v7141 = vpack.c.bf16 %v7136, %v7135
  %v7142 = vpack.c.bf16 %v7138, %v7137
  %7143 = vmatprep.subr.bf16.mxu0 %v3824
  %7144 = vmatpush1.bf16.msra.mxu0 %v3823
  %7145 = vmatprep.subr.bf16.mxu0 %v3816
  %7146 = vmatpush1.bf16.msra.mxu0 %v3815
  %7147 = vmatprep.subr.bf16.mxu0 %v3808
  %7148 = vmatpush1.bf16.msra.mxu0 %v3807
  %7149 = vmatprep.subr.bf16.mxu0 %v3800
  %7150 = vmatpush1.bf16.msra.mxu0 %v3799
  %7151 = vmatprep.subr.bf16.mxu0 %v3792
  %7152 = vmatpush1.bf16.msra.mxu0 %v3791
  %7153 = vmatprep.subr.bf16.mxu0 %v3784
  %7154 = vmatpush1.bf16.msra.mxu0 %v3783
  %7155 = vmatprep.subr.bf16.mxu0 %v3776
  %7156 = vmatpush1.bf16.msra.mxu0 %v3775
  %7157 = vmatprep.subr.bf16.mxu0 %v3768
  %7158 = vmatpush1.bf16.msra.mxu0 %v3767
  %7159 = vmatprep.subr.bf16.mxu0 %v3888
  %7160 = vmatpush2.bf16.msra.mxu0 %v3887
  %7161 = vmatprep.subr.bf16.mxu0 %v3880
  %7162 = vmatpush2.bf16.msra.mxu0 %v3879
  %7163 = vmatprep.subr.bf16.mxu0 %v3872
  %7164 = vmatpush2.bf16.msra.mxu0 %v3871
  %7165 = vmatprep.subr.bf16.mxu0 %v3864
  %7166 = vmatpush2.bf16.msra.mxu0 %v3863
  %7167 = vmatprep.subr.bf16.mxu0 %v3856
  %7168 = vmatpush2.bf16.msra.mxu0 %v3855
  %7169 = vmatprep.subr.bf16.mxu0 %v3848
  %7170 = vmatpush2.bf16.msra.mxu0 %v3847
  %7171 = vmatprep.subr.bf16.mxu0 %v3840
  %7172 = vmatpush2.bf16.msra.mxu0 %v3839
  %7173 = vmatprep.subr.bf16.mxu0 %v3832
  %7174 = vmatpush2.bf16.msra.mxu0 %v3831
  %7175 = vmatprep.mubr.bf16.mxu0 %v6879
  %7176 = vmatmul.mubr.bf16.gmra.mxu0 %v7139
  %v7177 = vpop.f32.mrf.mxu0
  %v7178 = vadd.f32 0.0, %v7177
  %v7179 = vpop.f32.mrf.mxu0
  %v7180 = vadd.f32 0.0, %v7179
  %v7181 = vpop.f32.mrf.mxu0
  %v7182 = vadd.f32 0.0, %v7181
  %v7183 = vpop.f32.mrf.mxu0
  %v7184 = vadd.f32 0.0, %v7183
  %7185 = vmatprep.mubr.bf16.mxu0 %v6880
  %7186 = vmatmul.mubr.bf16.gmra.mxu0 %v7140
  %v7187 = vpop.f32.mrf.mxu0
  %v7188 = vadd.f32 0.0, %v7187
  %v7189 = vpop.f32.mrf.mxu0
  %v7190 = vadd.f32 0.0, %v7189
  %v7191 = vpop.f32.mrf.mxu0
  %v7192 = vadd.f32 0.0, %v7191
  %v7193 = vpop.f32.mrf.mxu0
  %v7194 = vadd.f32 0.0, %v7193
  %7195 = vmatprep.mubr.bf16.mxu0 %v6881
  %7196 = vmatmul.mubr.bf16.gmra.mxu0 %v7141
  %v7197 = vpop.f32.mrf.mxu0
  %v7198 = vadd.f32 0.0, %v7197
  %v7199 = vpop.f32.mrf.mxu0
  %v7200 = vadd.f32 0.0, %v7199
  %v7201 = vpop.f32.mrf.mxu0
  %v7202 = vadd.f32 0.0, %v7201
  %v7203 = vpop.f32.mrf.mxu0
  %v7204 = vadd.f32 0.0, %v7203
  %7205 = vmatprep.mubr.bf16.mxu0 %v6882
  %7206 = vmatmul.mubr.bf16.gmra.mxu0 %v7142
  %v7207 = vpop.f32.mrf.mxu0
  %v7208 = vadd.f32 0.0, %v7207
  %v7209 = vpop.f32.mrf.mxu0
  %v7210 = vadd.f32 0.0, %v7209
  %v7211 = vpop.f32.mrf.mxu0
  %v7212 = vadd.f32 0.0, %v7211
  %v7213 = vpop.f32.mrf.mxu0
  %v7214 = vadd.f32 0.0, %v7213
  %7215 = vdwg.mxu0
  %7216 = vmatprep.subr.bf16.mxu0 %v3826
  %7217 = vmatpush1.bf16.msra.mxu0 %v3825
  %7218 = vmatprep.subr.bf16.mxu0 %v3818
  %7219 = vmatpush1.bf16.msra.mxu0 %v3817
  %7220 = vmatprep.subr.bf16.mxu0 %v3810
  %7221 = vmatpush1.bf16.msra.mxu0 %v3809
  %7222 = vmatprep.subr.bf16.mxu0 %v3802
  %7223 = vmatpush1.bf16.msra.mxu0 %v3801
  %7224 = vmatprep.subr.bf16.mxu0 %v3794
  %7225 = vmatpush1.bf16.msra.mxu0 %v3793
  %7226 = vmatprep.subr.bf16.mxu0 %v3786
  %7227 = vmatpush1.bf16.msra.mxu0 %v3785
  %7228 = vmatprep.subr.bf16.mxu0 %v3778
  %7229 = vmatpush1.bf16.msra.mxu0 %v3777
  %7230 = vmatprep.subr.bf16.mxu0 %v3770
  %7231 = vmatpush1.bf16.msra.mxu0 %v3769
  %7232 = vmatprep.subr.bf16.mxu0 %v3890
  %7233 = vmatpush2.bf16.msra.mxu0 %v3889
  %7234 = vmatprep.subr.bf16.mxu0 %v3882
  %7235 = vmatpush2.bf16.msra.mxu0 %v3881
  %7236 = vmatprep.subr.bf16.mxu0 %v3874
  %7237 = vmatpush2.bf16.msra.mxu0 %v3873
  %7238 = vmatprep.subr.bf16.mxu0 %v3866
  %7239 = vmatpush2.bf16.msra.mxu0 %v3865
  %7240 = vmatprep.subr.bf16.mxu0 %v3858
  %7241 = vmatpush2.bf16.msra.mxu0 %v3857
  %7242 = vmatprep.subr.bf16.mxu0 %v3850
  %7243 = vmatpush2.bf16.msra.mxu0 %v3849
  %7244 = vmatprep.subr.bf16.mxu0 %v3842
  %7245 = vmatpush2.bf16.msra.mxu0 %v3841
  %7246 = vmatprep.subr.bf16.mxu0 %v3834
  %7247 = vmatpush2.bf16.msra.mxu0 %v3833
  %7248 = vmatprep.mubr.bf16.mxu0 %v6879
  %7249 = vmatmul.mubr.bf16.gmra.mxu0 %v7139
  %v7250 = vpop.f32.mrf.mxu0
  %v7251 = vadd.f32 0.0, %v7250
  %v7252 = vpop.f32.mrf.mxu0
  %v7253 = vadd.f32 0.0, %v7252
  %v7254 = vpop.f32.mrf.mxu0
  %v7255 = vadd.f32 0.0, %v7254
  %v7256 = vpop.f32.mrf.mxu0
  %v7257 = vadd.f32 0.0, %v7256
  %7258 = vmatprep.mubr.bf16.mxu0 %v6880
  %7259 = vmatmul.mubr.bf16.gmra.mxu0 %v7140
  %v7260 = vpop.f32.mrf.mxu0
  %v7261 = vadd.f32 0.0, %v7260
  %v7262 = vpop.f32.mrf.mxu0
  %v7263 = vadd.f32 0.0, %v7262
  %v7264 = vpop.f32.mrf.mxu0
  %v7265 = vadd.f32 0.0, %v7264
  %v7266 = vpop.f32.mrf.mxu0
  %v7267 = vadd.f32 0.0, %v7266
  %7268 = vmatprep.mubr.bf16.mxu0 %v6881
  %7269 = vmatmul.mubr.bf16.gmra.mxu0 %v7141
  %v7270 = vpop.f32.mrf.mxu0
  %v7271 = vadd.f32 0.0, %v7270
  %v7272 = vpop.f32.mrf.mxu0
  %v7273 = vadd.f32 0.0, %v7272
  %v7274 = vpop.f32.mrf.mxu0
  %v7275 = vadd.f32 0.0, %v7274
  %v7276 = vpop.f32.mrf.mxu0
  %v7277 = vadd.f32 0.0, %v7276
  %7278 = vmatprep.mubr.bf16.mxu0 %v6882
  %7279 = vmatmul.mubr.bf16.gmra.mxu0 %v7142
  %v7280 = vpop.f32.mrf.mxu0
  %v7281 = vadd.f32 0.0, %v7280
  %v7282 = vpop.f32.mrf.mxu0
  %v7283 = vadd.f32 0.0, %v7282
  %v7284 = vpop.f32.mrf.mxu0
  %v7285 = vadd.f32 0.0, %v7284
  %v7286 = vpop.f32.mrf.mxu0
  %v7287 = vadd.f32 0.0, %v7286
  %7288 = vdwg.mxu0
  %7289 = vmatprep.subr.bf16.mxu0 %v3828
  %7290 = vmatpush1.bf16.msra.mxu0 %v3827
  %7291 = vmatprep.subr.bf16.mxu0 %v3820
  %7292 = vmatpush1.bf16.msra.mxu0 %v3819
  %7293 = vmatprep.subr.bf16.mxu0 %v3812
  %7294 = vmatpush1.bf16.msra.mxu0 %v3811
  %7295 = vmatprep.subr.bf16.mxu0 %v3804
  %7296 = vmatpush1.bf16.msra.mxu0 %v3803
  %7297 = vmatprep.subr.bf16.mxu0 %v3796
  %7298 = vmatpush1.bf16.msra.mxu0 %v3795
  %7299 = vmatprep.subr.bf16.mxu0 %v3788
  %7300 = vmatpush1.bf16.msra.mxu0 %v3787
  %7301 = vmatprep.subr.bf16.mxu0 %v3780
  %7302 = vmatpush1.bf16.msra.mxu0 %v3779
  %7303 = vmatprep.subr.bf16.mxu0 %v3772
  %7304 = vmatpush1.bf16.msra.mxu0 %v3771
  %7305 = vmatprep.subr.bf16.mxu0 %v3892
  %7306 = vmatpush2.bf16.msra.mxu0 %v3891
  %7307 = vmatprep.subr.bf16.mxu0 %v3884
  %7308 = vmatpush2.bf16.msra.mxu0 %v3883
  %7309 = vmatprep.subr.bf16.mxu0 %v3876
  %7310 = vmatpush2.bf16.msra.mxu0 %v3875
  %7311 = vmatprep.subr.bf16.mxu0 %v3868
  %7312 = vmatpush2.bf16.msra.mxu0 %v3867
  %7313 = vmatprep.subr.bf16.mxu0 %v3860
  %7314 = vmatpush2.bf16.msra.mxu0 %v3859
  %7315 = vmatprep.subr.bf16.mxu0 %v3852
  %7316 = vmatpush2.bf16.msra.mxu0 %v3851
  %7317 = vmatprep.subr.bf16.mxu0 %v3844
  %7318 = vmatpush2.bf16.msra.mxu0 %v3843
  %7319 = vmatprep.subr.bf16.mxu0 %v3836
  %7320 = vmatpush2.bf16.msra.mxu0 %v3835
  %7321 = vmatprep.mubr.bf16.mxu0 %v6879
  %7322 = vmatmul.mubr.bf16.gmra.mxu0 %v7139
  %v7323 = vpop.f32.mrf.mxu0
  %v7324 = vadd.f32 0.0, %v7323
  %v7325 = vpop.f32.mrf.mxu0
  %v7326 = vadd.f32 0.0, %v7325
  %v7327 = vpop.f32.mrf.mxu0
  %v7328 = vadd.f32 0.0, %v7327
  %v7329 = vpop.f32.mrf.mxu0
  %v7330 = vadd.f32 0.0, %v7329
  %7331 = vmatprep.mubr.bf16.mxu0 %v6880
  %7332 = vmatmul.mubr.bf16.gmra.mxu0 %v7140
  %v7333 = vpop.f32.mrf.mxu0
  %v7334 = vadd.f32 0.0, %v7333
  %v7335 = vpop.f32.mrf.mxu0
  %v7336 = vadd.f32 0.0, %v7335
  %v7337 = vpop.f32.mrf.mxu0
  %v7338 = vadd.f32 0.0, %v7337
  %v7339 = vpop.f32.mrf.mxu0
  %v7340 = vadd.f32 0.0, %v7339
  %7341 = vmatprep.mubr.bf16.mxu0 %v6881
  %7342 = vmatmul.mubr.bf16.gmra.mxu0 %v7141
  %v7343 = vpop.f32.mrf.mxu0
  %v7344 = vadd.f32 0.0, %v7343
  %v7345 = vpop.f32.mrf.mxu0
  %v7346 = vadd.f32 0.0, %v7345
  %v7347 = vpop.f32.mrf.mxu0
  %v7348 = vadd.f32 0.0, %v7347
  %v7349 = vpop.f32.mrf.mxu0
  %v7350 = vadd.f32 0.0, %v7349
  %7351 = vmatprep.mubr.bf16.mxu0 %v6882
  %7352 = vmatmul.mubr.bf16.gmra.mxu0 %v7142
  %v7353 = vpop.f32.mrf.mxu0
  %v7354 = vadd.f32 0.0, %v7353
  %v7355 = vpop.f32.mrf.mxu0
  %v7356 = vadd.f32 0.0, %v7355
  %v7357 = vpop.f32.mrf.mxu0
  %v7358 = vadd.f32 0.0, %v7357
  %v7359 = vpop.f32.mrf.mxu0
  %v7360 = vadd.f32 0.0, %v7359
  %7361 = vdwg.mxu0
  %7362 = vmatprep.subr.bf16.mxu0 %v3830
  %7363 = vmatpush1.bf16.msra.mxu0 %v3829
  %7364 = vmatprep.subr.bf16.mxu0 %v3822
  %7365 = vmatpush1.bf16.msra.mxu0 %v3821
  %7366 = vmatprep.subr.bf16.mxu0 %v3814
  %7367 = vmatpush1.bf16.msra.mxu0 %v3813
  %7368 = vmatprep.subr.bf16.mxu0 %v3806
  %7369 = vmatpush1.bf16.msra.mxu0 %v3805
  %7370 = vmatprep.subr.bf16.mxu0 %v3798
  %7371 = vmatpush1.bf16.msra.mxu0 %v3797
  %7372 = vmatprep.subr.bf16.mxu0 %v3790
  %7373 = vmatpush1.bf16.msra.mxu0 %v3789
  %7374 = vmatprep.subr.bf16.mxu0 %v3782
  %7375 = vmatpush1.bf16.msra.mxu0 %v3781
  %7376 = vmatprep.subr.bf16.mxu0 %v3774
  %7377 = vmatpush1.bf16.msra.mxu0 %v3773
  %7378 = vmatprep.subr.bf16.mxu0 %v3894
  %7379 = vmatpush2.bf16.msra.mxu0 %v3893
  %7380 = vmatprep.subr.bf16.mxu0 %v3886
  %7381 = vmatpush2.bf16.msra.mxu0 %v3885
  %7382 = vmatprep.subr.bf16.mxu0 %v3878
  %7383 = vmatpush2.bf16.msra.mxu0 %v3877
  %7384 = vmatprep.subr.bf16.mxu0 %v3870
  %7385 = vmatpush2.bf16.msra.mxu0 %v3869
  %7386 = vmatprep.subr.bf16.mxu0 %v3862
  %7387 = vmatpush2.bf16.msra.mxu0 %v3861
  %7388 = vmatprep.subr.bf16.mxu0 %v3854
  %7389 = vmatpush2.bf16.msra.mxu0 %v3853
  %7390 = vmatprep.subr.bf16.mxu0 %v3846
  %7391 = vmatpush2.bf16.msra.mxu0 %v3845
  %7392 = vmatprep.subr.bf16.mxu0 %v3838
  %7393 = vmatpush2.bf16.msra.mxu0 %v3837
  %7394 = vmatprep.mubr.bf16.mxu0 %v6879
  %7395 = vmatmul.mubr.bf16.gmra.mxu0 %v7139
  %v7396 = vpop.f32.mrf.mxu0
  %v7397 = vadd.f32 0.0, %v7396
  %v7398 = vpop.f32.mrf.mxu0
  %v7399 = vadd.f32 0.0, %v7398
  %v7400 = vpop.f32.mrf.mxu0
  %v7401 = vadd.f32 0.0, %v7400
  %v7402 = vpop.f32.mrf.mxu0
  %v7403 = vadd.f32 0.0, %v7402
  %7404 = vmatprep.mubr.bf16.mxu0 %v6880
  %7405 = vmatmul.mubr.bf16.gmra.mxu0 %v7140
  %v7406 = vpop.f32.mrf.mxu0
  %v7407 = vadd.f32 0.0, %v7406
  %v7408 = vpop.f32.mrf.mxu0
  %v7409 = vadd.f32 0.0, %v7408
  %v7410 = vpop.f32.mrf.mxu0
  %v7411 = vadd.f32 0.0, %v7410
  %v7412 = vpop.f32.mrf.mxu0
  %v7413 = vadd.f32 0.0, %v7412
  %7414 = vmatprep.mubr.bf16.mxu0 %v6881
  %7415 = vmatmul.mubr.bf16.gmra.mxu0 %v7141
  %v7416 = vpop.f32.mrf.mxu0
  %v7417 = vadd.f32 0.0, %v7416
  %v7418 = vpop.f32.mrf.mxu0
  %v7419 = vadd.f32 0.0, %v7418
  %v7420 = vpop.f32.mrf.mxu0
  %v7421 = vadd.f32 0.0, %v7420
  %v7422 = vpop.f32.mrf.mxu0
  %v7423 = vadd.f32 0.0, %v7422
  %7424 = vmatprep.mubr.bf16.mxu0 %v6882
  %7425 = vmatmul.mubr.bf16.gmra.mxu0 %v7142
  %v7426 = vpop.f32.mrf.mxu0
  %v7427 = vadd.f32 0.0, %v7426
  %v7428 = vpop.f32.mrf.mxu0
  %v7429 = vadd.f32 0.0, %v7428
  %v7430 = vpop.f32.mrf.mxu0
  %v7431 = vadd.f32 0.0, %v7430
  %v7432 = vpop.f32.mrf.mxu0
  %v7433 = vadd.f32 0.0, %v7432
  %7434 = vdwg.mxu0
  %v7435 = vadd.f32 %v7178, %v3106
  %v7436 = vadd.f32 %v7180, %v3110
  %v7437 = vadd.f32 %v7251, %v3114
  %v7438 = vadd.f32 %v7253, %v3118
  %v7439 = vadd.f32 %v7182, %v3106
  %v7440 = vadd.f32 %v7184, %v3110
  %v7441 = vadd.f32 %v7255, %v3114
  %v7442 = vadd.f32 %v7257, %v3118
  %v7443 = vadd.f32 %v7188, %v3106
  %v7444 = vadd.f32 %v7190, %v3110
  %v7445 = vadd.f32 %v7261, %v3114
  %v7446 = vadd.f32 %v7263, %v3118
  %v7447 = vadd.f32 %v7192, %v3106
  %v7448 = vadd.f32 %v7194, %v3110
  %v7449 = vadd.f32 %v7265, %v3114
  %v7450 = vadd.f32 %v7267, %v3118
  %v7451 = vadd.f32 %v7198, %v3106
  %v7452 = vadd.f32 %v7200, %v3110
  %v7453 = vadd.f32 %v7271, %v3114
  %v7454 = vadd.f32 %v7273, %v3118
  %v7455 = vadd.f32 %v7202, %v3106
  %v7456 = vadd.f32 %v7204, %v3110
  %v7457 = vadd.f32 %v7275, %v3114
  %v7458 = vadd.f32 %v7277, %v3118
  %v7459 = vadd.f32 %v7208, %v3106
  %v7460 = vadd.f32 %v7210, %v3110
  %v7461 = vadd.f32 %v7281, %v3114
  %v7462 = vadd.f32 %v7283, %v3118
  %v7463 = vadd.f32 %v7212, %v3106
  %v7464 = vadd.f32 %v7214, %v3110
  %v7465 = vadd.f32 %v7285, %v3114
  %v7466 = vadd.f32 %v7287, %v3118
  %v7467 = vxor.u32 %v7435, 2147483648
  %v7468 = vxor.u32 %v7439, 2147483648
  %v7469 = vxor.u32 %v7443, 2147483648
  %v7470 = vxor.u32 %v7447, 2147483648
  %v7471 = vxor.u32 %v7451, 2147483648
  %v7472 = vxor.u32 %v7455, 2147483648
  %v7473 = vxor.u32 %v7459, 2147483648
  %v7474 = vxor.u32 %v7463, 2147483648
  %v7475 = vmul.f32 %v7467, 1.442695
  %v7476 = vpow.pop %v7475
  %v7477 = vmul.f32 %v7468, 1.442695
  %v7478 = vpow.pop %v7477
  %v7479 = vmul.f32 %v7469, 1.442695
  %v7480 = vpow.pop %v7479
  %v7481 = vmul.f32 %v7470, 1.442695
  %v7482 = vpow.pop %v7481
  %v7483 = vmul.f32 %v7471, 1.442695
  %v7484 = vpow.pop %v7483
  %v7485 = vmul.f32 %v7472, 1.442695
  %v7486 = vpow.pop %v7485
  %v7487 = vmul.f32 %v7473, 1.442695
  %v7488 = vpow.pop %v7487
  %v7489 = vmul.f32 %v7474, 1.442695
  %v7490 = vpow.pop %v7489
  %v7491 = vadd.f32 %v7476, 1.0
  %v7492 = vadd.f32 %v7478, 1.0
  %v7493 = vadd.f32 %v7480, 1.0
  %v7494 = vadd.f32 %v7482, 1.0
  %v7495 = vadd.f32 %v7484, 1.0
  %v7496 = vadd.f32 %v7486, 1.0
  %v7497 = vadd.f32 %v7488, 1.0
  %v7498 = vadd.f32 %v7490, 1.0
  %v7499 = vrcp.pop %v7491
  %v7500 = vmul.f32 1.0, %v7499
  %v7501 = vrcp.pop %v7492
  %v7502 = vmul.f32 1.0, %v7501
  %v7503 = vrcp.pop %v7493
  %v7504 = vmul.f32 1.0, %v7503
  %v7505 = vrcp.pop %v7494
  %v7506 = vmul.f32 1.0, %v7505
  %v7507 = vrcp.pop %v7495
  %v7508 = vmul.f32 1.0, %v7507
  %v7509 = vrcp.pop %v7496
  %v7510 = vmul.f32 1.0, %v7509
  %v7511 = vrcp.pop %v7497
  %v7512 = vmul.f32 1.0, %v7511
  %v7513 = vrcp.pop %v7498
  %v7514 = vmul.f32 1.0, %v7513
  %v7515 = vxor.u32 %v7436, 2147483648
  %v7516 = vxor.u32 %v7440, 2147483648
  %v7517 = vxor.u32 %v7444, 2147483648
  %v7518 = vxor.u32 %v7448, 2147483648
  %v7519 = vxor.u32 %v7452, 2147483648
  %v7520 = vxor.u32 %v7456, 2147483648
  %v7521 = vxor.u32 %v7460, 2147483648
  %v7522 = vxor.u32 %v7464, 2147483648
  %v7523 = vmul.f32 %v7515, 1.442695
  %v7524 = vpow.pop %v7523
  %v7525 = vmul.f32 %v7516, 1.442695
  %v7526 = vpow.pop %v7525
  %v7527 = vmul.f32 %v7517, 1.442695
  %v7528 = vpow.pop %v7527
  %v7529 = vmul.f32 %v7518, 1.442695
  %v7530 = vpow.pop %v7529
  %v7531 = vmul.f32 %v7519, 1.442695
  %v7532 = vpow.pop %v7531
  %v7533 = vmul.f32 %v7520, 1.442695
  %v7534 = vpow.pop %v7533
  %v7535 = vmul.f32 %v7521, 1.442695
  %v7536 = vpow.pop %v7535
  %v7537 = vmul.f32 %v7522, 1.442695
  %v7538 = vpow.pop %v7537
  %v7539 = vadd.f32 %v7524, 1.0
  %v7540 = vadd.f32 %v7526, 1.0
  %v7541 = vadd.f32 %v7528, 1.0
  %v7542 = vadd.f32 %v7530, 1.0
  %v7543 = vadd.f32 %v7532, 1.0
  %v7544 = vadd.f32 %v7534, 1.0
  %v7545 = vadd.f32 %v7536, 1.0
  %v7546 = vadd.f32 %v7538, 1.0
  %v7547 = vrcp.pop %v7539
  %v7548 = vmul.f32 1.0, %v7547
  %v7549 = vrcp.pop %v7540
  %v7550 = vmul.f32 1.0, %v7549
  %v7551 = vrcp.pop %v7541
  %v7552 = vmul.f32 1.0, %v7551
  %v7553 = vrcp.pop %v7542
  %v7554 = vmul.f32 1.0, %v7553
  %v7555 = vrcp.pop %v7543
  %v7556 = vmul.f32 1.0, %v7555
  %v7557 = vrcp.pop %v7544
  %v7558 = vmul.f32 1.0, %v7557
  %v7559 = vrcp.pop %v7545
  %v7560 = vmul.f32 1.0, %v7559
  %v7561 = vrcp.pop %v7546
  %v7562 = vmul.f32 1.0, %v7561
  %v7563 = vtanh.pop %v7437
  %v7564 = vtanh.pop %v7441
  %v7565 = vtanh.pop %v7445
  %v7566 = vtanh.pop %v7449
  %v7567 = vtanh.pop %v7453
  %v7568 = vtanh.pop %v7457
  %v7569 = vtanh.pop %v7461
  %v7570 = vtanh.pop %v7465
  %v7571 = vxor.u32 %v7438, 2147483648
  %v7572 = vxor.u32 %v7442, 2147483648
  %v7573 = vxor.u32 %v7446, 2147483648
  %v7574 = vxor.u32 %v7450, 2147483648
  %v7575 = vxor.u32 %v7454, 2147483648
  %v7576 = vxor.u32 %v7458, 2147483648
  %v7577 = vxor.u32 %v7462, 2147483648
  %v7578 = vxor.u32 %v7466, 2147483648
  %v7579 = vmul.f32 %v7571, 1.442695
  %v7580 = vpow.pop %v7579
  %v7581 = vmul.f32 %v7572, 1.442695
  %v7582 = vpow.pop %v7581
  %v7583 = vmul.f32 %v7573, 1.442695
  %v7584 = vpow.pop %v7583
  %v7585 = vmul.f32 %v7574, 1.442695
  %v7586 = vpow.pop %v7585
  %v7587 = vmul.f32 %v7575, 1.442695
  %v7588 = vpow.pop %v7587
  %v7589 = vmul.f32 %v7576, 1.442695
  %v7590 = vpow.pop %v7589
  %v7591 = vmul.f32 %v7577, 1.442695
  %v7592 = vpow.pop %v7591
  %v7593 = vmul.f32 %v7578, 1.442695
  %v7594 = vpow.pop %v7593
  %v7595 = vadd.f32 %v7580, 1.0
  %v7596 = vadd.f32 %v7582, 1.0
  %v7597 = vadd.f32 %v7584, 1.0
  %v7598 = vadd.f32 %v7586, 1.0
  %v7599 = vadd.f32 %v7588, 1.0
  %v7600 = vadd.f32 %v7590, 1.0
  %v7601 = vadd.f32 %v7592, 1.0
  %v7602 = vadd.f32 %v7594, 1.0
  %v7603 = vrcp.pop %v7595
  %v7604 = vmul.f32 1.0, %v7603
  %v7605 = vrcp.pop %v7596
  %v7606 = vmul.f32 1.0, %v7605
  %v7607 = vrcp.pop %v7597
  %v7608 = vmul.f32 1.0, %v7607
  %v7609 = vrcp.pop %v7598
  %v7610 = vmul.f32 1.0, %v7609
  %v7611 = vrcp.pop %v7599
  %v7612 = vmul.f32 1.0, %v7611
  %v7613 = vrcp.pop %v7600
  %v7614 = vmul.f32 1.0, %v7613
  %v7615 = vrcp.pop %v7601
  %v7616 = vmul.f32 1.0, %v7615
  %v7617 = vrcp.pop %v7602
  %v7618 = vmul.f32 1.0, %v7617
  %v7619 = vmul.f32 %v7548, %v6855
  %v7620 = vmul.f32 %v7550, %v6856
  %v7621 = vmul.f32 %v7552, %v6857
  %v7622 = vmul.f32 %v7554, %v6858
  %v7623 = vmul.f32 %v7556, %v6859
  %v7624 = vmul.f32 %v7558, %v6860
  %v7625 = vmul.f32 %v7560, %v6861
  %v7626 = vmul.f32 %v7562, %v6862
  %v7627 = vmul.f32 %v7500, %v7563
  %v7628 = vmul.f32 %v7502, %v7564
  %v7629 = vmul.f32 %v7504, %v7565
  %v7630 = vmul.f32 %v7506, %v7566
  %v7631 = vmul.f32 %v7508, %v7567
  %v7632 = vmul.f32 %v7510, %v7568
  %v7633 = vmul.f32 %v7512, %v7569
  %v7634 = vmul.f32 %v7514, %v7570
  %v7635 = vadd.f32 %v7619, %v7627
  %v7636 = vadd.f32 %v7620, %v7628
  %v7637 = vadd.f32 %v7621, %v7629
  %v7638 = vadd.f32 %v7622, %v7630
  %v7639 = vadd.f32 %v7623, %v7631
  %v7640 = vadd.f32 %v7624, %v7632
  %v7641 = vadd.f32 %v7625, %v7633
  %v7642 = vadd.f32 %v7626, %v7634
  %v7643 = vtanh.pop %v7635
  %v7644 = vtanh.pop %v7636
  %v7645 = vtanh.pop %v7637
  %v7646 = vtanh.pop %v7638
  %v7647 = vtanh.pop %v7639
  %v7648 = vtanh.pop %v7640
  %v7649 = vtanh.pop %v7641
  %v7650 = vtanh.pop %v7642
  %v7651 = vmul.f32 %v7604, %v7643
  %v7652 = vmul.f32 %v7606, %v7644
  %v7653 = vmul.f32 %v7608, %v7645
  %v7654 = vmul.f32 %v7610, %v7646
  %v7655 = vmul.f32 %v7612, %v7647
  %v7656 = vmul.f32 %v7614, %v7648
  %v7657 = vmul.f32 %v7616, %v7649
  %v7658 = vmul.f32 %v7618, %v7650
  %v7659 = vpack.c.bf16 %v7652, %v7651
  %v7660 = vpack.c.bf16 %v7654, %v7653
  %v7661 = vpack.c.bf16 %v7656, %v7655
  %v7662 = vpack.c.bf16 %v7658, %v7657
  %v7663 = vld [vmem:[#allocation2 + $0x500] sm:$0xff]
  %v7664 = vld [vmem:[#allocation2 + $0x508] sm:$0xff]
  %v7665 = vld [vmem:[#allocation2 + $0x510] sm:$0xff]
  %v7666 = vld [vmem:[#allocation2 + $0x518] sm:$0xff]
  %v7667 = vld [vmem:[#allocation2 + $0x520] sm:$0xff]
  %v7668 = vld [vmem:[#allocation2 + $0x528] sm:$0xff]
  %v7669 = vld [vmem:[#allocation2 + $0x530] sm:$0xff]
  %v7670 = vld [vmem:[#allocation2 + $0x538] sm:$0xff]
  %v7671 = vld [vmem:[#allocation2 + $0x540] sm:$0xff]
  %v7672 = vld [vmem:[#allocation2 + $0x548] sm:$0xff]
  %v7673 = vld [vmem:[#allocation2 + $0x550] sm:$0xff]
  %v7674 = vld [vmem:[#allocation2 + $0x558] sm:$0xff]
  %v7675 = vld [vmem:[#allocation2 + $0x560] sm:$0xff]
  %v7676 = vld [vmem:[#allocation2 + $0x568] sm:$0xff]
  %v7677 = vld [vmem:[#allocation2 + $0x570] sm:$0xff]
  %v7678 = vld [vmem:[#allocation2 + $0x578] sm:$0xff]
  %v7679 = vld [vmem:[#allocation2 + $0x580] sm:$0xff]
  %v7680 = vld [vmem:[#allocation2 + $0x588] sm:$0xff]
  %v7681 = vld [vmem:[#allocation2 + $0x590] sm:$0xff]
  %v7682 = vld [vmem:[#allocation2 + $0x598] sm:$0xff]
  %v7683 = vld [vmem:[#allocation2 + $0x5a0] sm:$0xff]
  %v7684 = vld [vmem:[#allocation2 + $0x5a8] sm:$0xff]
  %v7685 = vld [vmem:[#allocation2 + $0x5b0] sm:$0xff]
  %v7686 = vld [vmem:[#allocation2 + $0x5b8] sm:$0xff]
  %v7687 = vld [vmem:[#allocation2 + $0x5c0] sm:$0xff]
  %v7688 = vld [vmem:[#allocation2 + $0x5c8] sm:$0xff]
  %v7689 = vld [vmem:[#allocation2 + $0x5d0] sm:$0xff]
  %v7690 = vld [vmem:[#allocation2 + $0x5d8] sm:$0xff]
  %v7691 = vld [vmem:[#allocation2 + $0x5e0] sm:$0xff]
  %v7692 = vld [vmem:[#allocation2 + $0x5e8] sm:$0xff]
  %v7693 = vld [vmem:[#allocation2 + $0x5f0] sm:$0xff]
  %v7694 = vld [vmem:[#allocation2 + $0x5f8] sm:$0xff]
  %v7695 = vadd.f32 %v7324, %v7663
  %v7696 = vadd.f32 %v7326, %v7664
  %v7697 = vadd.f32 %v7397, %v7665
  %v7698 = vadd.f32 %v7399, %v7666
  %v7699 = vadd.f32 %v7328, %v7667
  %v7700 = vadd.f32 %v7330, %v7668
  %v7701 = vadd.f32 %v7401, %v7669
  %v7702 = vadd.f32 %v7403, %v7670
  %v7703 = vadd.f32 %v7334, %v7671
  %v7704 = vadd.f32 %v7336, %v7672
  %v7705 = vadd.f32 %v7407, %v7673
  %v7706 = vadd.f32 %v7409, %v7674
  %v7707 = vadd.f32 %v7338, %v7675
  %v7708 = vadd.f32 %v7340, %v7676
  %v7709 = vadd.f32 %v7411, %v7677
  %v7710 = vadd.f32 %v7413, %v7678
  %v7711 = vadd.f32 %v7344, %v7679
  %v7712 = vadd.f32 %v7346, %v7680
  %v7713 = vadd.f32 %v7417, %v7681
  %v7714 = vadd.f32 %v7419, %v7682
  %v7715 = vadd.f32 %v7348, %v7683
  %v7716 = vadd.f32 %v7350, %v7684
  %v7717 = vadd.f32 %v7421, %v7685
  %v7718 = vadd.f32 %v7423, %v7686
  %v7719 = vadd.f32 %v7354, %v7687
  %v7720 = vadd.f32 %v7356, %v7688
  %v7721 = vadd.f32 %v7427, %v7689
  %v7722 = vadd.f32 %v7429, %v7690
  %v7723 = vadd.f32 %v7358, %v7691
  %v7724 = vadd.f32 %v7360, %v7692
  %v7725 = vadd.f32 %v7431, %v7693
  %v7726 = vadd.f32 %v7433, %v7694
  %v7727 = vxor.u32 %v7695, 2147483648
  %v7728 = vxor.u32 %v7699, 2147483648
  %v7729 = vxor.u32 %v7703, 2147483648
  %v7730 = vxor.u32 %v7707, 2147483648
  %v7731 = vxor.u32 %v7711, 2147483648
  %v7732 = vxor.u32 %v7715, 2147483648
  %v7733 = vxor.u32 %v7719, 2147483648
  %v7734 = vxor.u32 %v7723, 2147483648
  %v7735 = vmul.f32 %v7727, 1.442695
  %v7736 = vpow.pop %v7735
  %v7737 = vmul.f32 %v7728, 1.442695
  %v7738 = vpow.pop %v7737
  %v7739 = vmul.f32 %v7729, 1.442695
  %v7740 = vpow.pop %v7739
  %v7741 = vmul.f32 %v7730, 1.442695
  %v7742 = vpow.pop %v7741
  %v7743 = vmul.f32 %v7731, 1.442695
  %v7744 = vpow.pop %v7743
  %v7745 = vmul.f32 %v7732, 1.442695
  %v7746 = vpow.pop %v7745
  %v7747 = vmul.f32 %v7733, 1.442695
  %v7748 = vpow.pop %v7747
  %v7749 = vmul.f32 %v7734, 1.442695
  %v7750 = vpow.pop %v7749
  %v7751 = vadd.f32 %v7736, 1.0
  %v7752 = vadd.f32 %v7738, 1.0
  %v7753 = vadd.f32 %v7740, 1.0
  %v7754 = vadd.f32 %v7742, 1.0
  %v7755 = vadd.f32 %v7744, 1.0
  %v7756 = vadd.f32 %v7746, 1.0
  %v7757 = vadd.f32 %v7748, 1.0
  %v7758 = vadd.f32 %v7750, 1.0
  %v7759 = vrcp.pop %v7751
  %v7760 = vmul.f32 1.0, %v7759
  %v7761 = vrcp.pop %v7752
  %v7762 = vmul.f32 1.0, %v7761
  %v7763 = vrcp.pop %v7753
  %v7764 = vmul.f32 1.0, %v7763
  %v7765 = vrcp.pop %v7754
  %v7766 = vmul.f32 1.0, %v7765
  %v7767 = vrcp.pop %v7755
  %v7768 = vmul.f32 1.0, %v7767
  %v7769 = vrcp.pop %v7756
  %v7770 = vmul.f32 1.0, %v7769
  %v7771 = vrcp.pop %v7757
  %v7772 = vmul.f32 1.0, %v7771
  %v7773 = vrcp.pop %v7758
  %v7774 = vmul.f32 1.0, %v7773
  %v7775 = vxor.u32 %v7696, 2147483648
  %v7776 = vxor.u32 %v7700, 2147483648
  %v7777 = vxor.u32 %v7704, 2147483648
  %v7778 = vxor.u32 %v7708, 2147483648
  %v7779 = vxor.u32 %v7712, 2147483648
  %v7780 = vxor.u32 %v7716, 2147483648
  %v7781 = vxor.u32 %v7720, 2147483648
  %v7782 = vxor.u32 %v7724, 2147483648
  %v7783 = vmul.f32 %v7775, 1.442695
  %v7784 = vpow.pop %v7783
  %v7785 = vmul.f32 %v7776, 1.442695
  %v7786 = vpow.pop %v7785
  %v7787 = vmul.f32 %v7777, 1.442695
  %v7788 = vpow.pop %v7787
  %v7789 = vmul.f32 %v7778, 1.442695
  %v7790 = vpow.pop %v7789
  %v7791 = vmul.f32 %v7779, 1.442695
  %v7792 = vpow.pop %v7791
  %v7793 = vmul.f32 %v7780, 1.442695
  %v7794 = vpow.pop %v7793
  %v7795 = vmul.f32 %v7781, 1.442695
  %v7796 = vpow.pop %v7795
  %v7797 = vmul.f32 %v7782, 1.442695
  %v7798 = vpow.pop %v7797
  %v7799 = vadd.f32 %v7784, 1.0
  %v7800 = vadd.f32 %v7786, 1.0
  %v7801 = vadd.f32 %v7788, 1.0
  %v7802 = vadd.f32 %v7790, 1.0
  %v7803 = vadd.f32 %v7792, 1.0
  %v7804 = vadd.f32 %v7794, 1.0
  %v7805 = vadd.f32 %v7796, 1.0
  %v7806 = vadd.f32 %v7798, 1.0
  %v7807 = vrcp.pop %v7799
  %v7808 = vmul.f32 1.0, %v7807
  %v7809 = vrcp.pop %v7800
  %v7810 = vmul.f32 1.0, %v7809
  %v7811 = vrcp.pop %v7801
  %v7812 = vmul.f32 1.0, %v7811
  %v7813 = vrcp.pop %v7802
  %v7814 = vmul.f32 1.0, %v7813
  %v7815 = vrcp.pop %v7803
  %v7816 = vmul.f32 1.0, %v7815
  %v7817 = vrcp.pop %v7804
  %v7818 = vmul.f32 1.0, %v7817
  %v7819 = vrcp.pop %v7805
  %v7820 = vmul.f32 1.0, %v7819
  %v7821 = vrcp.pop %v7806
  %v7822 = vmul.f32 1.0, %v7821
  %v7823 = vtanh.pop %v7697
  %v7824 = vtanh.pop %v7701
  %v7825 = vtanh.pop %v7705
  %v7826 = vtanh.pop %v7709
  %v7827 = vtanh.pop %v7713
  %v7828 = vtanh.pop %v7717
  %v7829 = vtanh.pop %v7721
  %v7830 = vtanh.pop %v7725
  %v7831 = vxor.u32 %v7698, 2147483648
  %v7832 = vxor.u32 %v7702, 2147483648
  %v7833 = vxor.u32 %v7706, 2147483648
  %v7834 = vxor.u32 %v7710, 2147483648
  %v7835 = vxor.u32 %v7714, 2147483648
  %v7836 = vxor.u32 %v7718, 2147483648
  %v7837 = vxor.u32 %v7722, 2147483648
  %v7838 = vxor.u32 %v7726, 2147483648
  %v7839 = vmul.f32 %v7831, 1.442695
  %v7840 = vpow.pop %v7839
  %v7841 = vmul.f32 %v7832, 1.442695
  %v7842 = vpow.pop %v7841
  %v7843 = vmul.f32 %v7833, 1.442695
  %v7844 = vpow.pop %v7843
  %v7845 = vmul.f32 %v7834, 1.442695
  %v7846 = vpow.pop %v7845
  %v7847 = vmul.f32 %v7835, 1.442695
  %v7848 = vpow.pop %v7847
  %v7849 = vmul.f32 %v7836, 1.442695
  %v7850 = vpow.pop %v7849
  %v7851 = vmul.f32 %v7837, 1.442695
  %v7852 = vpow.pop %v7851
  %v7853 = vmul.f32 %v7838, 1.442695
  %v7854 = vpow.pop %v7853
  %v7855 = vadd.f32 %v7840, 1.0
  %v7856 = vadd.f32 %v7842, 1.0
  %v7857 = vadd.f32 %v7844, 1.0
  %v7858 = vadd.f32 %v7846, 1.0
  %v7859 = vadd.f32 %v7848, 1.0
  %v7860 = vadd.f32 %v7850, 1.0
  %v7861 = vadd.f32 %v7852, 1.0
  %v7862 = vadd.f32 %v7854, 1.0
  %v7863 = vrcp.pop %v7855
  %v7864 = vmul.f32 1.0, %v7863
  %v7865 = vrcp.pop %v7856
  %v7866 = vmul.f32 1.0, %v7865
  %v7867 = vrcp.pop %v7857
  %v7868 = vmul.f32 1.0, %v7867
  %v7869 = vrcp.pop %v7858
  %v7870 = vmul.f32 1.0, %v7869
  %v7871 = vrcp.pop %v7859
  %v7872 = vmul.f32 1.0, %v7871
  %v7873 = vrcp.pop %v7860
  %v7874 = vmul.f32 1.0, %v7873
  %v7875 = vrcp.pop %v7861
  %v7876 = vmul.f32 1.0, %v7875
  %v7877 = vrcp.pop %v7862
  %v7878 = vmul.f32 1.0, %v7877
  %v7879 = vmul.f32 %v7808, %v7115
  %v7880 = vmul.f32 %v7810, %v7116
  %v7881 = vmul.f32 %v7812, %v7117
  %v7882 = vmul.f32 %v7814, %v7118
  %v7883 = vmul.f32 %v7816, %v7119
  %v7884 = vmul.f32 %v7818, %v7120
  %v7885 = vmul.f32 %v7820, %v7121
  %v7886 = vmul.f32 %v7822, %v7122
  %v7887 = vmul.f32 %v7760, %v7823
  %v7888 = vmul.f32 %v7762, %v7824
  %v7889 = vmul.f32 %v7764, %v7825
  %v7890 = vmul.f32 %v7766, %v7826
  %v7891 = vmul.f32 %v7768, %v7827
  %v7892 = vmul.f32 %v7770, %v7828
  %v7893 = vmul.f32 %v7772, %v7829
  %v7894 = vmul.f32 %v7774, %v7830
  %v7895 = vadd.f32 %v7879, %v7887
  %v7896 = vadd.f32 %v7880, %v7888
  %v7897 = vadd.f32 %v7881, %v7889
  %v7898 = vadd.f32 %v7882, %v7890
  %v7899 = vadd.f32 %v7883, %v7891
  %v7900 = vadd.f32 %v7884, %v7892
  %v7901 = vadd.f32 %v7885, %v7893
  %v7902 = vadd.f32 %v7886, %v7894
  %v7903 = vtanh.pop %v7895
  %v7904 = vtanh.pop %v7896
  %v7905 = vtanh.pop %v7897
  %v7906 = vtanh.pop %v7898
  %v7907 = vtanh.pop %v7899
  %v7908 = vtanh.pop %v7900
  %v7909 = vtanh.pop %v7901
  %v7910 = vtanh.pop %v7902
  %v7911 = vmul.f32 %v7864, %v7903
  %v7912 = vmul.f32 %v7866, %v7904
  %v7913 = vmul.f32 %v7868, %v7905
  %v7914 = vmul.f32 %v7870, %v7906
  %v7915 = vmul.f32 %v7872, %v7907
  %v7916 = vmul.f32 %v7874, %v7908
  %v7917 = vmul.f32 %v7876, %v7909
  %v7918 = vmul.f32 %v7878, %v7910
  %v7919 = vpack.c.bf16 %v7912, %v7911
  %v7920 = vpack.c.bf16 %v7914, %v7913
  %v7921 = vpack.c.bf16 %v7916, %v7915
  %v7922 = vpack.c.bf16 %v7918, %v7917
  %7923 = vmatprep.subr.bf16.mxu0 %v3824
  %7924 = vmatpush1.bf16.msra.mxu0 %v3823
  %7925 = vmatprep.subr.bf16.mxu0 %v3816
  %7926 = vmatpush1.bf16.msra.mxu0 %v3815
  %7927 = vmatprep.subr.bf16.mxu0 %v3808
  %7928 = vmatpush1.bf16.msra.mxu0 %v3807
  %7929 = vmatprep.subr.bf16.mxu0 %v3800
  %7930 = vmatpush1.bf16.msra.mxu0 %v3799
  %7931 = vmatprep.subr.bf16.mxu0 %v3792
  %7932 = vmatpush1.bf16.msra.mxu0 %v3791
  %7933 = vmatprep.subr.bf16.mxu0 %v3784
  %7934 = vmatpush1.bf16.msra.mxu0 %v3783
  %7935 = vmatprep.subr.bf16.mxu0 %v3776
  %7936 = vmatpush1.bf16.msra.mxu0 %v3775
  %7937 = vmatprep.subr.bf16.mxu0 %v3768
  %7938 = vmatpush1.bf16.msra.mxu0 %v3767
  %7939 = vmatprep.subr.bf16.mxu0 %v3888
  %7940 = vmatpush2.bf16.msra.mxu0 %v3887
  %7941 = vmatprep.subr.bf16.mxu0 %v3880
  %7942 = vmatpush2.bf16.msra.mxu0 %v3879
  %7943 = vmatprep.subr.bf16.mxu0 %v3872
  %7944 = vmatpush2.bf16.msra.mxu0 %v3871
  %7945 = vmatprep.subr.bf16.mxu0 %v3864
  %7946 = vmatpush2.bf16.msra.mxu0 %v3863
  %7947 = vmatprep.subr.bf16.mxu0 %v3856
  %7948 = vmatpush2.bf16.msra.mxu0 %v3855
  %7949 = vmatprep.subr.bf16.mxu0 %v3848
  %7950 = vmatpush2.bf16.msra.mxu0 %v3847
  %7951 = vmatprep.subr.bf16.mxu0 %v3840
  %7952 = vmatpush2.bf16.msra.mxu0 %v3839
  %7953 = vmatprep.subr.bf16.mxu0 %v3832
  %7954 = vmatpush2.bf16.msra.mxu0 %v3831
  %7955 = vmatprep.mubr.bf16.mxu0 %v7659
  %7956 = vmatmul.mubr.bf16.gmra.mxu0 %v7919
  %v7957 = vpop.f32.mrf.mxu0
  %v7958 = vadd.f32 0.0, %v7957
  %v7959 = vpop.f32.mrf.mxu0
  %v7960 = vadd.f32 0.0, %v7959
  %v7961 = vpop.f32.mrf.mxu0
  %v7962 = vadd.f32 0.0, %v7961
  %v7963 = vpop.f32.mrf.mxu0
  %v7964 = vadd.f32 0.0, %v7963
  %7965 = vmatprep.mubr.bf16.mxu0 %v7660
  %7966 = vmatmul.mubr.bf16.gmra.mxu0 %v7920
  %v7967 = vpop.f32.mrf.mxu0
  %v7968 = vadd.f32 0.0, %v7967
  %v7969 = vpop.f32.mrf.mxu0
  %v7970 = vadd.f32 0.0, %v7969
  %v7971 = vpop.f32.mrf.mxu0
  %v7972 = vadd.f32 0.0, %v7971
  %v7973 = vpop.f32.mrf.mxu0
  %v7974 = vadd.f32 0.0, %v7973
  %7975 = vmatprep.mubr.bf16.mxu0 %v7661
  %7976 = vmatmul.mubr.bf16.gmra.mxu0 %v7921
  %v7977 = vpop.f32.mrf.mxu0
  %v7978 = vadd.f32 0.0, %v7977
  %v7979 = vpop.f32.mrf.mxu0
  %v7980 = vadd.f32 0.0, %v7979
  %v7981 = vpop.f32.mrf.mxu0
  %v7982 = vadd.f32 0.0, %v7981
  %v7983 = vpop.f32.mrf.mxu0
  %v7984 = vadd.f32 0.0, %v7983
  %7985 = vmatprep.mubr.bf16.mxu0 %v7662
  %7986 = vmatmul.mubr.bf16.gmra.mxu0 %v7922
  %v7987 = vpop.f32.mrf.mxu0
  %v7988 = vadd.f32 0.0, %v7987
  %v7989 = vpop.f32.mrf.mxu0
  %v7990 = vadd.f32 0.0, %v7989
  %v7991 = vpop.f32.mrf.mxu0
  %v7992 = vadd.f32 0.0, %v7991
  %v7993 = vpop.f32.mrf.mxu0
  %v7994 = vadd.f32 0.0, %v7993
  %7995 = vdwg.mxu0
  %7996 = vmatprep.subr.bf16.mxu0 %v3826
  %7997 = vmatpush1.bf16.msra.mxu0 %v3825
  %7998 = vmatprep.subr.bf16.mxu0 %v3818
  %7999 = vmatpush1.bf16.msra.mxu0 %v3817
  %8000 = vmatprep.subr.bf16.mxu0 %v3810
  %8001 = vmatpush1.bf16.msra.mxu0 %v3809
  %8002 = vmatprep.subr.bf16.mxu0 %v3802
  %8003 = vmatpush1.bf16.msra.mxu0 %v3801
  %8004 = vmatprep.subr.bf16.mxu0 %v3794
  %8005 = vmatpush1.bf16.msra.mxu0 %v3793
  %8006 = vmatprep.subr.bf16.mxu0 %v3786
  %8007 = vmatpush1.bf16.msra.mxu0 %v3785
  %8008 = vmatprep.subr.bf16.mxu0 %v3778
  %8009 = vmatpush1.bf16.msra.mxu0 %v3777
  %8010 = vmatprep.subr.bf16.mxu0 %v3770
  %8011 = vmatpush1.bf16.msra.mxu0 %v3769
  %8012 = vmatprep.subr.bf16.mxu0 %v3890
  %8013 = vmatpush2.bf16.msra.mxu0 %v3889
  %8014 = vmatprep.subr.bf16.mxu0 %v3882
  %8015 = vmatpush2.bf16.msra.mxu0 %v3881
  %8016 = vmatprep.subr.bf16.mxu0 %v3874
  %8017 = vmatpush2.bf16.msra.mxu0 %v3873
  %8018 = vmatprep.subr.bf16.mxu0 %v3866
  %8019 = vmatpush2.bf16.msra.mxu0 %v3865
  %8020 = vmatprep.subr.bf16.mxu0 %v3858
  %8021 = vmatpush2.bf16.msra.mxu0 %v3857
  %8022 = vmatprep.subr.bf16.mxu0 %v3850
  %8023 = vmatpush2.bf16.msra.mxu0 %v3849
  %8024 = vmatprep.subr.bf16.mxu0 %v3842
  %8025 = vmatpush2.bf16.msra.mxu0 %v3841
  %8026 = vmatprep.subr.bf16.mxu0 %v3834
  %8027 = vmatpush2.bf16.msra.mxu0 %v3833
  %8028 = vmatprep.mubr.bf16.mxu0 %v7659
  %8029 = vmatmul.mubr.bf16.gmra.mxu0 %v7919
  %v8030 = vpop.f32.mrf.mxu0
  %v8031 = vadd.f32 0.0, %v8030
  %v8032 = vpop.f32.mrf.mxu0
  %v8033 = vadd.f32 0.0, %v8032
  %v8034 = vpop.f32.mrf.mxu0
  %v8035 = vadd.f32 0.0, %v8034
  %v8036 = vpop.f32.mrf.mxu0
  %v8037 = vadd.f32 0.0, %v8036
  %8038 = vmatprep.mubr.bf16.mxu0 %v7660
  %8039 = vmatmul.mubr.bf16.gmra.mxu0 %v7920
  %v8040 = vpop.f32.mrf.mxu0
  %v8041 = vadd.f32 0.0, %v8040
  %v8042 = vpop.f32.mrf.mxu0
  %v8043 = vadd.f32 0.0, %v8042
  %v8044 = vpop.f32.mrf.mxu0
  %v8045 = vadd.f32 0.0, %v8044
  %v8046 = vpop.f32.mrf.mxu0
  %v8047 = vadd.f32 0.0, %v8046
  %8048 = vmatprep.mubr.bf16.mxu0 %v7661
  %8049 = vmatmul.mubr.bf16.gmra.mxu0 %v7921
  %v8050 = vpop.f32.mrf.mxu0
  %v8051 = vadd.f32 0.0, %v8050
  %v8052 = vpop.f32.mrf.mxu0
  %v8053 = vadd.f32 0.0, %v8052
  %v8054 = vpop.f32.mrf.mxu0
  %v8055 = vadd.f32 0.0, %v8054
  %v8056 = vpop.f32.mrf.mxu0
  %v8057 = vadd.f32 0.0, %v8056
  %8058 = vmatprep.mubr.bf16.mxu0 %v7662
  %8059 = vmatmul.mubr.bf16.gmra.mxu0 %v7922
  %v8060 = vpop.f32.mrf.mxu0
  %v8061 = vadd.f32 0.0, %v8060
  %v8062 = vpop.f32.mrf.mxu0
  %v8063 = vadd.f32 0.0, %v8062
  %v8064 = vpop.f32.mrf.mxu0
  %v8065 = vadd.f32 0.0, %v8064
  %v8066 = vpop.f32.mrf.mxu0
  %v8067 = vadd.f32 0.0, %v8066
  %8068 = vdwg.mxu0
  %8069 = vmatprep.subr.bf16.mxu0 %v3828
  %8070 = vmatpush1.bf16.msra.mxu0 %v3827
  %8071 = vmatprep.subr.bf16.mxu0 %v3820
  %8072 = vmatpush1.bf16.msra.mxu0 %v3819
  %8073 = vmatprep.subr.bf16.mxu0 %v3812
  %8074 = vmatpush1.bf16.msra.mxu0 %v3811
  %8075 = vmatprep.subr.bf16.mxu0 %v3804
  %8076 = vmatpush1.bf16.msra.mxu0 %v3803
  %8077 = vmatprep.subr.bf16.mxu0 %v3796
  %8078 = vmatpush1.bf16.msra.mxu0 %v3795
  %8079 = vmatprep.subr.bf16.mxu0 %v3788
  %8080 = vmatpush1.bf16.msra.mxu0 %v3787
  %8081 = vmatprep.subr.bf16.mxu0 %v3780
  %8082 = vmatpush1.bf16.msra.mxu0 %v3779
  %8083 = vmatprep.subr.bf16.mxu0 %v3772
  %8084 = vmatpush1.bf16.msra.mxu0 %v3771
  %8085 = vmatprep.subr.bf16.mxu0 %v3892
  %8086 = vmatpush2.bf16.msra.mxu0 %v3891
  %8087 = vmatprep.subr.bf16.mxu0 %v3884
  %8088 = vmatpush2.bf16.msra.mxu0 %v3883
  %8089 = vmatprep.subr.bf16.mxu0 %v3876
  %8090 = vmatpush2.bf16.msra.mxu0 %v3875
  %8091 = vmatprep.subr.bf16.mxu0 %v3868
  %8092 = vmatpush2.bf16.msra.mxu0 %v3867
  %8093 = vmatprep.subr.bf16.mxu0 %v3860
  %8094 = vmatpush2.bf16.msra.mxu0 %v3859
  %8095 = vmatprep.subr.bf16.mxu0 %v3852
  %8096 = vmatpush2.bf16.msra.mxu0 %v3851
  %8097 = vmatprep.subr.bf16.mxu0 %v3844
  %8098 = vmatpush2.bf16.msra.mxu0 %v3843
  %8099 = vmatprep.subr.bf16.mxu0 %v3836
  %8100 = vmatpush2.bf16.msra.mxu0 %v3835
  %8101 = vmatprep.mubr.bf16.mxu0 %v7659
  %8102 = vmatmul.mubr.bf16.gmra.mxu0 %v7919
  %v8103 = vpop.f32.mrf.mxu0
  %v8104 = vadd.f32 0.0, %v8103
  %v8105 = vpop.f32.mrf.mxu0
  %v8106 = vadd.f32 0.0, %v8105
  %v8107 = vpop.f32.mrf.mxu0
  %v8108 = vadd.f32 0.0, %v8107
  %v8109 = vpop.f32.mrf.mxu0
  %v8110 = vadd.f32 0.0, %v8109
  %8111 = vmatprep.mubr.bf16.mxu0 %v7660
  %8112 = vmatmul.mubr.bf16.gmra.mxu0 %v7920
  %v8113 = vpop.f32.mrf.mxu0
  %v8114 = vadd.f32 0.0, %v8113
  %v8115 = vpop.f32.mrf.mxu0
  %v8116 = vadd.f32 0.0, %v8115
  %v8117 = vpop.f32.mrf.mxu0
  %v8118 = vadd.f32 0.0, %v8117
  %v8119 = vpop.f32.mrf.mxu0
  %v8120 = vadd.f32 0.0, %v8119
  %8121 = vmatprep.mubr.bf16.mxu0 %v7661
  %8122 = vmatmul.mubr.bf16.gmra.mxu0 %v7921
  %v8123 = vpop.f32.mrf.mxu0
  %v8124 = vadd.f32 0.0, %v8123
  %v8125 = vpop.f32.mrf.mxu0
  %v8126 = vadd.f32 0.0, %v8125
  %v8127 = vpop.f32.mrf.mxu0
  %v8128 = vadd.f32 0.0, %v8127
  %v8129 = vpop.f32.mrf.mxu0
  %v8130 = vadd.f32 0.0, %v8129
  %8131 = vmatprep.mubr.bf16.mxu0 %v7662
  %8132 = vmatmul.mubr.bf16.gmra.mxu0 %v7922
  %v8133 = vpop.f32.mrf.mxu0
  %v8134 = vadd.f32 0.0, %v8133
  %v8135 = vpop.f32.mrf.mxu0
  %v8136 = vadd.f32 0.0, %v8135
  %v8137 = vpop.f32.mrf.mxu0
  %v8138 = vadd.f32 0.0, %v8137
  %v8139 = vpop.f32.mrf.mxu0
  %v8140 = vadd.f32 0.0, %v8139
  %8141 = vdwg.mxu0
  %8142 = vmatprep.subr.bf16.mxu0 %v3830
  %8143 = vmatpush1.bf16.msra.mxu0 %v3829
  %8144 = vmatprep.subr.bf16.mxu0 %v3822
  %8145 = vmatpush1.bf16.msra.mxu0 %v3821
  %8146 = vmatprep.subr.bf16.mxu0 %v3814
  %8147 = vmatpush1.bf16.msra.mxu0 %v3813
  %8148 = vmatprep.subr.bf16.mxu0 %v3806
  %8149 = vmatpush1.bf16.msra.mxu0 %v3805
  %8150 = vmatprep.subr.bf16.mxu0 %v3798
  %8151 = vmatpush1.bf16.msra.mxu0 %v3797
  %8152 = vmatprep.subr.bf16.mxu0 %v3790
  %8153 = vmatpush1.bf16.msra.mxu0 %v3789
  %8154 = vmatprep.subr.bf16.mxu0 %v3782
  %8155 = vmatpush1.bf16.msra.mxu0 %v3781
  %8156 = vmatprep.subr.bf16.mxu0 %v3774
  %8157 = vmatpush1.bf16.msra.mxu0 %v3773
  %8158 = vmatprep.subr.bf16.mxu0 %v3894
  %8159 = vmatpush2.bf16.msra.mxu0 %v3893
  %8160 = vmatprep.subr.bf16.mxu0 %v3886
  %8161 = vmatpush2.bf16.msra.mxu0 %v3885
  %8162 = vmatprep.subr.bf16.mxu0 %v3878
  %8163 = vmatpush2.bf16.msra.mxu0 %v3877
  %8164 = vmatprep.subr.bf16.mxu0 %v3870
  %8165 = vmatpush2.bf16.msra.mxu0 %v3869
  %8166 = vmatprep.subr.bf16.mxu0 %v3862
  %8167 = vmatpush2.bf16.msra.mxu0 %v3861
  %8168 = vmatprep.subr.bf16.mxu0 %v3854
  %8169 = vmatpush2.bf16.msra.mxu0 %v3853
  %8170 = vmatprep.subr.bf16.mxu0 %v3846
  %8171 = vmatpush2.bf16.msra.mxu0 %v3845
  %8172 = vmatprep.subr.bf16.mxu0 %v3838
  %8173 = vmatpush2.bf16.msra.mxu0 %v3837
  %8174 = vmatprep.mubr.bf16.mxu0 %v7659
  %8175 = vmatmul.mubr.bf16.gmra.mxu0 %v7919
  %v8176 = vpop.f32.mrf.mxu0
  %v8177 = vadd.f32 0.0, %v8176
  %v8178 = vpop.f32.mrf.mxu0
  %v8179 = vadd.f32 0.0, %v8178
  %v8180 = vpop.f32.mrf.mxu0
  %v8181 = vadd.f32 0.0, %v8180
  %v8182 = vpop.f32.mrf.mxu0
  %v8183 = vadd.f32 0.0, %v8182
  %8184 = vmatprep.mubr.bf16.mxu0 %v7660
  %8185 = vmatmul.mubr.bf16.gmra.mxu0 %v7920
  %v8186 = vpop.f32.mrf.mxu0
  %v8187 = vadd.f32 0.0, %v8186
  %v8188 = vpop.f32.mrf.mxu0
  %v8189 = vadd.f32 0.0, %v8188
  %v8190 = vpop.f32.mrf.mxu0
  %v8191 = vadd.f32 0.0, %v8190
  %v8192 = vpop.f32.mrf.mxu0
  %v8193 = vadd.f32 0.0, %v8192
  %8194 = vmatprep.mubr.bf16.mxu0 %v7661
  %8195 = vmatmul.mubr.bf16.gmra.mxu0 %v7921
  %v8196 = vpop.f32.mrf.mxu0
  %v8197 = vadd.f32 0.0, %v8196
  %v8198 = vpop.f32.mrf.mxu0
  %v8199 = vadd.f32 0.0, %v8198
  %v8200 = vpop.f32.mrf.mxu0
  %v8201 = vadd.f32 0.0, %v8200
  %v8202 = vpop.f32.mrf.mxu0
  %v8203 = vadd.f32 0.0, %v8202
  %8204 = vmatprep.mubr.bf16.mxu0 %v7662
  %8205 = vmatmul.mubr.bf16.gmra.mxu0 %v7922
  %v8206 = vpop.f32.mrf.mxu0
  %v8207 = vadd.f32 0.0, %v8206
  %v8208 = vpop.f32.mrf.mxu0
  %v8209 = vadd.f32 0.0, %v8208
  %v8210 = vpop.f32.mrf.mxu0
  %v8211 = vadd.f32 0.0, %v8210
  %v8212 = vpop.f32.mrf.mxu0
  %v8213 = vadd.f32 0.0, %v8212
  %8214 = vdwg.mxu0
  %v8215 = vadd.f32 %v7958, %v3106
  %v8216 = vadd.f32 %v7960, %v3110
  %v8217 = vadd.f32 %v8031, %v3114
  %v8218 = vadd.f32 %v8033, %v3118
  %v8219 = vadd.f32 %v7962, %v3106
  %v8220 = vadd.f32 %v7964, %v3110
  %v8221 = vadd.f32 %v8035, %v3114
  %v8222 = vadd.f32 %v8037, %v3118
  %v8223 = vadd.f32 %v7968, %v3106
  %v8224 = vadd.f32 %v7970, %v3110
  %v8225 = vadd.f32 %v8041, %v3114
  %v8226 = vadd.f32 %v8043, %v3118
  %v8227 = vadd.f32 %v7972, %v3106
  %v8228 = vadd.f32 %v7974, %v3110
  %v8229 = vadd.f32 %v8045, %v3114
  %v8230 = vadd.f32 %v8047, %v3118
  %v8231 = vadd.f32 %v7978, %v3106
  %v8232 = vadd.f32 %v7980, %v3110
  %v8233 = vadd.f32 %v8051, %v3114
  %v8234 = vadd.f32 %v8053, %v3118
  %v8235 = vadd.f32 %v7982, %v3106
  %v8236 = vadd.f32 %v7984, %v3110
  %v8237 = vadd.f32 %v8055, %v3114
  %v8238 = vadd.f32 %v8057, %v3118
  %v8239 = vadd.f32 %v7988, %v3106
  %v8240 = vadd.f32 %v7990, %v3110
  %v8241 = vadd.f32 %v8061, %v3114
  %v8242 = vadd.f32 %v8063, %v3118
  %v8243 = vadd.f32 %v7992, %v3106
  %v8244 = vadd.f32 %v7994, %v3110
  %v8245 = vadd.f32 %v8065, %v3114
  %v8246 = vadd.f32 %v8067, %v3118
  %v8247 = vxor.u32 %v8215, 2147483648
  %v8248 = vxor.u32 %v8219, 2147483648
  %v8249 = vxor.u32 %v8223, 2147483648
  %v8250 = vxor.u32 %v8227, 2147483648
  %v8251 = vxor.u32 %v8231, 2147483648
  %v8252 = vxor.u32 %v8235, 2147483648
  %v8253 = vxor.u32 %v8239, 2147483648
  %v8254 = vxor.u32 %v8243, 2147483648
  %v8255 = vmul.f32 %v8247, 1.442695
  %v8256 = vpow.pop %v8255
  %v8257 = vmul.f32 %v8248, 1.442695
  %v8258 = vpow.pop %v8257
  %v8259 = vmul.f32 %v8249, 1.442695
  %v8260 = vpow.pop %v8259
  %v8261 = vmul.f32 %v8250, 1.442695
  %v8262 = vpow.pop %v8261
  %v8263 = vmul.f32 %v8251, 1.442695
  %v8264 = vpow.pop %v8263
  %v8265 = vmul.f32 %v8252, 1.442695
  %v8266 = vpow.pop %v8265
  %v8267 = vmul.f32 %v8253, 1.442695
  %v8268 = vpow.pop %v8267
  %v8269 = vmul.f32 %v8254, 1.442695
  %v8270 = vpow.pop %v8269
  %v8271 = vadd.f32 %v8256, 1.0
  %v8272 = vadd.f32 %v8258, 1.0
  %v8273 = vadd.f32 %v8260, 1.0
  %v8274 = vadd.f32 %v8262, 1.0
  %v8275 = vadd.f32 %v8264, 1.0
  %v8276 = vadd.f32 %v8266, 1.0
  %v8277 = vadd.f32 %v8268, 1.0
  %v8278 = vadd.f32 %v8270, 1.0
  %v8279 = vrcp.pop %v8271
  %v8280 = vmul.f32 1.0, %v8279
  %v8281 = vrcp.pop %v8272
  %v8282 = vmul.f32 1.0, %v8281
  %v8283 = vrcp.pop %v8273
  %v8284 = vmul.f32 1.0, %v8283
  %v8285 = vrcp.pop %v8274
  %v8286 = vmul.f32 1.0, %v8285
  %v8287 = vrcp.pop %v8275
  %v8288 = vmul.f32 1.0, %v8287
  %v8289 = vrcp.pop %v8276
  %v8290 = vmul.f32 1.0, %v8289
  %v8291 = vrcp.pop %v8277
  %v8292 = vmul.f32 1.0, %v8291
  %v8293 = vrcp.pop %v8278
  %v8294 = vmul.f32 1.0, %v8293
  %v8295 = vxor.u32 %v8216, 2147483648
  %v8296 = vxor.u32 %v8220, 2147483648
  %v8297 = vxor.u32 %v8224, 2147483648
  %v8298 = vxor.u32 %v8228, 2147483648
  %v8299 = vxor.u32 %v8232, 2147483648
  %v8300 = vxor.u32 %v8236, 2147483648
  %v8301 = vxor.u32 %v8240, 2147483648
  %v8302 = vxor.u32 %v8244, 2147483648
  %v8303 = vmul.f32 %v8295, 1.442695
  %v8304 = vpow.pop %v8303
  %v8305 = vmul.f32 %v8296, 1.442695
  %v8306 = vpow.pop %v8305
  %v8307 = vmul.f32 %v8297, 1.442695
  %v8308 = vpow.pop %v8307
  %v8309 = vmul.f32 %v8298, 1.442695
  %v8310 = vpow.pop %v8309
  %v8311 = vmul.f32 %v8299, 1.442695
  %v8312 = vpow.pop %v8311
  %v8313 = vmul.f32 %v8300, 1.442695
  %v8314 = vpow.pop %v8313
  %v8315 = vmul.f32 %v8301, 1.442695
  %v8316 = vpow.pop %v8315
  %v8317 = vmul.f32 %v8302, 1.442695
  %v8318 = vpow.pop %v8317
  %v8319 = vadd.f32 %v8304, 1.0
  %v8320 = vadd.f32 %v8306, 1.0
  %v8321 = vadd.f32 %v8308, 1.0
  %v8322 = vadd.f32 %v8310, 1.0
  %v8323 = vadd.f32 %v8312, 1.0
  %v8324 = vadd.f32 %v8314, 1.0
  %v8325 = vadd.f32 %v8316, 1.0
  %v8326 = vadd.f32 %v8318, 1.0
  %v8327 = vrcp.pop %v8319
  %v8328 = vmul.f32 1.0, %v8327
  %v8329 = vrcp.pop %v8320
  %v8330 = vmul.f32 1.0, %v8329
  %v8331 = vrcp.pop %v8321
  %v8332 = vmul.f32 1.0, %v8331
  %v8333 = vrcp.pop %v8322
  %v8334 = vmul.f32 1.0, %v8333
  %v8335 = vrcp.pop %v8323
  %v8336 = vmul.f32 1.0, %v8335
  %v8337 = vrcp.pop %v8324
  %v8338 = vmul.f32 1.0, %v8337
  %v8339 = vrcp.pop %v8325
  %v8340 = vmul.f32 1.0, %v8339
  %v8341 = vrcp.pop %v8326
  %v8342 = vmul.f32 1.0, %v8341
  %v8343 = vtanh.pop %v8217
  %v8344 = vtanh.pop %v8221
  %v8345 = vtanh.pop %v8225
  %v8346 = vtanh.pop %v8229
  %v8347 = vtanh.pop %v8233
  %v8348 = vtanh.pop %v8237
  %v8349 = vtanh.pop %v8241
  %v8350 = vtanh.pop %v8245
  %v8351 = vxor.u32 %v8218, 2147483648
  %v8352 = vxor.u32 %v8222, 2147483648
  %v8353 = vxor.u32 %v8226, 2147483648
  %v8354 = vxor.u32 %v8230, 2147483648
  %v8355 = vxor.u32 %v8234, 2147483648
  %v8356 = vxor.u32 %v8238, 2147483648
  %v8357 = vxor.u32 %v8242, 2147483648
  %v8358 = vxor.u32 %v8246, 2147483648
  %v8359 = vmul.f32 %v8351, 1.442695
  %v8360 = vpow.pop %v8359
  %v8361 = vmul.f32 %v8352, 1.442695
  %v8362 = vpow.pop %v8361
  %v8363 = vmul.f32 %v8353, 1.442695
  %v8364 = vpow.pop %v8363
  %v8365 = vmul.f32 %v8354, 1.442695
  %v8366 = vpow.pop %v8365
  %v8367 = vmul.f32 %v8355, 1.442695
  %v8368 = vpow.pop %v8367
  %v8369 = vmul.f32 %v8356, 1.442695
  %v8370 = vpow.pop %v8369
  %v8371 = vmul.f32 %v8357, 1.442695
  %v8372 = vpow.pop %v8371
  %v8373 = vmul.f32 %v8358, 1.442695
  %v8374 = vpow.pop %v8373
  %v8375 = vadd.f32 %v8360, 1.0
  %v8376 = vadd.f32 %v8362, 1.0
  %v8377 = vadd.f32 %v8364, 1.0
  %v8378 = vadd.f32 %v8366, 1.0
  %v8379 = vadd.f32 %v8368, 1.0
  %v8380 = vadd.f32 %v8370, 1.0
  %v8381 = vadd.f32 %v8372, 1.0
  %v8382 = vadd.f32 %v8374, 1.0
  %v8383 = vrcp.pop %v8375
  %v8384 = vmul.f32 1.0, %v8383
  %v8385 = vrcp.pop %v8376
  %v8386 = vmul.f32 1.0, %v8385
  %v8387 = vrcp.pop %v8377
  %v8388 = vmul.f32 1.0, %v8387
  %v8389 = vrcp.pop %v8378
  %v8390 = vmul.f32 1.0, %v8389
  %v8391 = vrcp.pop %v8379
  %v8392 = vmul.f32 1.0, %v8391
  %v8393 = vrcp.pop %v8380
  %v8394 = vmul.f32 1.0, %v8393
  %v8395 = vrcp.pop %v8381
  %v8396 = vmul.f32 1.0, %v8395
  %v8397 = vrcp.pop %v8382
  %v8398 = vmul.f32 1.0, %v8397
  %v8399 = vmul.f32 %v8328, %v7635
  %v8400 = vmul.f32 %v8330, %v7636
  %v8401 = vmul.f32 %v8332, %v7637
  %v8402 = vmul.f32 %v8334, %v7638
  %v8403 = vmul.f32 %v8336, %v7639
  %v8404 = vmul.f32 %v8338, %v7640
  %v8405 = vmul.f32 %v8340, %v7641
  %v8406 = vmul.f32 %v8342, %v7642
  %v8407 = vmul.f32 %v8280, %v8343
  %v8408 = vmul.f32 %v8282, %v8344
  %v8409 = vmul.f32 %v8284, %v8345
  %v8410 = vmul.f32 %v8286, %v8346
  %v8411 = vmul.f32 %v8288, %v8347
  %v8412 = vmul.f32 %v8290, %v8348
  %v8413 = vmul.f32 %v8292, %v8349
  %v8414 = vmul.f32 %v8294, %v8350
  %v8415 = vadd.f32 %v8399, %v8407
  %v8416 = vadd.f32 %v8400, %v8408
  %v8417 = vadd.f32 %v8401, %v8409
  %v8418 = vadd.f32 %v8402, %v8410
  %v8419 = vadd.f32 %v8403, %v8411
  %v8420 = vadd.f32 %v8404, %v8412
  %v8421 = vadd.f32 %v8405, %v8413
  %v8422 = vadd.f32 %v8406, %v8414
  %v8423 = vtanh.pop %v8415
  %v8424 = vtanh.pop %v8416
  %v8425 = vtanh.pop %v8417
  %v8426 = vtanh.pop %v8418
  %v8427 = vtanh.pop %v8419
  %v8428 = vtanh.pop %v8420
  %v8429 = vtanh.pop %v8421
  %v8430 = vtanh.pop %v8422
  %v8431 = vmul.f32 %v8384, %v8423
  %v8432 = vmul.f32 %v8386, %v8424
  %v8433 = vmul.f32 %v8388, %v8425
  %v8434 = vmul.f32 %v8390, %v8426
  %v8435 = vmul.f32 %v8392, %v8427
  %v8436 = vmul.f32 %v8394, %v8428
  %v8437 = vmul.f32 %v8396, %v8429
  %v8438 = vmul.f32 %v8398, %v8430
  %v8439 = vpack.c.bf16 %v8432, %v8431
  %v8440 = vpack.c.bf16 %v8434, %v8433
  %v8441 = vpack.c.bf16 %v8436, %v8435
  %v8442 = vpack.c.bf16 %v8438, %v8437
  %v8443 = vld [vmem:[#allocation2 + $0x600] sm:$0xff]
  %v8444 = vld [vmem:[#allocation2 + $0x608] sm:$0xff]
  %v8445 = vld [vmem:[#allocation2 + $0x610] sm:$0xff]
  %v8446 = vld [vmem:[#allocation2 + $0x618] sm:$0xff]
  %v8447 = vld [vmem:[#allocation2 + $0x620] sm:$0xff]
  %v8448 = vld [vmem:[#allocation2 + $0x628] sm:$0xff]
  %v8449 = vld [vmem:[#allocation2 + $0x630] sm:$0xff]
  %v8450 = vld [vmem:[#allocation2 + $0x638] sm:$0xff]
  %v8451 = vld [vmem:[#allocation2 + $0x640] sm:$0xff]
  %v8452 = vld [vmem:[#allocation2 + $0x648] sm:$0xff]
  %v8453 = vld [vmem:[#allocation2 + $0x650] sm:$0xff]
  %v8454 = vld [vmem:[#allocation2 + $0x658] sm:$0xff]
  %v8455 = vld [vmem:[#allocation2 + $0x660] sm:$0xff]
  %v8456 = vld [vmem:[#allocation2 + $0x668] sm:$0xff]
  %v8457 = vld [vmem:[#allocation2 + $0x670] sm:$0xff]
  %v8458 = vld [vmem:[#allocation2 + $0x678] sm:$0xff]
  %v8459 = vld [vmem:[#allocation2 + $0x680] sm:$0xff]
  %v8460 = vld [vmem:[#allocation2 + $0x688] sm:$0xff]
  %v8461 = vld [vmem:[#allocation2 + $0x690] sm:$0xff]
  %v8462 = vld [vmem:[#allocation2 + $0x698] sm:$0xff]
  %v8463 = vld [vmem:[#allocation2 + $0x6a0] sm:$0xff]
  %v8464 = vld [vmem:[#allocation2 + $0x6a8] sm:$0xff]
  %v8465 = vld [vmem:[#allocation2 + $0x6b0] sm:$0xff]
  %v8466 = vld [vmem:[#allocation2 + $0x6b8] sm:$0xff]
  %v8467 = vld [vmem:[#allocation2 + $0x6c0] sm:$0xff]
  %v8468 = vld [vmem:[#allocation2 + $0x6c8] sm:$0xff]
  %v8469 = vld [vmem:[#allocation2 + $0x6d0] sm:$0xff]
  %v8470 = vld [vmem:[#allocation2 + $0x6d8] sm:$0xff]
  %v8471 = vld [vmem:[#allocation2 + $0x6e0] sm:$0xff]
  %v8472 = vld [vmem:[#allocation2 + $0x6e8] sm:$0xff]
  %v8473 = vld [vmem:[#allocation2 + $0x6f0] sm:$0xff]
  %v8474 = vld [vmem:[#allocation2 + $0x6f8] sm:$0xff]
  %v8475 = vadd.f32 %v8104, %v8443
  %v8476 = vadd.f32 %v8106, %v8444
  %v8477 = vadd.f32 %v8177, %v8445
  %v8478 = vadd.f32 %v8179, %v8446
  %v8479 = vadd.f32 %v8108, %v8447
  %v8480 = vadd.f32 %v8110, %v8448
  %v8481 = vadd.f32 %v8181, %v8449
  %v8482 = vadd.f32 %v8183, %v8450
  %v8483 = vadd.f32 %v8114, %v8451
  %v8484 = vadd.f32 %v8116, %v8452
  %v8485 = vadd.f32 %v8187, %v8453
  %v8486 = vadd.f32 %v8189, %v8454
  %v8487 = vadd.f32 %v8118, %v8455
  %v8488 = vadd.f32 %v8120, %v8456
  %v8489 = vadd.f32 %v8191, %v8457
  %v8490 = vadd.f32 %v8193, %v8458
  %v8491 = vadd.f32 %v8124, %v8459
  %v8492 = vadd.f32 %v8126, %v8460
  %v8493 = vadd.f32 %v8197, %v8461
  %v8494 = vadd.f32 %v8199, %v8462
  %v8495 = vadd.f32 %v8128, %v8463
  %v8496 = vadd.f32 %v8130, %v8464
  %v8497 = vadd.f32 %v8201, %v8465
  %v8498 = vadd.f32 %v8203, %v8466
  %v8499 = vadd.f32 %v8134, %v8467
  %v8500 = vadd.f32 %v8136, %v8468
  %v8501 = vadd.f32 %v8207, %v8469
  %v8502 = vadd.f32 %v8209, %v8470
  %v8503 = vadd.f32 %v8138, %v8471
  %v8504 = vadd.f32 %v8140, %v8472
  %v8505 = vadd.f32 %v8211, %v8473
  %v8506 = vadd.f32 %v8213, %v8474
  %v8507 = vxor.u32 %v8475, 2147483648
  %v8508 = vxor.u32 %v8479, 2147483648
  %v8509 = vxor.u32 %v8483, 2147483648
  %v8510 = vxor.u32 %v8487, 2147483648
  %v8511 = vxor.u32 %v8491, 2147483648
  %v8512 = vxor.u32 %v8495, 2147483648
  %v8513 = vxor.u32 %v8499, 2147483648
  %v8514 = vxor.u32 %v8503, 2147483648
  %v8515 = vmul.f32 %v8507, 1.442695
  %v8516 = vpow.pop %v8515
  %v8517 = vmul.f32 %v8508, 1.442695
  %v8518 = vpow.pop %v8517
  %v8519 = vmul.f32 %v8509, 1.442695
  %v8520 = vpow.pop %v8519
  %v8521 = vmul.f32 %v8510, 1.442695
  %v8522 = vpow.pop %v8521
  %v8523 = vmul.f32 %v8511, 1.442695
  %v8524 = vpow.pop %v8523
  %v8525 = vmul.f32 %v8512, 1.442695
  %v8526 = vpow.pop %v8525
  %v8527 = vmul.f32 %v8513, 1.442695
  %v8528 = vpow.pop %v8527
  %v8529 = vmul.f32 %v8514, 1.442695
  %v8530 = vpow.pop %v8529
  %v8531 = vadd.f32 %v8516, 1.0
  %v8532 = vadd.f32 %v8518, 1.0
  %v8533 = vadd.f32 %v8520, 1.0
  %v8534 = vadd.f32 %v8522, 1.0
  %v8535 = vadd.f32 %v8524, 1.0
  %v8536 = vadd.f32 %v8526, 1.0
  %v8537 = vadd.f32 %v8528, 1.0
  %v8538 = vadd.f32 %v8530, 1.0
  %v8539 = vrcp.pop %v8531
  %v8540 = vmul.f32 1.0, %v8539
  %v8541 = vrcp.pop %v8532
  %v8542 = vmul.f32 1.0, %v8541
  %v8543 = vrcp.pop %v8533
  %v8544 = vmul.f32 1.0, %v8543
  %v8545 = vrcp.pop %v8534
  %v8546 = vmul.f32 1.0, %v8545
  %v8547 = vrcp.pop %v8535
  %v8548 = vmul.f32 1.0, %v8547
  %v8549 = vrcp.pop %v8536
  %v8550 = vmul.f32 1.0, %v8549
  %v8551 = vrcp.pop %v8537
  %v8552 = vmul.f32 1.0, %v8551
  %v8553 = vrcp.pop %v8538
  %v8554 = vmul.f32 1.0, %v8553
  %v8555 = vxor.u32 %v8476, 2147483648
  %v8556 = vxor.u32 %v8480, 2147483648
  %v8557 = vxor.u32 %v8484, 2147483648
  %v8558 = vxor.u32 %v8488, 2147483648
  %v8559 = vxor.u32 %v8492, 2147483648
  %v8560 = vxor.u32 %v8496, 2147483648
  %v8561 = vxor.u32 %v8500, 2147483648
  %v8562 = vxor.u32 %v8504, 2147483648
  %v8563 = vmul.f32 %v8555, 1.442695
  %v8564 = vpow.pop %v8563
  %v8565 = vmul.f32 %v8556, 1.442695
  %v8566 = vpow.pop %v8565
  %v8567 = vmul.f32 %v8557, 1.442695
  %v8568 = vpow.pop %v8567
  %v8569 = vmul.f32 %v8558, 1.442695
  %v8570 = vpow.pop %v8569
  %v8571 = vmul.f32 %v8559, 1.442695
  %v8572 = vpow.pop %v8571
  %v8573 = vmul.f32 %v8560, 1.442695
  %v8574 = vpow.pop %v8573
  %v8575 = vmul.f32 %v8561, 1.442695
  %v8576 = vpow.pop %v8575
  %v8577 = vmul.f32 %v8562, 1.442695
  %v8578 = vpow.pop %v8577
  %v8579 = vadd.f32 %v8564, 1.0
  %v8580 = vadd.f32 %v8566, 1.0
  %v8581 = vadd.f32 %v8568, 1.0
  %v8582 = vadd.f32 %v8570, 1.0
  %v8583 = vadd.f32 %v8572, 1.0
  %v8584 = vadd.f32 %v8574, 1.0
  %v8585 = vadd.f32 %v8576, 1.0
  %v8586 = vadd.f32 %v8578, 1.0
  %v8587 = vrcp.pop %v8579
  %v8588 = vmul.f32 1.0, %v8587
  %v8589 = vrcp.pop %v8580
  %v8590 = vmul.f32 1.0, %v8589
  %v8591 = vrcp.pop %v8581
  %v8592 = vmul.f32 1.0, %v8591
  %v8593 = vrcp.pop %v8582
  %v8594 = vmul.f32 1.0, %v8593
  %v8595 = vrcp.pop %v8583
  %v8596 = vmul.f32 1.0, %v8595
  %v8597 = vrcp.pop %v8584
  %v8598 = vmul.f32 1.0, %v8597
  %v8599 = vrcp.pop %v8585
  %v8600 = vmul.f32 1.0, %v8599
  %v8601 = vrcp.pop %v8586
  %v8602 = vmul.f32 1.0, %v8601
  %v8603 = vtanh.pop %v8477
  %v8604 = vtanh.pop %v8481
  %v8605 = vtanh.pop %v8485
  %v8606 = vtanh.pop %v8489
  %v8607 = vtanh.pop %v8493
  %v8608 = vtanh.pop %v8497
  %v8609 = vtanh.pop %v8501
  %v8610 = vtanh.pop %v8505
  %v8611 = vxor.u32 %v8478, 2147483648
  %v8612 = vxor.u32 %v8482, 2147483648
  %v8613 = vxor.u32 %v8486, 2147483648
  %v8614 = vxor.u32 %v8490, 2147483648
  %v8615 = vxor.u32 %v8494, 2147483648
  %v8616 = vxor.u32 %v8498, 2147483648
  %v8617 = vxor.u32 %v8502, 2147483648
  %v8618 = vxor.u32 %v8506, 2147483648
  %v8619 = vmul.f32 %v8611, 1.442695
  %v8620 = vpow.pop %v8619
  %v8621 = vmul.f32 %v8612, 1.442695
  %v8622 = vpow.pop %v8621
  %v8623 = vmul.f32 %v8613, 1.442695
  %v8624 = vpow.pop %v8623
  %v8625 = vmul.f32 %v8614, 1.442695
  %v8626 = vpow.pop %v8625
  %v8627 = vmul.f32 %v8615, 1.442695
  %v8628 = vpow.pop %v8627
  %v8629 = vmul.f32 %v8616, 1.442695
  %v8630 = vpow.pop %v8629
  %v8631 = vmul.f32 %v8617, 1.442695
  %v8632 = vpow.pop %v8631
  %v8633 = vmul.f32 %v8618, 1.442695
  %v8634 = vpow.pop %v8633
  %v8635 = vadd.f32 %v8620, 1.0
  %v8636 = vadd.f32 %v8622, 1.0
  %v8637 = vadd.f32 %v8624, 1.0
  %v8638 = vadd.f32 %v8626, 1.0
  %v8639 = vadd.f32 %v8628, 1.0
  %v8640 = vadd.f32 %v8630, 1.0
  %v8641 = vadd.f32 %v8632, 1.0
  %v8642 = vadd.f32 %v8634, 1.0
  %v8643 = vrcp.pop %v8635
  %v8644 = vmul.f32 1.0, %v8643
  %v8645 = vrcp.pop %v8636
  %v8646 = vmul.f32 1.0, %v8645
  %v8647 = vrcp.pop %v8637
  %v8648 = vmul.f32 1.0, %v8647
  %v8649 = vrcp.pop %v8638
  %v8650 = vmul.f32 1.0, %v8649
  %v8651 = vrcp.pop %v8639
  %v8652 = vmul.f32 1.0, %v8651
  %v8653 = vrcp.pop %v8640
  %v8654 = vmul.f32 1.0, %v8653
  %v8655 = vrcp.pop %v8641
  %v8656 = vmul.f32 1.0, %v8655
  %v8657 = vrcp.pop %v8642
  %v8658 = vmul.f32 1.0, %v8657
  %v8659 = vmul.f32 %v8588, %v7895
  %v8660 = vmul.f32 %v8590, %v7896
  %v8661 = vmul.f32 %v8592, %v7897
  %v8662 = vmul.f32 %v8594, %v7898
  %v8663 = vmul.f32 %v8596, %v7899
  %v8664 = vmul.f32 %v8598, %v7900
  %v8665 = vmul.f32 %v8600, %v7901
  %v8666 = vmul.f32 %v8602, %v7902
  %v8667 = vmul.f32 %v8540, %v8603
  %v8668 = vmul.f32 %v8542, %v8604
  %v8669 = vmul.f32 %v8544, %v8605
  %v8670 = vmul.f32 %v8546, %v8606
  %v8671 = vmul.f32 %v8548, %v8607
  %v8672 = vmul.f32 %v8550, %v8608
  %v8673 = vmul.f32 %v8552, %v8609
  %v8674 = vmul.f32 %v8554, %v8610
  %v8675 = vadd.f32 %v8659, %v8667
  %v8676 = vadd.f32 %v8660, %v8668
  %v8677 = vadd.f32 %v8661, %v8669
  %v8678 = vadd.f32 %v8662, %v8670
  %v8679 = vadd.f32 %v8663, %v8671
  %v8680 = vadd.f32 %v8664, %v8672
  %v8681 = vadd.f32 %v8665, %v8673
  %v8682 = vadd.f32 %v8666, %v8674
  %v8683 = vtanh.pop %v8675
  %v8684 = vtanh.pop %v8676
  %v8685 = vtanh.pop %v8677
  %v8686 = vtanh.pop %v8678
  %v8687 = vtanh.pop %v8679
  %v8688 = vtanh.pop %v8680
  %v8689 = vtanh.pop %v8681
  %v8690 = vtanh.pop %v8682
  %v8691 = vmul.f32 %v8644, %v8683
  %v8692 = vmul.f32 %v8646, %v8684
  %v8693 = vmul.f32 %v8648, %v8685
  %v8694 = vmul.f32 %v8650, %v8686
  %v8695 = vmul.f32 %v8652, %v8687
  %v8696 = vmul.f32 %v8654, %v8688
  %v8697 = vmul.f32 %v8656, %v8689
  %v8698 = vmul.f32 %v8658, %v8690
  %v8699 = vpack.c.bf16 %v8692, %v8691
  %v8700 = vpack.c.bf16 %v8694, %v8693
  %v8701 = vpack.c.bf16 %v8696, %v8695
  %v8702 = vpack.c.bf16 %v8698, %v8697
  %8703 = vmatprep.subr.bf16.mxu0 %v3824
  %8704 = vmatpush1.bf16.msra.mxu0 %v3823
  %8705 = vmatprep.subr.bf16.mxu0 %v3816
  %8706 = vmatpush1.bf16.msra.mxu0 %v3815
  %8707 = vmatprep.subr.bf16.mxu0 %v3808
  %8708 = vmatpush1.bf16.msra.mxu0 %v3807
  %8709 = vmatprep.subr.bf16.mxu0 %v3800
  %8710 = vmatpush1.bf16.msra.mxu0 %v3799
  %8711 = vmatprep.subr.bf16.mxu0 %v3792
  %8712 = vmatpush1.bf16.msra.mxu0 %v3791
  %8713 = vmatprep.subr.bf16.mxu0 %v3784
  %8714 = vmatpush1.bf16.msra.mxu0 %v3783
  %8715 = vmatprep.subr.bf16.mxu0 %v3776
  %8716 = vmatpush1.bf16.msra.mxu0 %v3775
  %8717 = vmatprep.subr.bf16.mxu0 %v3768
  %8718 = vmatpush1.bf16.msra.mxu0 %v3767
  %8719 = vmatprep.subr.bf16.mxu0 %v3888
  %8720 = vmatpush2.bf16.msra.mxu0 %v3887
  %8721 = vmatprep.subr.bf16.mxu0 %v3880
  %8722 = vmatpush2.bf16.msra.mxu0 %v3879
  %8723 = vmatprep.subr.bf16.mxu0 %v3872
  %8724 = vmatpush2.bf16.msra.mxu0 %v3871
  %8725 = vmatprep.subr.bf16.mxu0 %v3864
  %8726 = vmatpush2.bf16.msra.mxu0 %v3863
  %8727 = vmatprep.subr.bf16.mxu0 %v3856
  %8728 = vmatpush2.bf16.msra.mxu0 %v3855
  %8729 = vmatprep.subr.bf16.mxu0 %v3848
  %8730 = vmatpush2.bf16.msra.mxu0 %v3847
  %8731 = vmatprep.subr.bf16.mxu0 %v3840
  %8732 = vmatpush2.bf16.msra.mxu0 %v3839
  %8733 = vmatprep.subr.bf16.mxu0 %v3832
  %8734 = vmatpush2.bf16.msra.mxu0 %v3831
  %8735 = vmatprep.mubr.bf16.mxu0 %v8439
  %8736 = vmatmul.mubr.bf16.gmra.mxu0 %v8699
  %v8737 = vpop.f32.mrf.mxu0
  %v8738 = vadd.f32 0.0, %v8737
  %v8739 = vpop.f32.mrf.mxu0
  %v8740 = vadd.f32 0.0, %v8739
  %v8741 = vpop.f32.mrf.mxu0
  %v8742 = vadd.f32 0.0, %v8741
  %v8743 = vpop.f32.mrf.mxu0
  %v8744 = vadd.f32 0.0, %v8743
  %8745 = vmatprep.mubr.bf16.mxu0 %v8440
  %8746 = vmatmul.mubr.bf16.gmra.mxu0 %v8700
  %v8747 = vpop.f32.mrf.mxu0
  %v8748 = vadd.f32 0.0, %v8747
  %v8749 = vpop.f32.mrf.mxu0
  %v8750 = vadd.f32 0.0, %v8749
  %v8751 = vpop.f32.mrf.mxu0
  %v8752 = vadd.f32 0.0, %v8751
  %v8753 = vpop.f32.mrf.mxu0
  %v8754 = vadd.f32 0.0, %v8753
  %8755 = vmatprep.mubr.bf16.mxu0 %v8441
  %8756 = vmatmul.mubr.bf16.gmra.mxu0 %v8701
  %v8757 = vpop.f32.mrf.mxu0
  %v8758 = vadd.f32 0.0, %v8757
  %v8759 = vpop.f32.mrf.mxu0
  %v8760 = vadd.f32 0.0, %v8759
  %v8761 = vpop.f32.mrf.mxu0
  %v8762 = vadd.f32 0.0, %v8761
  %v8763 = vpop.f32.mrf.mxu0
  %v8764 = vadd.f32 0.0, %v8763
  %8765 = vmatprep.mubr.bf16.mxu0 %v8442
  %8766 = vmatmul.mubr.bf16.gmra.mxu0 %v8702
  %v8767 = vpop.f32.mrf.mxu0
  %v8768 = vadd.f32 0.0, %v8767
  %v8769 = vpop.f32.mrf.mxu0
  %v8770 = vadd.f32 0.0, %v8769
  %v8771 = vpop.f32.mrf.mxu0
  %v8772 = vadd.f32 0.0, %v8771
  %v8773 = vpop.f32.mrf.mxu0
  %v8774 = vadd.f32 0.0, %v8773
  %8775 = vdwg.mxu0
  %8776 = vmatprep.subr.bf16.mxu0 %v3826
  %8777 = vmatpush1.bf16.msra.mxu0 %v3825
  %8778 = vmatprep.subr.bf16.mxu0 %v3818
  %8779 = vmatpush1.bf16.msra.mxu0 %v3817
  %8780 = vmatprep.subr.bf16.mxu0 %v3810
  %8781 = vmatpush1.bf16.msra.mxu0 %v3809
  %8782 = vmatprep.subr.bf16.mxu0 %v3802
  %8783 = vmatpush1.bf16.msra.mxu0 %v3801
  %8784 = vmatprep.subr.bf16.mxu0 %v3794
  %8785 = vmatpush1.bf16.msra.mxu0 %v3793
  %8786 = vmatprep.subr.bf16.mxu0 %v3786
  %8787 = vmatpush1.bf16.msra.mxu0 %v3785
  %8788 = vmatprep.subr.bf16.mxu0 %v3778
  %8789 = vmatpush1.bf16.msra.mxu0 %v3777
  %8790 = vmatprep.subr.bf16.mxu0 %v3770
  %8791 = vmatpush1.bf16.msra.mxu0 %v3769
  %8792 = vmatprep.subr.bf16.mxu0 %v3890
  %8793 = vmatpush2.bf16.msra.mxu0 %v3889
  %8794 = vmatprep.subr.bf16.mxu0 %v3882
  %8795 = vmatpush2.bf16.msra.mxu0 %v3881
  %8796 = vmatprep.subr.bf16.mxu0 %v3874
  %8797 = vmatpush2.bf16.msra.mxu0 %v3873
  %8798 = vmatprep.subr.bf16.mxu0 %v3866
  %8799 = vmatpush2.bf16.msra.mxu0 %v3865
  %8800 = vmatprep.subr.bf16.mxu0 %v3858
  %8801 = vmatpush2.bf16.msra.mxu0 %v3857
  %8802 = vmatprep.subr.bf16.mxu0 %v3850
  %8803 = vmatpush2.bf16.msra.mxu0 %v3849
  %8804 = vmatprep.subr.bf16.mxu0 %v3842
  %8805 = vmatpush2.bf16.msra.mxu0 %v3841
  %8806 = vmatprep.subr.bf16.mxu0 %v3834
  %8807 = vmatpush2.bf16.msra.mxu0 %v3833
  %8808 = vmatprep.mubr.bf16.mxu0 %v8439
  %8809 = vmatmul.mubr.bf16.gmra.mxu0 %v8699
  %v8810 = vpop.f32.mrf.mxu0
  %v8811 = vadd.f32 0.0, %v8810
  %v8812 = vpop.f32.mrf.mxu0
  %v8813 = vadd.f32 0.0, %v8812
  %v8814 = vpop.f32.mrf.mxu0
  %v8815 = vadd.f32 0.0, %v8814
  %v8816 = vpop.f32.mrf.mxu0
  %v8817 = vadd.f32 0.0, %v8816
  %8818 = vmatprep.mubr.bf16.mxu0 %v8440
  %8819 = vmatmul.mubr.bf16.gmra.mxu0 %v8700
  %v8820 = vpop.f32.mrf.mxu0
  %v8821 = vadd.f32 0.0, %v8820
  %v8822 = vpop.f32.mrf.mxu0
  %v8823 = vadd.f32 0.0, %v8822
  %v8824 = vpop.f32.mrf.mxu0
  %v8825 = vadd.f32 0.0, %v8824
  %v8826 = vpop.f32.mrf.mxu0
  %v8827 = vadd.f32 0.0, %v8826
  %8828 = vmatprep.mubr.bf16.mxu0 %v8441
  %8829 = vmatmul.mubr.bf16.gmra.mxu0 %v8701
  %v8830 = vpop.f32.mrf.mxu0
  %v8831 = vadd.f32 0.0, %v8830
  %v8832 = vpop.f32.mrf.mxu0
  %v8833 = vadd.f32 0.0, %v8832
  %v8834 = vpop.f32.mrf.mxu0
  %v8835 = vadd.f32 0.0, %v8834
  %v8836 = vpop.f32.mrf.mxu0
  %v8837 = vadd.f32 0.0, %v8836
  %8838 = vmatprep.mubr.bf16.mxu0 %v8442
  %8839 = vmatmul.mubr.bf16.gmra.mxu0 %v8702
  %v8840 = vpop.f32.mrf.mxu0
  %v8841 = vadd.f32 0.0, %v8840
  %v8842 = vpop.f32.mrf.mxu0
  %v8843 = vadd.f32 0.0, %v8842
  %v8844 = vpop.f32.mrf.mxu0
  %v8845 = vadd.f32 0.0, %v8844
  %v8846 = vpop.f32.mrf.mxu0
  %v8847 = vadd.f32 0.0, %v8846
  %8848 = vdwg.mxu0
  %8849 = vmatprep.subr.bf16.mxu0 %v3828
  %8850 = vmatpush1.bf16.msra.mxu0 %v3827
  %8851 = vmatprep.subr.bf16.mxu0 %v3820
  %8852 = vmatpush1.bf16.msra.mxu0 %v3819
  %8853 = vmatprep.subr.bf16.mxu0 %v3812
  %8854 = vmatpush1.bf16.msra.mxu0 %v3811
  %8855 = vmatprep.subr.bf16.mxu0 %v3804
  %8856 = vmatpush1.bf16.msra.mxu0 %v3803
  %8857 = vmatprep.subr.bf16.mxu0 %v3796
  %8858 = vmatpush1.bf16.msra.mxu0 %v3795
  %8859 = vmatprep.subr.bf16.mxu0 %v3788
  %8860 = vmatpush1.bf16.msra.mxu0 %v3787
  %8861 = vmatprep.subr.bf16.mxu0 %v3780
  %8862 = vmatpush1.bf16.msra.mxu0 %v3779
  %8863 = vmatprep.subr.bf16.mxu0 %v3772
  %8864 = vmatpush1.bf16.msra.mxu0 %v3771
  %8865 = vmatprep.subr.bf16.mxu0 %v3892
  %8866 = vmatpush2.bf16.msra.mxu0 %v3891
  %8867 = vmatprep.subr.bf16.mxu0 %v3884
  %8868 = vmatpush2.bf16.msra.mxu0 %v3883
  %8869 = vmatprep.subr.bf16.mxu0 %v3876
  %8870 = vmatpush2.bf16.msra.mxu0 %v3875
  %8871 = vmatprep.subr.bf16.mxu0 %v3868
  %8872 = vmatpush2.bf16.msra.mxu0 %v3867
  %8873 = vmatprep.subr.bf16.mxu0 %v3860
  %8874 = vmatpush2.bf16.msra.mxu0 %v3859
  %8875 = vmatprep.subr.bf16.mxu0 %v3852
  %8876 = vmatpush2.bf16.msra.mxu0 %v3851
  %8877 = vmatprep.subr.bf16.mxu0 %v3844
  %8878 = vmatpush2.bf16.msra.mxu0 %v3843
  %8879 = vmatprep.subr.bf16.mxu0 %v3836
  %8880 = vmatpush2.bf16.msra.mxu0 %v3835
  %8881 = vmatprep.mubr.bf16.mxu0 %v8439
  %8882 = vmatmul.mubr.bf16.gmra.mxu0 %v8699
  %v8883 = vpop.f32.mrf.mxu0
  %v8884 = vadd.f32 0.0, %v8883
  %v8885 = vpop.f32.mrf.mxu0
  %v8886 = vadd.f32 0.0, %v8885
  %v8887 = vpop.f32.mrf.mxu0
  %v8888 = vadd.f32 0.0, %v8887
  %v8889 = vpop.f32.mrf.mxu0
  %v8890 = vadd.f32 0.0, %v8889
  %8891 = vmatprep.mubr.bf16.mxu0 %v8440
  %8892 = vmatmul.mubr.bf16.gmra.mxu0 %v8700
  %v8893 = vpop.f32.mrf.mxu0
  %v8894 = vadd.f32 0.0, %v8893
  %v8895 = vpop.f32.mrf.mxu0
  %v8896 = vadd.f32 0.0, %v8895
  %v8897 = vpop.f32.mrf.mxu0
  %v8898 = vadd.f32 0.0, %v8897
  %v8899 = vpop.f32.mrf.mxu0
  %v8900 = vadd.f32 0.0, %v8899
  %8901 = vmatprep.mubr.bf16.mxu0 %v8441
  %8902 = vmatmul.mubr.bf16.gmra.mxu0 %v8701
  %v8903 = vpop.f32.mrf.mxu0
  %v8904 = vadd.f32 0.0, %v8903
  %v8905 = vpop.f32.mrf.mxu0
  %v8906 = vadd.f32 0.0, %v8905
  %v8907 = vpop.f32.mrf.mxu0
  %v8908 = vadd.f32 0.0, %v8907
  %v8909 = vpop.f32.mrf.mxu0
  %v8910 = vadd.f32 0.0, %v8909
  %8911 = vmatprep.mubr.bf16.mxu0 %v8442
  %8912 = vmatmul.mubr.bf16.gmra.mxu0 %v8702
  %v8913 = vpop.f32.mrf.mxu0
  %v8914 = vadd.f32 0.0, %v8913
  %v8915 = vpop.f32.mrf.mxu0
  %v8916 = vadd.f32 0.0, %v8915
  %v8917 = vpop.f32.mrf.mxu0
  %v8918 = vadd.f32 0.0, %v8917
  %v8919 = vpop.f32.mrf.mxu0
  %v8920 = vadd.f32 0.0, %v8919
  %8921 = vdwg.mxu0
  %8922 = vmatprep.subr.bf16.mxu0 %v3830
  %8923 = vmatpush1.bf16.msra.mxu0 %v3829
  %8924 = vmatprep.subr.bf16.mxu0 %v3822
  %8925 = vmatpush1.bf16.msra.mxu0 %v3821
  %8926 = vmatprep.subr.bf16.mxu0 %v3814
  %8927 = vmatpush1.bf16.msra.mxu0 %v3813
  %8928 = vmatprep.subr.bf16.mxu0 %v3806
  %8929 = vmatpush1.bf16.msra.mxu0 %v3805
  %8930 = vmatprep.subr.bf16.mxu0 %v3798
  %8931 = vmatpush1.bf16.msra.mxu0 %v3797
  %8932 = vmatprep.subr.bf16.mxu0 %v3790
  %8933 = vmatpush1.bf16.msra.mxu0 %v3789
  %8934 = vmatprep.subr.bf16.mxu0 %v3782
  %8935 = vmatpush1.bf16.msra.mxu0 %v3781
  %8936 = vmatprep.subr.bf16.mxu0 %v3774
  %8937 = vmatpush1.bf16.msra.mxu0 %v3773
  %8938 = vmatprep.subr.bf16.mxu0 %v3894
  %8939 = vmatpush2.bf16.msra.mxu0 %v3893
  %8940 = vmatprep.subr.bf16.mxu0 %v3886
  %8941 = vmatpush2.bf16.msra.mxu0 %v3885
  %8942 = vmatprep.subr.bf16.mxu0 %v3878
  %8943 = vmatpush2.bf16.msra.mxu0 %v3877
  %8944 = vmatprep.subr.bf16.mxu0 %v3870
  %8945 = vmatpush2.bf16.msra.mxu0 %v3869
  %8946 = vmatprep.subr.bf16.mxu0 %v3862
  %8947 = vmatpush2.bf16.msra.mxu0 %v3861
  %8948 = vmatprep.subr.bf16.mxu0 %v3854
  %8949 = vmatpush2.bf16.msra.mxu0 %v3853
  %8950 = vmatprep.subr.bf16.mxu0 %v3846
  %8951 = vmatpush2.bf16.msra.mxu0 %v3845
  %8952 = vmatprep.subr.bf16.mxu0 %v3838
  %8953 = vmatpush2.bf16.msra.mxu0 %v3837
  %8954 = vmatprep.mubr.bf16.mxu0 %v8439
  %8955 = vmatmul.mubr.bf16.gmra.mxu0 %v8699
  %v8956 = vpop.f32.mrf.mxu0
  %v8957 = vadd.f32 0.0, %v8956
  %v8958 = vpop.f32.mrf.mxu0
  %v8959 = vadd.f32 0.0, %v8958
  %v8960 = vpop.f32.mrf.mxu0
  %v8961 = vadd.f32 0.0, %v8960
  %v8962 = vpop.f32.mrf.mxu0
  %v8963 = vadd.f32 0.0, %v8962
  %8964 = vmatprep.mubr.bf16.mxu0 %v8440
  %8965 = vmatmul.mubr.bf16.gmra.mxu0 %v8700
  %v8966 = vpop.f32.mrf.mxu0
  %v8967 = vadd.f32 0.0, %v8966
  %v8968 = vpop.f32.mrf.mxu0
  %v8969 = vadd.f32 0.0, %v8968
  %v8970 = vpop.f32.mrf.mxu0
  %v8971 = vadd.f32 0.0, %v8970
  %v8972 = vpop.f32.mrf.mxu0
  %v8973 = vadd.f32 0.0, %v8972
  %8974 = vmatprep.mubr.bf16.mxu0 %v8441
  %8975 = vmatmul.mubr.bf16.gmra.mxu0 %v8701
  %v8976 = vpop.f32.mrf.mxu0
  %v8977 = vadd.f32 0.0, %v8976
  %v8978 = vpop.f32.mrf.mxu0
  %v8979 = vadd.f32 0.0, %v8978
  %v8980 = vpop.f32.mrf.mxu0
  %v8981 = vadd.f32 0.0, %v8980
  %v8982 = vpop.f32.mrf.mxu0
  %v8983 = vadd.f32 0.0, %v8982
  %8984 = vmatprep.mubr.bf16.mxu0 %v8442
  %8985 = vmatmul.mubr.bf16.gmra.mxu0 %v8702
  %v8986 = vpop.f32.mrf.mxu0
  %v8987 = vadd.f32 0.0, %v8986
  %v8988 = vpop.f32.mrf.mxu0
  %v8989 = vadd.f32 0.0, %v8988
  %v8990 = vpop.f32.mrf.mxu0
  %v8991 = vadd.f32 0.0, %v8990
  %v8992 = vpop.f32.mrf.mxu0
  %v8993 = vadd.f32 0.0, %v8992
  %8994 = vdwg.mxu0
  %v8995 = vadd.f32 %v8738, %v3106
  %v8996 = vadd.f32 %v8740, %v3110
  %v8997 = vadd.f32 %v8811, %v3114
  %v8998 = vadd.f32 %v8813, %v3118
  %v8999 = vadd.f32 %v8742, %v3106
  %v9000 = vadd.f32 %v8744, %v3110
  %v9001 = vadd.f32 %v8815, %v3114
  %v9002 = vadd.f32 %v8817, %v3118
  %v9003 = vadd.f32 %v8748, %v3106
  %v9004 = vadd.f32 %v8750, %v3110
  %v9005 = vadd.f32 %v8821, %v3114
  %v9006 = vadd.f32 %v8823, %v3118
  %v9007 = vadd.f32 %v8752, %v3106
  %v9008 = vadd.f32 %v8754, %v3110
  %v9009 = vadd.f32 %v8825, %v3114
  %v9010 = vadd.f32 %v8827, %v3118
  %v9011 = vadd.f32 %v8758, %v3106
  %v9012 = vadd.f32 %v8760, %v3110
  %v9013 = vadd.f32 %v8831, %v3114
  %v9014 = vadd.f32 %v8833, %v3118
  %v9015 = vadd.f32 %v8762, %v3106
  %v9016 = vadd.f32 %v8764, %v3110
  %v9017 = vadd.f32 %v8835, %v3114
  %v9018 = vadd.f32 %v8837, %v3118
  %v9019 = vadd.f32 %v8768, %v3106
  %v9020 = vadd.f32 %v8770, %v3110
  %v9021 = vadd.f32 %v8841, %v3114
  %v9022 = vadd.f32 %v8843, %v3118
  %v9023 = vadd.f32 %v8772, %v3106
  %v9024 = vadd.f32 %v8774, %v3110
  %v9025 = vadd.f32 %v8845, %v3114
  %v9026 = vadd.f32 %v8847, %v3118
  %v9027 = vxor.u32 %v8995, 2147483648
  %v9028 = vxor.u32 %v8999, 2147483648
  %v9029 = vxor.u32 %v9003, 2147483648
  %v9030 = vxor.u32 %v9007, 2147483648
  %v9031 = vxor.u32 %v9011, 2147483648
  %v9032 = vxor.u32 %v9015, 2147483648
  %v9033 = vxor.u32 %v9019, 2147483648
  %v9034 = vxor.u32 %v9023, 2147483648
  %v9035 = vmul.f32 %v9027, 1.442695
  %v9036 = vpow.pop %v9035
  %v9037 = vmul.f32 %v9028, 1.442695
  %v9038 = vpow.pop %v9037
  %v9039 = vmul.f32 %v9029, 1.442695
  %v9040 = vpow.pop %v9039
  %v9041 = vmul.f32 %v9030, 1.442695
  %v9042 = vpow.pop %v9041
  %v9043 = vmul.f32 %v9031, 1.442695
  %v9044 = vpow.pop %v9043
  %v9045 = vmul.f32 %v9032, 1.442695
  %v9046 = vpow.pop %v9045
  %v9047 = vmul.f32 %v9033, 1.442695
  %v9048 = vpow.pop %v9047
  %v9049 = vmul.f32 %v9034, 1.442695
  %v9050 = vpow.pop %v9049
  %v9051 = vadd.f32 %v9036, 1.0
  %v9052 = vadd.f32 %v9038, 1.0
  %v9053 = vadd.f32 %v9040, 1.0
  %v9054 = vadd.f32 %v9042, 1.0
  %v9055 = vadd.f32 %v9044, 1.0
  %v9056 = vadd.f32 %v9046, 1.0
  %v9057 = vadd.f32 %v9048, 1.0
  %v9058 = vadd.f32 %v9050, 1.0
  %v9059 = vrcp.pop %v9051
  %v9060 = vmul.f32 1.0, %v9059
  %v9061 = vrcp.pop %v9052
  %v9062 = vmul.f32 1.0, %v9061
  %v9063 = vrcp.pop %v9053
  %v9064 = vmul.f32 1.0, %v9063
  %v9065 = vrcp.pop %v9054
  %v9066 = vmul.f32 1.0, %v9065
  %v9067 = vrcp.pop %v9055
  %v9068 = vmul.f32 1.0, %v9067
  %v9069 = vrcp.pop %v9056
  %v9070 = vmul.f32 1.0, %v9069
  %v9071 = vrcp.pop %v9057
  %v9072 = vmul.f32 1.0, %v9071
  %v9073 = vrcp.pop %v9058
  %v9074 = vmul.f32 1.0, %v9073
  %v9075 = vxor.u32 %v8996, 2147483648
  %v9076 = vxor.u32 %v9000, 2147483648
  %v9077 = vxor.u32 %v9004, 2147483648
  %v9078 = vxor.u32 %v9008, 2147483648
  %v9079 = vxor.u32 %v9012, 2147483648
  %v9080 = vxor.u32 %v9016, 2147483648
  %v9081 = vxor.u32 %v9020, 2147483648
  %v9082 = vxor.u32 %v9024, 2147483648
  %v9083 = vmul.f32 %v9075, 1.442695
  %v9084 = vpow.pop %v9083
  %v9085 = vmul.f32 %v9076, 1.442695
  %v9086 = vpow.pop %v9085
  %v9087 = vmul.f32 %v9077, 1.442695
  %v9088 = vpow.pop %v9087
  %v9089 = vmul.f32 %v9078, 1.442695
  %v9090 = vpow.pop %v9089
  %v9091 = vmul.f32 %v9079, 1.442695
  %v9092 = vpow.pop %v9091
  %v9093 = vmul.f32 %v9080, 1.442695
  %v9094 = vpow.pop %v9093
  %v9095 = vmul.f32 %v9081, 1.442695
  %v9096 = vpow.pop %v9095
  %v9097 = vmul.f32 %v9082, 1.442695
  %v9098 = vpow.pop %v9097
  %v9099 = vadd.f32 %v9084, 1.0
  %v9100 = vadd.f32 %v9086, 1.0
  %v9101 = vadd.f32 %v9088, 1.0
  %v9102 = vadd.f32 %v9090, 1.0
  %v9103 = vadd.f32 %v9092, 1.0
  %v9104 = vadd.f32 %v9094, 1.0
  %v9105 = vadd.f32 %v9096, 1.0
  %v9106 = vadd.f32 %v9098, 1.0
  %v9107 = vrcp.pop %v9099
  %v9108 = vmul.f32 1.0, %v9107
  %v9109 = vrcp.pop %v9100
  %v9110 = vmul.f32 1.0, %v9109
  %v9111 = vrcp.pop %v9101
  %v9112 = vmul.f32 1.0, %v9111
  %v9113 = vrcp.pop %v9102
  %v9114 = vmul.f32 1.0, %v9113
  %v9115 = vrcp.pop %v9103
  %v9116 = vmul.f32 1.0, %v9115
  %v9117 = vrcp.pop %v9104
  %v9118 = vmul.f32 1.0, %v9117
  %v9119 = vrcp.pop %v9105
  %v9120 = vmul.f32 1.0, %v9119
  %v9121 = vrcp.pop %v9106
  %v9122 = vmul.f32 1.0, %v9121
  %v9123 = vtanh.pop %v8997
  %v9124 = vtanh.pop %v9001
  %v9125 = vtanh.pop %v9005
  %v9126 = vtanh.pop %v9009
  %v9127 = vtanh.pop %v9013
  %v9128 = vtanh.pop %v9017
  %v9129 = vtanh.pop %v9021
  %v9130 = vtanh.pop %v9025
  %v9131 = vxor.u32 %v8998, 2147483648
  %v9132 = vxor.u32 %v9002, 2147483648
  %v9133 = vxor.u32 %v9006, 2147483648
  %v9134 = vxor.u32 %v9010, 2147483648
  %v9135 = vxor.u32 %v9014, 2147483648
  %v9136 = vxor.u32 %v9018, 2147483648
  %v9137 = vxor.u32 %v9022, 2147483648
  %v9138 = vxor.u32 %v9026, 2147483648
  %v9139 = vmul.f32 %v9131, 1.442695
  %v9140 = vpow.pop %v9139
  %v9141 = vmul.f32 %v9132, 1.442695
  %v9142 = vpow.pop %v9141
  %v9143 = vmul.f32 %v9133, 1.442695
  %v9144 = vpow.pop %v9143
  %v9145 = vmul.f32 %v9134, 1.442695
  %v9146 = vpow.pop %v9145
  %v9147 = vmul.f32 %v9135, 1.442695
  %v9148 = vpow.pop %v9147
  %v9149 = vmul.f32 %v9136, 1.442695
  %v9150 = vpow.pop %v9149
  %v9151 = vmul.f32 %v9137, 1.442695
  %v9152 = vpow.pop %v9151
  %v9153 = vmul.f32 %v9138, 1.442695
  %v9154 = vpow.pop %v9153
  %v9155 = vadd.f32 %v9140, 1.0
  %v9156 = vadd.f32 %v9142, 1.0
  %v9157 = vadd.f32 %v9144, 1.0
  %v9158 = vadd.f32 %v9146, 1.0
  %v9159 = vadd.f32 %v9148, 1.0
  %v9160 = vadd.f32 %v9150, 1.0
  %v9161 = vadd.f32 %v9152, 1.0
  %v9162 = vadd.f32 %v9154, 1.0
  %v9163 = vrcp.pop %v9155
  %v9164 = vmul.f32 1.0, %v9163
  %v9165 = vrcp.pop %v9156
  %v9166 = vmul.f32 1.0, %v9165
  %v9167 = vrcp.pop %v9157
  %v9168 = vmul.f32 1.0, %v9167
  %v9169 = vrcp.pop %v9158
  %v9170 = vmul.f32 1.0, %v9169
  %v9171 = vrcp.pop %v9159
  %v9172 = vmul.f32 1.0, %v9171
  %v9173 = vrcp.pop %v9160
  %v9174 = vmul.f32 1.0, %v9173
  %v9175 = vrcp.pop %v9161
  %v9176 = vmul.f32 1.0, %v9175
  %v9177 = vrcp.pop %v9162
  %v9178 = vmul.f32 1.0, %v9177
  %v9179 = vmul.f32 %v9108, %v8415
  %v9180 = vmul.f32 %v9110, %v8416
  %v9181 = vmul.f32 %v9112, %v8417
  %v9182 = vmul.f32 %v9114, %v8418
  %v9183 = vmul.f32 %v9116, %v8419
  %v9184 = vmul.f32 %v9118, %v8420
  %v9185 = vmul.f32 %v9120, %v8421
  %v9186 = vmul.f32 %v9122, %v8422
  %v9187 = vmul.f32 %v9060, %v9123
  %v9188 = vmul.f32 %v9062, %v9124
  %v9189 = vmul.f32 %v9064, %v9125
  %v9190 = vmul.f32 %v9066, %v9126
  %v9191 = vmul.f32 %v9068, %v9127
  %v9192 = vmul.f32 %v9070, %v9128
  %v9193 = vmul.f32 %v9072, %v9129
  %v9194 = vmul.f32 %v9074, %v9130
  %v9195 = vadd.f32 %v9179, %v9187
  %v9196 = vadd.f32 %v9180, %v9188
  %v9197 = vadd.f32 %v9181, %v9189
  %v9198 = vadd.f32 %v9182, %v9190
  %v9199 = vadd.f32 %v9183, %v9191
  %v9200 = vadd.f32 %v9184, %v9192
  %v9201 = vadd.f32 %v9185, %v9193
  %v9202 = vadd.f32 %v9186, %v9194
  %v9203 = vtanh.pop %v9195
  %v9204 = vtanh.pop %v9196
  %v9205 = vtanh.pop %v9197
  %v9206 = vtanh.pop %v9198
  %v9207 = vtanh.pop %v9199
  %v9208 = vtanh.pop %v9200
  %v9209 = vtanh.pop %v9201
  %v9210 = vtanh.pop %v9202
  %v9211 = vmul.f32 %v9164, %v9203
  %v9212 = vmul.f32 %v9166, %v9204
  %v9213 = vmul.f32 %v9168, %v9205
  %v9214 = vmul.f32 %v9170, %v9206
  %v9215 = vmul.f32 %v9172, %v9207
  %v9216 = vmul.f32 %v9174, %v9208
  %v9217 = vmul.f32 %v9176, %v9209
  %v9218 = vmul.f32 %v9178, %v9210
  %v9219 = vpack.c.bf16 %v9212, %v9211
  %v9220 = vpack.c.bf16 %v9214, %v9213
  %v9221 = vpack.c.bf16 %v9216, %v9215
  %v9222 = vpack.c.bf16 %v9218, %v9217
  %v9223 = vld [vmem:[#allocation2 + $0x700] sm:$0xff]
  %v9224 = vld [vmem:[#allocation2 + $0x708] sm:$0xff]
  %v9225 = vld [vmem:[#allocation2 + $0x710] sm:$0xff]
  %v9226 = vld [vmem:[#allocation2 + $0x718] sm:$0xff]
  %v9227 = vld [vmem:[#allocation2 + $0x720] sm:$0xff]
  %v9228 = vld [vmem:[#allocation2 + $0x728] sm:$0xff]
  %v9229 = vld [vmem:[#allocation2 + $0x730] sm:$0xff]
  %v9230 = vld [vmem:[#allocation2 + $0x738] sm:$0xff]
  %v9231 = vld [vmem:[#allocation2 + $0x740] sm:$0xff]
  %v9232 = vld [vmem:[#allocation2 + $0x748] sm:$0xff]
  %v9233 = vld [vmem:[#allocation2 + $0x750] sm:$0xff]
  %v9234 = vld [vmem:[#allocation2 + $0x758] sm:$0xff]
  %v9235 = vld [vmem:[#allocation2 + $0x760] sm:$0xff]
  %v9236 = vld [vmem:[#allocation2 + $0x768] sm:$0xff]
  %v9237 = vld [vmem:[#allocation2 + $0x770] sm:$0xff]
  %v9238 = vld [vmem:[#allocation2 + $0x778] sm:$0xff]
  %v9239 = vld [vmem:[#allocation2 + $0x780] sm:$0xff]
  %v9240 = vld [vmem:[#allocation2 + $0x788] sm:$0xff]
  %v9241 = vld [vmem:[#allocation2 + $0x790] sm:$0xff]
  %v9242 = vld [vmem:[#allocation2 + $0x798] sm:$0xff]
  %v9243 = vld [vmem:[#allocation2 + $0x7a0] sm:$0xff]
  %v9244 = vld [vmem:[#allocation2 + $0x7a8] sm:$0xff]
  %v9245 = vld [vmem:[#allocation2 + $0x7b0] sm:$0xff]
  %v9246 = vld [vmem:[#allocation2 + $0x7b8] sm:$0xff]
  %v9247 = vld [vmem:[#allocation2 + $0x7c0] sm:$0xff]
  %v9248 = vld [vmem:[#allocation2 + $0x7c8] sm:$0xff]
  %v9249 = vld [vmem:[#allocation2 + $0x7d0] sm:$0xff]
  %v9250 = vld [vmem:[#allocation2 + $0x7d8] sm:$0xff]
  %v9251 = vld [vmem:[#allocation2 + $0x7e0] sm:$0xff]
  %v9252 = vld [vmem:[#allocation2 + $0x7e8] sm:$0xff]
  %v9253 = vld [vmem:[#allocation2 + $0x7f0] sm:$0xff]
  %v9254 = vld [vmem:[#allocation2 + $0x7f8] sm:$0xff]
  %v9255 = vadd.f32 %v8884, %v9223
  %v9256 = vadd.f32 %v8886, %v9224
  %v9257 = vadd.f32 %v8957, %v9225
  %v9258 = vadd.f32 %v8959, %v9226
  %v9259 = vadd.f32 %v8888, %v9227
  %v9260 = vadd.f32 %v8890, %v9228
  %v9261 = vadd.f32 %v8961, %v9229
  %v9262 = vadd.f32 %v8963, %v9230
  %v9263 = vadd.f32 %v8894, %v9231
  %v9264 = vadd.f32 %v8896, %v9232
  %v9265 = vadd.f32 %v8967, %v9233
  %v9266 = vadd.f32 %v8969, %v9234
  %v9267 = vadd.f32 %v8898, %v9235
  %v9268 = vadd.f32 %v8900, %v9236
  %v9269 = vadd.f32 %v8971, %v9237
  %v9270 = vadd.f32 %v8973, %v9238
  %v9271 = vadd.f32 %v8904, %v9239
  %v9272 = vadd.f32 %v8906, %v9240
  %v9273 = vadd.f32 %v8977, %v9241
  %v9274 = vadd.f32 %v8979, %v9242
  %v9275 = vadd.f32 %v8908, %v9243
  %v9276 = vadd.f32 %v8910, %v9244
  %v9277 = vadd.f32 %v8981, %v9245
  %v9278 = vadd.f32 %v8983, %v9246
  %v9279 = vadd.f32 %v8914, %v9247
  %v9280 = vadd.f32 %v8916, %v9248
  %v9281 = vadd.f32 %v8987, %v9249
  %v9282 = vadd.f32 %v8989, %v9250
  %v9283 = vadd.f32 %v8918, %v9251
  %v9284 = vadd.f32 %v8920, %v9252
  %v9285 = vadd.f32 %v8991, %v9253
  %v9286 = vadd.f32 %v8993, %v9254
  %v9287 = vxor.u32 %v9255, 2147483648
  %v9288 = vxor.u32 %v9259, 2147483648
  %v9289 = vxor.u32 %v9263, 2147483648
  %v9290 = vxor.u32 %v9267, 2147483648
  %v9291 = vxor.u32 %v9271, 2147483648
  %v9292 = vxor.u32 %v9275, 2147483648
  %v9293 = vxor.u32 %v9279, 2147483648
  %v9294 = vxor.u32 %v9283, 2147483648
  %v9295 = vmul.f32 %v9287, 1.442695
  %v9296 = vpow.pop %v9295
  %v9297 = vmul.f32 %v9288, 1.442695
  %v9298 = vpow.pop %v9297
  %v9299 = vmul.f32 %v9289, 1.442695
  %v9300 = vpow.pop %v9299
  %v9301 = vmul.f32 %v9290, 1.442695
  %v9302 = vpow.pop %v9301
  %v9303 = vmul.f32 %v9291, 1.442695
  %v9304 = vpow.pop %v9303
  %v9305 = vmul.f32 %v9292, 1.442695
  %v9306 = vpow.pop %v9305
  %v9307 = vmul.f32 %v9293, 1.442695
  %v9308 = vpow.pop %v9307
  %v9309 = vmul.f32 %v9294, 1.442695
  %v9310 = vpow.pop %v9309
  %v9311 = vadd.f32 %v9296, 1.0
  %v9312 = vadd.f32 %v9298, 1.0
  %v9313 = vadd.f32 %v9300, 1.0
  %v9314 = vadd.f32 %v9302, 1.0
  %v9315 = vadd.f32 %v9304, 1.0
  %v9316 = vadd.f32 %v9306, 1.0
  %v9317 = vadd.f32 %v9308, 1.0
  %v9318 = vadd.f32 %v9310, 1.0
  %v9319 = vrcp.pop %v9311
  %v9320 = vmul.f32 1.0, %v9319
  %v9321 = vrcp.pop %v9312
  %v9322 = vmul.f32 1.0, %v9321
  %v9323 = vrcp.pop %v9313
  %v9324 = vmul.f32 1.0, %v9323
  %v9325 = vrcp.pop %v9314
  %v9326 = vmul.f32 1.0, %v9325
  %v9327 = vrcp.pop %v9315
  %v9328 = vmul.f32 1.0, %v9327
  %v9329 = vrcp.pop %v9316
  %v9330 = vmul.f32 1.0, %v9329
  %v9331 = vrcp.pop %v9317
  %v9332 = vmul.f32 1.0, %v9331
  %v9333 = vrcp.pop %v9318
  %v9334 = vmul.f32 1.0, %v9333
  %v9335 = vxor.u32 %v9256, 2147483648
  %v9336 = vxor.u32 %v9260, 2147483648
  %v9337 = vxor.u32 %v9264, 2147483648
  %v9338 = vxor.u32 %v9268, 2147483648
  %v9339 = vxor.u32 %v9272, 2147483648
  %v9340 = vxor.u32 %v9276, 2147483648
  %v9341 = vxor.u32 %v9280, 2147483648
  %v9342 = vxor.u32 %v9284, 2147483648
  %v9343 = vmul.f32 %v9335, 1.442695
  %v9344 = vpow.pop %v9343
  %v9345 = vmul.f32 %v9336, 1.442695
  %v9346 = vpow.pop %v9345
  %v9347 = vmul.f32 %v9337, 1.442695
  %v9348 = vpow.pop %v9347
  %v9349 = vmul.f32 %v9338, 1.442695
  %v9350 = vpow.pop %v9349
  %v9351 = vmul.f32 %v9339, 1.442695
  %v9352 = vpow.pop %v9351
  %v9353 = vmul.f32 %v9340, 1.442695
  %v9354 = vpow.pop %v9353
  %v9355 = vmul.f32 %v9341, 1.442695
  %v9356 = vpow.pop %v9355
  %v9357 = vmul.f32 %v9342, 1.442695
  %v9358 = vpow.pop %v9357
  %v9359 = vadd.f32 %v9344, 1.0
  %v9360 = vadd.f32 %v9346, 1.0
  %v9361 = vadd.f32 %v9348, 1.0
  %v9362 = vadd.f32 %v9350, 1.0
  %v9363 = vadd.f32 %v9352, 1.0
  %v9364 = vadd.f32 %v9354, 1.0
  %v9365 = vadd.f32 %v9356, 1.0
  %v9366 = vadd.f32 %v9358, 1.0
  %v9367 = vrcp.pop %v9359
  %v9368 = vmul.f32 1.0, %v9367
  %v9369 = vrcp.pop %v9360
  %v9370 = vmul.f32 1.0, %v9369
  %v9371 = vrcp.pop %v9361
  %v9372 = vmul.f32 1.0, %v9371
  %v9373 = vrcp.pop %v9362
  %v9374 = vmul.f32 1.0, %v9373
  %v9375 = vrcp.pop %v9363
  %v9376 = vmul.f32 1.0, %v9375
  %v9377 = vrcp.pop %v9364
  %v9378 = vmul.f32 1.0, %v9377
  %v9379 = vrcp.pop %v9365
  %v9380 = vmul.f32 1.0, %v9379
  %v9381 = vrcp.pop %v9366
  %v9382 = vmul.f32 1.0, %v9381
  %v9383 = vtanh.pop %v9257
  %v9384 = vtanh.pop %v9261
  %v9385 = vtanh.pop %v9265
  %v9386 = vtanh.pop %v9269
  %v9387 = vtanh.pop %v9273
  %v9388 = vtanh.pop %v9277
  %v9389 = vtanh.pop %v9281
  %v9390 = vtanh.pop %v9285
  %v9391 = vxor.u32 %v9258, 2147483648
  %v9392 = vxor.u32 %v9262, 2147483648
  %v9393 = vxor.u32 %v9266, 2147483648
  %v9394 = vxor.u32 %v9270, 2147483648
  %v9395 = vxor.u32 %v9274, 2147483648
  %v9396 = vxor.u32 %v9278, 2147483648
  %v9397 = vxor.u32 %v9282, 2147483648
  %v9398 = vxor.u32 %v9286, 2147483648
  %v9399 = vmul.f32 %v9391, 1.442695
  %v9400 = vpow.pop %v9399
  %v9401 = vmul.f32 %v9392, 1.442695
  %v9402 = vpow.pop %v9401
  %v9403 = vmul.f32 %v9393, 1.442695
  %v9404 = vpow.pop %v9403
  %v9405 = vmul.f32 %v9394, 1.442695
  %v9406 = vpow.pop %v9405
  %v9407 = vmul.f32 %v9395, 1.442695
  %v9408 = vpow.pop %v9407
  %v9409 = vmul.f32 %v9396, 1.442695
  %v9410 = vpow.pop %v9409
  %v9411 = vmul.f32 %v9397, 1.442695
  %v9412 = vpow.pop %v9411
  %v9413 = vmul.f32 %v9398, 1.442695
  %v9414 = vpow.pop %v9413
  %v9415 = vadd.f32 %v9400, 1.0
  %v9416 = vadd.f32 %v9402, 1.0
  %v9417 = vadd.f32 %v9404, 1.0
  %v9418 = vadd.f32 %v9406, 1.0
  %v9419 = vadd.f32 %v9408, 1.0
  %v9420 = vadd.f32 %v9410, 1.0
  %v9421 = vadd.f32 %v9412, 1.0
  %v9422 = vadd.f32 %v9414, 1.0
  %v9423 = vrcp.pop %v9415
  %v9424 = vmul.f32 1.0, %v9423
  %v9425 = vrcp.pop %v9416
  %v9426 = vmul.f32 1.0, %v9425
  %v9427 = vrcp.pop %v9417
  %v9428 = vmul.f32 1.0, %v9427
  %v9429 = vrcp.pop %v9418
  %v9430 = vmul.f32 1.0, %v9429
  %v9431 = vrcp.pop %v9419
  %v9432 = vmul.f32 1.0, %v9431
  %v9433 = vrcp.pop %v9420
  %v9434 = vmul.f32 1.0, %v9433
  %v9435 = vrcp.pop %v9421
  %v9436 = vmul.f32 1.0, %v9435
  %v9437 = vrcp.pop %v9422
  %v9438 = vmul.f32 1.0, %v9437
  %v9439 = vmul.f32 %v9368, %v8675
  %v9440 = vmul.f32 %v9370, %v8676
  %v9441 = vmul.f32 %v9372, %v8677
  %v9442 = vmul.f32 %v9374, %v8678
  %v9443 = vmul.f32 %v9376, %v8679
  %v9444 = vmul.f32 %v9378, %v8680
  %v9445 = vmul.f32 %v9380, %v8681
  %v9446 = vmul.f32 %v9382, %v8682
  %v9447 = vmul.f32 %v9320, %v9383
  %v9448 = vmul.f32 %v9322, %v9384
  %v9449 = vmul.f32 %v9324, %v9385
  %v9450 = vmul.f32 %v9326, %v9386
  %v9451 = vmul.f32 %v9328, %v9387
  %v9452 = vmul.f32 %v9330, %v9388
  %v9453 = vmul.f32 %v9332, %v9389
  %v9454 = vmul.f32 %v9334, %v9390
  %v9455 = vadd.f32 %v9439, %v9447
  %v9456 = vadd.f32 %v9440, %v9448
  %v9457 = vadd.f32 %v9441, %v9449
  %v9458 = vadd.f32 %v9442, %v9450
  %v9459 = vadd.f32 %v9443, %v9451
  %v9460 = vadd.f32 %v9444, %v9452
  %v9461 = vadd.f32 %v9445, %v9453
  %v9462 = vadd.f32 %v9446, %v9454
  %v9463 = vtanh.pop %v9455
  %v9464 = vtanh.pop %v9456
  %v9465 = vtanh.pop %v9457
  %v9466 = vtanh.pop %v9458
  %v9467 = vtanh.pop %v9459
  %v9468 = vtanh.pop %v9460
  %v9469 = vtanh.pop %v9461
  %v9470 = vtanh.pop %v9462
  %v9471 = vmul.f32 %v9424, %v9463
  %v9472 = vmul.f32 %v9426, %v9464
  %v9473 = vmul.f32 %v9428, %v9465
  %v9474 = vmul.f32 %v9430, %v9466
  %v9475 = vmul.f32 %v9432, %v9467
  %v9476 = vmul.f32 %v9434, %v9468
  %v9477 = vmul.f32 %v9436, %v9469
  %v9478 = vmul.f32 %v9438, %v9470
  %v9479 = vpack.c.bf16 %v9472, %v9471
  %v9480 = vpack.c.bf16 %v9474, %v9473
  %v9481 = vpack.c.bf16 %v9476, %v9475
  %v9482 = vpack.c.bf16 %v9478, %v9477
  %9483 = vmatprep.subr.bf16.mxu0 %v3824
  %9484 = vmatpush1.bf16.msra.mxu0 %v3823
  %9485 = vmatprep.subr.bf16.mxu0 %v3816
  %9486 = vmatpush1.bf16.msra.mxu0 %v3815
  %9487 = vmatprep.subr.bf16.mxu0 %v3808
  %9488 = vmatpush1.bf16.msra.mxu0 %v3807
  %9489 = vmatprep.subr.bf16.mxu0 %v3800
  %9490 = vmatpush1.bf16.msra.mxu0 %v3799
  %9491 = vmatprep.subr.bf16.mxu0 %v3792
  %9492 = vmatpush1.bf16.msra.mxu0 %v3791
  %9493 = vmatprep.subr.bf16.mxu0 %v3784
  %9494 = vmatpush1.bf16.msra.mxu0 %v3783
  %9495 = vmatprep.subr.bf16.mxu0 %v3776
  %9496 = vmatpush1.bf16.msra.mxu0 %v3775
  %9497 = vmatprep.subr.bf16.mxu0 %v3768
  %9498 = vmatpush1.bf16.msra.mxu0 %v3767
  %9499 = vmatprep.subr.bf16.mxu0 %v3888
  %9500 = vmatpush2.bf16.msra.mxu0 %v3887
  %9501 = vmatprep.subr.bf16.mxu0 %v3880
  %9502 = vmatpush2.bf16.msra.mxu0 %v3879
  %9503 = vmatprep.subr.bf16.mxu0 %v3872
  %9504 = vmatpush2.bf16.msra.mxu0 %v3871
  %9505 = vmatprep.subr.bf16.mxu0 %v3864
  %9506 = vmatpush2.bf16.msra.mxu0 %v3863
  %9507 = vmatprep.subr.bf16.mxu0 %v3856
  %9508 = vmatpush2.bf16.msra.mxu0 %v3855
  %9509 = vmatprep.subr.bf16.mxu0 %v3848
  %9510 = vmatpush2.bf16.msra.mxu0 %v3847
  %9511 = vmatprep.subr.bf16.mxu0 %v3840
  %9512 = vmatpush2.bf16.msra.mxu0 %v3839
  %9513 = vmatprep.subr.bf16.mxu0 %v3832
  %9514 = vmatpush2.bf16.msra.mxu0 %v3831
  %9515 = vmatprep.mubr.bf16.mxu0 %v9219
  %9516 = vmatmul.mubr.bf16.gmra.mxu0 %v9479
  %v9517 = vpop.f32.mrf.mxu0
  %v9518 = vadd.f32 0.0, %v9517
  %v9519 = vpop.f32.mrf.mxu0
  %v9520 = vadd.f32 0.0, %v9519
  %v9521 = vpop.f32.mrf.mxu0
  %v9522 = vadd.f32 0.0, %v9521
  %v9523 = vpop.f32.mrf.mxu0
  %v9524 = vadd.f32 0.0, %v9523
  %9525 = vmatprep.mubr.bf16.mxu0 %v9220
  %9526 = vmatmul.mubr.bf16.gmra.mxu0 %v9480
  %v9527 = vpop.f32.mrf.mxu0
  %v9528 = vadd.f32 0.0, %v9527
  %v9529 = vpop.f32.mrf.mxu0
  %v9530 = vadd.f32 0.0, %v9529
  %v9531 = vpop.f32.mrf.mxu0
  %v9532 = vadd.f32 0.0, %v9531
  %v9533 = vpop.f32.mrf.mxu0
  %v9534 = vadd.f32 0.0, %v9533
  %9535 = vmatprep.mubr.bf16.mxu0 %v9221
  %9536 = vmatmul.mubr.bf16.gmra.mxu0 %v9481
  %v9537 = vpop.f32.mrf.mxu0
  %v9538 = vadd.f32 0.0, %v9537
  %v9539 = vpop.f32.mrf.mxu0
  %v9540 = vadd.f32 0.0, %v9539
  %v9541 = vpop.f32.mrf.mxu0
  %v9542 = vadd.f32 0.0, %v9541
  %v9543 = vpop.f32.mrf.mxu0
  %v9544 = vadd.f32 0.0, %v9543
  %9545 = vmatprep.mubr.bf16.mxu0 %v9222
  %9546 = vmatmul.mubr.bf16.gmra.mxu0 %v9482
  %v9547 = vpop.f32.mrf.mxu0
  %v9548 = vadd.f32 0.0, %v9547
  %v9549 = vpop.f32.mrf.mxu0
  %v9550 = vadd.f32 0.0, %v9549
  %v9551 = vpop.f32.mrf.mxu0
  %v9552 = vadd.f32 0.0, %v9551
  %v9553 = vpop.f32.mrf.mxu0
  %v9554 = vadd.f32 0.0, %v9553
  %9555 = vdwg.mxu0
  %9556 = vmatprep.subr.bf16.mxu0 %v3826
  %9557 = vmatpush1.bf16.msra.mxu0 %v3825
  %9558 = vmatprep.subr.bf16.mxu0 %v3818
  %9559 = vmatpush1.bf16.msra.mxu0 %v3817
  %9560 = vmatprep.subr.bf16.mxu0 %v3810
  %9561 = vmatpush1.bf16.msra.mxu0 %v3809
  %9562 = vmatprep.subr.bf16.mxu0 %v3802
  %9563 = vmatpush1.bf16.msra.mxu0 %v3801
  %9564 = vmatprep.subr.bf16.mxu0 %v3794
  %9565 = vmatpush1.bf16.msra.mxu0 %v3793
  %9566 = vmatprep.subr.bf16.mxu0 %v3786
  %9567 = vmatpush1.bf16.msra.mxu0 %v3785
  %9568 = vmatprep.subr.bf16.mxu0 %v3778
  %9569 = vmatpush1.bf16.msra.mxu0 %v3777
  %9570 = vmatprep.subr.bf16.mxu0 %v3770
  %9571 = vmatpush1.bf16.msra.mxu0 %v3769
  %9572 = vmatprep.subr.bf16.mxu0 %v3890
  %9573 = vmatpush2.bf16.msra.mxu0 %v3889
  %9574 = vmatprep.subr.bf16.mxu0 %v3882
  %9575 = vmatpush2.bf16.msra.mxu0 %v3881
  %9576 = vmatprep.subr.bf16.mxu0 %v3874
  %9577 = vmatpush2.bf16.msra.mxu0 %v3873
  %9578 = vmatprep.subr.bf16.mxu0 %v3866
  %9579 = vmatpush2.bf16.msra.mxu0 %v3865
  %9580 = vmatprep.subr.bf16.mxu0 %v3858
  %9581 = vmatpush2.bf16.msra.mxu0 %v3857
  %9582 = vmatprep.subr.bf16.mxu0 %v3850
  %9583 = vmatpush2.bf16.msra.mxu0 %v3849
  %9584 = vmatprep.subr.bf16.mxu0 %v3842
  %9585 = vmatpush2.bf16.msra.mxu0 %v3841
  %9586 = vmatprep.subr.bf16.mxu0 %v3834
  %9587 = vmatpush2.bf16.msra.mxu0 %v3833
  %9588 = vmatprep.mubr.bf16.mxu0 %v9219
  %9589 = vmatmul.mubr.bf16.gmra.mxu0 %v9479
  %v9590 = vpop.f32.mrf.mxu0
  %v9591 = vadd.f32 0.0, %v9590
  %v9592 = vpop.f32.mrf.mxu0
  %v9593 = vadd.f32 0.0, %v9592
  %v9594 = vpop.f32.mrf.mxu0
  %v9595 = vadd.f32 0.0, %v9594
  %v9596 = vpop.f32.mrf.mxu0
  %v9597 = vadd.f32 0.0, %v9596
  %9598 = vmatprep.mubr.bf16.mxu0 %v9220
  %9599 = vmatmul.mubr.bf16.gmra.mxu0 %v9480
  %v9600 = vpop.f32.mrf.mxu0
  %v9601 = vadd.f32 0.0, %v9600
  %v9602 = vpop.f32.mrf.mxu0
  %v9603 = vadd.f32 0.0, %v9602
  %v9604 = vpop.f32.mrf.mxu0
  %v9605 = vadd.f32 0.0, %v9604
  %v9606 = vpop.f32.mrf.mxu0
  %v9607 = vadd.f32 0.0, %v9606
  %9608 = vmatprep.mubr.bf16.mxu0 %v9221
  %9609 = vmatmul.mubr.bf16.gmra.mxu0 %v9481
  %v9610 = vpop.f32.mrf.mxu0
  %v9611 = vadd.f32 0.0, %v9610
  %v9612 = vpop.f32.mrf.mxu0
  %v9613 = vadd.f32 0.0, %v9612
  %v9614 = vpop.f32.mrf.mxu0
  %v9615 = vadd.f32 0.0, %v9614
  %v9616 = vpop.f32.mrf.mxu0
  %v9617 = vadd.f32 0.0, %v9616
  %9618 = vmatprep.mubr.bf16.mxu0 %v9222
  %9619 = vmatmul.mubr.bf16.gmra.mxu0 %v9482
  %v9620 = vpop.f32.mrf.mxu0
  %v9621 = vadd.f32 0.0, %v9620
  %v9622 = vpop.f32.mrf.mxu0
  %v9623 = vadd.f32 0.0, %v9622
  %v9624 = vpop.f32.mrf.mxu0
  %v9625 = vadd.f32 0.0, %v9624
  %v9626 = vpop.f32.mrf.mxu0
  %v9627 = vadd.f32 0.0, %v9626
  %9628 = vdwg.mxu0
  %v9629 = vadd.f32 %v9518, %v3106
  %v9630 = vadd.f32 %v9520, %v3110
  %v9631 = vadd.f32 %v9591, %v3114
  %v9632 = vadd.f32 %v9593, %v3118
  %v9633 = vadd.f32 %v9522, %v3106
  %v9634 = vadd.f32 %v9524, %v3110
  %v9635 = vadd.f32 %v9595, %v3114
  %v9636 = vadd.f32 %v9597, %v3118
  %v9637 = vadd.f32 %v9528, %v3106
  %v9638 = vadd.f32 %v9530, %v3110
  %v9639 = vadd.f32 %v9601, %v3114
  %v9640 = vadd.f32 %v9603, %v3118
  %v9641 = vadd.f32 %v9532, %v3106
  %v9642 = vadd.f32 %v9534, %v3110
  %v9643 = vadd.f32 %v9605, %v3114
  %v9644 = vadd.f32 %v9607, %v3118
  %v9645 = vadd.f32 %v9538, %v3106
  %v9646 = vadd.f32 %v9540, %v3110
  %v9647 = vadd.f32 %v9611, %v3114
  %v9648 = vadd.f32 %v9613, %v3118
  %v9649 = vadd.f32 %v9542, %v3106
  %v9650 = vadd.f32 %v9544, %v3110
  %v9651 = vadd.f32 %v9615, %v3114
  %v9652 = vadd.f32 %v9617, %v3118
  %v9653 = vadd.f32 %v9548, %v3106
  %v9654 = vadd.f32 %v9550, %v3110
  %v9655 = vadd.f32 %v9621, %v3114
  %v9656 = vadd.f32 %v9623, %v3118
  %v9657 = vadd.f32 %v9552, %v3106
  %v9658 = vadd.f32 %v9554, %v3110
  %v9659 = vadd.f32 %v9625, %v3114
  %v9660 = vadd.f32 %v9627, %v3118
  %v9661 = vxor.u32 %v9629, 2147483648
  %v9662 = vxor.u32 %v9633, 2147483648
  %v9663 = vxor.u32 %v9637, 2147483648
  %v9664 = vxor.u32 %v9641, 2147483648
  %v9665 = vxor.u32 %v9645, 2147483648
  %v9666 = vxor.u32 %v9649, 2147483648
  %v9667 = vxor.u32 %v9653, 2147483648
  %v9668 = vxor.u32 %v9657, 2147483648
  %v9669 = vmul.f32 %v9661, 1.442695
  %v9670 = vpow.pop %v9669
  %v9671 = vmul.f32 %v9662, 1.442695
  %v9672 = vpow.pop %v9671
  %v9673 = vmul.f32 %v9663, 1.442695
  %v9674 = vpow.pop %v9673
  %v9675 = vmul.f32 %v9664, 1.442695
  %v9676 = vpow.pop %v9675
  %v9677 = vmul.f32 %v9665, 1.442695
  %v9678 = vpow.pop %v9677
  %v9679 = vmul.f32 %v9666, 1.442695
  %v9680 = vpow.pop %v9679
  %v9681 = vmul.f32 %v9667, 1.442695
  %v9682 = vpow.pop %v9681
  %v9683 = vmul.f32 %v9668, 1.442695
  %v9684 = vpow.pop %v9683
  %v9685 = vadd.f32 %v9670, 1.0
  %v9686 = vadd.f32 %v9672, 1.0
  %v9687 = vadd.f32 %v9674, 1.0
  %v9688 = vadd.f32 %v9676, 1.0
  %v9689 = vadd.f32 %v9678, 1.0
  %v9690 = vadd.f32 %v9680, 1.0
  %v9691 = vadd.f32 %v9682, 1.0
  %v9692 = vadd.f32 %v9684, 1.0
  %v9693 = vrcp.pop %v9685
  %v9694 = vmul.f32 1.0, %v9693
  %v9695 = vrcp.pop %v9686
  %v9696 = vmul.f32 1.0, %v9695
  %v9697 = vrcp.pop %v9687
  %v9698 = vmul.f32 1.0, %v9697
  %v9699 = vrcp.pop %v9688
  %v9700 = vmul.f32 1.0, %v9699
  %v9701 = vrcp.pop %v9689
  %v9702 = vmul.f32 1.0, %v9701
  %v9703 = vrcp.pop %v9690
  %v9704 = vmul.f32 1.0, %v9703
  %v9705 = vrcp.pop %v9691
  %v9706 = vmul.f32 1.0, %v9705
  %v9707 = vrcp.pop %v9692
  %v9708 = vmul.f32 1.0, %v9707
  %v9709 = vxor.u32 %v9630, 2147483648
  %v9710 = vxor.u32 %v9634, 2147483648
  %v9711 = vxor.u32 %v9638, 2147483648
  %v9712 = vxor.u32 %v9642, 2147483648
  %v9713 = vxor.u32 %v9646, 2147483648
  %v9714 = vxor.u32 %v9650, 2147483648
  %v9715 = vxor.u32 %v9654, 2147483648
  %v9716 = vxor.u32 %v9658, 2147483648
  %v9717 = vmul.f32 %v9709, 1.442695
  %v9718 = vpow.pop %v9717
  %v9719 = vmul.f32 %v9710, 1.442695
  %v9720 = vpow.pop %v9719
  %v9721 = vmul.f32 %v9711, 1.442695
  %v9722 = vpow.pop %v9721
  %v9723 = vmul.f32 %v9712, 1.442695
  %v9724 = vpow.pop %v9723
  %v9725 = vmul.f32 %v9713, 1.442695
  %v9726 = vpow.pop %v9725
  %v9727 = vmul.f32 %v9714, 1.442695
  %v9728 = vpow.pop %v9727
  %v9729 = vmul.f32 %v9715, 1.442695
  %v9730 = vpow.pop %v9729
  %v9731 = vmul.f32 %v9716, 1.442695
  %v9732 = vpow.pop %v9731
  %v9733 = vadd.f32 %v9718, 1.0
  %v9734 = vadd.f32 %v9720, 1.0
  %v9735 = vadd.f32 %v9722, 1.0
  %v9736 = vadd.f32 %v9724, 1.0
  %v9737 = vadd.f32 %v9726, 1.0
  %v9738 = vadd.f32 %v9728, 1.0
  %v9739 = vadd.f32 %v9730, 1.0
  %v9740 = vadd.f32 %v9732, 1.0
  %v9741 = vrcp.pop %v9733
  %v9742 = vmul.f32 1.0, %v9741
  %v9743 = vrcp.pop %v9734
  %v9744 = vmul.f32 1.0, %v9743
  %v9745 = vrcp.pop %v9735
  %v9746 = vmul.f32 1.0, %v9745
  %v9747 = vrcp.pop %v9736
  %v9748 = vmul.f32 1.0, %v9747
  %v9749 = vrcp.pop %v9737
  %v9750 = vmul.f32 1.0, %v9749
  %v9751 = vrcp.pop %v9738
  %v9752 = vmul.f32 1.0, %v9751
  %v9753 = vrcp.pop %v9739
  %v9754 = vmul.f32 1.0, %v9753
  %v9755 = vrcp.pop %v9740
  %v9756 = vmul.f32 1.0, %v9755
  %v9757 = vtanh.pop %v9631
  %v9758 = vtanh.pop %v9635
  %v9759 = vtanh.pop %v9639
  %v9760 = vtanh.pop %v9643
  %v9761 = vtanh.pop %v9647
  %v9762 = vtanh.pop %v9651
  %v9763 = vtanh.pop %v9655
  %v9764 = vtanh.pop %v9659
  %v9765 = vxor.u32 %v9632, 2147483648
  %v9766 = vxor.u32 %v9636, 2147483648
  %v9767 = vxor.u32 %v9640, 2147483648
  %v9768 = vxor.u32 %v9644, 2147483648
  %v9769 = vxor.u32 %v9648, 2147483648
  %v9770 = vxor.u32 %v9652, 2147483648
  %v9771 = vxor.u32 %v9656, 2147483648
  %v9772 = vxor.u32 %v9660, 2147483648
  %v9773 = vmul.f32 %v9765, 1.442695
  %v9774 = vpow.pop %v9773
  %v9775 = vmul.f32 %v9766, 1.442695
  %v9776 = vpow.pop %v9775
  %v9777 = vmul.f32 %v9767, 1.442695
  %v9778 = vpow.pop %v9777
  %v9779 = vmul.f32 %v9768, 1.442695
  %v9780 = vpow.pop %v9779
  %v9781 = vmul.f32 %v9769, 1.442695
  %v9782 = vpow.pop %v9781
  %v9783 = vmul.f32 %v9770, 1.442695
  %v9784 = vpow.pop %v9783
  %v9785 = vmul.f32 %v9771, 1.442695
  %v9786 = vpow.pop %v9785
  %v9787 = vmul.f32 %v9772, 1.442695
  %v9788 = vpow.pop %v9787
  %v9789 = vadd.f32 %v9774, 1.0
  %v9790 = vadd.f32 %v9776, 1.0
  %v9791 = vadd.f32 %v9778, 1.0
  %v9792 = vadd.f32 %v9780, 1.0
  %v9793 = vadd.f32 %v9782, 1.0
  %v9794 = vadd.f32 %v9784, 1.0
  %v9795 = vadd.f32 %v9786, 1.0
  %v9796 = vadd.f32 %v9788, 1.0
  %v9797 = vrcp.pop %v9789
  %v9798 = vmul.f32 1.0, %v9797
  %v9799 = vrcp.pop %v9790
  %v9800 = vmul.f32 1.0, %v9799
  %v9801 = vrcp.pop %v9791
  %v9802 = vmul.f32 1.0, %v9801
  %v9803 = vrcp.pop %v9792
  %v9804 = vmul.f32 1.0, %v9803
  %v9805 = vrcp.pop %v9793
  %v9806 = vmul.f32 1.0, %v9805
  %v9807 = vrcp.pop %v9794
  %v9808 = vmul.f32 1.0, %v9807
  %v9809 = vrcp.pop %v9795
  %v9810 = vmul.f32 1.0, %v9809
  %v9811 = vrcp.pop %v9796
  %v9812 = vmul.f32 1.0, %v9811
  %v9813 = vmul.f32 %v9742, %v9195
  %v9814 = vmul.f32 %v9744, %v9196
  %v9815 = vmul.f32 %v9746, %v9197
  %v9816 = vmul.f32 %v9748, %v9198
  %v9817 = vmul.f32 %v9750, %v9199
  %v9818 = vmul.f32 %v9752, %v9200
  %v9819 = vmul.f32 %v9754, %v9201
  %v9820 = vmul.f32 %v9756, %v9202
  %v9821 = vmul.f32 %v9694, %v9757
  %v9822 = vmul.f32 %v9696, %v9758
  %v9823 = vmul.f32 %v9698, %v9759
  %v9824 = vmul.f32 %v9700, %v9760
  %v9825 = vmul.f32 %v9702, %v9761
  %v9826 = vmul.f32 %v9704, %v9762
  %v9827 = vmul.f32 %v9706, %v9763
  %v9828 = vmul.f32 %v9708, %v9764
  %v9829 = vadd.f32 %v9813, %v9821
  %v9830 = vadd.f32 %v9814, %v9822
  %v9831 = vadd.f32 %v9815, %v9823
  %v9832 = vadd.f32 %v9816, %v9824
  %v9833 = vadd.f32 %v9817, %v9825
  %v9834 = vadd.f32 %v9818, %v9826
  %v9835 = vadd.f32 %v9819, %v9827
  %v9836 = vadd.f32 %v9820, %v9828
  %v9837 = vtanh.pop %v9829
  %v9838 = vtanh.pop %v9830
  %v9839 = vtanh.pop %v9831
  %v9840 = vtanh.pop %v9832
  %v9841 = vtanh.pop %v9833
  %v9842 = vtanh.pop %v9834
  %v9843 = vtanh.pop %v9835
  %v9844 = vtanh.pop %v9836
  %v9845 = vmul.f32 %v9798, %v9837
  %v9846 = vmul.f32 %v9800, %v9838
  %v9847 = vmul.f32 %v9802, %v9839
  %v9848 = vmul.f32 %v9804, %v9840
  %v9849 = vmul.f32 %v9806, %v9841
  %v9850 = vmul.f32 %v9808, %v9842
  %v9851 = vmul.f32 %v9810, %v9843
  %v9852 = vmul.f32 %v9812, %v9844
  %v9853 = vpack.c.bf16 %v9846, %v9845
  %v9854 = vpack.c.bf16 %v9848, %v9847
  %v9855 = vpack.c.bf16 %v9850, %v9849
  %v9856 = vpack.c.bf16 %v9852, %v9851
  %v9857 = vld [vmem:[%s6] sm:$0xf]
  %v9858 = vld [vmem:[%s6 + $0x4] sm:$0xf]
  %v9859 = vld [vmem:[%s6 + $0x8] sm:$0xf]
  %v9860 = vld [vmem:[%s6 + $0xc] sm:$0xf]
  %v9861 = vld [vmem:[%s6 + $0x10] sm:$0xf]
  %v9862 = vld [vmem:[%s6 + $0x14] sm:$0xf]
  %v9863 = vld [vmem:[%s6 + $0x18] sm:$0xf]
  %v9864 = vld [vmem:[%s6 + $0x1c] sm:$0xf]
  %v9865 = vld [vmem:[%s6 + $0x20] sm:$0xf]
  %v9866 = vld [vmem:[%s6 + $0x24] sm:$0xf]
  %v9867 = vld [vmem:[%s6 + $0x28] sm:$0xf]
  %v9868 = vld [vmem:[%s6 + $0x2c] sm:$0xf]
  %v9869 = vld [vmem:[%s6 + $0x30] sm:$0xf]
  %v9870 = vld [vmem:[%s6 + $0x34] sm:$0xf]
  %v9871 = vld [vmem:[%s6 + $0x38] sm:$0xf]
  %v9872 = vld [vmem:[%s6 + $0x3c] sm:$0xf]
  %v9873 = vld [vmem:[%s7] sm:$0x1]
  %v9875 = vlaneseq
  %v9876 = vshrl.u32 %v9875, 7
  %v9877 = vsub.s32 0, %v9876
  %v9878 = vrot.slane %v9873, %v9877
  %v9896 = vunpack.c.l.b16 %v9857
  %v9897 = vunpack.c.l.b16 %v9858
  %v9898 = vunpack.c.l.b16 %v9859
  %v9899 = vunpack.c.l.b16 %v9860
  %v9900 = vunpack.c.l.b16 %v9861
  %v9901 = vunpack.c.l.b16 %v9862
  %v9902 = vunpack.c.l.b16 %v9863
  %v9903 = vunpack.c.l.b16 %v9864
  %v9904 = vunpack.c.l.b16 %v9865
  %v9905 = vunpack.c.l.b16 %v9866
  %v9906 = vunpack.c.l.b16 %v9867
  %v9907 = vunpack.c.l.b16 %v9868
  %v9908 = vunpack.c.l.b16 %v9869
  %v9909 = vunpack.c.l.b16 %v9870
  %v9910 = vunpack.c.l.b16 %v9871
  %v9911 = vunpack.c.l.b16 %v9872
  %v9912 = vpack.c.b16 %v9897, %v9896
  %v9913 = vpack.c.b16 %v9899, %v9898
  %v9914 = vpack.c.b16 %v9901, %v9900
  %v9915 = vpack.c.b16 %v9903, %v9902
  %v9916 = vpack.c.b16 %v9905, %v9904
  %v9917 = vpack.c.b16 %v9907, %v9906
  %v9918 = vpack.c.b16 %v9909, %v9908
  %v9919 = vpack.c.b16 %v9911, %v9910
  %9928 = vmatprep.subr.bf16.mxu0 0
  %9929 = vmatpush1.bf16.msra.mxu0 %v9919
  %9930 = vmatprep.subr.bf16.mxu0 0
  %9931 = vmatpush1.bf16.msra.mxu0 %v9918
  %9932 = vmatprep.subr.bf16.mxu0 0
  %9933 = vmatpush1.bf16.msra.mxu0 %v9917
  %9934 = vmatprep.subr.bf16.mxu0 0
  %9935 = vmatpush1.bf16.msra.mxu0 %v9916
  %9936 = vmatprep.subr.bf16.mxu0 0
  %9937 = vmatpush1.bf16.msra.mxu0 %v9915
  %9938 = vmatprep.subr.bf16.mxu0 0
  %9939 = vmatpush1.bf16.msra.mxu0 %v9914
  %9940 = vmatprep.subr.bf16.mxu0 0
  %9941 = vmatpush1.bf16.msra.mxu0 %v9913
  %9942 = vmatprep.subr.bf16.mxu0 0
  %9943 = vmatpush1.bf16.msra.mxu0 %v9912
  %9944 = vmatprep.subr.bf16.mxu0 0
  %9945 = vmatpush2.bf16.msra.mxu0 0
  %9946 = vmatprep.subr.bf16.mxu0 0
  %9947 = vmatpush2.bf16.msra.mxu0 0
  %9948 = vmatprep.subr.bf16.mxu0 0
  %9949 = vmatpush2.bf16.msra.mxu0 0
  %9950 = vmatprep.subr.bf16.mxu0 0
  %9951 = vmatpush2.bf16.msra.mxu0 0
  %9952 = vmatprep.subr.bf16.mxu0 0
  %9953 = vmatpush2.bf16.msra.mxu0 0
  %9954 = vmatprep.subr.bf16.mxu0 0
  %9955 = vmatpush2.bf16.msra.mxu0 0
  %9956 = vmatprep.subr.bf16.mxu0 0
  %9957 = vmatpush2.bf16.msra.mxu0 0
  %9958 = vmatprep.subr.bf16.mxu0 0
  %9959 = vmatpush2.bf16.msra.mxu0 0
  %9960 = vmatprep.mubr.bf16.mxu0 0
  %9961 = vmatmul.mubr.bf16.gmra.mxu0 %v9853
  %v9962 = vpop.f32.mrf.mxu0
  %v9963 = vadd.f32 %v9878, %v9962
  %v9964 = vpop.f32.mrf.mxu0
  %v9965 = vpop.f32.mrf.mxu0
  %v9966 = vadd.f32 %v9878, %v9965
  %v9967 = vpop.f32.mrf.mxu0
  %9968 = vmatprep.mubr.bf16.mxu0 0
  %9969 = vmatmul.mubr.bf16.gmra.mxu0 %v9854
  %v9970 = vpop.f32.mrf.mxu0
  %v9971 = vadd.f32 %v9878, %v9970
  %v9972 = vpop.f32.mrf.mxu0
  %v9973 = vpop.f32.mrf.mxu0
  %v9974 = vadd.f32 %v9878, %v9973
  %v9975 = vpop.f32.mrf.mxu0
  %9976 = vmatprep.mubr.bf16.mxu0 0
  %9977 = vmatmul.mubr.bf16.gmra.mxu0 %v9855
  %v9978 = vpop.f32.mrf.mxu0
  %v9979 = vadd.f32 %v9878, %v9978
  %v9980 = vpop.f32.mrf.mxu0
  %v9981 = vpop.f32.mrf.mxu0
  %v9982 = vadd.f32 %v9878, %v9981
  %v9983 = vpop.f32.mrf.mxu0
  %9984 = vmatprep.mubr.bf16.mxu0 0
  %9985 = vmatmul.mubr.bf16.gmra.mxu0 %v9856
  %v9986 = vpop.f32.mrf.mxu0
  %v9987 = vadd.f32 %v9878, %v9986
  %v9988 = vpop.f32.mrf.mxu0
  %v9989 = vpop.f32.mrf.mxu0
  %v9990 = vadd.f32 %v9878, %v9989
  %v9991 = vpop.f32.mrf.mxu0
  %9992 = vdwg.mxu0
  %9993 = vmax.xlane.f32.xlu0 %v9963
  %v9994 = vpop.xlane.xlu0 %9993
  %9995 = vmax.xlane.f32.xlu0 %v9966
  %v9996 = vpop.xlane.xlu0 %9995
  %9997 = vmax.xlane.f32.xlu0 %v9971
  %v9998 = vpop.xlane.xlu0 %9997
  %9999 = vmax.xlane.f32.xlu0 %v9974
  %v10000 = vpop.xlane.xlu0 %9999
  %10001 = vmax.xlane.f32.xlu0 %v9979
  %v10002 = vpop.xlane.xlu0 %10001
  %10003 = vmax.xlane.f32.xlu0 %v9982
  %v10004 = vpop.xlane.xlu0 %10003
  %10005 = vmax.xlane.f32.xlu0 %v9987
  %v10006 = vpop.xlane.xlu0 %10005
  %10007 = vmax.xlane.f32.xlu0 %v9990
  %v10008 = vpop.xlane.xlu0 %10007
  %v10009 = vsub.f32 %v9963, %v9994
  %v10010 = vsub.f32 %v9966, %v9996
  %v10011 = vsub.f32 %v9971, %v9998
  %v10012 = vsub.f32 %v9974, %v10000
  %v10013 = vsub.f32 %v9979, %v10002
  %v10014 = vsub.f32 %v9982, %v10004
  %v10015 = vsub.f32 %v9987, %v10006
  %v10016 = vsub.f32 %v9990, %v10008
  %v10017 = vmul.f32 %v10009, 1.442695
  %v10018 = vpow.pop %v10017
  %v10019 = vmul.f32 %v10010, 1.442695
  %v10020 = vpow.pop %v10019
  %v10021 = vmul.f32 %v10011, 1.442695
  %v10022 = vpow.pop %v10021
  %v10023 = vmul.f32 %v10012, 1.442695
  %v10024 = vpow.pop %v10023
  %v10025 = vmul.f32 %v10013, 1.442695
  %v10026 = vpow.pop %v10025
  %v10027 = vmul.f32 %v10014, 1.442695
  %v10028 = vpow.pop %v10027
  %v10029 = vmul.f32 %v10015, 1.442695
  %v10030 = vpow.pop %v10029
  %v10031 = vmul.f32 %v10016, 1.442695
  %v10032 = vpow.pop %v10031
  %10033 = vadd.xlane.f32.xlu0 %v10018
  %v10034 = vpop.xlane.xlu0 %10033
  %10035 = vadd.xlane.f32.xlu0 %v10020
  %v10036 = vpop.xlane.xlu0 %10035
  %10037 = vadd.xlane.f32.xlu0 %v10022
  %v10038 = vpop.xlane.xlu0 %10037
  %10039 = vadd.xlane.f32.xlu0 %v10024
  %v10040 = vpop.xlane.xlu0 %10039
  %10041 = vadd.xlane.f32.xlu0 %v10026
  %v10042 = vpop.xlane.xlu0 %10041
  %10043 = vadd.xlane.f32.xlu0 %v10028
  %v10044 = vpop.xlane.xlu0 %10043
  %10045 = vadd.xlane.f32.xlu0 %v10030
  %v10046 = vpop.xlane.xlu0 %10045
  %10047 = vadd.xlane.f32.xlu0 %v10032
  %v10048 = vpop.xlane.xlu0 %10047
  %v10049 = vlog2.pop %v10034
  %v10050 = vmul.f32 %v10049, 0.6931472
  %v10051 = vlog2.pop %v10036
  %v10052 = vmul.f32 %v10051, 0.6931472
  %v10053 = vlog2.pop %v10038
  %v10054 = vmul.f32 %v10053, 0.6931472
  %v10055 = vlog2.pop %v10040
  %v10056 = vmul.f32 %v10055, 0.6931472
  %v10057 = vlog2.pop %v10042
  %v10058 = vmul.f32 %v10057, 0.6931472
  %v10059 = vlog2.pop %v10044
  %v10060 = vmul.f32 %v10059, 0.6931472
  %v10061 = vlog2.pop %v10046
  %v10062 = vmul.f32 %v10061, 0.6931472
  %v10063 = vlog2.pop %v10048
  %v10064 = vmul.f32 %v10063, 0.6931472
  %v10065 = vsub.f32 %v10009, %v10050
  %v10066 = vsub.f32 %v10010, %v10052
  %v10067 = vsub.f32 %v10011, %v10054
  %v10068 = vsub.f32 %v10012, %v10056
  %v10069 = vsub.f32 %v10013, %v10058
  %v10070 = vsub.f32 %v10014, %v10060
  %v10071 = vsub.f32 %v10015, %v10062
  %v10072 = vsub.f32 %v10016, %v10064
  %10073 = vst [vmem:[%s8] sm:$0xff] %v10065
  %10074 = vst [vmem:[%s8 + $0x8] sm:$0xff] %v10066
  %10075 = vst [vmem:[%s8 + $0x10] sm:$0xff] %v10067
  %10076 = vst [vmem:[%s8 + $0x18] sm:$0xff] %v10068
  %10077 = vst [vmem:[%s8 + $0x20] sm:$0xff] %v10069
  %10078 = vst [vmem:[%s8 + $0x28] sm:$0xff] %v10070
  %10079 = vst [vmem:[%s8 + $0x30] sm:$0xff] %v10071
  %10080 = vst [vmem:[%s8 + $0x38] sm:$0xff] %v10072
  // Predicated region
  $region34: #{lstm_net_forward.1} parent=0 // pred_check
    _
  $region35: #{lstm_net_forward.1} parent=0 // pred_check_branch
    %10082 = sbr.rel (0) target = $region37
  $region36: #{lstm_net_forward.1} parent=0 // pred_region
    _
  $region37: #{lstm_net_forward.1} parent=0 // pred_fallthru
    _
  // Predicated region
  $region38: #{lstm_net_forward.1} parent=0 // pred_check
    _
  $region39: #{lstm_net_forward.1} parent=0 // pred_check_branch
    %10084 = sbr.rel (0) target = $region41
  $region40: #{lstm_net_forward.1} parent=0 // pred_region
    _
  $region41: #{lstm_net_forward.1} parent=0 // pred_fallthru
    _

</llo_original>
